<compile_context>
chip_gen: v7x
topology: tpu7x:2x2x1
jax: 0.10.0
libtpu: 0.0.40
codegen_flags: <defaults>
</compile_context>

<pallas_src>
import functools
import numpy as np
import jax
import jax.numpy as jnp
from jax.experimental import pallas as pl
from jax.experimental.pallas import tpu as pltpu

# ---------------- configuration (small shapes consistent with the module) ----
IMG = 16           # img_size
PATCH = 4          # patch_size
IN_CHANS = 3
EMBED_DIM = 32
DEPTH = 2
NUM_HEADS = 4
DEC_EMBED_DIM = 32
DEC_DEPTH = 2
DEC_NUM_HEADS = 4
MLP_RATIO = 4.0
BATCH = 2
MASK_RATIO = 0.8   # forward() default
LN_EPS = 1e-5      # nn.LayerNorm default
HEAD_PAD = 128     # lane-dense head output width (valid cols sliced in wrapper)

VMEM_SPEC = pl.BlockSpec(memory_space=pltpu.MemorySpace.VMEM)


def _round_up(v, m):
    return ((v + m - 1) // m) * m


def _const_idx(nd):
    return lambda l: (0,) * nd


def _full_spec(a):
    # Full-array block + constant index map -> resident in VMEM, DMA'd once.
    return pl.BlockSpec(tuple(a.shape), _const_idx(a.ndim))


# ---------------- in-kernel math helpers --------------------------------------

def _ln(x, g, b, eps):
    mu = jnp.mean(x, axis=-1, keepdims=True)
    xc = x - mu
    var = jnp.mean(xc * xc, axis=-1, keepdims=True)
    return xc * jax.lax.rsqrt(var + eps) * g + b


def _erf(z):
    # TODO(synk): lax.erf lowering inside Mosaic is not guaranteed; use the
    # Abramowitz-Stegun 7.1.26 polynomial (|err| <= 1.5e-7 ~ f32 eps) so the
    # exact-erf GELU can be fused in-kernel using only EUP-native exp.
    p = 0.3275911
    a1, a2, a3, a4, a5 = (0.254829592, -0.284496736, 1.421413741,
                          -1.453152027, 1.061405429)
    sgn = jnp.where(z >= 0.0, 1.0, -1.0)
    za = jnp.abs(z)
    t = 1.0 / (1.0 + p * za)
    poly = ((((a5 * t + a4) * t + a3) * t + a2) * t + a1) * t
    return sgn * (1.0 - poly * jnp.exp(-za * za))


def _gelu_exact(x):
    return 0.5 * x * (1.0 + _erf(x * float(1.0 / np.sqrt(2.0))))


# ---------------- Pallas kernels ----------------------------------------------

def _patch_embed_kernel(x_ref, w_ref, b_ref, pos_ref, o_ref):
    # Fused Conv2d(k=p, stride=p) as a single matmul over (N*L, C*p*p) + pos add.
    o_ref[...] = (jnp.dot(x_ref[...], w_ref[...], preferred_element_type=jnp.float32)
                  + b_ref[...] + pos_ref[...])


def patch_embed_call(x_flat, w_pe, b_pe, pos_flat):
    M = x_flat.shape[0]
    Dm = w_pe.shape[1]
    return pl.pallas_call(
        _patch_embed_kernel,
        out_shape=jax.ShapeDtypeStruct((M, Dm), jnp.float32),
        in_specs=[VMEM_SPEC, VMEM_SPEC, VMEM_SPEC, VMEM_SPEC],
        out_specs=VMEM_SPEC,
    )(x_flat, w_pe, b_pe, pos_flat)


_BLK_ORDER = ("ln1g", "ln1b", "wqkv", "bqkv", "wproj", "bproj",
              "ln2g", "ln2b", "wfc1", "bfc1", "wfc2", "bfc2")


def _make_stack_kernel(*, num_heads, n_batch, lp, lv, eps, fuse_loss, p_valid=None):
    """Fused transformer stack: grid = (depth,), all batches in one block.

    Layer-0 prologue: zero the padded scratch, scatter each batch's (lv, D)
    tokens (+ pos) into rows [b*lp, b*lp+lv).  Each layer: LN1 -> qkv ->
    per-head softmax(QK^T)V with the output projection folded into the head
    loop -> residual -> LN2 -> fc1 -> exact GELU -> fc2 -> residual.
    Last layer: final LayerNorm + linear head (128-lane padded) and, for the
    decoder, the masked-MSE loss, all before the single HBM writeback.
    """
    def kernel(*refs):
        if fuse_loss:
            (x_ref, pos_ref, bias_ref, *w_refs,
             tgt_ref, lmask_ref, o_ref, loss_ref, acc_ref) = refs
        else:
            (x_ref, pos_ref, bias_ref, *w_refs, o_ref, acc_ref) = refs
        (ln1g, ln1b, wqkv, bqkv, wproj, bproj,
         ln2g, ln2b, wfc1, bfc1, wfc2, bfc2,
         fng, fnb, wh, bh) = w_refs

        layer = pl.program_id(0)

        # ---- layer-0 prologue: pad tokens to lp rows per batch + pos add ----
        @pl.when(layer == 0)
        def _():
            acc_ref[...] = jnp.zeros_like(acc_ref)
            for b in range(n_batch):
                acc_ref[b * lp:b * lp + lv, :] = x_ref[b] + pos_ref[...]

        x = acc_ref[...]                              # (n_batch*lp, D), carried
        D = x.shape[-1]
        dh = D // num_heads

        # ---- attention: LN1 -> qkv -> per-head softmax(QK^T)V -> proj ----
        h = _ln(x, ln1g[layer], ln1b[layer], eps)
        qkv = jnp.dot(h, wqkv[layer], preferred_element_type=jnp.float32) + bqkv[layer]
        q = qkv[:, :D]                # attention scale folded into wqkv at init
        k = qkv[:, D:2 * D]
        v = qkv[:, 2 * D:]
        w_o = wproj[layer]            # (D, D)
        bias = bias_ref[...]          # block-diagonal + key-padding additive mask

        attn = None
        for hd in range(num_heads):   # static loop; output proj folded in (no concat)
            cs = slice(hd * dh, (hd + 1) * dh)
            s = jax.lax.dot_general(q[:, cs], k[:, cs],
                                    (((1,), (1,)), ((), ())),
                                    preferred_element_type=jnp.float32)
            s = s + bias
            s = s - jnp.max(s, axis=-1, keepdims=True)
            p = jnp.exp(s)
            p = p / jnp.sum(p, axis=-1, keepdims=True)     # exact divide
            hv = jnp.dot(p, v[:, cs], preferred_element_type=jnp.float32)
            contrib = jnp.dot(hv, w_o[cs, :], preferred_element_type=jnp.float32)
            attn = contrib if attn is None else attn + contrib
        x = x + attn + bproj[layer]

        # ---- MLP: LN2 -> fc1 -> exact GELU -> fc2 ----
        h = _ln(x, ln2g[layer], ln2b[layer], eps)
        h = jnp.dot(h, wfc1[layer], preferred_element_type=jnp.float32) + bfc1[layer]
        h = _gelu_exact(h)
        x = x + jnp.dot(h, wfc2[layer], preferred_element_type=jnp.float32) + bfc2[layer]
        acc_ref[...] = x

        # ---- last layer: final LN + fused head (+ fused masked-MSE loss) ----
        @pl.when(layer == pl.num_programs(0) - 1)
        def _():
            y = _ln(x, fng[...], fnb[...], eps)
            y = jnp.dot(y, wh[...], preferred_element_type=jnp.float32) + bh[...]
            o_ref[...] = y                               # 128-lane dense store
            if fuse_loss:
                # Padded head columns of y and tgt are exactly zero, so summing
                # over all 128 lanes and dividing by p_valid equals mean(dim=-1)
                # over the true prediction width.
                d = y - tgt_ref[...]
                per = jnp.sum(d * d, axis=-1, keepdims=True) * (1.0 / p_valid)
                m = lmask_ref[...]                        # 0 for cls / pad rows
                num = jnp.sum(per * m, axis=(0, 1), keepdims=True)
                den = jnp.sum(m, axis=(0, 1), keepdims=True)
                loss_ref[...] = num / jnp.maximum(den, 1e-6)

    return kernel


def run_vit_stack(x, pos, blk, fn_g, fn_b, head_w, head_b, *,
                  num_heads, lp, loss_inputs=None):
    """x: (N, Lv, D) unpadded tokens; pos: (Lv, D) added at layer 0 (zeros for
    the encoder).  Returns (N*lp, head_w.shape[1]) rows, plus a (1,1) loss if
    loss_inputs=(target_rows, mask_rows, p_valid)."""
    N, lv, D = x.shape
    depth = blk["wqkv"].shape[0]
    dout = head_w.shape[1]
    nlp = N * lp

    # Block-diagonal additive attention bias (cross-batch + key-padding mask),
    # built once at trace time as a constant.
    r = np.arange(nlp)
    same = (r[:, None] // lp == r[None, :] // lp) & ((r[None, :] % lp) < lv)
    bias = jnp.asarray(np.where(same, 0.0, -1e30), jnp.float32)       # (nlp, nlp)

    blk_vals = [blk[name] for name in _BLK_ORDER]
    inputs = [x, pos, bias] + blk_vals + [fn_g, fn_b, head_w, head_b]
    in_specs = [_full_spec(a) for a in inputs]

    fuse_loss = loss_inputs is not None
    p_valid = None
    if fuse_loss:
        tgt_rows, mask_rows, p_valid = loss_inputs
        inputs += [tgt_rows, mask_rows]
        in_specs += [_full_spec(tgt_rows), _full_spec(mask_rows)]
        out_shape = (jax.ShapeDtypeStruct((nlp, dout), jnp.float32),
                     jax.ShapeDtypeStruct((1, 1), jnp.float32))
        out_specs = (pl.BlockSpec((nlp, dout), _const_idx(2)),
                     pl.BlockSpec((1, 1), _const_idx(2)))
    else:
        out_shape = jax.ShapeDtypeStruct((nlp, dout), jnp.float32)
        out_specs = pl.BlockSpec((nlp, dout), _const_idx(2))

    kernel = _make_stack_kernel(num_heads=num_heads, n_batch=N, lp=lp, lv=lv,
                                eps=LN_EPS, fuse_loss=fuse_loss, p_valid=p_valid)

    return pl.pallas_call(
        kernel,
        out_shape=out_shape,
        grid=(depth,),
        in_specs=in_specs,
        out_specs=out_specs,
        scratch_shapes=[pltpu.VMEM((nlp, D), jnp.float32)],
        compiler_params=pltpu.CompilerParams(dimension_semantics=("arbitrary",)),
    )(*inputs)


# ---------------- plain-JAX glue ----------------------------------------------

def get_1d_sincos_pos_embed_from_grid(embed_dim, pos):
    omega = np.arange(embed_dim // 2, dtype=np.float64)
    omega /= embed_dim / 2.0
    omega = 1.0 / 10000 ** omega
    pos = pos.reshape(-1)
    out = np.einsum("m,d->md", pos, omega)
    return np.concatenate([np.sin(out), np.cos(out)], axis=1)


def get_2d_sincos_pos_embed(embed_dim, grid_size, cls_token=False):
    grid_h = np.arange(grid_size, dtype=np.float32)
    grid_w = np.arange(grid_size, dtype=np.float32)
    grid = np.meshgrid(grid_w, grid_h)
    grid = np.stack(grid, axis=0).reshape([2, 1, grid_size, grid_size])
    emb_h = get_1d_sincos_pos_embed_from_grid(embed_dim // 2, grid[0])
    emb_w = get_1d_sincos_pos_embed_from_grid(embed_dim // 2, grid[1])
    pos = np.concatenate([emb_h, emb_w], axis=1)
    if cls_token:
        pos = np.concatenate([np.zeros([1, embed_dim]), pos], axis=0)
    return pos


def patchify(imgs):
    """Matches MaskedAutoencoderViT.patchify (non-audio branch): (ph, pw, c) order."""
    N, C, H, W = imgs.shape
    h = w = H // PATCH
    x = imgs.reshape(N, C, h, PATCH, w, PATCH)
    x = jnp.einsum("nchpwq->nhwpqc", x)
    return x.reshape(N, h * w, PATCH * PATCH * C)


def random_masking(x, mask_ratio, key):
    # TODO(synk): argsort-based per-sample shuffling has no clean Pallas equivalent; done in JAX.
    N, L, D = x.shape
    len_keep = int(L * (1 - mask_ratio))
    noise = jax.random.uniform(key, (N, L))
    ids_shuffle = jnp.argsort(noise, axis=1)
    ids_restore = jnp.argsort(ids_shuffle, axis=1)
    ids_keep = ids_shuffle[:, :len_keep]
    x_masked = jnp.take_along_axis(x, ids_keep[:, :, None], axis=1)
    mask = jnp.ones((N, L), jnp.float32).at[:, :len_keep].set(0.0)
    mask = jnp.take_along_axis(mask, ids_restore, axis=1)
    return x_masked, mask, ids_restore


def mae_forward(params, imgs, key, mask_ratio=MASK_RATIO):
    N, C, H, W = imgs.shape
    hp, wp = H // PATCH, W // PATCH
    L = hp * wp

    # ---- patch embed (Conv2d k=p stride=p, (c,ph,pw) flatten order) + pos add
    xp = imgs.reshape(N, C, hp, PATCH, wp, PATCH)
    xp = jnp.transpose(xp, (0, 2, 4, 1, 3, 5)).reshape(N * L, C * PATCH * PATCH)
    pos_patches = jnp.tile(params["pos_embed"][0, 1:, :], (N, 1))       # (N*L, D)
    tokens = patch_embed_call(xp, params["w_pe"], params["b_pe"], pos_patches)
    tokens = tokens.reshape(N, L, EMBED_DIM)

    # ---- random masking + cls token (JAX glue)
    x_masked, mask, ids_restore = random_masking(tokens, mask_ratio, key)
    cls_tok = params["cls_token"] + params["pos_embed"][:, :1, :]
    x = jnp.concatenate(
        [jnp.broadcast_to(cls_tok, (N, 1, EMBED_DIM)), x_masked], axis=1)   # (N, Lv, D)
    lv_enc = x.shape[1]
    lp_enc = _round_up(lv_enc, 8)

    # ---- encoder: blocks + final norm + decoder_embed head fused (128-lane out)
    enc_rows = run_vit_stack(
        x, jnp.zeros((lv_enc, EMBED_DIM), jnp.float32),       # pos already added
        params["enc"], params["norm_g"], params["norm_b"],
        params["dec_w_embed"], params["dec_b_embed"],
        num_heads=NUM_HEADS, lp=lp_enc)                        # (N*lp_enc, 128)
    enc = enc_rows.reshape(N, lp_enc, HEAD_PAD)[:, :lv_enc, :DEC_EMBED_DIM]

    # ---- decoder token assembly (mask tokens + unshuffle gather, JAX glue)
    # TODO(synk): the ids_restore gather could be fused via PrefetchScalarGridSpec,
    # but dynamic in-kernel row gather is risky on Mosaic at these shapes; kept in JAX.
    mask_tokens = jnp.broadcast_to(params["mask_token"],
                                   (N, L + 1 - lv_enc, DEC_EMBED_DIM))
    x_ = jnp.concatenate([enc[:, 1:, :], mask_tokens], axis=1)
    x_ = jnp.take_along_axis(x_, ids_restore[:, :, None], axis=1)
    xd = jnp.concatenate([enc[:, :1, :], x_], axis=1)          # (N, L+1, Dd); pos added in-kernel
    lv_dec = L + 1
    lp_dec = _round_up(lv_dec, 8)

    # ---- fused-loss inputs: target / mask laid out in the decoder's row space
    target = patchify(imgs)                                    # (N, L, P)
    P = target.shape[-1]
    tgt_rows = jnp.zeros((N, lp_dec, HEAD_PAD), jnp.float32)
    tgt_rows = tgt_rows.at[:, 1:lv_dec, :P].set(target).reshape(N * lp_dec, HEAD_PAD)
    mask_rows = jnp.zeros((N, lp_dec), jnp.float32)
    mask_rows = mask_rows.at[:, 1:lv_dec].set(mask).reshape(N * lp_dec, 1)

    # ---- decoder: dec_pos add + blocks + final norm + decoder_pred + loss fused
    pred_rows, loss11 = run_vit_stack(
        xd, params["dec_pos_embed"][0],
        params["dec"], params["dec_norm_g"], params["dec_norm_b"],
        params["dec_w_pred"], params["dec_b_pred"],
        num_heads=DEC_NUM_HEADS, lp=lp_dec,
        loss_inputs=(tgt_rows, mask_rows, P))

    pred = pred_rows.reshape(N, lp_dec, HEAD_PAD)[:, 1:lv_dec, :P]   # drop cls/pad rows & lanes
    loss_recon = loss11[0, 0]
    loss_contrastive = jnp.array([0.0], jnp.float32)   # matches torch.FloatTensor([0.0])
    return loss_recon, pred, mask, loss_contrastive


# ---------------- deterministic parameter initialization ----------------------

def xavier(key, in_f, out_f):
    """Xavier-uniform stored pre-transposed as (K=in, N=out)."""
    bound = float(np.sqrt(6.0 / (in_f + out_f)))
    return jax.random.uniform(key, (in_f, out_f), jnp.float32, -bound, bound)


def init_block(key, dim, hidden, q_scale):
    ks = jax.random.split(key, 4)
    # Attention scale folded into the Q columns of wqkv (offline transform).
    wqkv = xavier(ks[0], dim, 3 * dim)
    wqkv = wqkv.at[:, :dim].multiply(q_scale)
    return dict(
        ln1g=jnp.ones((1, dim), jnp.float32), ln1b=jnp.zeros((1, dim), jnp.float32),
        wqkv=wqkv, bqkv=jnp.zeros((1, 3 * dim), jnp.float32),
        wproj=xavier(ks[1], dim, dim), bproj=jnp.zeros((1, dim), jnp.float32),
        ln2g=jnp.ones((1, dim), jnp.float32), ln2b=jnp.zeros((1, dim), jnp.float32),
        wfc1=xavier(ks[2], dim, hidden), bfc1=jnp.zeros((1, hidden), jnp.float32),
        wfc2=xavier(ks[3], hidden, dim), bfc2=jnp.zeros((1, dim), jnp.float32),
    )


def init_block_stack(key, dim, mlp_ratio, depth, num_heads):
    hidden = int(dim * mlp_ratio)
    q_scale = float((dim // num_heads) ** -0.5)
    blocks = [init_block(k, dim, hidden, q_scale) for k in jax.random.split(key, depth)]
    return jax.tree_util.tree_map(lambda *xs: jnp.stack(xs, axis=0), *blocks)


def init_params(key):
    keys = jax.random.split(key, 8)
    num_patches = (IMG // PATCH) ** 2
    patch_dim = IN_CHANS * PATCH * PATCH
    gs = int(num_patches ** 0.5)
    pos = get_2d_sincos_pos_embed(EMBED_DIM, gs, cls_token=True)
    dec_pos = get_2d_sincos_pos_embed(DEC_EMBED_DIM, gs, cls_token=True)

    def pad_head(w):   # zero-pad head output columns to HEAD_PAD (lane-dense store)
        return jnp.pad(w, ((0, 0), (0, HEAD_PAD - w.shape[1])))

    return dict(
        w_pe=xavier(keys[0], patch_dim, EMBED_DIM),
        b_pe=jnp.zeros((1, EMBED_DIM), jnp.float32),
        cls_token=0.02 * jax.random.normal(keys[1], (1, 1, EMBED_DIM), jnp.float32),
        pos_embed=jnp.asarray(pos, jnp.float32)[None],
        enc=init_block_stack(keys[2], EMBED_DIM, MLP_RATIO, DEPTH, NUM_HEADS),
        norm_g=jnp.ones((1, EMBED_DIM), jnp.float32),
        norm_b=jnp.zeros((1, EMBED_DIM), jnp.float32),
        dec_w_embed=pad_head(xavier(keys[3], EMBED_DIM, DEC_EMBED_DIM)),
        dec_b_embed=jnp.zeros((1, HEAD_PAD), jnp.float32),
        mask_token=0.02 * jax.random.normal(keys[4], (1, 1, DEC_EMBED_DIM), jnp.float32),
        dec_pos_embed=jnp.asarray(dec_pos, jnp.float32)[None],
        dec=init_block_stack(keys[5], DEC_EMBED_DIM, MLP_RATIO, DEC_DEPTH, DEC_NUM_HEADS),
        dec_norm_g=jnp.ones((1, DEC_EMBED_DIM), jnp.float32),
        dec_norm_b=jnp.zeros((1, DEC_EMBED_DIM), jnp.float32),
        dec_w_pred=pad_head(xavier(keys[6], DEC_EMBED_DIM, PATCH * PATCH * IN_CHANS)),
        dec_b_pred=jnp.zeros((1, HEAD_PAD), jnp.float32),
    )


# ---------------- main ---------------------------------------------------------

if __name__ == "__main__":
    root = jax.random.PRNGKey(0)
    pkey, ikey, mkey = jax.random.split(root, 3)
    params = init_params(pkey)
    imgs = jax.random.normal(ikey, (BATCH, IN_CHANS, IMG, IMG), jnp.float32)

    fwd = jax.jit(functools.partial(mae_forward, mask_ratio=MASK_RATIO))
    loss_recon, pred, mask, loss_contrastive = fwd(params, imgs, mkey)
    jax.block_until_ready((loss_recon, pred, mask, loss_contrastive))

    num_patches = (IMG // PATCH) ** 2
    assert pred.shape == (BATCH, num_patches, PATCH * PATCH * IN_CHANS)
    assert mask.shape == (BATCH, num_patches)
    assert loss_recon.shape == ()
    assert loss_contrastive.shape == (1,)
    assert bool(jnp.isfinite(loss_recon))
    assert bool(jnp.all(jnp.isfinite(pred)))
    print("KERNEL_OK")
</pallas_src>

<mosaic_0001>
module attributes {stable_mosaic.version = 11 : i64} {
  func.func @_patch_embed_kernel(%arg0: memref<32x48xf32, #tpu.memory_space<vmem>>, %arg1: memref<48x32xf32, #tpu.memory_space<vmem>>, %arg2: memref<1x32xf32, #tpu.memory_space<vmem>>, %arg3: memref<32x32xf32, #tpu.memory_space<vmem>>, %arg4: memref<32x32xf32, #tpu.memory_space<vmem>>) attributes {dimension_semantics = [], scalar_prefetch = 0 : i64, scratch_operands = 0 : i64, tpu.core_type = #tpu.core_type<tc>} {
    %c0 = arith.constant 0 : index
    %c0_0 = arith.constant 0 : index
    %0 = vector.load %arg0[%c0, %c0_0] : memref<32x48xf32, #tpu.memory_space<vmem>>, vector<32x48xf32>
    %c0_1 = arith.constant 0 : index
    %c0_2 = arith.constant 0 : index
    %1 = vector.load %arg1[%c0_1, %c0_2] : memref<48x32xf32, #tpu.memory_space<vmem>>, vector<48x32xf32>
    %cst = arith.constant dense<0.000000e+00> : vector<32x32xf32>
    %2 = tpu.matmul %0, %1, %cst {dimension_numbers = #tpu.dot_dimension_numbers<[1], [0], [0], [1], [0, 0, 1, 1], [], []>} : vector<32x48xf32>, vector<48x32xf32>, vector<32x32xf32> -> vector<32x32xf32>
    %c0_3 = arith.constant 0 : index
    %c0_4 = arith.constant 0 : index
    %3 = vector.load %arg2[%c0_3, %c0_4] : memref<1x32xf32, #tpu.memory_space<vmem>>, vector<1x32xf32>
    %4 = vector.broadcast %3 : vector<1x32xf32> to vector<32x32xf32>
    %5 = arith.addf %2, %4 : vector<32x32xf32>
    %c0_5 = arith.constant 0 : index
    %c0_6 = arith.constant 0 : index
    %6 = vector.load %arg3[%c0_5, %c0_6] : memref<32x32xf32, #tpu.memory_space<vmem>>, vector<32x32xf32>
    %7 = arith.addf %5, %6 : vector<32x32xf32>
    %c0_7 = arith.constant 0 : index
    %c0_8 = arith.constant 0 : index
    %8 = vector.load %arg4[%c0_7, %c0_8] : memref<32x32xf32, #tpu.memory_space<vmem>>, vector<32x32xf32>
    tpu.vector_store %arg4[%c0_7, %c0_8], %7 {strides = array<i32>} : memref<32x32xf32, #tpu.memory_space<vmem>>, vector<32x32xf32>,
    return
  }
}

module attributes {stable_mosaic.version = 11 : i64} {
  func.func @kernel(%arg0: i32, %arg1: memref<2x4x32xf32, #tpu.memory_space<vmem>>, %arg2: memref<4x32xf32, #tpu.memory_space<vmem>>, %arg3: memref<16x16xf32, #tpu.memory_space<vmem>>, %arg4: memref<2x1x32xf32, #tpu.memory_space<vmem>>, %arg5: memref<2x1x32xf32, #tpu.memory_space<vmem>>, %arg6: memref<2x32x96xf32, #tpu.memory_space<vmem>>, %arg7: memref<2x1x96xf32, #tpu.memory_space<vmem>>, %arg8: memref<2x32x32xf32, #tpu.memory_space<vmem>>, %arg9: memref<2x1x32xf32, #tpu.memory_space<vmem>>, %arg10: memref<2x1x32xf32, #tpu.memory_space<vmem>>, %arg11: memref<2x1x32xf32, #tpu.memory_space<vmem>>, %arg12: memref<2x32x128xf32, #tpu.memory_space<vmem>>, %arg13: memref<2x1x128xf32, #tpu.memory_space<vmem>>, %arg14: memref<2x128x32xf32, #tpu.memory_space<vmem>>, %arg15: memref<2x1x32xf32, #tpu.memory_space<vmem>>, %arg16: memref<1x32xf32, #tpu.memory_space<vmem>>, %arg17: memref<1x32xf32, #tpu.memory_space<vmem>>, %arg18: memref<32x128xf32, #tpu.memory_space<vmem>>, %arg19: memref<1x128xf32, #tpu.memory_space<vmem>>, %arg20: memref<16x128xf32, #tpu.memory_space<vmem>>, %arg21: memref<16x32xf32, #tpu.memory_space<vmem>>) attributes {dimension_semantics = [#tpu.dimension_semantics<arbitrary>], iteration_bounds = array<i64: 2>, scalar_prefetch = 0 : i64, scratch_operands = 1 : i64, tpu.core_type = #tpu.core_type<tc>, window_params = [{pipeline_mode = #tpu.pipeline_mode<synchronous>, transform_indices = @transform_0, window_bounds = array<i64: 2, 4, 32>}, {pipeline_mode = #tpu.pipeline_mode<synchronous>, transform_indices = @transform_1, window_bounds = array<i64: 4, 32>}, {pipeline_mode = #tpu.pipeline_mode<synchronous>, transform_indices = @transform_2, window_bounds = array<i64: 16, 16>}, {pipeline_mode = #tpu.pipeline_mode<synchronous>, transform_indices = @transform_3, window_bounds = array<i64: 2, 1, 32>}, {pipeline_mode = #tpu.pipeline_mode<synchronous>, transform_indices = @transform_4, window_bounds = array<i64: 2, 1, 32>}, {pipeline_mode = #tpu.pipeline_mode<synchronous>, transform_indices = @transform_5, window_bounds = array<i64: 2, 32, 96>}, {pipeline_mode = #tpu.pipeline_mode<synchronous>, transform_indices = @transform_6, window_bounds = array<i64: 2, 1, 96>}, {pipeline_mode = #tpu.pipeline_mode<synchronous>, transform_indices = @transform_7, window_bounds = array<i64: 2, 32, 32>}, {pipeline_mode = #tpu.pipeline_mode<synchronous>, transform_indices = @transform_8, window_bounds = array<i64: 2, 1, 32>}, {pipeline_mode = #tpu.pipeline_mode<synchronous>, transform_indices = @transform_9, window_bounds = array<i64: 2, 1, 32>}, {pipeline_mode = #tpu.pipeline_mode<synchronous>, transform_indices = @transform_10, window_bounds = array<i64: 2, 1, 32>}, {pipeline_mode = #tpu.pipeline_mode<synchronous>, transform_indices = @transform_11, window_bounds = array<i64: 2, 32, 128>}, {pipeline_mode = #tpu.pipeline_mode<synchronous>, transform_indices = @transform_12, window_bounds = array<i64: 2, 1, 128>}, {pipeline_mode = #tpu.pipeline_mode<synchronous>, transform_indices = @transform_13, window_bounds = array<i64: 2, 128, 32>}, {pipeline_mode = #tpu.pipeline_mode<synchronous>, transform_indices = @transform_14, window_bounds = array<i64: 2, 1, 32>}, {pipeline_mode = #tpu.pipeline_mode<synchronous>, transform_indices = @transform_15, window_bounds = array<i64: 1, 32>}, {pipeline_mode = #tpu.pipeline_mode<synchronous>, transform_indices = @transform_16, window_bounds = array<i64: 1, 32>}, {pipeline_mode = #tpu.pipeline_mode<synchronous>, transform_indices = @transform_17, window_bounds = array<i64: 32, 128>}, {pipeline_mode = #tpu.pipeline_mode<synchronous>, transform_indices = @transform_18, window_bounds = array<i64: 1, 128>}, {pipeline_mode = #tpu.pipeline_mode<synchronous>, transform_indices = @transform_19, window_bounds = array<i64: 16, 128>}]} {
    %c0_i32 = arith.constant 0 : i32
    %0 = arith.cmpi eq, %arg0, %c0_i32 : i32
    %1 = arith.extui %0 : i1 to i32
    %c0_i32_0 = arith.constant 0 : i32
    %2 = arith.cmpi ne, %1, %c0_i32_0 : i32
    scf.if %2 {
      %cst_79 = arith.constant 0.000000e+00 : f32
      %213 = vector.broadcast %cst_79 : f32 to vector<16x32xf32>
      %c0_80 = arith.constant 0 : index
      %c0_81 = arith.constant 0 : index
      %214 = vector.load %arg21[%c0_80, %c0_81] : memref<16x32xf32, #tpu.memory_space<vmem>>, vector<16x32xf32>
      tpu.vector_store %arg21[%c0_80, %c0_81], %213 {strides = array<i32>} : memref<16x32xf32, #tpu.memory_space<vmem>>, vector<16x32xf32>,
      %c0_82 = arith.constant 0 : index
      %c0_83 = arith.constant 0 : index
      %c0_84 = arith.constant 0 : index
      %215 = vector.load %arg1[%c0_82, %c0_83, %c0_84] : memref<2x4x32xf32, #tpu.memory_space<vmem>>, vector<1x4x32xf32>
      %216 = vector.shape_cast %215 : vector<1x4x32xf32> to vector<4x32xf32>
      %c0_85 = arith.constant 0 : index
      %c0_86 = arith.constant 0 : index
      %217 = vector.load %arg2[%c0_85, %c0_86] : memref<4x32xf32, #tpu.memory_space<vmem>>, vector<4x32xf32>
      %218 = arith.addf %216, %217 : vector<4x32xf32>
      %c0_87 = arith.constant 0 : index
      %c0_88 = arith.constant 0 : index
      %219 = vector.load %arg21[%c0_87, %c0_88] : memref<16x32xf32, #tpu.memory_space<vmem>>, vector<4x32xf32>
      tpu.vector_store %arg21[%c0_87, %c0_88], %218 {strides = array<i32>} : memref<16x32xf32, #tpu.memory_space<vmem>>, vector<4x32xf32>,
      %c1 = arith.constant 1 : index
      %c0_89 = arith.constant 0 : index
      %c0_90 = arith.constant 0 : index
      %220 = vector.load %arg1[%c1, %c0_89, %c0_90] : memref<2x4x32xf32, #tpu.memory_space<vmem>>, vector<1x4x32xf32>
      %221 = vector.shape_cast %220 : vector<1x4x32xf32> to vector<4x32xf32>
      %c0_91 = arith.constant 0 : index
      %c0_92 = arith.constant 0 : index
      %222 = vector.load %arg2[%c0_91, %c0_92] : memref<4x32xf32, #tpu.memory_space<vmem>>, vector<4x32xf32>
      %223 = arith.addf %221, %222 : vector<4x32xf32>
      %c8 = arith.constant 8 : index
      %c0_93 = arith.constant 0 : index
      %224 = vector.load %arg21[%c8, %c0_93] : memref<16x32xf32, #tpu.memory_space<vmem>>, vector<4x32xf32>
      tpu.vector_store %arg21[%c8, %c0_93], %223 {strides = array<i32>} : memref<16x32xf32, #tpu.memory_space<vmem>>, vector<4x32xf32>,
    } else {
    }
    %c0 = arith.constant 0 : index
    %c0_1 = arith.constant 0 : index
    %3 = vector.load %arg21[%c0, %c0_1] : memref<16x32xf32, #tpu.memory_space<vmem>>, vector<16x32xf32>
    %4 = arith.index_cast %arg0 : i32 to index
    %c0_2 = arith.constant 0 : index
    %c0_3 = arith.constant 0 : index
    %5 = vector.load %arg4[%4, %c0_2, %c0_3] : memref<2x1x32xf32, #tpu.memory_space<vmem>>, vector<1x1x32xf32>
    %6 = vector.shape_cast %5 : vector<1x1x32xf32> to vector<1x32xf32>
    %7 = arith.index_cast %arg0 : i32 to index
    %c0_4 = arith.constant 0 : index
    %c0_5 = arith.constant 0 : index
    %8 = vector.load %arg5[%7, %c0_4, %c0_5] : memref<2x1x32xf32, #tpu.memory_space<vmem>>, vector<1x1x32xf32>
    %9 = vector.shape_cast %8 : vector<1x1x32xf32> to vector<1x32xf32>
    %cst = arith.constant dense<0.000000e+00> : vector<16xf32>
    %10 = vector.multi_reduction <add>, %3, %cst [1] : vector<16x32xf32> to vector<16xf32>
    %11 = vector.shape_cast %10 : vector<16xf32> to vector<16x1xf32>
    %cst_6 = arith.constant 3.200000e+01 : f32
    %12 = vector.broadcast %cst_6 : f32 to vector<16x1xf32>
    %13 = arith.divf %11, %12 : vector<16x1xf32>
    %14 = vector.broadcast %13 : vector<16x1xf32> to vector<16x32xf32>
    %15 = arith.subf %3, %14 : vector<16x32xf32>
    %16 = arith.mulf %15, %15 : vector<16x32xf32>
    %cst_7 = arith.constant dense<0.000000e+00> : vector<16xf32>
    %17 = vector.multi_reduction <add>, %16, %cst_7 [1] : vector<16x32xf32> to vector<16xf32>
    %18 = vector.shape_cast %17 : vector<16xf32> to vector<16x1xf32>
    %cst_8 = arith.constant 3.200000e+01 : f32
    %19 = vector.broadcast %cst_8 : f32 to vector<16x1xf32>
    %20 = arith.divf %18, %19 : vector<16x1xf32>
    %cst_9 = arith.constant 9.99999974E-6 : f32
    %21 = vector.broadcast %cst_9 : f32 to vector<16x1xf32>
    %22 = arith.addf %20, %21 : vector<16x1xf32>
    %23 = math.rsqrt %22 : vector<16x1xf32>
    %24 = vector.broadcast %23 : vector<16x1xf32> to vector<16x32xf32>
    %25 = arith.mulf %15, %24 : vector<16x32xf32>
    %26 = vector.broadcast %6 : vector<1x32xf32> to vector<16x32xf32>
    %27 = arith.mulf %25, %26 : vector<16x32xf32>
    %28 = vector.broadcast %9 : vector<1x32xf32> to vector<16x32xf32>
    %29 = arith.addf %27, %28 : vector<16x32xf32>
    %30 = arith.index_cast %arg0 : i32 to index
    %c0_10 = arith.constant 0 : index
    %c0_11 = arith.constant 0 : index
    %31 = vector.load %arg6[%30, %c0_10, %c0_11] : memref<2x32x96xf32, #tpu.memory_space<vmem>>, vector<1x32x96xf32>
    %32 = vector.shape_cast %31 : vector<1x32x96xf32> to vector<32x96xf32>
    %cst_12 = arith.constant dense<0.000000e+00> : vector<16x96xf32>
    %33 = tpu.matmul %29, %32, %cst_12 {dimension_numbers = #tpu.dot_dimension_numbers<[1], [0], [0], [1], [0, 0, 1, 1], [], []>} : vector<16x32xf32>, vector<32x96xf32>, vector<16x96xf32> -> vector<16x96xf32>
    %34 = arith.index_cast %arg0 : i32 to index
    %c0_13 = arith.constant 0 : index
    %c0_14 = arith.constant 0 : index
    %35 = vector.load %arg7[%34, %c0_13, %c0_14] : memref<2x1x96xf32, #tpu.memory_space<vmem>>, vector<1x1x96xf32>
    %36 = vector.shape_cast %35 : vector<1x1x96xf32> to vector<1x96xf32>
    %37 = vector.broadcast %36 : vector<1x96xf32> to vector<16x96xf32>
    %38 = arith.addf %33, %37 : vector<16x96xf32>
    %39 = vector.extract_strided_slice %38 {offsets = [0, 0], sizes = [16, 32], strides = [1, 1]} : vector<16x96xf32> to vector<16x32xf32>
    %40 = vector.extract_strided_slice %38 {offsets = [0, 32], sizes = [16, 32], strides = [1, 1]} : vector<16x96xf32> to vector<16x32xf32>
    %41 = vector.extract_strided_slice %38 {offsets = [0, 64], sizes = [16, 32], strides = [1, 1]} : vector<16x96xf32> to vector<16x32xf32>
    %42 = arith.index_cast %arg0 : i32 to index
    %c0_15 = arith.constant 0 : index
    %c0_16 = arith.constant 0 : index
    %43 = vector.load %arg8[%42, %c0_15, %c0_16] : memref<2x32x32xf32, #tpu.memory_space<vmem>>, vector<1x32x32xf32>
    %44 = vector.shape_cast %43 : vector<1x32x32xf32> to vector<32x32xf32>
    %c0_17 = arith.constant 0 : index
    %c0_18 = arith.constant 0 : index
    %45 = vector.load %arg3[%c0_17, %c0_18] : memref<16x16xf32, #tpu.memory_space<vmem>>, vector<16x16xf32>
    %46 = vector.extract_strided_slice %39 {offsets = [0, 0], sizes = [16, 8], strides = [1, 1]} : vector<16x32xf32> to vector<16x8xf32>
    %47 = vector.extract_strided_slice %40 {offsets = [0, 0], sizes = [16, 8], strides = [1, 1]} : vector<16x32xf32> to vector<16x8xf32>
    %cst_19 = arith.constant dense<0.000000e+00> : vector<16x16xf32>
    %48 = tpu.matmul %46, %47, %cst_19 {dimension_numbers = #tpu.dot_dimension_numbers<[1], [1], [0], [0], [0, 0, 1, 0], [], []>} : vector<16x8xf32>, vector<16x8xf32>, vector<16x16xf32> -> vector<16x16xf32>
    %49 = arith.addf %48, %45 : vector<16x16xf32>
    %cst_20 = arith.constant dense<0xFF800000> : vector<16xf32>
    %50 = vector.multi_reduction <maximumf>, %49, %cst_20 [1] : vector<16x16xf32> to vector<16xf32>
    %51 = vector.shape_cast %50 : vector<16xf32> to vector<16x1xf32>
    %52 = vector.broadcast %51 : vector<16x1xf32> to vector<16x16xf32>
    %53 = arith.subf %49, %52 : vector<16x16xf32>
    %54 = math.exp %53 : vector<16x16xf32>
    %cst_21 = arith.constant dense<0.000000e+00> : vector<16xf32>
    %55 = vector.multi_reduction <add>, %54, %cst_21 [1] : vector<16x16xf32> to vector<16xf32>
    %56 = vector.shape_cast %55 : vector<16xf32> to vector<16x1xf32>
    %57 = vector.broadcast %56 : vector<16x1xf32> to vector<16x16xf32>
    %58 = arith.divf %54, %57 : vector<16x16xf32>
    %59 = vector.extract_strided_slice %41 {offsets = [0, 0], sizes = [16, 8], strides = [1, 1]} : vector<16x32xf32> to vector<16x8xf32>
    %cst_22 = arith.constant dense<0.000000e+00> : vector<16x8xf32>
    %60 = tpu.matmul %58, %59, %cst_22 {dimension_numbers = #tpu.dot_dimension_numbers<[1], [0], [0], [1], [0, 0, 1, 1], [], []>} : vector<16x16xf32>, vector<16x8xf32>, vector<16x8xf32> -> vector<16x8xf32>
    %61 = vector.extract_strided_slice %44 {offsets = [0, 0], sizes = [8, 32], strides = [1, 1]} : vector<32x32xf32> to vector<8x32xf32>
    %cst_23 = arith.constant dense<0.000000e+00> : vector<16x32xf32>
    %62 = tpu.matmul %60, %61, %cst_23 {dimension_numbers = #tpu.dot_dimension_numbers<[1], [0], [0], [1], [0, 0, 1, 1], [], []>} : vector<16x8xf32>, vector<8x32xf32>, vector<16x32xf32> -> vector<16x32xf32>
    %63 = vector.extract_strided_slice %39 {offsets = [0, 8], sizes = [16, 8], strides = [1, 1]} : vector<16x32xf32> to vector<16x8xf32>
    %64 = vector.extract_strided_slice %40 {offsets = [0, 8], sizes = [16, 8], strides = [1, 1]} : vector<16x32xf32> to vector<16x8xf32>
    %cst_24 = arith.constant dense<0.000000e+00> : vector<16x16xf32>
    %65 = tpu.matmul %63, %64, %cst_24 {dimension_numbers = #tpu.dot_dimension_numbers<[1], [1], [0], [0], [0, 0, 1, 0], [], []>} : vector<16x8xf32>, vector<16x8xf32>, vector<16x16xf32> -> vector<16x16xf32>
    %66 = arith.addf %65, %45 : vector<16x16xf32>
    %cst_25 = arith.constant dense<0xFF800000> : vector<16xf32>
    %67 = vector.multi_reduction <maximumf>, %66, %cst_25 [1] : vector<16x16xf32> to vector<16xf32>
    %68 = vector.shape_cast %67 : vector<16xf32> to vector<16x1xf32>
    %69 = vector.broadcast %68 : vector<16x1xf32> to vector<16x16xf32>
    %70 = arith.subf %66, %69 : vector<16x16xf32>
    %71 = math.exp %70 : vector<16x16xf32>
    %cst_26 = arith.constant dense<0.000000e+00> : vector<16xf32>
    %72 = vector.multi_reduction <add>, %71, %cst_26 [1] : vector<16x16xf32> to vector<16xf32>
    %73 = vector.shape_cast %72 : vector<16xf32> to vector<16x1xf32>
    %74 = vector.broadcast %73 : vector<16x1xf32> to vector<16x16xf32>
    %75 = arith.divf %71, %74 : vector<16x16xf32>
    %76 = vector.extract_strided_slice %41 {offsets = [0, 8], sizes = [16, 8], strides = [1, 1]} : vector<16x32xf32> to vector<16x8xf32>
    %cst_27 = arith.constant dense<0.000000e+00> : vector<16x8xf32>
    %77 = tpu.matmul %75, %76, %cst_27 {dimension_numbers = #tpu.dot_dimension_numbers<[1], [0], [0], [1], [0, 0, 1, 1], [], []>} : vector<16x16xf32>, vector<16x8xf32>, vector<16x8xf32> -> vector<16x8xf32>
    %78 = vector.extract_strided_slice %44 {offsets = [8, 0], sizes = [8, 32], strides = [1, 1]} : vector<32x32xf32> to vector<8x32xf32>
    %cst_28 = arith.constant dense<0.000000e+00> : vector<16x32xf32>
    %79 = tpu.matmul %77, %78, %cst_28 {dimension_numbers = #tpu.dot_dimension_numbers<[1], [0], [0], [1], [0, 0, 1, 1], [], []>} : vector<16x8xf32>, vector<8x32xf32>, vector<16x32xf32> -> vector<16x32xf32>
    %80 = arith.addf %62, %79 : vector<16x32xf32>
    %81 = vector.extract_strided_slice %39 {offsets = [0, 16], sizes = [16, 8], strides = [1, 1]} : vector<16x32xf32> to vector<16x8xf32>
    %82 = vector.extract_strided_slice %40 {offsets = [0, 16], sizes = [16, 8], strides = [1, 1]} : vector<16x32xf32> to vector<16x8xf32>
    %cst_29 = arith.constant dense<0.000000e+00> : vector<16x16xf32>
    %83 = tpu.matmul %81, %82, %cst_29 {dimension_numbers = #tpu.dot_dimension_numbers<[1], [1], [0], [0], [0, 0, 1, 0], [], []>} : vector<16x8xf32>, vector<16x8xf32>, vector<16x16xf32> -> vector<16x16xf32>
    %84 = arith.addf %83, %45 : vector<16x16xf32>
    %cst_30 = arith.constant dense<0xFF800000> : vector<16xf32>
    %85 = vector.multi_reduction <maximumf>, %84, %cst_30 [1] : vector<16x16xf32> to vector<16xf32>
    %86 = vector.shape_cast %85 : vector<16xf32> to vector<16x1xf32>
    %87 = vector.broadcast %86 : vector<16x1xf32> to vector<16x16xf32>
    %88 = arith.subf %84, %87 : vector<16x16xf32>
    %89 = math.exp %88 : vector<16x16xf32>
    %cst_31 = arith.constant dense<0.000000e+00> : vector<16xf32>
    %90 = vector.multi_reduction <add>, %89, %cst_31 [1] : vector<16x16xf32> to vector<16xf32>
    %91 = vector.shape_cast %90 : vector<16xf32> to vector<16x1xf32>
    %92 = vector.broadcast %91 : vector<16x1xf32> to vector<16x16xf32>
    %93 = arith.divf %89, %92 : vector<16x16xf32>
    %94 = vector.extract_strided_slice %41 {offsets = [0, 16], sizes = [16, 8], strides = [1, 1]} : vector<16x32xf32> to vector<16x8xf32>
    %cst_32 = arith.constant dense<0.000000e+00> : vector<16x8xf32>
    %95 = tpu.matmul %93, %94, %cst_32 {dimension_numbers = #tpu.dot_dimension_numbers<[1], [0], [0], [1], [0, 0, 1, 1], [], []>} : vector<16x16xf32>, vector<16x8xf32>, vector<16x8xf32> -> vector<16x8xf32>
    %96 = vector.extract_strided_slice %44 {offsets = [16, 0], sizes = [8, 32], strides = [1, 1]} : vector<32x32xf32> to vector<8x32xf32>
    %cst_33 = arith.constant dense<0.000000e+00> : vector<16x32xf32>
    %97 = tpu.matmul %95, %96, %cst_33 {dimension_numbers = #tpu.dot_dimension_numbers<[1], [0], [0], [1], [0, 0, 1, 1], [], []>} : vector<16x8xf32>, vector<8x32xf32>, vector<16x32xf32> -> vector<16x32xf32>
    %98 = arith.addf %80, %97 : vector<16x32xf32>
    %99 = vector.extract_strided_slice %39 {offsets = [0, 24], sizes = [16, 8], strides = [1, 1]} : vector<16x32xf32> to vector<16x8xf32>
    %100 = vector.extract_strided_slice %40 {offsets = [0, 24], sizes = [16, 8], strides = [1, 1]} : vector<16x32xf32> to vector<16x8xf32>
    %cst_34 = arith.constant dense<0.000000e+00> : vector<16x16xf32>
    %101 = tpu.matmul %99, %100, %cst_34 {dimension_numbers = #tpu.dot_dimension_numbers<[1], [1], [0], [0], [0, 0, 1, 0], [], []>} : vector<16x8xf32>, vector<16x8xf32>, vector<16x16xf32> -> vector<16x16xf32>
    %102 = arith.addf %101, %45 : vector<16x16xf32>
    %cst_35 = arith.constant dense<0xFF800000> : vector<16xf32>
    %103 = vector.multi_reduction <maximumf>, %102, %cst_35 [1] : vector<16x16xf32> to vector<16xf32>
    %104 = vector.shape_cast %103 : vector<16xf32> to vector<16x1xf32>
    %105 = vector.broadcast %104 : vector<16x1xf32> to vector<16x16xf32>
    %106 = arith.subf %102, %105 : vector<16x16xf32>
    %107 = math.exp %106 : vector<16x16xf32>
    %cst_36 = arith.constant dense<0.000000e+00> : vector<16xf32>
    %108 = vector.multi_reduction <add>, %107, %cst_36 [1] : vector<16x16xf32> to vector<16xf32>
    %109 = vector.shape_cast %108 : vector<16xf32> to vector<16x1xf32>
    %110 = vector.broadcast %109 : vector<16x1xf32> to vector<16x16xf32>
    %111 = arith.divf %107, %110 : vector<16x16xf32>
    %112 = vector.extract_strided_slice %41 {offsets = [0, 24], sizes = [16, 8], strides = [1, 1]} : vector<16x32xf32> to vector<16x8xf32>
    %cst_37 = arith.constant dense<0.000000e+00> : vector<16x8xf32>
    %113 = tpu.matmul %111, %112, %cst_37 {dimension_numbers = #tpu.dot_dimension_numbers<[1], [0], [0], [1], [0, 0, 1, 1], [], []>} : vector<16x16xf32>, vector<16x8xf32>, vector<16x8xf32> -> vector<16x8xf32>
    %114 = vector.extract_strided_slice %44 {offsets = [24, 0], sizes = [8, 32], strides = [1, 1]} : vector<32x32xf32> to vector<8x32xf32>
    %cst_38 = arith.constant dense<0.000000e+00> : vector<16x32xf32>
    %115 = tpu.matmul %113, %114, %cst_38 {dimension_numbers = #tpu.dot_dimension_numbers<[1], [0], [0], [1], [0, 0, 1, 1], [], []>} : vector<16x8xf32>, vector<8x32xf32>, vector<16x32xf32> -> vector<16x32xf32>
    %116 = arith.addf %98, %115 : vector<16x32xf32>
    %117 = arith.addf %3, %116 : vector<16x32xf32>
    %118 = arith.index_cast %arg0 : i32 to index
    %c0_39 = arith.constant 0 : index
    %c0_40 = arith.constant 0 : index
    %119 = vector.load %arg9[%118, %c0_39, %c0_40] : memref<2x1x32xf32, #tpu.memory_space<vmem>>, vector<1x1x32xf32>
    %120 = vector.shape_cast %119 : vector<1x1x32xf32> to vector<1x32xf32>
    %121 = vector.broadcast %120 : vector<1x32xf32> to vector<16x32xf32>
    %122 = arith.addf %117, %121 : vector<16x32xf32>
    %123 = arith.index_cast %arg0 : i32 to index
    %c0_41 = arith.constant 0 : index
    %c0_42 = arith.constant 0 : index
    %124 = vector.load %arg10[%123, %c0_41, %c0_42] : memref<2x1x32xf32, #tpu.memory_space<vmem>>, vector<1x1x32xf32>
    %125 = vector.shape_cast %124 : vector<1x1x32xf32> to vector<1x32xf32>
    %126 = arith.index_cast %arg0 : i32 to index
    %c0_43 = arith.constant 0 : index
    %c0_44 = arith.constant 0 : index
    %127 = vector.load %arg11[%126, %c0_43, %c0_44] : memref<2x1x32xf32, #tpu.memory_space<vmem>>, vector<1x1x32xf32>
    %128 = vector.shape_cast %127 : vector<1x1x32xf32> to vector<1x32xf32>
    %cst_45 = arith.constant dense<0.000000e+00> : vector<16xf32>
    %129 = vector.multi_reduction <add>, %122, %cst_45 [1] : vector<16x32xf32> to vector<16xf32>
    %130 = vector.shape_cast %129 : vector<16xf32> to vector<16x1xf32>
    %cst_46 = arith.constant 3.200000e+01 : f32
    %131 = vector.broadcast %cst_46 : f32 to vector<16x1xf32>
    %132 = arith.divf %130, %131 : vector<16x1xf32>
    %133 = vector.broadcast %132 : vector<16x1xf32> to vector<16x32xf32>
    %134 = arith.subf %122, %133 : vector<16x32xf32>
    %135 = arith.mulf %134, %134 : vector<16x32xf32>
    %cst_47 = arith.constant dense<0.000000e+00> : vector<16xf32>
    %136 = vector.multi_reduction <add>, %135, %cst_47 [1] : vector<16x32xf32> to vector<16xf32>
    %137 = vector.shape_cast %136 : vector<16xf32> to vector<16x1xf32>
    %cst_48 = arith.constant 3.200000e+01 : f32
    %138 = vector.broadcast %cst_48 : f32 to vector<16x1xf32>
    %139 = arith.divf %137, %138 : vector<16x1xf32>
    %cst_49 = arith.constant 9.99999974E-6 : f32
    %140 = vector.broadcast %cst_49 : f32 to vector<16x1xf32>
    %141 = arith.addf %139, %140 : vector<16x1xf32>
    %142 = math.rsqrt %141 : vector<16x1xf32>
    %143 = vector.broadcast %142 : vector<16x1xf32> to vector<16x32xf32>
    %144 = arith.mulf %134, %143 : vector<16x32xf32>
    %145 = vector.broadcast %125 : vector<1x32xf32> to vector<16x32xf32>
    %146 = arith.mulf %144, %145 : vector<16x32xf32>
    %147 = vector.broadcast %128 : vector<1x32xf32> to vector<16x32xf32>
    %148 = arith.addf %146, %147 : vector<16x32xf32>
    %149 = arith.index_cast %arg0 : i32 to index
    %c0_50 = arith.constant 0 : index
    %c0_51 = arith.constant 0 : index
    %150 = vector.load %arg12[%149, %c0_50, %c0_51] : memref<2x32x128xf32, #tpu.memory_space<vmem>>, vector<1x32x128xf32>
    %151 = vector.shape_cast %150 : vector<1x32x128xf32> to vector<32x128xf32>
    %cst_52 = arith.constant dense<0.000000e+00> : vector<16x128xf32>
    %152 = tpu.matmul %148, %151, %cst_52 {dimension_numbers = #tpu.dot_dimension_numbers<[1], [0], [0], [1], [0, 0, 1, 1], [], []>} : vector<16x32xf32>, vector<32x128xf32>, vector<16x128xf32> -> vector<16x128xf32>
    %153 = arith.index_cast %arg0 : i32 to index
    %c0_53 = arith.constant 0 : index
    %c0_54 = arith.constant 0 : index
    %154 = vector.load %arg13[%153, %c0_53, %c0_54] : memref<2x1x128xf32, #tpu.memory_space<vmem>>, vector<1x1x128xf32>
    %155 = vector.shape_cast %154 : vector<1x1x128xf32> to vector<1x128xf32>
    %156 = vector.broadcast %155 : vector<1x128xf32> to vector<16x128xf32>
    %157 = arith.addf %152, %156 : vector<16x128xf32>
    %cst_55 = arith.constant 5.000000e-01 : f32
    %158 = vector.broadcast %cst_55 : f32 to vector<16x128xf32>
    %159 = arith.mulf %158, %157 : vector<16x128xf32>
    %cst_56 = arith.constant 0.707106769 : f32
    %160 = vector.broadcast %cst_56 : f32 to vector<16x128xf32>
    %161 = arith.mulf %157, %160 : vector<16x128xf32>
    %cst_57 = arith.constant 0.000000e+00 : f32
    %162 = vector.broadcast %cst_57 : f32 to vector<16x128xf32>
    %163 = arith.cmpf oge, %161, %162 : vector<16x128xf32>
    %cst_58 = arith.constant 1.000000e+00 : f32
    %cst_59 = arith.constant -1.000000e+00 : f32
    %164 = vector.broadcast %cst_58 : f32 to vector<16x128xf32>
    %165 = vector.broadcast %cst_59 : f32 to vector<16x128xf32>
    %166 = arith.select %163, %164, %165 : vector<16x128xi1>, vector<16x128xf32>
    %167 = math.absf %161 : vector<16x128xf32>
    %cst_60 = arith.constant 0.327591091 : f32
    %168 = vector.broadcast %cst_60 : f32 to vector<16x128xf32>
    %169 = arith.mulf %168, %167 : vector<16x128xf32>
    %cst_61 = arith.constant 1.000000e+00 : f32
    %170 = vector.broadcast %cst_61 : f32 to vector<16x128xf32>
    %171 = arith.addf %170, %169 : vector<16x128xf32>
    %cst_62 = arith.constant 1.000000e+00 : f32
    %172 = vector.broadcast %cst_62 : f32 to vector<16x128xf32>
    %173 = arith.divf %172, %171 : vector<16x128xf32>
    %cst_63 = arith.constant 1.06140542 : f32
    %174 = vector.broadcast %cst_63 : f32 to vector<16x128xf32>
    %175 = arith.mulf %174, %173 : vector<16x128xf32>
    %cst_64 = arith.constant -1.45315206 : f32
    %176 = vector.broadcast %cst_64 : f32 to vector<16x128xf32>
    %177 = arith.addf %175, %176 : vector<16x128xf32>
    %178 = arith.mulf %177, %173 : vector<16x128xf32>
    %cst_65 = arith.constant 1.42141378 : f32
    %179 = vector.broadcast %cst_65 : f32 to vector<16x128xf32>
    %180 = arith.addf %178, %179 : vector<16x128xf32>
    %181 = arith.mulf %180, %173 : vector<16x128xf32>
    %cst_66 = arith.constant -0.284496725 : f32
    %182 = vector.broadcast %cst_66 : f32 to vector<16x128xf32>
    %183 = arith.addf %181, %182 : vector<16x128xf32>
    %184 = arith.mulf %183, %173 : vector<16x128xf32>
    %cst_67 = arith.constant 0.254829586 : f32
    %185 = vector.broadcast %cst_67 : f32 to vector<16x128xf32>
    %186 = arith.addf %184, %185 : vector<16x128xf32>
    %187 = arith.mulf %186, %173 : vector<16x128xf32>
    %cst_68 = arith.constant 0.000000e+00 : f32
    %188 = vector.broadcast %cst_68 : f32 to vector<16x128xf32>
    %189 = arith.subf %188, %167 : vector<16x128xf32>
    %190 = arith.mulf %189, %167 : vector<16x128xf32>
    %191 = math.exp %190 : vector<16x128xf32>
    %192 = arith.mulf %187, %191 : vector<16x128xf32>
    %cst_69 = arith.constant 1.000000e+00 : f32
    %193 = vector.broadcast %cst_69 : f32 to vector<16x128xf32>
    %194 = arith.subf %193, %192 : vector<16x128xf32>
    %195 = arith.mulf %166, %194 : vector<16x128xf32>
    %cst_70 = arith.constant 1.000000e+00 : f32
    %196 = vector.broadcast %cst_70 : f32 to vector<16x128xf32>
    %197 = arith.addf %196, %195 : vector<16x128xf32>
    %198 = arith.mulf %159, %197 : vector<16x128xf32>
    %199 = arith.index_cast %arg0 : i32 to index
    %c0_71 = arith.constant 0 : index
    %c0_72 = arith.constant 0 : index
    %200 = vector.load %arg14[%199, %c0_71, %c0_72] : memref<2x128x32xf32, #tpu.memory_space<vmem>>, vector<1x128x32xf32>
    %201 = vector.shape_cast %200 : vector<1x128x32xf32> to vector<128x32xf32>
    %cst_73 = arith.constant dense<0.000000e+00> : vector<16x32xf32>
    %202 = tpu.matmul %198, %201, %cst_73 {dimension_numbers = #tpu.dot_dimension_numbers<[1], [0], [0], [1], [0, 0, 1, 1], [], []>} : vector<16x128xf32>, vector<128x32xf32>, vector<16x32xf32> -> vector<16x32xf32>
    %203 = arith.addf %122, %202 : vector<16x32xf32>
    %204 = arith.index_cast %arg0 : i32 to index
    %c0_74 = arith.constant 0 : index
    %c0_75 = arith.constant 0 : index
    %205 = vector.load %arg15[%204, %c0_74, %c0_75] : memref<2x1x32xf32, #tpu.memory_space<vmem>>, vector<1x1x32xf32>
    %206 = vector.shape_cast %205 : vector<1x1x32xf32> to vector<1x32xf32>
    %207 = vector.broadcast %206 : vector<1x32xf32> to vector<16x32xf32>
    %208 = arith.addf %203, %207 : vector<16x32xf32>
    %c0_76 = arith.constant 0 : index
    %c0_77 = arith.constant 0 : index
    %209 = vector.load %arg21[%c0_76, %c0_77] : memref<16x32xf32, #tpu.memory_space<vmem>>, vector<16x32xf32>
    tpu.vector_store %arg21[%c0_76, %c0_77], %208 {strides = array<i32>} : memref<16x32xf32, #tpu.memory_space<vmem>>, vector<16x32xf32>,
    %c1_i32 = arith.constant 1 : i32
    %210 = arith.cmpi eq, %arg0, %c1_i32 : i32
    %211 = arith.extui %210 : i1 to i32
    %c0_i32_78 = arith.constant 0 : i32
    %212 = arith.cmpi ne, %211, %c0_i32_78 : i32
    scf.if %212 {
      %c0_79 = arith.constant 0 : index
      %c0_80 = arith.constant 0 : index
      %213 = vector.load %arg16[%c0_79, %c0_80] : memref<1x32xf32, #tpu.memory_space<vmem>>, vector<1x32xf32>
      %c0_81 = arith.constant 0 : index
      %c0_82 = arith.constant 0 : index
      %214 = vector.load %arg17[%c0_81, %c0_82] : memref<1x32xf32, #tpu.memory_space<vmem>>, vector<1x32xf32>
      %cst_83 = arith.constant dense<0.000000e+00> : vector<16xf32>
      %215 = vector.multi_reduction <add>, %208, %cst_83 [1] : vector<16x32xf32> to vector<16xf32>
      %216 = vector.shape_cast %215 : vector<16xf32> to vector<16x1xf32>
      %cst_84 = arith.constant 3.200000e+01 : f32
      %217 = vector.broadcast %cst_84 : f32 to vector<16x1xf32>
      %218 = arith.divf %216, %217 : vector<16x1xf32>
      %219 = vector.broadcast %218 : vector<16x1xf32> to vector<16x32xf32>
      %220 = arith.subf %208, %219 : vector<16x32xf32>
      %221 = arith.mulf %220, %220 : vector<16x32xf32>
      %cst_85 = arith.constant dense<0.000000e+00> : vector<16xf32>
      %222 = vector.multi_reduction <add>, %221, %cst_85 [1] : vector<16x32xf32> to vector<16xf32>
      %223 = vector.shape_cast %222 : vector<16xf32> to vector<16x1xf32>
      %cst_86 = arith.constant 3.200000e+01 : f32
      %224 = vector.broadcast %cst_86 : f32 to vector<16x1xf32>
      %225 = arith.divf %223, %224 : vector<16x1xf32>
      %cst_87 = arith.constant 9.99999974E-6 : f32
      %226 = vector.broadcast %cst_87 : f32 to vector<16x1xf32>
      %227 = arith.addf %225, %226 : vector<16x1xf32>
      %228 = math.rsqrt %227 : vector<16x1xf32>
      %229 = vector.broadcast %228 : vector<16x1xf32> to vector<16x32xf32>
      %230 = arith.mulf %220, %229 : vector<16x32xf32>
      %231 = vector.broadcast %213 : vector<1x32xf32> to vector<16x32xf32>
      %232 = arith.mulf %230, %231 : vector<16x32xf32>
      %233 = vector.broadcast %214 : vector<1x32xf32> to vector<16x32xf32>
      %234 = arith.addf %232, %233 : vector<16x32xf32>
      %c0_88 = arith.constant 0 : index
      %c0_89 = arith.constant 0 : index
      %235 = vector.load %arg18[%c0_88, %c0_89] : memref<32x128xf32, #tpu.memory_space<vmem>>, vector<32x128xf32>
      %cst_90 = arith.constant dense<0.000000e+00> : vector<16x128xf32>
      %236 = tpu.matmul %234, %235, %cst_90 {dimension_numbers = #tpu.dot_dimension_numbers<[1], [0], [0], [1], [0, 0, 1, 1], [], []>} : vector<16x32xf32>, vector<32x128xf32>, vector<16x128xf32> -> vector<16x128xf32>
      %c0_91 = arith.constant 0 : index
      %c0_92 = arith.constant 0 : index
      %237 = vector.load %arg19[%c0_91, %c0_92] : memref<1x128xf32, #tpu.memory_space<vmem>>, vector<1x128xf32>
      %238 = vector.broadcast %237 : vector<1x128xf32> to vector<16x128xf32>
      %239 = arith.addf %236, %238 : vector<16x128xf32>
      %c0_93 = arith.constant 0 : index
      %c0_94 = arith.constant 0 : index
      %240 = vector.load %arg20[%c0_93, %c0_94] : memref<16x128xf32, #tpu.memory_space<vmem>>, vector<16x128xf32>
      tpu.vector_store %arg20[%c0_93, %c0_94], %239 {strides = array<i32>} : memref<16x128xf32, #tpu.memory_space<vmem>>, vector<16x128xf32>,
    } else {
    }
    return
  }
  func.func @transform_0(%arg0: i32) -> (i32, i32, i32) {
    %c0_i32 = arith.constant 0 : i32
    %c0_i32_0 = arith.constant 0 : i32
    %c0_i32_1 = arith.constant 0 : i32
    %c0_i32_2 = arith.constant 0 : i32
    return %c0_i32, %c0_i32_0, %c0_i32_1 : i32, i32, i32
  }
  func.func @transform_1(%arg0: i32) -> (i32, i32) {
    %c0_i32 = arith.constant 0 : i32
    %c0_i32_0 = arith.constant 0 : i32
    %c0_i32_1 = arith.constant 0 : i32
    return %c0_i32, %c0_i32_0 : i32, i32
  }
  func.func @transform_2(%arg0: i32) -> (i32, i32) {
    %c0_i32 = arith.constant 0 : i32
    %c0_i32_0 = arith.constant 0 : i32
    %c0_i32_1 = arith.constant 0 : i32
    return %c0_i32, %c0_i32_0 : i32, i32
  }
  func.func @transform_3(%arg0: i32) -> (i32, i32, i32) {
    %c0_i32 = arith.constant 0 : i32
    %c0_i32_0 = arith.constant 0 : i32
    %c0_i32_1 = arith.constant 0 : i32
    %c0_i32_2 = arith.constant 0 : i32
    return %c0_i32, %c0_i32_0, %c0_i32_1 : i32, i32, i32
  }
  func.func @transform_4(%arg0: i32) -> (i32, i32, i32) {
    %c0_i32 = arith.constant 0 : i32
    %c0_i32_0 = arith.constant 0 : i32
    %c0_i32_1 = arith.constant 0 : i32
    %c0_i32_2 = arith.constant 0 : i32
    return %c0_i32, %c0_i32_0, %c0_i32_1 : i32, i32, i32
  }
  func.func @transform_5(%arg0: i32) -> (i32, i32, i32) {
    %c0_i32 = arith.constant 0 : i32
    %c0_i32_0 = arith.constant 0 : i32
    %c0_i32_1 = arith.constant 0 : i32
    %c0_i32_2 = arith.constant 0 : i32
    return %c0_i32, %c0_i32_0, %c0_i32_1 : i32, i32, i32
  }
  func.func @transform_6(%arg0: i32) -> (i32, i32, i32) {
    %c0_i32 = arith.constant 0 : i32
    %c0_i32_0 = arith.constant 0 : i32
    %c0_i32_1 = arith.constant 0 : i32
    %c0_i32_2 = arith.constant 0 : i32
    return %c0_i32, %c0_i32_0, %c0_i32_1 : i32, i32, i32
  }
  func.func @transform_7(%arg0: i32) -> (i32, i32, i32) {
    %c0_i32 = arith.constant 0 : i32
    %c0_i32_0 = arith.constant 0 : i32
    %c0_i32_1 = arith.constant 0 : i32
    %c0_i32_2 = arith.constant 0 : i32
    return %c0_i32, %c0_i32_0, %c0_i32_1 : i32, i32, i32
  }
  func.func @transform_8(%arg0: i32) -> (i32, i32, i32) {
    %c0_i32 = arith.constant 0 : i32
    %c0_i32_0 = arith.constant 0 : i32
    %c0_i32_1 = arith.constant 0 : i32
    %c0_i32_2 = arith.constant 0 : i32
    return %c0_i32, %c0_i32_0, %c0_i32_1 : i32, i32, i32
  }
  func.func @transform_9(%arg0: i32) -> (i32, i32, i32) {
    %c0_i32 = arith.constant 0 : i32
    %c0_i32_0 = arith.constant 0 : i32
    %c0_i32_1 = arith.constant 0 : i32
    %c0_i32_2 = arith.constant 0 : i32
    return %c0_i32, %c0_i32_0, %c0_i32_1 : i32, i32, i32
  }
  func.func @transform_10(%arg0: i32) -> (i32, i32, i32) {
    %c0_i32 = arith.constant 0 : i32
    %c0_i32_0 = arith.constant 0 : i32
    %c0_i32_1 = arith.constant 0 : i32
    %c0_i32_2 = arith.constant 0 : i32
    return %c0_i32, %c0_i32_0, %c0_i32_1 : i32, i32, i32
  }
  func.func @transform_11(%arg0: i32) -> (i32, i32, i32) {
    %c0_i32 = arith.constant 0 : i32
    %c0_i32_0 = arith.constant 0 : i32
    %c0_i32_1 = arith.constant 0 : i32
    %c0_i32_2 = arith.constant 0 : i32
    return %c0_i32, %c0_i32_0, %c0_i32_1 : i32, i32, i32
  }
  func.func @transform_12(%arg0: i32) -> (i32, i32, i32) {
    %c0_i32 = arith.constant 0 : i32
    %c0_i32_0 = arith.constant 0 : i32
    %c0_i32_1 = arith.constant 0 : i32
    %c0_i32_2 = arith.constant 0 : i32
    return %c0_i32, %c0_i32_0, %c0_i32_1 : i32, i32, i32
  }
  func.func @transform_13(%arg0: i32) -> (i32, i32, i32) {
    %c0_i32 = arith.constant 0 : i32
    %c0_i32_0 = arith.constant 0 : i32
    %c0_i32_1 = arith.constant 0 : i32
    %c0_i32_2 = arith.constant 0 : i32
    return %c0_i32, %c0_i32_0, %c0_i32_1 : i32, i32, i32
  }
  func.func @transform_14(%arg0: i32) -> (i32, i32, i32) {
    %c0_i32 = arith.constant 0 : i32
    %c0_i32_0 = arith.constant 0 : i32
    %c0_i32_1 = arith.constant 0 : i32
    %c0_i32_2 = arith.constant 0 : i32
    return %c0_i32, %c0_i32_0, %c0_i32_1 : i32, i32, i32
  }
  func.func @transform_15(%arg0: i32) -> (i32, i32) {
    %c0_i32 = arith.constant 0 : i32
    %c0_i32_0 = arith.constant 0 : i32
    %c0_i32_1 = arith.constant 0 : i32
    return %c0_i32, %c0_i32_0 : i32, i32
  }
  func.func @transform_16(%arg0: i32) -> (i32, i32) {
    %c0_i32 = arith.constant 0 : i32
    %c0_i32_0 = arith.constant 0 : i32
    %c0_i32_1 = arith.constant 0 : i32
    return %c0_i32, %c0_i32_0 : i32, i32
  }
  func.func @transform_17(%arg0: i32) -> (i32, i32) {
    %c0_i32 = arith.constant 0 : i32
    %c0_i32_0 = arith.constant 0 : i32
    %c0_i32_1 = arith.constant 0 : i32
    return %c0_i32, %c0_i32_0 : i32, i32
  }
  func.func @transform_18(%arg0: i32) -> (i32, i32) {
    %c0_i32 = arith.constant 0 : i32
    %c0_i32_0 = arith.constant 0 : i32
    %c0_i32_1 = arith.constant 0 : i32
    return %c0_i32, %c0_i32_0 : i32, i32
  }
  func.func @transform_19(%arg0: i32) -> (i32, i32) {
    %c0_i32 = arith.constant 0 : i32
    %c0_i32_0 = arith.constant 0 : i32
    %c0_i32_1 = arith.constant 0 : i32
    return %c0_i32, %c0_i32_0 : i32, i32
  }
}

module attributes {stable_mosaic.version = 11 : i64} {
  func.func @kernel(%arg0: i32, %arg1: memref<2x17x32xf32, #tpu.memory_space<vmem>>, %arg2: memref<17x32xf32, #tpu.memory_space<vmem>>, %arg3: memref<48x48xf32, #tpu.memory_space<vmem>>, %arg4: memref<2x1x32xf32, #tpu.memory_space<vmem>>, %arg5: memref<2x1x32xf32, #tpu.memory_space<vmem>>, %arg6: memref<2x32x96xf32, #tpu.memory_space<vmem>>, %arg7: memref<2x1x96xf32, #tpu.memory_space<vmem>>, %arg8: memref<2x32x32xf32, #tpu.memory_space<vmem>>, %arg9: memref<2x1x32xf32, #tpu.memory_space<vmem>>, %arg10: memref<2x1x32xf32, #tpu.memory_space<vmem>>, %arg11: memref<2x1x32xf32, #tpu.memory_space<vmem>>, %arg12: memref<2x32x128xf32, #tpu.memory_space<vmem>>, %arg13: memref<2x1x128xf32, #tpu.memory_space<vmem>>, %arg14: memref<2x128x32xf32, #tpu.memory_space<vmem>>, %arg15: memref<2x1x32xf32, #tpu.memory_space<vmem>>, %arg16: memref<1x32xf32, #tpu.memory_space<vmem>>, %arg17: memref<1x32xf32, #tpu.memory_space<vmem>>, %arg18: memref<32x128xf32, #tpu.memory_space<vmem>>, %arg19: memref<1x128xf32, #tpu.memory_space<vmem>>, %arg20: memref<48x128xf32, #tpu.memory_space<vmem>>, %arg21: memref<48x1xf32, #tpu.memory_space<vmem>>, %arg22: memref<48x128xf32, #tpu.memory_space<vmem>>, %arg23: memref<1x1xf32, #tpu.memory_space<vmem>>, %arg24: memref<48x32xf32, #tpu.memory_space<vmem>>) attributes {dimension_semantics = [#tpu.dimension_semantics<arbitrary>], iteration_bounds = array<i64: 2>, scalar_prefetch = 0 : i64, scratch_operands = 1 : i64, tpu.core_type = #tpu.core_type<tc>, window_params = [{pipeline_mode = #tpu.pipeline_mode<synchronous>, transform_indices = @transform_0, window_bounds = array<i64: 2, 17, 32>}, {pipeline_mode = #tpu.pipeline_mode<synchronous>, transform_indices = @transform_1, window_bounds = array<i64: 17, 32>}, {pipeline_mode = #tpu.pipeline_mode<synchronous>, transform_indices = @transform_2, window_bounds = array<i64: 48, 48>}, {pipeline_mode = #tpu.pipeline_mode<synchronous>, transform_indices = @transform_3, window_bounds = array<i64: 2, 1, 32>}, {pipeline_mode = #tpu.pipeline_mode<synchronous>, transform_indices = @transform_4, window_bounds = array<i64: 2, 1, 32>}, {pipeline_mode = #tpu.pipeline_mode<synchronous>, transform_indices = @transform_5, window_bounds = array<i64: 2, 32, 96>}, {pipeline_mode = #tpu.pipeline_mode<synchronous>, transform_indices = @transform_6, window_bounds = array<i64: 2, 1, 96>}, {pipeline_mode = #tpu.pipeline_mode<synchronous>, transform_indices = @transform_7, window_bounds = array<i64: 2, 32, 32>}, {pipeline_mode = #tpu.pipeline_mode<synchronous>, transform_indices = @transform_8, window_bounds = array<i64: 2, 1, 32>}, {pipeline_mode = #tpu.pipeline_mode<synchronous>, transform_indices = @transform_9, window_bounds = array<i64: 2, 1, 32>}, {pipeline_mode = #tpu.pipeline_mode<synchronous>, transform_indices = @transform_10, window_bounds = array<i64: 2, 1, 32>}, {pipeline_mode = #tpu.pipeline_mode<synchronous>, transform_indices = @transform_11, window_bounds = array<i64: 2, 32, 128>}, {pipeline_mode = #tpu.pipeline_mode<synchronous>, transform_indices = @transform_12, window_bounds = array<i64: 2, 1, 128>}, {pipeline_mode = #tpu.pipeline_mode<synchronous>, transform_indices = @transform_13, window_bounds = array<i64: 2, 128, 32>}, {pipeline_mode = #tpu.pipeline_mode<synchronous>, transform_indices = @transform_14, window_bounds = array<i64: 2, 1, 32>}, {pipeline_mode = #tpu.pipeline_mode<synchronous>, transform_indices = @transform_15, window_bounds = array<i64: 1, 32>}, {pipeline_mode = #tpu.pipeline_mode<synchronous>, transform_indices = @transform_16, window_bounds = array<i64: 1, 32>}, {pipeline_mode = #tpu.pipeline_mode<synchronous>, transform_indices = @transform_17, window_bounds = array<i64: 32, 128>}, {pipeline_mode = #tpu.pipeline_mode<synchronous>, transform_indices = @transform_18, window_bounds = array<i64: 1, 128>}, {pipeline_mode = #tpu.pipeline_mode<synchronous>, transform_indices = @transform_19, window_bounds = array<i64: 48, 128>}, {pipeline_mode = #tpu.pipeline_mode<synchronous>, transform_indices = @transform_20, window_bounds = array<i64: 48, 1>}, {pipeline_mode = #tpu.pipeline_mode<synchronous>, transform_indices = @transform_21, window_bounds = array<i64: 48, 128>}, {pipeline_mode = #tpu.pipeline_mode<synchronous>, transform_indices = @transform_22, window_bounds = array<i64: 1, 1>}]} {
    %c0_i32 = arith.constant 0 : i32
    %0 = arith.cmpi eq, %arg0, %c0_i32 : i32
    %1 = arith.extui %0 : i1 to i32
    %c0_i32_0 = arith.constant 0 : i32
    %2 = arith.cmpi ne, %1, %c0_i32_0 : i32
    scf.if %2 {
      %cst_79 = arith.constant 0.000000e+00 : f32
      %213 = vector.broadcast %cst_79 : f32 to vector<48x32xf32>
      %c0_80 = arith.constant 0 : index
      %c0_81 = arith.constant 0 : index
      %214 = vector.load %arg24[%c0_80, %c0_81] : memref<48x32xf32, #tpu.memory_space<vmem>>, vector<48x32xf32>
      tpu.vector_store %arg24[%c0_80, %c0_81], %213 {strides = array<i32>} : memref<48x32xf32, #tpu.memory_space<vmem>>, vector<48x32xf32>,
      %c0_82 = arith.constant 0 : index
      %c0_83 = arith.constant 0 : index
      %c0_84 = arith.constant 0 : index
      %215 = vector.load %arg1[%c0_82, %c0_83, %c0_84] : memref<2x17x32xf32, #tpu.memory_space<vmem>>, vector<1x17x32xf32>
      %216 = vector.shape_cast %215 : vector<1x17x32xf32> to vector<17x32xf32>
      %c0_85 = arith.constant 0 : index
      %c0_86 = arith.constant 0 : index
      %217 = vector.load %arg2[%c0_85, %c0_86] : memref<17x32xf32, #tpu.memory_space<vmem>>, vector<17x32xf32>
      %218 = arith.addf %216, %217 : vector<17x32xf32>
      %c0_87 = arith.constant 0 : index
      %c0_88 = arith.constant 0 : index
      %219 = vector.load %arg24[%c0_87, %c0_88] : memref<48x32xf32, #tpu.memory_space<vmem>>, vector<17x32xf32>
      tpu.vector_store %arg24[%c0_87, %c0_88], %218 {strides = array<i32>} : memref<48x32xf32, #tpu.memory_space<vmem>>, vector<17x32xf32>,
      %c1 = arith.constant 1 : index
      %c0_89 = arith.constant 0 : index
      %c0_90 = arith.constant 0 : index
      %220 = vector.load %arg1[%c1, %c0_89, %c0_90] : memref<2x17x32xf32, #tpu.memory_space<vmem>>, vector<1x17x32xf32>
      %221 = vector.shape_cast %220 : vector<1x17x32xf32> to vector<17x32xf32>
      %c0_91 = arith.constant 0 : index
      %c0_92 = arith.constant 0 : index
      %222 = vector.load %arg2[%c0_91, %c0_92] : memref<17x32xf32, #tpu.memory_space<vmem>>, vector<17x32xf32>
      %223 = arith.addf %221, %222 : vector<17x32xf32>
      %c24 = arith.constant 24 : index
      %c0_93 = arith.constant 0 : index
      %224 = vector.load %arg24[%c24, %c0_93] : memref<48x32xf32, #tpu.memory_space<vmem>>, vector<17x32xf32>
      tpu.vector_store %arg24[%c24, %c0_93], %223 {strides = array<i32>} : memref<48x32xf32, #tpu.memory_space<vmem>>, vector<17x32xf32>,
    } else {
    }
    %c0 = arith.constant 0 : index
    %c0_1 = arith.constant 0 : index
    %3 = vector.load %arg24[%c0, %c0_1] : memref<48x32xf32, #tpu.memory_space<vmem>>, vector<48x32xf32>
    %4 = arith.index_cast %arg0 : i32 to index
    %c0_2 = arith.constant 0 : index
    %c0_3 = arith.constant 0 : index
    %5 = vector.load %arg4[%4, %c0_2, %c0_3] : memref<2x1x32xf32, #tpu.memory_space<vmem>>, vector<1x1x32xf32>
    %6 = vector.shape_cast %5 : vector<1x1x32xf32> to vector<1x32xf32>
    %7 = arith.index_cast %arg0 : i32 to index
    %c0_4 = arith.constant 0 : index
    %c0_5 = arith.constant 0 : index
    %8 = vector.load %arg5[%7, %c0_4, %c0_5] : memref<2x1x32xf32, #tpu.memory_space<vmem>>, vector<1x1x32xf32>
    %9 = vector.shape_cast %8 : vector<1x1x32xf32> to vector<1x32xf32>
    %cst = arith.constant dense<0.000000e+00> : vector<48xf32>
    %10 = vector.multi_reduction <add>, %3, %cst [1] : vector<48x32xf32> to vector<48xf32>
    %11 = vector.shape_cast %10 : vector<48xf32> to vector<48x1xf32>
    %cst_6 = arith.constant 3.200000e+01 : f32
    %12 = vector.broadcast %cst_6 : f32 to vector<48x1xf32>
    %13 = arith.divf %11, %12 : vector<48x1xf32>
    %14 = vector.broadcast %13 : vector<48x1xf32> to vector<48x32xf32>
    %15 = arith.subf %3, %14 : vector<48x32xf32>
    %16 = arith.mulf %15, %15 : vector<48x32xf32>
    %cst_7 = arith.constant dense<0.000000e+00> : vector<48xf32>
    %17 = vector.multi_reduction <add>, %16, %cst_7 [1] : vector<48x32xf32> to vector<48xf32>
    %18 = vector.shape_cast %17 : vector<48xf32> to vector<48x1xf32>
    %cst_8 = arith.constant 3.200000e+01 : f32
    %19 = vector.broadcast %cst_8 : f32 to vector<48x1xf32>
    %20 = arith.divf %18, %19 : vector<48x1xf32>
    %cst_9 = arith.constant 9.99999974E-6 : f32
    %21 = vector.broadcast %cst_9 : f32 to vector<48x1xf32>
    %22 = arith.addf %20, %21 : vector<48x1xf32>
    %23 = math.rsqrt %22 : vector<48x1xf32>
    %24 = vector.broadcast %23 : vector<48x1xf32> to vector<48x32xf32>
    %25 = arith.mulf %15, %24 : vector<48x32xf32>
    %26 = vector.broadcast %6 : vector<1x32xf32> to vector<48x32xf32>
    %27 = arith.mulf %25, %26 : vector<48x32xf32>
    %28 = vector.broadcast %9 : vector<1x32xf32> to vector<48x32xf32>
    %29 = arith.addf %27, %28 : vector<48x32xf32>
    %30 = arith.index_cast %arg0 : i32 to index
    %c0_10 = arith.constant 0 : index
    %c0_11 = arith.constant 0 : index
    %31 = vector.load %arg6[%30, %c0_10, %c0_11] : memref<2x32x96xf32, #tpu.memory_space<vmem>>, vector<1x32x96xf32>
    %32 = vector.shape_cast %31 : vector<1x32x96xf32> to vector<32x96xf32>
    %cst_12 = arith.constant dense<0.000000e+00> : vector<48x96xf32>
    %33 = tpu.matmul %29, %32, %cst_12 {dimension_numbers = #tpu.dot_dimension_numbers<[1], [0], [0], [1], [0, 0, 1, 1], [], []>} : vector<48x32xf32>, vector<32x96xf32>, vector<48x96xf32> -> vector<48x96xf32>
    %34 = arith.index_cast %arg0 : i32 to index
    %c0_13 = arith.constant 0 : index
    %c0_14 = arith.constant 0 : index
    %35 = vector.load %arg7[%34, %c0_13, %c0_14] : memref<2x1x96xf32, #tpu.memory_space<vmem>>, vector<1x1x96xf32>
    %36 = vector.shape_cast %35 : vector<1x1x96xf32> to vector<1x96xf32>
    %37 = vector.broadcast %36 : vector<1x96xf32> to vector<48x96xf32>
    %38 = arith.addf %33, %37 : vector<48x96xf32>
    %39 = vector.extract_strided_slice %38 {offsets = [0, 0], sizes = [48, 32], strides = [1, 1]} : vector<48x96xf32> to vector<48x32xf32>
    %40 = vector.extract_strided_slice %38 {offsets = [0, 32], sizes = [48, 32], strides = [1, 1]} : vector<48x96xf32> to vector<48x32xf32>
    %41 = vector.extract_strided_slice %38 {offsets = [0, 64], sizes = [48, 32], strides = [1, 1]} : vector<48x96xf32> to vector<48x32xf32>
    %42 = arith.index_cast %arg0 : i32 to index
    %c0_15 = arith.constant 0 : index
    %c0_16 = arith.constant 0 : index
    %43 = vector.load %arg8[%42, %c0_15, %c0_16] : memref<2x32x32xf32, #tpu.memory_space<vmem>>, vector<1x32x32xf32>
    %44 = vector.shape_cast %43 : vector<1x32x32xf32> to vector<32x32xf32>
    %c0_17 = arith.constant 0 : index
    %c0_18 = arith.constant 0 : index
    %45 = vector.load %arg3[%c0_17, %c0_18] : memref<48x48xf32, #tpu.memory_space<vmem>>, vector<48x48xf32>
    %46 = vector.extract_strided_slice %39 {offsets = [0, 0], sizes = [48, 8], strides = [1, 1]} : vector<48x32xf32> to vector<48x8xf32>
    %47 = vector.extract_strided_slice %40 {offsets = [0, 0], sizes = [48, 8], strides = [1, 1]} : vector<48x32xf32> to vector<48x8xf32>
    %cst_19 = arith.constant dense<0.000000e+00> : vector<48x48xf32>
    %48 = tpu.matmul %46, %47, %cst_19 {dimension_numbers = #tpu.dot_dimension_numbers<[1], [1], [0], [0], [0, 0, 1, 0], [], []>} : vector<48x8xf32>, vector<48x8xf32>, vector<48x48xf32> -> vector<48x48xf32>
    %49 = arith.addf %48, %45 : vector<48x48xf32>
    %cst_20 = arith.constant dense<0xFF800000> : vector<48xf32>
    %50 = vector.multi_reduction <maximumf>, %49, %cst_20 [1] : vector<48x48xf32> to vector<48xf32>
    %51 = vector.shape_cast %50 : vector<48xf32> to vector<48x1xf32>
    %52 = vector.broadcast %51 : vector<48x1xf32> to vector<48x48xf32>
    %53 = arith.subf %49, %52 : vector<48x48xf32>
    %54 = math.exp %53 : vector<48x48xf32>
    %cst_21 = arith.constant dense<0.000000e+00> : vector<48xf32>
    %55 = vector.multi_reduction <add>, %54, %cst_21 [1] : vector<48x48xf32> to vector<48xf32>
    %56 = vector.shape_cast %55 : vector<48xf32> to vector<48x1xf32>
    %57 = vector.broadcast %56 : vector<48x1xf32> to vector<48x48xf32>
    %58 = arith.divf %54, %57 : vector<48x48xf32>
    %59 = vector.extract_strided_slice %41 {offsets = [0, 0], sizes = [48, 8], strides = [1, 1]} : vector<48x32xf32> to vector<48x8xf32>
    %cst_22 = arith.constant dense<0.000000e+00> : vector<48x8xf32>
    %60 = tpu.matmul %58, %59, %cst_22 {dimension_numbers = #tpu.dot_dimension_numbers<[1], [0], [0], [1], [0, 0, 1, 1], [], []>} : vector<48x48xf32>, vector<48x8xf32>, vector<48x8xf32> -> vector<48x8xf32>
    %61 = vector.extract_strided_slice %44 {offsets = [0, 0], sizes = [8, 32], strides = [1, 1]} : vector<32x32xf32> to vector<8x32xf32>
    %cst_23 = arith.constant dense<0.000000e+00> : vector<48x32xf32>
    %62 = tpu.matmul %60, %61, %cst_23 {dimension_numbers = #tpu.dot_dimension_numbers<[1], [0], [0], [1], [0, 0, 1, 1], [], []>} : vector<48x8xf32>, vector<8x32xf32>, vector<48x32xf32> -> vector<48x32xf32>
    %63 = vector.extract_strided_slice %39 {offsets = [0, 8], sizes = [48, 8], strides = [1, 1]} : vector<48x32xf32> to vector<48x8xf32>
    %64 = vector.extract_strided_slice %40 {offsets = [0, 8], sizes = [48, 8], strides = [1, 1]} : vector<48x32xf32> to vector<48x8xf32>
    %cst_24 = arith.constant dense<0.000000e+00> : vector<48x48xf32>
    %65 = tpu.matmul %63, %64, %cst_24 {dimension_numbers = #tpu.dot_dimension_numbers<[1], [1], [0], [0], [0, 0, 1, 0], [], []>} : vector<48x8xf32>, vector<48x8xf32>, vector<48x48xf32> -> vector<48x48xf32>
    %66 = arith.addf %65, %45 : vector<48x48xf32>
    %cst_25 = arith.constant dense<0xFF800000> : vector<48xf32>
    %67 = vector.multi_reduction <maximumf>, %66, %cst_25 [1] : vector<48x48xf32> to vector<48xf32>
    %68 = vector.shape_cast %67 : vector<48xf32> to vector<48x1xf32>
    %69 = vector.broadcast %68 : vector<48x1xf32> to vector<48x48xf32>
    %70 = arith.subf %66, %69 : vector<48x48xf32>
    %71 = math.exp %70 : vector<48x48xf32>
    %cst_26 = arith.constant dense<0.000000e+00> : vector<48xf32>
    %72 = vector.multi_reduction <add>, %71, %cst_26 [1] : vector<48x48xf32> to vector<48xf32>
    %73 = vector.shape_cast %72 : vector<48xf32> to vector<48x1xf32>
    %74 = vector.broadcast %73 : vector<48x1xf32> to vector<48x48xf32>
    %75 = arith.divf %71, %74 : vector<48x48xf32>
    %76 = vector.extract_strided_slice %41 {offsets = [0, 8], sizes = [48, 8], strides = [1, 1]} : vector<48x32xf32> to vector<48x8xf32>
    %cst_27 = arith.constant dense<0.000000e+00> : vector<48x8xf32>
    %77 = tpu.matmul %75, %76, %cst_27 {dimension_numbers = #tpu.dot_dimension_numbers<[1], [0], [0], [1], [0, 0, 1, 1], [], []>} : vector<48x48xf32>, vector<48x8xf32>, vector<48x8xf32> -> vector<48x8xf32>
    %78 = vector.extract_strided_slice %44 {offsets = [8, 0], sizes = [8, 32], strides = [1, 1]} : vector<32x32xf32> to vector<8x32xf32>
    %cst_28 = arith.constant dense<0.000000e+00> : vector<48x32xf32>
    %79 = tpu.matmul %77, %78, %cst_28 {dimension_numbers = #tpu.dot_dimension_numbers<[1], [0], [0], [1], [0, 0, 1, 1], [], []>} : vector<48x8xf32>, vector<8x32xf32>, vector<48x32xf32> -> vector<48x32xf32>
    %80 = arith.addf %62, %79 : vector<48x32xf32>
    %81 = vector.extract_strided_slice %39 {offsets = [0, 16], sizes = [48, 8], strides = [1, 1]} : vector<48x32xf32> to vector<48x8xf32>
    %82 = vector.extract_strided_slice %40 {offsets = [0, 16], sizes = [48, 8], strides = [1, 1]} : vector<48x32xf32> to vector<48x8xf32>
    %cst_29 = arith.constant dense<0.000000e+00> : vector<48x48xf32>
    %83 = tpu.matmul %81, %82, %cst_29 {dimension_numbers = #tpu.dot_dimension_numbers<[1], [1], [0], [0], [0, 0, 1, 0], [], []>} : vector<48x8xf32>, vector<48x8xf32>, vector<48x48xf32> -> vector<48x48xf32>
    %84 = arith.addf %83, %45 : vector<48x48xf32>
    %cst_30 = arith.constant dense<0xFF800000> : vector<48xf32>
    %85 = vector.multi_reduction <maximumf>, %84, %cst_30 [1] : vector<48x48xf32> to vector<48xf32>
    %86 = vector.shape_cast %85 : vector<48xf32> to vector<48x1xf32>
    %87 = vector.broadcast %86 : vector<48x1xf32> to vector<48x48xf32>
    %88 = arith.subf %84, %87 : vector<48x48xf32>
    %89 = math.exp %88 : vector<48x48xf32>
    %cst_31 = arith.constant dense<0.000000e+00> : vector<48xf32>
    %90 = vector.multi_reduction <add>, %89, %cst_31 [1] : vector<48x48xf32> to vector<48xf32>
    %91 = vector.shape_cast %90 : vector<48xf32> to vector<48x1xf32>
    %92 = vector.broadcast %91 : vector<48x1xf32> to vector<48x48xf32>
    %93 = arith.divf %89, %92 : vector<48x48xf32>
    %94 = vector.extract_strided_slice %41 {offsets = [0, 16], sizes = [48, 8], strides = [1, 1]} : vector<48x32xf32> to vector<48x8xf32>
    %cst_32 = arith.constant dense<0.000000e+00> : vector<48x8xf32>
    %95 = tpu.matmul %93, %94, %cst_32 {dimension_numbers = #tpu.dot_dimension_numbers<[1], [0], [0], [1], [0, 0, 1, 1], [], []>} : vector<48x48xf32>, vector<48x8xf32>, vector<48x8xf32> -> vector<48x8xf32>
    %96 = vector.extract_strided_slice %44 {offsets = [16, 0], sizes = [8, 32], strides = [1, 1]} : vector<32x32xf32> to vector<8x32xf32>
    %cst_33 = arith.constant dense<0.000000e+00> : vector<48x32xf32>
    %97 = tpu.matmul %95, %96, %cst_33 {dimension_numbers = #tpu.dot_dimension_numbers<[1], [0], [0], [1], [0, 0, 1, 1], [], []>} : vector<48x8xf32>, vector<8x32xf32>, vector<48x32xf32> -> vector<48x32xf32>
    %98 = arith.addf %80, %97 : vector<48x32xf32>
    %99 = vector.extract_strided_slice %39 {offsets = [0, 24], sizes = [48, 8], strides = [1, 1]} : vector<48x32xf32> to vector<48x8xf32>
    %100 = vector.extract_strided_slice %40 {offsets = [0, 24], sizes = [48, 8], strides = [1, 1]} : vector<48x32xf32> to vector<48x8xf32>
    %cst_34 = arith.constant dense<0.000000e+00> : vector<48x48xf32>
    %101 = tpu.matmul %99, %100, %cst_34 {dimension_numbers = #tpu.dot_dimension_numbers<[1], [1], [0], [0], [0, 0, 1, 0], [], []>} : vector<48x8xf32>, vector<48x8xf32>, vector<48x48xf32> -> vector<48x48xf32>
    %102 = arith.addf %101, %45 : vector<48x48xf32>
    %cst_35 = arith.constant dense<0xFF800000> : vector<48xf32>
    %103 = vector.multi_reduction <maximumf>, %102, %cst_35 [1] : vector<48x48xf32> to vector<48xf32>
    %104 = vector.shape_cast %103 : vector<48xf32> to vector<48x1xf32>
    %105 = vector.broadcast %104 : vector<48x1xf32> to vector<48x48xf32>
    %106 = arith.subf %102, %105 : vector<48x48xf32>
    %107 = math.exp %106 : vector<48x48xf32>
    %cst_36 = arith.constant dense<0.000000e+00> : vector<48xf32>
    %108 = vector.multi_reduction <add>, %107, %cst_36 [1] : vector<48x48xf32> to vector<48xf32>
    %109 = vector.shape_cast %108 : vector<48xf32> to vector<48x1xf32>
    %110 = vector.broadcast %109 : vector<48x1xf32> to vector<48x48xf32>
    %111 = arith.divf %107, %110 : vector<48x48xf32>
    %112 = vector.extract_strided_slice %41 {offsets = [0, 24], sizes = [48, 8], strides = [1, 1]} : vector<48x32xf32> to vector<48x8xf32>
    %cst_37 = arith.constant dense<0.000000e+00> : vector<48x8xf32>
    %113 = tpu.matmul %111, %112, %cst_37 {dimension_numbers = #tpu.dot_dimension_numbers<[1], [0], [0], [1], [0, 0, 1, 1], [], []>} : vector<48x48xf32>, vector<48x8xf32>, vector<48x8xf32> -> vector<48x8xf32>
    %114 = vector.extract_strided_slice %44 {offsets = [24, 0], sizes = [8, 32], strides = [1, 1]} : vector<32x32xf32> to vector<8x32xf32>
    %cst_38 = arith.constant dense<0.000000e+00> : vector<48x32xf32>
    %115 = tpu.matmul %113, %114, %cst_38 {dimension_numbers = #tpu.dot_dimension_numbers<[1], [0], [0], [1], [0, 0, 1, 1], [], []>} : vector<48x8xf32>, vector<8x32xf32>, vector<48x32xf32> -> vector<48x32xf32>
    %116 = arith.addf %98, %115 : vector<48x32xf32>
    %117 = arith.addf %3, %116 : vector<48x32xf32>
    %118 = arith.index_cast %arg0 : i32 to index
    %c0_39 = arith.constant 0 : index
    %c0_40 = arith.constant 0 : index
    %119 = vector.load %arg9[%118, %c0_39, %c0_40] : memref<2x1x32xf32, #tpu.memory_space<vmem>>, vector<1x1x32xf32>
    %120 = vector.shape_cast %119 : vector<1x1x32xf32> to vector<1x32xf32>
    %121 = vector.broadcast %120 : vector<1x32xf32> to vector<48x32xf32>
    %122 = arith.addf %117, %121 : vector<48x32xf32>
    %123 = arith.index_cast %arg0 : i32 to index
    %c0_41 = arith.constant 0 : index
    %c0_42 = arith.constant 0 : index
    %124 = vector.load %arg10[%123, %c0_41, %c0_42] : memref<2x1x32xf32, #tpu.memory_space<vmem>>, vector<1x1x32xf32>
    %125 = vector.shape_cast %124 : vector<1x1x32xf32> to vector<1x32xf32>
    %126 = arith.index_cast %arg0 : i32 to index
    %c0_43 = arith.constant 0 : index
    %c0_44 = arith.constant 0 : index
    %127 = vector.load %arg11[%126, %c0_43, %c0_44] : memref<2x1x32xf32, #tpu.memory_space<vmem>>, vector<1x1x32xf32>
    %128 = vector.shape_cast %127 : vector<1x1x32xf32> to vector<1x32xf32>
    %cst_45 = arith.constant dense<0.000000e+00> : vector<48xf32>
    %129 = vector.multi_reduction <add>, %122, %cst_45 [1] : vector<48x32xf32> to vector<48xf32>
    %130 = vector.shape_cast %129 : vector<48xf32> to vector<48x1xf32>
    %cst_46 = arith.constant 3.200000e+01 : f32
    %131 = vector.broadcast %cst_46 : f32 to vector<48x1xf32>
    %132 = arith.divf %130, %131 : vector<48x1xf32>
    %133 = vector.broadcast %132 : vector<48x1xf32> to vector<48x32xf32>
    %134 = arith.subf %122, %133 : vector<48x32xf32>
    %135 = arith.mulf %134, %134 : vector<48x32xf32>
    %cst_47 = arith.constant dense<0.000000e+00> : vector<48xf32>
    %136 = vector.multi_reduction <add>, %135, %cst_47 [1] : vector<48x32xf32> to vector<48xf32>
    %137 = vector.shape_cast %136 : vector<48xf32> to vector<48x1xf32>
    %cst_48 = arith.constant 3.200000e+01 : f32
    %138 = vector.broadcast %cst_48 : f32 to vector<48x1xf32>
    %139 = arith.divf %137, %138 : vector<48x1xf32>
    %cst_49 = arith.constant 9.99999974E-6 : f32
    %140 = vector.broadcast %cst_49 : f32 to vector<48x1xf32>
    %141 = arith.addf %139, %140 : vector<48x1xf32>
    %142 = math.rsqrt %141 : vector<48x1xf32>
    %143 = vector.broadcast %142 : vector<48x1xf32> to vector<48x32xf32>
    %144 = arith.mulf %134, %143 : vector<48x32xf32>
    %145 = vector.broadcast %125 : vector<1x32xf32> to vector<48x32xf32>
    %146 = arith.mulf %144, %145 : vector<48x32xf32>
    %147 = vector.broadcast %128 : vector<1x32xf32> to vector<48x32xf32>
    %148 = arith.addf %146, %147 : vector<48x32xf32>
    %149 = arith.index_cast %arg0 : i32 to index
    %c0_50 = arith.constant 0 : index
    %c0_51 = arith.constant 0 : index
    %150 = vector.load %arg12[%149, %c0_50, %c0_51] : memref<2x32x128xf32, #tpu.memory_space<vmem>>, vector<1x32x128xf32>
    %151 = vector.shape_cast %150 : vector<1x32x128xf32> to vector<32x128xf32>
    %cst_52 = arith.constant dense<0.000000e+00> : vector<48x128xf32>
    %152 = tpu.matmul %148, %151, %cst_52 {dimension_numbers = #tpu.dot_dimension_numbers<[1], [0], [0], [1], [0, 0, 1, 1], [], []>} : vector<48x32xf32>, vector<32x128xf32>, vector<48x128xf32> -> vector<48x128xf32>
    %153 = arith.index_cast %arg0 : i32 to index
    %c0_53 = arith.constant 0 : index
    %c0_54 = arith.constant 0 : index
    %154 = vector.load %arg13[%153, %c0_53, %c0_54] : memref<2x1x128xf32, #tpu.memory_space<vmem>>, vector<1x1x128xf32>
    %155 = vector.shape_cast %154 : vector<1x1x128xf32> to vector<1x128xf32>
    %156 = vector.broadcast %155 : vector<1x128xf32> to vector<48x128xf32>
    %157 = arith.addf %152, %156 : vector<48x128xf32>
    %cst_55 = arith.constant 5.000000e-01 : f32
    %158 = vector.broadcast %cst_55 : f32 to vector<48x128xf32>
    %159 = arith.mulf %158, %157 : vector<48x128xf32>
    %cst_56 = arith.constant 0.707106769 : f32
    %160 = vector.broadcast %cst_56 : f32 to vector<48x128xf32>
    %161 = arith.mulf %157, %160 : vector<48x128xf32>
    %cst_57 = arith.constant 0.000000e+00 : f32
    %162 = vector.broadcast %cst_57 : f32 to vector<48x128xf32>
    %163 = arith.cmpf oge, %161, %162 : vector<48x128xf32>
    %cst_58 = arith.constant 1.000000e+00 : f32
    %cst_59 = arith.constant -1.000000e+00 : f32
    %164 = vector.broadcast %cst_58 : f32 to vector<48x128xf32>
    %165 = vector.broadcast %cst_59 : f32 to vector<48x128xf32>
    %166 = arith.select %163, %164, %165 : vector<48x128xi1>, vector<48x128xf32>
    %167 = math.absf %161 : vector<48x128xf32>
    %cst_60 = arith.constant 0.327591091 : f32
    %168 = vector.broadcast %cst_60 : f32 to vector<48x128xf32>
    %169 = arith.mulf %168, %167 : vector<48x128xf32>
    %cst_61 = arith.constant 1.000000e+00 : f32
    %170 = vector.broadcast %cst_61 : f32 to vector<48x128xf32>
    %171 = arith.addf %170, %169 : vector<48x128xf32>
    %cst_62 = arith.constant 1.000000e+00 : f32
    %172 = vector.broadcast %cst_62 : f32 to vector<48x128xf32>
    %173 = arith.divf %172, %171 : vector<48x128xf32>
    %cst_63 = arith.constant 1.06140542 : f32
    %174 = vector.broadcast %cst_63 : f32 to vector<48x128xf32>
    %175 = arith.mulf %174, %173 : vector<48x128xf32>
    %cst_64 = arith.constant -1.45315206 : f32
    %176 = vector.broadcast %cst_64 : f32 to vector<48x128xf32>
    %177 = arith.addf %175, %176 : vector<48x128xf32>
    %178 = arith.mulf %177, %173 : vector<48x128xf32>
    %cst_65 = arith.constant 1.42141378 : f32
    %179 = vector.broadcast %cst_65 : f32 to vector<48x128xf32>
    %180 = arith.addf %178, %179 : vector<48x128xf32>
    %181 = arith.mulf %180, %173 : vector<48x128xf32>
    %cst_66 = arith.constant -0.284496725 : f32
    %182 = vector.broadcast %cst_66 : f32 to vector<48x128xf32>
    %183 = arith.addf %181, %182 : vector<48x128xf32>
    %184 = arith.mulf %183, %173 : vector<48x128xf32>
    %cst_67 = arith.constant 0.254829586 : f32
    %185 = vector.broadcast %cst_67 : f32 to vector<48x128xf32>
    %186 = arith.addf %184, %185 : vector<48x128xf32>
    %187 = arith.mulf %186, %173 : vector<48x128xf32>
    %cst_68 = arith.constant 0.000000e+00 : f32
    %188 = vector.broadcast %cst_68 : f32 to vector<48x128xf32>
    %189 = arith.subf %188, %167 : vector<48x128xf32>
    %190 = arith.mulf %189, %167 : vector<48x128xf32>
    %191 = math.exp %190 : vector<48x128xf32>
    %192 = arith.mulf %187, %191 : vector<48x128xf32>
    %cst_69 = arith.constant 1.000000e+00 : f32
    %193 = vector.broadcast %cst_69 : f32 to vector<48x128xf32>
    %194 = arith.subf %193, %192 : vector<48x128xf32>
    %195 = arith.mulf %166, %194 : vector<48x128xf32>
    %cst_70 = arith.constant 1.000000e+00 : f32
    %196 = vector.broadcast %cst_70 : f32 to vector<48x128xf32>
    %197 = arith.addf %196, %195 : vector<48x128xf32>
    %198 = arith.mulf %159, %197 : vector<48x128xf32>
    %199 = arith.index_cast %arg0 : i32 to index
    %c0_71 = arith.constant 0 : index
    %c0_72 = arith.constant 0 : index
    %200 = vector.load %arg14[%199, %c0_71, %c0_72] : memref<2x128x32xf32, #tpu.memory_space<vmem>>, vector<1x128x32xf32>
    %201 = vector.shape_cast %200 : vector<1x128x32xf32> to vector<128x32xf32>
    %cst_73 = arith.constant dense<0.000000e+00> : vector<48x32xf32>
    %202 = tpu.matmul %198, %201, %cst_73 {dimension_numbers = #tpu.dot_dimension_numbers<[1], [0], [0], [1], [0, 0, 1, 1], [], []>} : vector<48x128xf32>, vector<128x32xf32>, vector<48x32xf32> -> vector<48x32xf32>
    %203 = arith.addf %122, %202 : vector<48x32xf32>
    %204 = arith.index_cast %arg0 : i32 to index
    %c0_74 = arith.constant 0 : index
    %c0_75 = arith.constant 0 : index
    %205 = vector.load %arg15[%204, %c0_74, %c0_75] : memref<2x1x32xf32, #tpu.memory_space<vmem>>, vector<1x1x32xf32>
    %206 = vector.shape_cast %205 : vector<1x1x32xf32> to vector<1x32xf32>
    %207 = vector.broadcast %206 : vector<1x32xf32> to vector<48x32xf32>
    %208 = arith.addf %203, %207 : vector<48x32xf32>
    %c0_76 = arith.constant 0 : index
    %c0_77 = arith.constant 0 : index
    %209 = vector.load %arg24[%c0_76, %c0_77] : memref<48x32xf32, #tpu.memory_space<vmem>>, vector<48x32xf32>
    tpu.vector_store %arg24[%c0_76, %c0_77], %208 {strides = array<i32>} : memref<48x32xf32, #tpu.memory_space<vmem>>, vector<48x32xf32>,
    %c1_i32 = arith.constant 1 : i32
    %210 = arith.cmpi eq, %arg0, %c1_i32 : i32
    %211 = arith.extui %210 : i1 to i32
    %c0_i32_78 = arith.constant 0 : i32
    %212 = arith.cmpi ne, %211, %c0_i32_78 : i32
    scf.if %212 {
      %c0_79 = arith.constant 0 : index
      %c0_80 = arith.constant 0 : index
      %213 = vector.load %arg16[%c0_79, %c0_80] : memref<1x32xf32, #tpu.memory_space<vmem>>, vector<1x32xf32>
      %c0_81 = arith.constant 0 : index
      %c0_82 = arith.constant 0 : index
      %214 = vector.load %arg17[%c0_81, %c0_82] : memref<1x32xf32, #tpu.memory_space<vmem>>, vector<1x32xf32>
      %cst_83 = arith.constant dense<0.000000e+00> : vector<48xf32>
      %215 = vector.multi_reduction <add>, %208, %cst_83 [1] : vector<48x32xf32> to vector<48xf32>
      %216 = vector.shape_cast %215 : vector<48xf32> to vector<48x1xf32>
      %cst_84 = arith.constant 3.200000e+01 : f32
      %217 = vector.broadcast %cst_84 : f32 to vector<48x1xf32>
      %218 = arith.divf %216, %217 : vector<48x1xf32>
      %219 = vector.broadcast %218 : vector<48x1xf32> to vector<48x32xf32>
      %220 = arith.subf %208, %219 : vector<48x32xf32>
      %221 = arith.mulf %220, %220 : vector<48x32xf32>
      %cst_85 = arith.constant dense<0.000000e+00> : vector<48xf32>
      %222 = vector.multi_reduction <add>, %221, %cst_85 [1] : vector<48x32xf32> to vector<48xf32>
      %223 = vector.shape_cast %222 : vector<48xf32> to vector<48x1xf32>
      %cst_86 = arith.constant 3.200000e+01 : f32
      %224 = vector.broadcast %cst_86 : f32 to vector<48x1xf32>
      %225 = arith.divf %223, %224 : vector<48x1xf32>
      %cst_87 = arith.constant 9.99999974E-6 : f32
      %226 = vector.broadcast %cst_87 : f32 to vector<48x1xf32>
      %227 = arith.addf %225, %226 : vector<48x1xf32>
      %228 = math.rsqrt %227 : vector<48x1xf32>
      %229 = vector.broadcast %228 : vector<48x1xf32> to vector<48x32xf32>
      %230 = arith.mulf %220, %229 : vector<48x32xf32>
      %231 = vector.broadcast %213 : vector<1x32xf32> to vector<48x32xf32>
      %232 = arith.mulf %230, %231 : vector<48x32xf32>
      %233 = vector.broadcast %214 : vector<1x32xf32> to vector<48x32xf32>
      %234 = arith.addf %232, %233 : vector<48x32xf32>
      %c0_88 = arith.constant 0 : index
      %c0_89 = arith.constant 0 : index
      %235 = vector.load %arg18[%c0_88, %c0_89] : memref<32x128xf32, #tpu.memory_space<vmem>>, vector<32x128xf32>
      %cst_90 = arith.constant dense<0.000000e+00> : vector<48x128xf32>
      %236 = tpu.matmul %234, %235, %cst_90 {dimension_numbers = #tpu.dot_dimension_numbers<[1], [0], [0], [1], [0, 0, 1, 1], [], []>} : vector<48x32xf32>, vector<32x128xf32>, vector<48x128xf32> -> vector<48x128xf32>
      %c0_91 = arith.constant 0 : index
      %c0_92 = arith.constant 0 : index
      %237 = vector.load %arg19[%c0_91, %c0_92] : memref<1x128xf32, #tpu.memory_space<vmem>>, vector<1x128xf32>
      %238 = vector.broadcast %237 : vector<1x128xf32> to vector<48x128xf32>
      %239 = arith.addf %236, %238 : vector<48x128xf32>
      %c0_93 = arith.constant 0 : index
      %c0_94 = arith.constant 0 : index
      %240 = vector.load %arg22[%c0_93, %c0_94] : memref<48x128xf32, #tpu.memory_space<vmem>>, vector<48x128xf32>
      tpu.vector_store %arg22[%c0_93, %c0_94], %239 {strides = array<i32>} : memref<48x128xf32, #tpu.memory_space<vmem>>, vector<48x128xf32>,
      %c0_95 = arith.constant 0 : index
      %c0_96 = arith.constant 0 : index
      %241 = vector.load %arg20[%c0_95, %c0_96] : memref<48x128xf32, #tpu.memory_space<vmem>>, vector<48x128xf32>
      %242 = arith.subf %239, %241 : vector<48x128xf32>
      %243 = arith.mulf %242, %242 : vector<48x128xf32>
      %cst_97 = arith.constant dense<0.000000e+00> : vector<48xf32>
      %244 = vector.multi_reduction <add>, %243, %cst_97 [1] : vector<48x128xf32> to vector<48xf32>
      %245 = vector.shape_cast %244 : vector<48xf32> to vector<48x1xf32>
      %cst_98 = arith.constant 0.020833334 : f32
      %246 = vector.broadcast %cst_98 : f32 to vector<48x1xf32>
      %247 = arith.mulf %245, %246 : vector<48x1xf32>
      %c0_99 = arith.constant 0 : index
      %c0_100 = arith.constant 0 : index
      %248 = vector.load %arg21[%c0_99, %c0_100] : memref<48x1xf32, #tpu.memory_space<vmem>>, vector<48x1xf32>
      %249 = arith.mulf %247, %248 : vector<48x1xf32>
      %250 = vector.shape_cast %249 : vector<48x1xf32> to vector<1x48x1xf32>
      %cst_101 = arith.constant dense<0.000000e+00> : vector<1xf32>
      %251 = vector.multi_reduction <add>, %250, %cst_101 [1, 2] : vector<1x48x1xf32> to vector<1xf32>
      %252 = vector.shape_cast %251 : vector<1xf32> to vector<1x1x1xf32>
      %253 = vector.extract %252[0, 0, 0] : f32 from vector<1x1x1xf32>
      %254 = vector.broadcast %253 : f32 to vector<1x1xf32>
      %255 = vector.shape_cast %248 : vector<48x1xf32> to vector<1x48x1xf32>
      %cst_102 = arith.constant dense<0.000000e+00> : vector<1xf32>
      %256 = vector.multi_reduction <add>, %255, %cst_102 [1, 2] : vector<1x48x1xf32> to vector<1xf32>
      %257 = vector.shape_cast %256 : vector<1xf32> to vector<1x1x1xf32>
      %258 = vector.extract %257[0, 0, 0] : f32 from vector<1x1x1xf32>
      %259 = vector.broadcast %258 : f32 to vector<1x1xf32>
      %cst_103 = arith.constant 9.99999997E-7 : f32
      %260 = vector.broadcast %cst_103 : f32 to vector<1x1xf32>
      %261 = arith.maximumf %259, %260 : vector<1x1xf32>
      %262 = arith.divf %254, %261 : vector<1x1xf32>
      %c0_104 = arith.constant 0 : index
      %c0_105 = arith.constant 0 : index
      %263 = vector.load %arg23[%c0_104, %c0_105] : memref<1x1xf32, #tpu.memory_space<vmem>>, vector<1x1xf32>
      tpu.vector_store %arg23[%c0_104, %c0_105], %262 {strides = array<i32>} : memref<1x1xf32, #tpu.memory_space<vmem>>, vector<1x1xf32>,
    } else {
    }
    return
  }
  func.func @transform_0(%arg0: i32) -> (i32, i32, i32) {
    %c0_i32 = arith.constant 0 : i32
    %c0_i32_0 = arith.constant 0 : i32
    %c0_i32_1 = arith.constant 0 : i32
    %c0_i32_2 = arith.constant 0 : i32
    return %c0_i32, %c0_i32_0, %c0_i32_1 : i32, i32, i32
  }
  func.func @transform_1(%arg0: i32) -> (i32, i32) {
    %c0_i32 = arith.constant 0 : i32
    %c0_i32_0 = arith.constant 0 : i32
    %c0_i32_1 = arith.constant 0 : i32
    return %c0_i32, %c0_i32_0 : i32, i32
  }
  func.func @transform_2(%arg0: i32) -> (i32, i32) {
    %c0_i32 = arith.constant 0 : i32
    %c0_i32_0 = arith.constant 0 : i32
    %c0_i32_1 = arith.constant 0 : i32
    return %c0_i32, %c0_i32_0 : i32, i32
  }
  func.func @transform_3(%arg0: i32) -> (i32, i32, i32) {
    %c0_i32 = arith.constant 0 : i32
    %c0_i32_0 = arith.constant 0 : i32
    %c0_i32_1 = arith.constant 0 : i32
    %c0_i32_2 = arith.constant 0 : i32
    return %c0_i32, %c0_i32_0, %c0_i32_1 : i32, i32, i32
  }
  func.func @transform_4(%arg0: i32) -> (i32, i32, i32) {
    %c0_i32 = arith.constant 0 : i32
    %c0_i32_0 = arith.constant 0 : i32
    %c0_i32_1 = arith.constant 0 : i32
    %c0_i32_2 = arith.constant 0 : i32
    return %c0_i32, %c0_i32_0, %c0_i32_1 : i32, i32, i32
  }
  func.func @transform_5(%arg0: i32) -> (i32, i32, i32) {
    %c0_i32 = arith.constant 0 : i32
    %c0_i32_0 = arith.constant 0 : i32
    %c0_i32_1 = arith.constant 0 : i32
    %c0_i32_2 = arith.constant 0 : i32
    return %c0_i32, %c0_i32_0, %c0_i32_1 : i32, i32, i32
  }
  func.func @transform_6(%arg0: i32) -> (i32, i32, i32) {
    %c0_i32 = arith.constant 0 : i32
    %c0_i32_0 = arith.constant 0 : i32
    %c0_i32_1 = arith.constant 0 : i32
    %c0_i32_2 = arith.constant 0 : i32
    return %c0_i32, %c0_i32_0, %c0_i32_1 : i32, i32, i32
  }
  func.func @transform_7(%arg0: i32) -> (i32, i32, i32) {
    %c0_i32 = arith.constant 0 : i32
    %c0_i32_0 = arith.constant 0 : i32
    %c0_i32_1 = arith.constant 0 : i32
    %c0_i32_2 = arith.constant 0 : i32
    return %c0_i32, %c0_i32_0, %c0_i32_1 : i32, i32, i32
  }
  func.func @transform_8(%arg0: i32) -> (i32, i32, i32) {
    %c0_i32 = arith.constant 0 : i32
    %c0_i32_0 = arith.constant 0 : i32
    %c0_i32_1 = arith.constant 0 : i32
    %c0_i32_2 = arith.constant 0 : i32
    return %c0_i32, %c0_i32_0, %c0_i32_1 : i32, i32, i32
  }
  func.func @transform_9(%arg0: i32) -> (i32, i32, i32) {
    %c0_i32 = arith.constant 0 : i32
    %c0_i32_0 = arith.constant 0 : i32
    %c0_i32_1 = arith.constant 0 : i32
    %c0_i32_2 = arith.constant 0 : i32
    return %c0_i32, %c0_i32_0, %c0_i32_1 : i32, i32, i32
  }
  func.func @transform_10(%arg0: i32) -> (i32, i32, i32) {
    %c0_i32 = arith.constant 0 : i32
    %c0_i32_0 = arith.constant 0 : i32
    %c0_i32_1 = arith.constant 0 : i32
    %c0_i32_2 = arith.constant 0 : i32
    return %c0_i32, %c0_i32_0, %c0_i32_1 : i32, i32, i32
  }
  func.func @transform_11(%arg0: i32) -> (i32, i32, i32) {
    %c0_i32 = arith.constant 0 : i32
    %c0_i32_0 = arith.constant 0 : i32
    %c0_i32_1 = arith.constant 0 : i32
    %c0_i32_2 = arith.constant 0 : i32
    return %c0_i32, %c0_i32_0, %c0_i32_1 : i32, i32, i32
  }
  func.func @transform_12(%arg0: i32) -> (i32, i32, i32) {
    %c0_i32 = arith.constant 0 : i32
    %c0_i32_0 = arith.constant 0 : i32
    %c0_i32_1 = arith.constant 0 : i32
    %c0_i32_2 = arith.constant 0 : i32
    return %c0_i32, %c0_i32_0, %c0_i32_1 : i32, i32, i32
  }
  func.func @transform_13(%arg0: i32) -> (i32, i32, i32) {
    %c0_i32 = arith.constant 0 : i32
    %c0_i32_0 = arith.constant 0 : i32
    %c0_i32_1 = arith.constant 0 : i32
    %c0_i32_2 = arith.constant 0 : i32
    return %c0_i32, %c0_i32_0, %c0_i32_1 : i32, i32, i32
  }
  func.func @transform_14(%arg0: i32) -> (i32, i32, i32) {
    %c0_i32 = arith.constant 0 : i32
    %c0_i32_0 = arith.constant 0 : i32
    %c0_i32_1 = arith.constant 0 : i32
    %c0_i32_2 = arith.constant 0 : i32
    return %c0_i32, %c0_i32_0, %c0_i32_1 : i32, i32, i32
  }
  func.func @transform_15(%arg0: i32) -> (i32, i32) {
    %c0_i32 = arith.constant 0 : i32
    %c0_i32_0 = arith.constant 0 : i32
    %c0_i32_1 = arith.constant 0 : i32
    return %c0_i32, %c0_i32_0 : i32, i32
  }
  func.func @transform_16(%arg0: i32) -> (i32, i32) {
    %c0_i32 = arith.constant 0 : i32
    %c0_i32_0 = arith.constant 0 : i32
    %c0_i32_1 = arith.constant 0 : i32
    return %c0_i32, %c0_i32_0 : i32, i32
  }
  func.func @transform_17(%arg0: i32) -> (i32, i32) {
    %c0_i32 = arith.constant 0 : i32
    %c0_i32_0 = arith.constant 0 : i32
    %c0_i32_1 = arith.constant 0 : i32
    return %c0_i32, %c0_i32_0 : i32, i32
  }
  func.func @transform_18(%arg0: i32) -> (i32, i32) {
    %c0_i32 = arith.constant 0 : i32
    %c0_i32_0 = arith.constant 0 : i32
    %c0_i32_1 = arith.constant 0 : i32
    return %c0_i32, %c0_i32_0 : i32, i32
  }
  func.func @transform_19(%arg0: i32) -> (i32, i32) {
    %c0_i32 = arith.constant 0 : i32
    %c0_i32_0 = arith.constant 0 : i32
    %c0_i32_1 = arith.constant 0 : i32
    return %c0_i32, %c0_i32_0 : i32, i32
  }
  func.func @transform_20(%arg0: i32) -> (i32, i32) {
    %c0_i32 = arith.constant 0 : i32
    %c0_i32_0 = arith.constant 0 : i32
    %c0_i32_1 = arith.constant 0 : i32
    return %c0_i32, %c0_i32_0 : i32, i32
  }
  func.func @transform_21(%arg0: i32) -> (i32, i32) {
    %c0_i32 = arith.constant 0 : i32
    %c0_i32_0 = arith.constant 0 : i32
    %c0_i32_1 = arith.constant 0 : i32
    return %c0_i32, %c0_i32_0 : i32, i32
  }
  func.func @transform_22(%arg0: i32) -> (i32, i32) {
    %c0_i32 = arith.constant 0 : i32
    %c0_i32_0 = arith.constant 0 : i32
    %c0_i32_1 = arith.constant 0 : i32
    return %c0_i32, %c0_i32_0 : i32, i32
  }
}

</mosaic_0001>

<llo_original>
// kernel: mae_forward.3
$region0: #{mae_forward.3}
  #allocation0 [shape = 'u32[]', space=smem, size = 0x4, offset = 0x4, fixed_abs, tag = 'smem constant byte address 0x4 - core index']
  #allocation1 [shape = 'u32[144,128]{1,0:T(1,128)}', space=vmem, size = 0x12000, scoped, tag = 'internal scratch']
  %s0 = inlined_call_operand.vmem [shape: f32[32,48], index: 0, kind: input, shape index: {}]
  %s1 = inlined_call_operand.vmem [shape: f32[48,32], index: 1, kind: input, shape index: {}]
  %s2 = inlined_call_operand.vmem [shape: f32[1,32], index: 2, kind: input, shape index: {}]
  %s3 = inlined_call_operand.vmem [shape: f32[32,32], index: 3, kind: input, shape index: {}]
  %s4 = inlined_call_operand.vmem [shape: f32[32,32], index: 4, kind: output, shape index: {}]
  %s5 = sld [smem:[#allocation0]]
  $region26: #{mae_forward.3} parent=0
    _
  %s7 = ssub.s32 1, %s5
  %s8 = scalar_select 0, %s7, %s5
  // Predicated region
  $region2: #{mae_forward.3} parent=0 // pred_check
    _
  $region3: #{mae_forward.3} parent=0 // pred_check_branch
    %10 = sbr.rel (0) target = $region5
  $region4: #{mae_forward.3} parent=0 // pred_region
    _
  $region5: #{mae_forward.3} parent=0 // pred_fallthru
    _
  // Predicated region
  $region6: #{mae_forward.3} parent=0 // pred_check
    _
  $region7: #{mae_forward.3} parent=0 // pred_check_branch
    %12 = sbr.rel (0) target = $region9
  $region8: #{mae_forward.3} parent=0 // pred_region
    _
  $region9: #{mae_forward.3} parent=0 // pred_fallthru
    _
  // Predicated region
  $region10: #{mae_forward.3} parent=0 // pred_check
    _
  $region11: #{mae_forward.3} parent=0 // pred_check_branch
    %14 = sbr.rel (0) target = $region13
  $region12: #{mae_forward.3} parent=0 // pred_region
    _
  $region13: #{mae_forward.3} parent=0 // pred_fallthru
    _
  // Predicated region
  $region14: #{mae_forward.3} parent=0 // pred_check
    _
  $region15: #{mae_forward.3} parent=0 // pred_check_branch
    %16 = sbr.rel (0) target = $region17
  $region16: #{mae_forward.3} parent=0 // pred_region
    _
  $region17: #{mae_forward.3} parent=0 // pred_fallthru
    _
  %v17 = vld [vmem:[%s0] sm:$0xff]
  %v18 = vld [vmem:[%s0 + $0x8] sm:$0xff]
  %v19 = vld [vmem:[%s0 + $0x10] sm:$0xff]
  %v20 = vld [vmem:[%s0 + $0x18] sm:$0xff]
  %v21 = vld [vmem:[%s1] sm:$0xff]
  %v22 = vld [vmem:[%s1 + $0x8] sm:$0xff]
  %v23 = vld [vmem:[%s1 + $0x10] sm:$0xff]
  %v24 = vld [vmem:[%s1 + $0x18] sm:$0xff]
  %v25 = vld [vmem:[%s1 + $0x20] sm:$0xff]
  %v26 = vld [vmem:[%s1 + $0x28] sm:$0xff]
  %v27 = vld [vmem:[%s2] sm:$0x1]
  %v29 = vlaneseq
  %v30 = vshrl.u32 %v29, 7
  %v31 = vsub.s32 0, %v30
  %v32 = vrot.slane %v27, %v31
  %vm34 = vcmask 392192
  %v36 = vsel %vm34, %v17, 0
  %v39 = vsel %vm34, %v18, 0
  %v42 = vsel %vm34, %v19, 0
  %v45 = vsel %vm34, %v20, 0
  %47 = vmatprep.subr.mxu0 0.0
  %48 = vmatpush1.msra.mxu0 %v21
  %49 = vmatprep.subr.mxu0 0.0
  %50 = vmatpush1.msra.mxu0 %v22
  %51 = vmatprep.subr.mxu0 0.0
  %52 = vmatpush1.msra.mxu0 %v23
  %53 = vmatprep.subr.mxu0 0.0
  %54 = vmatpush1.msra.mxu0 %v24
  %55 = vmatprep.subr.mxu0 0.0
  %56 = vmatpush1.msra.mxu0 %v25
  %57 = vmatprep.subr.mxu0 0.0
  %58 = vmatpush1.msra.mxu0 %v26
  %59 = vmatprep.subr.mxu0 0.0
  %60 = vmatpush1.msra.mxu0 0.0
  %61 = vmatprep.subr.mxu0 0.0
  %62 = vmatpush1.msra.mxu0 0.0
  %63 = vmatprep.subr.mxu0 0.0
  %64 = vmatpush1.msra.mxu0 0.0
  %65 = vmatprep.subr.mxu0 0.0
  %66 = vmatpush1.msra.mxu0 0.0
  %67 = vmatprep.subr.mxu0 0.0
  %68 = vmatpush1.msra.mxu0 0.0
  %69 = vmatprep.subr.mxu0 0.0
  %70 = vmatpush1.msra.mxu0 0.0
  %71 = vmatprep.subr.mxu0 0.0
  %72 = vmatpush1.msra.mxu0 0.0
  %73 = vmatprep.subr.mxu0 0.0
  %74 = vmatpush1.msra.mxu0 0.0
  %75 = vmatprep.subr.mxu0 0.0
  %76 = vmatpush1.msra.mxu0 0.0
  %77 = vmatprep.subr.mxu0 0.0
  %78 = vmatpush1.msra.mxu0 0.0
  %79 = vmatprep.subr.mxu0 0.0
  %80 = vmatpush1.msra.mxu0 0.0
  %81 = vmatprep.subr.mxu0 0.0
  %82 = vmatpush1.msra.mxu0 0.0
  %83 = vmatprep.subr.mxu0 0.0
  %84 = vmatpush1.msra.mxu0 0.0
  %85 = vmatprep.subr.mxu0 0.0
  %86 = vmatpush1.msra.mxu0 0.0
  %87 = vmatprep.subr.mxu0 0.0
  %88 = vmatpush1.msra.mxu0 0.0
  %89 = vmatprep.subr.mxu0 0.0
  %90 = vmatpush1.msra.mxu0 0.0
  %91 = vmatprep.subr.mxu0 0.0
  %92 = vmatpush1.msra.mxu0 0.0
  %93 = vmatprep.subr.mxu0 0.0
  %94 = vmatpush1.msra.mxu0 0.0
  %95 = vmatprep.subr.mxu0 0.0
  %96 = vmatpush1.msra.mxu0 0.0
  %97 = vmatprep.subr.mxu0 0.0
  %98 = vmatpush1.msra.mxu0 0.0
  %99 = vmatprep.subr.mxu0 0.0
  %100 = vmatpush1.msra.mxu0 0.0
  %101 = vmatprep.subr.mxu0 0.0
  %102 = vmatpush1.msra.mxu0 0.0
  %103 = vmatprep.subr.mxu0 0.0
  %104 = vmatpush1.msra.mxu0 0.0
  %105 = vmatprep.subr.mxu0 0.0
  %106 = vmatpush1.msra.mxu0 0.0
  %107 = vmatprep.subr.mxu0 0.0
  %108 = vmatpush1.msra.mxu0 0.0
  %109 = vmatprep.subr.mxu0 0.0
  %110 = vmatpush1.msra.mxu0 0.0
  %111 = vmatprep.mubr.f32.mxu0 0.0
  %112 = vmatmul.mubr.f32.gmra.mrb[0].mxu0 %v36
  %v113 = vpop.f32.mrb[0].mxu0
  %v114 = vadd.f32 %v32, %v113
  %v115 = vpop.f32.mrb[0].mxu0
  %116 = vmatprep.mubr.f32.mxu0 0.0
  %117 = vmatmul.mubr.f32.gmra.mrb[0].mxu0 %v39
  %v118 = vpop.f32.mrb[0].mxu0
  %v119 = vadd.f32 %v32, %v118
  %v120 = vpop.f32.mrb[0].mxu0
  %121 = vmatprep.mubr.f32.mxu0 0.0
  %122 = vmatmul.mubr.f32.gmra.mrb[0].mxu0 %v42
  %v123 = vpop.f32.mrb[0].mxu0
  %v124 = vadd.f32 %v32, %v123
  %v125 = vpop.f32.mrb[0].mxu0
  %126 = vmatprep.mubr.f32.mxu0 0.0
  %127 = vmatmul.mubr.f32.gmra.mrb[0].mxu0 %v45
  %v128 = vpop.f32.mrb[0].mxu0
  %v129 = vadd.f32 %v32, %v128
  %v130 = vpop.f32.mrb[0].mxu0
  %131 = vdwg.mxu0
  %v132 = vld [vmem:[%s3] sm:$0xff]
  %v133 = vld [vmem:[%s3 + $0x8] sm:$0xff]
  %v134 = vld [vmem:[%s3 + $0x10] sm:$0xff]
  %v135 = vld [vmem:[%s3 + $0x18] sm:$0xff]
  %v136 = vadd.f32 %v114, %v132
  %v137 = vadd.f32 %v119, %v133
  %v138 = vadd.f32 %v124, %v134
  %v139 = vadd.f32 %v129, %v135
  %vm140 = vcmask 261120
  %141 = vst.msk [vmem:[%s4] sm:$0xff] %vm140, %v136
  %142 = vst.msk [vmem:[%s4 + $0x8] sm:$0xff] %vm140, %v137
  %143 = vst.msk [vmem:[%s4 + $0x10] sm:$0xff] %vm140, %v138
  %144 = vst.msk [vmem:[%s4 + $0x18] sm:$0xff] %vm140, %v139
  // Predicated region
  $region18: #{mae_forward.3} parent=0 // pred_check
    _
  $region19: #{mae_forward.3} parent=0 // pred_check_branch
    %146 = sbr.rel (0) target = $region21
  $region20: #{mae_forward.3} parent=0 // pred_region
    _
  $region21: #{mae_forward.3} parent=0 // pred_fallthru
    _
  // Predicated region
  $region22: #{mae_forward.3} parent=0 // pred_check
    _
  $region23: #{mae_forward.3} parent=0 // pred_check_branch
    %148 = sbr.rel (0) target = $region25
  $region24: #{mae_forward.3} parent=0 // pred_region
    _
  $region25: #{mae_forward.3} parent=0 // pred_fallthru
    _

// kernel: mae_forward.4
$region0: #{mae_forward.4}
  #allocation0 [shape = 'u32[]', space=smem, size = 0x4, offset = 0x4, fixed_abs, tag = 'smem constant byte address 0x4 - core index']
  #allocation1 [shape = 'u32[144,128]{1,0:T(1,128)}', space=vmem, size = 0x12000, scoped, tag = 'internal scratch']
  #allocation2 [shape = 'f32[16,32]{1,0:T(8,128)}', space=vmem, size = 0x2000, scoped, tag = 'scratch operand']
  %s0 = inlined_call_operand.vmem [shape: f32[2,4,32], index: 0, kind: input, shape index: {}]
  %s1 = inlined_call_operand.vmem [shape: f32[4,32], index: 1, kind: input, shape index: {}]
  %s2 = inlined_call_operand.vmem [shape: f32[16,16], index: 2, kind: input, shape index: {}]
  %s3 = inlined_call_operand.vmem [shape: f32[2,1,32], index: 3, kind: input, shape index: {}]
  %s4 = inlined_call_operand.vmem [shape: f32[2,1,32], index: 4, kind: input, shape index: {}]
  %s5 = inlined_call_operand.vmem [shape: f32[2,32,96], index: 5, kind: input, shape index: {}]
  %s6 = inlined_call_operand.vmem [shape: f32[2,1,96], index: 6, kind: input, shape index: {}]
  %s7 = inlined_call_operand.vmem [shape: f32[2,32,32], index: 7, kind: input, shape index: {}]
  %s8 = inlined_call_operand.vmem [shape: f32[2,1,32], index: 8, kind: input, shape index: {}]
  %s9 = inlined_call_operand.vmem [shape: f32[2,1,32], index: 9, kind: input, shape index: {}]
  %s10 = inlined_call_operand.vmem [shape: f32[2,1,32], index: 10, kind: input, shape index: {}]
  %s11 = inlined_call_operand.vmem [shape: f32[2,32,128], index: 11, kind: input, shape index: {}]
  %s12 = inlined_call_operand.vmem [shape: f32[2,1,128], index: 12, kind: input, shape index: {}]
  %s13 = inlined_call_operand.vmem [shape: f32[2,128,32], index: 13, kind: input, shape index: {}]
  %s14 = inlined_call_operand.vmem [shape: f32[2,1,32], index: 14, kind: input, shape index: {}]
  %s15 = inlined_call_operand.vmem [shape: f32[1,32], index: 15, kind: input, shape index: {}]
  %s16 = inlined_call_operand.vmem [shape: f32[1,32], index: 16, kind: input, shape index: {}]
  %s17 = inlined_call_operand.vmem [shape: f32[32,128], index: 17, kind: input, shape index: {}]
  %s18 = inlined_call_operand.vmem [shape: f32[1,128], index: 18, kind: input, shape index: {}]
  %s19 = inlined_call_operand.vmem [shape: f32[16,128], index: 19, kind: output, shape index: {}]
  %s20 = sld [smem:[#allocation0]]
  $region117: #{mae_forward.4} parent=0
    _
  %s22 = ssub.s32 1, %s20
  %s23 = scalar_select 0, %s22, %s20
  loop: start=0, step=1, limit=4
  $region2: #{mae_forward.4} parent=0 // loop_pre_header
    _
  $region3: #{mae_forward.4} parent=0 // loop_header
    %s25 = sphi 0, %s29
    %p26 = scmp.ge.s32.totalorder %s25, 4
    %s33 = sphi 0, %s33
    %s35 = sphi 0, %s33
    %s36 = sphi 0, %s35
    %s50 = sphi 0, %s36
    %s54 = sphi 0, %s54
    %s56 = sphi 0, %s54
    %s57 = sphi 0, %s56
    %s71 = sphi 0, %s57
    %s75 = sphi 0, %s75
    %s77 = sphi 0, %s75
    %s78 = sphi 0, %s77
    %s92 = sphi 0, %s78
    %s96 = sphi 0, %s96
    %s98 = sphi 0, %s96
    %s99 = sphi 0, %s98
    %s113 = sphi 0, %s99
    %s117 = sphi 0, %s117
    %s119 = sphi 0, %s117
    %s120 = sphi 0, %s119
    %s134 = sphi 0, %s120
    %s138 = sphi 0, %s138
    %s140 = sphi 0, %s138
    %s141 = sphi 0, %s140
    %s155 = sphi 0, %s141
    %s159 = sphi 0, %s159
    %s161 = sphi 0, %s159
    %s162 = sphi 0, %s161
    %s176 = sphi 0, %s162
    %s180 = sphi 0, %s180
    %s182 = sphi 0, %s180
    %s183 = sphi 0, %s182
    %s197 = sphi 0, %s183
    %s201 = sphi 0, %s201
    %s203 = sphi 0, %s201
    %s204 = sphi 0, %s203
    %s218 = sphi 0, %s204
    %s222 = sphi 0, %s222
    %s224 = sphi 0, %s222
    %s225 = sphi 0, %s224
    %s239 = sphi 0, %s225
    %s243 = sphi 0, %s243
    %s245 = sphi 0, %s243
    %s246 = sphi 0, %s245
    %s260 = sphi 0, %s246
    %s264 = sphi 0, %s264
    %s266 = sphi 0, %s264
    %s267 = sphi 0, %s266
    %s281 = sphi 0, %s267
    %s285 = sphi 0, %s285
    %s287 = sphi 0, %s285
    %s288 = sphi 0, %s287
    %s302 = sphi 0, %s288
    %s306 = sphi 0, %s306
    %s308 = sphi 0, %s306
    %s309 = sphi 0, %s308
    %s323 = sphi 0, %s309
    %s327 = sphi 0, %s327
    %s329 = sphi 0, %s327
    %s330 = sphi 0, %s329
    %s344 = sphi 0, %s330
    %s348 = sphi 0, %s348
    %s350 = sphi 0, %s348
    %s351 = sphi 0, %s350
    %s365 = sphi 0, %s351
    %s369 = sphi 0, %s369
    %s371 = sphi 0, %s369
    %s372 = sphi 0, %s371
    %s386 = sphi 0, %s372
    %s390 = sphi 0, %s390
    %s392 = sphi 0, %s390
    %s393 = sphi 0, %s392
    %s407 = sphi 0, %s393
    %s411 = sphi 0, %s411
    %s413 = sphi 0, %s411
    %s414 = sphi 0, %s413
    %s428 = sphi 0, %s414
    %s432 = sphi 0, %s432
    %s434 = sphi 0, %s432
    %s435 = sphi 0, %s434
    %s449 = sphi 0, %s435
  $region4: #{mae_forward.4} parent=0 // loop_header_branch
    %28 = sbr.rel (%p26) target = $region8
  $region5: #{mae_forward.4} parent=0 // loop_body
    %s30 = ssub.s32 %s25, 1
    %s31 = ssub.s32 %s25, 2
    %s32 = sadd.s32 %s25, 1
    %s34 = sadd.s32 %s33, 1
    %p37 = scmp.eq.s32.totalorder %s25, 1
    %p38 = scmp.ne.s32.totalorder %s33, %s35
    %p39 = scmp.eq.s32.totalorder %s25, 0
    %p40 = por %p38, %p39
    %p41 = scmp.ne.s32.totalorder %s33, %s35
    %p42 = scmp.eq.s32.totalorder %s30, 1
    %p43 = por %p41, %p42
    %p44 = scmp.ne.s32.totalorder %s35, %s36
    %p45 = scmp.eq.s32.totalorder %s30, 0
    %p46 = por %p44, %p45
    %p47 = scmp.ne.s32.totalorder %s35, %s36
    %p48 = scmp.eq.s32.totalorder %s31, 1
    %p49 = por %p47, %p48
    %p51 = scmp.ne.s32.totalorder %s36, %s50
    %p52 = scmp.eq.s32.totalorder %s31, 0
    %p53 = por %p51, %p52
    %s55 = sadd.s32 %s54, 1
    %p58 = scmp.eq.s32.totalorder %s25, 1
    %p59 = scmp.ne.s32.totalorder %s54, %s56
    %p60 = scmp.eq.s32.totalorder %s25, 0
    %p61 = por %p59, %p60
    %p62 = scmp.ne.s32.totalorder %s54, %s56
    %p63 = scmp.eq.s32.totalorder %s30, 1
    %p64 = por %p62, %p63
    %p65 = scmp.ne.s32.totalorder %s56, %s57
    %p66 = scmp.eq.s32.totalorder %s30, 0
    %p67 = por %p65, %p66
    %p68 = scmp.ne.s32.totalorder %s56, %s57
    %p69 = scmp.eq.s32.totalorder %s31, 1
    %p70 = por %p68, %p69
    %p72 = scmp.ne.s32.totalorder %s57, %s71
    %p73 = scmp.eq.s32.totalorder %s31, 0
    %p74 = por %p72, %p73
    %s76 = sadd.s32 %s75, 1
    %p79 = scmp.eq.s32.totalorder %s25, 1
    %p80 = scmp.ne.s32.totalorder %s75, %s77
    %p81 = scmp.eq.s32.totalorder %s25, 0
    %p82 = por %p80, %p81
    %p83 = scmp.ne.s32.totalorder %s75, %s77
    %p84 = scmp.eq.s32.totalorder %s30, 1
    %p85 = por %p83, %p84
    %p86 = scmp.ne.s32.totalorder %s77, %s78
    %p87 = scmp.eq.s32.totalorder %s30, 0
    %p88 = por %p86, %p87
    %p89 = scmp.ne.s32.totalorder %s77, %s78
    %p90 = scmp.eq.s32.totalorder %s31, 1
    %p91 = por %p89, %p90
    %p93 = scmp.ne.s32.totalorder %s78, %s92
    %p94 = scmp.eq.s32.totalorder %s31, 0
    %p95 = por %p93, %p94
    %s97 = sadd.s32 %s96, 1
    %p100 = scmp.eq.s32.totalorder %s25, 1
    %p101 = scmp.ne.s32.totalorder %s96, %s98
    %p102 = scmp.eq.s32.totalorder %s25, 0
    %p103 = por %p101, %p102
    %p104 = scmp.ne.s32.totalorder %s96, %s98
    %p105 = scmp.eq.s32.totalorder %s30, 1
    %p106 = por %p104, %p105
    %p107 = scmp.ne.s32.totalorder %s98, %s99
    %p108 = scmp.eq.s32.totalorder %s30, 0
    %p109 = por %p107, %p108
    %p110 = scmp.ne.s32.totalorder %s98, %s99
    %p111 = scmp.eq.s32.totalorder %s31, 1
    %p112 = por %p110, %p111
    %p114 = scmp.ne.s32.totalorder %s99, %s113
    %p115 = scmp.eq.s32.totalorder %s31, 0
    %p116 = por %p114, %p115
    %s118 = sadd.s32 %s117, 1
    %p121 = scmp.eq.s32.totalorder %s25, 1
    %p122 = scmp.ne.s32.totalorder %s117, %s119
    %p123 = scmp.eq.s32.totalorder %s25, 0
    %p124 = por %p122, %p123
    %p125 = scmp.ne.s32.totalorder %s117, %s119
    %p126 = scmp.eq.s32.totalorder %s30, 1
    %p127 = por %p125, %p126
    %p128 = scmp.ne.s32.totalorder %s119, %s120
    %p129 = scmp.eq.s32.totalorder %s30, 0
    %p130 = por %p128, %p129
    %p131 = scmp.ne.s32.totalorder %s119, %s120
    %p132 = scmp.eq.s32.totalorder %s31, 1
    %p133 = por %p131, %p132
    %p135 = scmp.ne.s32.totalorder %s120, %s134
    %p136 = scmp.eq.s32.totalorder %s31, 0
    %p137 = por %p135, %p136
    %s139 = sadd.s32 %s138, 1
    %p142 = scmp.eq.s32.totalorder %s25, 1
    %p143 = scmp.ne.s32.totalorder %s138, %s140
    %p144 = scmp.eq.s32.totalorder %s25, 0
    %p145 = por %p143, %p144
    %p146 = scmp.ne.s32.totalorder %s138, %s140
    %p147 = scmp.eq.s32.totalorder %s30, 1
    %p148 = por %p146, %p147
    %p149 = scmp.ne.s32.totalorder %s140, %s141
    %p150 = scmp.eq.s32.totalorder %s30, 0
    %p151 = por %p149, %p150
    %p152 = scmp.ne.s32.totalorder %s140, %s141
    %p153 = scmp.eq.s32.totalorder %s31, 1
    %p154 = por %p152, %p153
    %p156 = scmp.ne.s32.totalorder %s141, %s155
    %p157 = scmp.eq.s32.totalorder %s31, 0
    %p158 = por %p156, %p157
    %s160 = sadd.s32 %s159, 1
    %p163 = scmp.eq.s32.totalorder %s25, 1
    %p164 = scmp.ne.s32.totalorder %s159, %s161
    %p165 = scmp.eq.s32.totalorder %s25, 0
    %p166 = por %p164, %p165
    %p167 = scmp.ne.s32.totalorder %s159, %s161
    %p168 = scmp.eq.s32.totalorder %s30, 1
    %p169 = por %p167, %p168
    %p170 = scmp.ne.s32.totalorder %s161, %s162
    %p171 = scmp.eq.s32.totalorder %s30, 0
    %p172 = por %p170, %p171
    %p173 = scmp.ne.s32.totalorder %s161, %s162
    %p174 = scmp.eq.s32.totalorder %s31, 1
    %p175 = por %p173, %p174
    %p177 = scmp.ne.s32.totalorder %s162, %s176
    %p178 = scmp.eq.s32.totalorder %s31, 0
    %p179 = por %p177, %p178
    %s181 = sadd.s32 %s180, 1
    %p184 = scmp.eq.s32.totalorder %s25, 1
    %p185 = scmp.ne.s32.totalorder %s180, %s182
    %p186 = scmp.eq.s32.totalorder %s25, 0
    %p187 = por %p185, %p186
    %p188 = scmp.ne.s32.totalorder %s180, %s182
    %p189 = scmp.eq.s32.totalorder %s30, 1
    %p190 = por %p188, %p189
    %p191 = scmp.ne.s32.totalorder %s182, %s183
    %p192 = scmp.eq.s32.totalorder %s30, 0
    %p193 = por %p191, %p192
    %p194 = scmp.ne.s32.totalorder %s182, %s183
    %p195 = scmp.eq.s32.totalorder %s31, 1
    %p196 = por %p194, %p195
    %p198 = scmp.ne.s32.totalorder %s183, %s197
    %p199 = scmp.eq.s32.totalorder %s31, 0
    %p200 = por %p198, %p199
    %s202 = sadd.s32 %s201, 1
    %p205 = scmp.eq.s32.totalorder %s25, 1
    %p206 = scmp.ne.s32.totalorder %s201, %s203
    %p207 = scmp.eq.s32.totalorder %s25, 0
    %p208 = por %p206, %p207
    %p209 = scmp.ne.s32.totalorder %s201, %s203
    %p210 = scmp.eq.s32.totalorder %s30, 1
    %p211 = por %p209, %p210
    %p212 = scmp.ne.s32.totalorder %s203, %s204
    %p213 = scmp.eq.s32.totalorder %s30, 0
    %p214 = por %p212, %p213
    %p215 = scmp.ne.s32.totalorder %s203, %s204
    %p216 = scmp.eq.s32.totalorder %s31, 1
    %p217 = por %p215, %p216
    %p219 = scmp.ne.s32.totalorder %s204, %s218
    %p220 = scmp.eq.s32.totalorder %s31, 0
    %p221 = por %p219, %p220
    %s223 = sadd.s32 %s222, 1
    %p226 = scmp.eq.s32.totalorder %s25, 1
    %p227 = scmp.ne.s32.totalorder %s222, %s224
    %p228 = scmp.eq.s32.totalorder %s25, 0
    %p229 = por %p227, %p228
    %p230 = scmp.ne.s32.totalorder %s222, %s224
    %p231 = scmp.eq.s32.totalorder %s30, 1
    %p232 = por %p230, %p231
    %p233 = scmp.ne.s32.totalorder %s224, %s225
    %p234 = scmp.eq.s32.totalorder %s30, 0
    %p235 = por %p233, %p234
    %p236 = scmp.ne.s32.totalorder %s224, %s225
    %p237 = scmp.eq.s32.totalorder %s31, 1
    %p238 = por %p236, %p237
    %p240 = scmp.ne.s32.totalorder %s225, %s239
    %p241 = scmp.eq.s32.totalorder %s31, 0
    %p242 = por %p240, %p241
    %s244 = sadd.s32 %s243, 1
    %p247 = scmp.eq.s32.totalorder %s25, 1
    %p248 = scmp.ne.s32.totalorder %s243, %s245
    %p249 = scmp.eq.s32.totalorder %s25, 0
    %p250 = por %p248, %p249
    %p251 = scmp.ne.s32.totalorder %s243, %s245
    %p252 = scmp.eq.s32.totalorder %s30, 1
    %p253 = por %p251, %p252
    %p254 = scmp.ne.s32.totalorder %s245, %s246
    %p255 = scmp.eq.s32.totalorder %s30, 0
    %p256 = por %p254, %p255
    %p257 = scmp.ne.s32.totalorder %s245, %s246
    %p258 = scmp.eq.s32.totalorder %s31, 1
    %p259 = por %p257, %p258
    %p261 = scmp.ne.s32.totalorder %s246, %s260
    %p262 = scmp.eq.s32.totalorder %s31, 0
    %p263 = por %p261, %p262
    %s265 = sadd.s32 %s264, 1
    %p268 = scmp.eq.s32.totalorder %s25, 1
    %p269 = scmp.ne.s32.totalorder %s264, %s266
    %p270 = scmp.eq.s32.totalorder %s25, 0
    %p271 = por %p269, %p270
    %p272 = scmp.ne.s32.totalorder %s264, %s266
    %p273 = scmp.eq.s32.totalorder %s30, 1
    %p274 = por %p272, %p273
    %p275 = scmp.ne.s32.totalorder %s266, %s267
    %p276 = scmp.eq.s32.totalorder %s30, 0
    %p277 = por %p275, %p276
    %p278 = scmp.ne.s32.totalorder %s266, %s267
    %p279 = scmp.eq.s32.totalorder %s31, 1
    %p280 = por %p278, %p279
    %p282 = scmp.ne.s32.totalorder %s267, %s281
    %p283 = scmp.eq.s32.totalorder %s31, 0
    %p284 = por %p282, %p283
    %s286 = sadd.s32 %s285, 1
    %p289 = scmp.eq.s32.totalorder %s25, 1
    %p290 = scmp.ne.s32.totalorder %s285, %s287
    %p291 = scmp.eq.s32.totalorder %s25, 0
    %p292 = por %p290, %p291
    %p293 = scmp.ne.s32.totalorder %s285, %s287
    %p294 = scmp.eq.s32.totalorder %s30, 1
    %p295 = por %p293, %p294
    %p296 = scmp.ne.s32.totalorder %s287, %s288
    %p297 = scmp.eq.s32.totalorder %s30, 0
    %p298 = por %p296, %p297
    %p299 = scmp.ne.s32.totalorder %s287, %s288
    %p300 = scmp.eq.s32.totalorder %s31, 1
    %p301 = por %p299, %p300
    %p303 = scmp.ne.s32.totalorder %s288, %s302
    %p304 = scmp.eq.s32.totalorder %s31, 0
    %p305 = por %p303, %p304
    %s307 = sadd.s32 %s306, 1
    %p310 = scmp.eq.s32.totalorder %s25, 1
    %p311 = scmp.ne.s32.totalorder %s306, %s308
    %p312 = scmp.eq.s32.totalorder %s25, 0
    %p313 = por %p311, %p312
    %p314 = scmp.ne.s32.totalorder %s306, %s308
    %p315 = scmp.eq.s32.totalorder %s30, 1
    %p316 = por %p314, %p315
    %p317 = scmp.ne.s32.totalorder %s308, %s309
    %p318 = scmp.eq.s32.totalorder %s30, 0
    %p319 = por %p317, %p318
    %p320 = scmp.ne.s32.totalorder %s308, %s309
    %p321 = scmp.eq.s32.totalorder %s31, 1
    %p322 = por %p320, %p321
    %p324 = scmp.ne.s32.totalorder %s309, %s323
    %p325 = scmp.eq.s32.totalorder %s31, 0
    %p326 = por %p324, %p325
    %s328 = sadd.s32 %s327, 1
    %p331 = scmp.eq.s32.totalorder %s25, 1
    %p332 = scmp.ne.s32.totalorder %s327, %s329
    %p333 = scmp.eq.s32.totalorder %s25, 0
    %p334 = por %p332, %p333
    %p335 = scmp.ne.s32.totalorder %s327, %s329
    %p336 = scmp.eq.s32.totalorder %s30, 1
    %p337 = por %p335, %p336
    %p338 = scmp.ne.s32.totalorder %s329, %s330
    %p339 = scmp.eq.s32.totalorder %s30, 0
    %p340 = por %p338, %p339
    %p341 = scmp.ne.s32.totalorder %s329, %s330
    %p342 = scmp.eq.s32.totalorder %s31, 1
    %p343 = por %p341, %p342
    %p345 = scmp.ne.s32.totalorder %s330, %s344
    %p346 = scmp.eq.s32.totalorder %s31, 0
    %p347 = por %p345, %p346
    %s349 = sadd.s32 %s348, 1
    %p352 = scmp.eq.s32.totalorder %s25, 1
    %p353 = scmp.ne.s32.totalorder %s348, %s350
    %p354 = scmp.eq.s32.totalorder %s25, 0
    %p355 = por %p353, %p354
    %p356 = scmp.ne.s32.totalorder %s348, %s350
    %p357 = scmp.eq.s32.totalorder %s30, 1
    %p358 = por %p356, %p357
    %p359 = scmp.ne.s32.totalorder %s350, %s351
    %p360 = scmp.eq.s32.totalorder %s30, 0
    %p361 = por %p359, %p360
    %p362 = scmp.ne.s32.totalorder %s350, %s351
    %p363 = scmp.eq.s32.totalorder %s31, 1
    %p364 = por %p362, %p363
    %p366 = scmp.ne.s32.totalorder %s351, %s365
    %p367 = scmp.eq.s32.totalorder %s31, 0
    %p368 = por %p366, %p367
    %s370 = sadd.s32 %s369, 1
    %p373 = scmp.eq.s32.totalorder %s25, 1
    %p374 = scmp.ne.s32.totalorder %s369, %s371
    %p375 = scmp.eq.s32.totalorder %s25, 0
    %p376 = por %p374, %p375
    %p377 = scmp.ne.s32.totalorder %s369, %s371
    %p378 = scmp.eq.s32.totalorder %s30, 1
    %p379 = por %p377, %p378
    %p380 = scmp.ne.s32.totalorder %s371, %s372
    %p381 = scmp.eq.s32.totalorder %s30, 0
    %p382 = por %p380, %p381
    %p383 = scmp.ne.s32.totalorder %s371, %s372
    %p384 = scmp.eq.s32.totalorder %s31, 1
    %p385 = por %p383, %p384
    %p387 = scmp.ne.s32.totalorder %s372, %s386
    %p388 = scmp.eq.s32.totalorder %s31, 0
    %p389 = por %p387, %p388
    %s391 = sadd.s32 %s390, 1
    %p394 = scmp.eq.s32.totalorder %s25, 1
    %p395 = scmp.ne.s32.totalorder %s390, %s392
    %p396 = scmp.eq.s32.totalorder %s25, 0
    %p397 = por %p395, %p396
    %p398 = scmp.ne.s32.totalorder %s390, %s392
    %p399 = scmp.eq.s32.totalorder %s30, 1
    %p400 = por %p398, %p399
    %p401 = scmp.ne.s32.totalorder %s392, %s393
    %p402 = scmp.eq.s32.totalorder %s30, 0
    %p403 = por %p401, %p402
    %p404 = scmp.ne.s32.totalorder %s392, %s393
    %p405 = scmp.eq.s32.totalorder %s31, 1
    %p406 = por %p404, %p405
    %p408 = scmp.ne.s32.totalorder %s393, %s407
    %p409 = scmp.eq.s32.totalorder %s31, 0
    %p410 = por %p408, %p409
    %s412 = sadd.s32 %s411, 1
    %p415 = scmp.eq.s32.totalorder %s25, 1
    %p416 = scmp.ne.s32.totalorder %s411, %s413
    %p417 = scmp.eq.s32.totalorder %s25, 0
    %p418 = por %p416, %p417
    %p419 = scmp.ne.s32.totalorder %s411, %s413
    %p420 = scmp.eq.s32.totalorder %s30, 1
    %p421 = por %p419, %p420
    %p422 = scmp.ne.s32.totalorder %s413, %s414
    %p423 = scmp.eq.s32.totalorder %s30, 0
    %p424 = por %p422, %p423
    %p425 = scmp.ne.s32.totalorder %s413, %s414
    %p426 = scmp.eq.s32.totalorder %s31, 1
    %p427 = por %p425, %p426
    %p429 = scmp.ne.s32.totalorder %s414, %s428
    %p430 = scmp.eq.s32.totalorder %s31, 0
    %p431 = por %p429, %p430
    %s433 = sadd.s32 %s432, 1
    %p436 = scmp.eq.s32.totalorder %s25, 1
    %p437 = scmp.ne.s32.totalorder %s432, %s434
    %p438 = scmp.eq.s32.totalorder %s25, 0
    %p439 = por %p437, %p438
    %p440 = scmp.ne.s32.totalorder %s432, %s434
    %p441 = scmp.eq.s32.totalorder %s30, 1
    %p442 = por %p440, %p441
    %p443 = scmp.ne.s32.totalorder %s434, %s435
    %p444 = scmp.eq.s32.totalorder %s30, 0
    %p445 = por %p443, %p444
    %p446 = scmp.ne.s32.totalorder %s434, %s435
    %p447 = scmp.eq.s32.totalorder %s31, 1
    %p448 = por %p446, %p447
    %p450 = scmp.ne.s32.totalorder %s435, %s449
    %p451 = scmp.eq.s32.totalorder %s31, 0
    %p452 = por %p450, %p451
    %p453 = scmp.le.s32.totalorder 1, %s25
    %p454 = scmp.lt.s32.totalorder %s25, 3
    %p455 = pnand %p453, %p454
    %p456 = pneg %p455
    // Predicated region
    $region9: #{mae_forward.4} parent=5 // pred_check
      _
    $region10: #{mae_forward.4} parent=5 // pred_check_branch
      %458 = sbr.rel (%p455) target = $region12
    $region11: #{mae_forward.4} parent=5 // pred_region
      %s459 = ssub.s32 %s25, 1
      // Predicated region
      $region13: #{mae_forward.4} parent=11 // pred_check
        %p460 = pneg %p46
      $region14: #{mae_forward.4} parent=11 // pred_check_branch
        %462 = sbr.rel (%p460) target = $region16
      $region15: #{mae_forward.4} parent=11 // pred_region
        _
      $region16: #{mae_forward.4} parent=11 // pred_fallthru
        _
      // Predicated region
      $region17: #{mae_forward.4} parent=11 // pred_check
        %p463 = pneg %p67
      $region18: #{mae_forward.4} parent=11 // pred_check_branch
        %465 = sbr.rel (%p463) target = $region20
      $region19: #{mae_forward.4} parent=11 // pred_region
        _
      $region20: #{mae_forward.4} parent=11 // pred_fallthru
        _
      // Predicated region
      $region21: #{mae_forward.4} parent=11 // pred_check
        %p466 = pneg %p88
      $region22: #{mae_forward.4} parent=11 // pred_check_branch
        %468 = sbr.rel (%p466) target = $region24
      $region23: #{mae_forward.4} parent=11 // pred_region
        _
      $region24: #{mae_forward.4} parent=11 // pred_fallthru
        _
      // Predicated region
      $region25: #{mae_forward.4} parent=11 // pred_check
        %p469 = pneg %p109
      $region26: #{mae_forward.4} parent=11 // pred_check_branch
        %471 = sbr.rel (%p469) target = $region28
      $region27: #{mae_forward.4} parent=11 // pred_region
        _
      $region28: #{mae_forward.4} parent=11 // pred_fallthru
        _
      // Predicated region
      $region29: #{mae_forward.4} parent=11 // pred_check
        %p472 = pneg %p130
      $region30: #{mae_forward.4} parent=11 // pred_check_branch
        %474 = sbr.rel (%p472) target = $region32
      $region31: #{mae_forward.4} parent=11 // pred_region
        _
      $region32: #{mae_forward.4} parent=11 // pred_fallthru
        _
      // Predicated region
      $region33: #{mae_forward.4} parent=11 // pred_check
        %p475 = pneg %p151
      $region34: #{mae_forward.4} parent=11 // pred_check_branch
        %477 = sbr.rel (%p475) target = $region36
      $region35: #{mae_forward.4} parent=11 // pred_region
        _
      $region36: #{mae_forward.4} parent=11 // pred_fallthru
        _
      // Predicated region
      $region37: #{mae_forward.4} parent=11 // pred_check
        %p478 = pneg %p172
      $region38: #{mae_forward.4} parent=11 // pred_check_branch
        %480 = sbr.rel (%p478) target = $region40
      $region39: #{mae_forward.4} parent=11 // pred_region
        _
      $region40: #{mae_forward.4} parent=11 // pred_fallthru
        _
      // Predicated region
      $region41: #{mae_forward.4} parent=11 // pred_check
        %p481 = pneg %p193
      $region42: #{mae_forward.4} parent=11 // pred_check_branch
        %483 = sbr.rel (%p481) target = $region44
      $region43: #{mae_forward.4} parent=11 // pred_region
        _
      $region44: #{mae_forward.4} parent=11 // pred_fallthru
        _
      // Predicated region
      $region45: #{mae_forward.4} parent=11 // pred_check
        %p484 = pneg %p214
      $region46: #{mae_forward.4} parent=11 // pred_check_branch
        %486 = sbr.rel (%p484) target = $region48
      $region47: #{mae_forward.4} parent=11 // pred_region
        _
      $region48: #{mae_forward.4} parent=11 // pred_fallthru
        _
      // Predicated region
      $region49: #{mae_forward.4} parent=11 // pred_check
        %p487 = pneg %p235
      $region50: #{mae_forward.4} parent=11 // pred_check_branch
        %489 = sbr.rel (%p487) target = $region52
      $region51: #{mae_forward.4} parent=11 // pred_region
        _
      $region52: #{mae_forward.4} parent=11 // pred_fallthru
        _
      // Predicated region
      $region53: #{mae_forward.4} parent=11 // pred_check
        %p490 = pneg %p256
      $region54: #{mae_forward.4} parent=11 // pred_check_branch
        %492 = sbr.rel (%p490) target = $region56
      $region55: #{mae_forward.4} parent=11 // pred_region
        _
      $region56: #{mae_forward.4} parent=11 // pred_fallthru
        _
      // Predicated region
      $region57: #{mae_forward.4} parent=11 // pred_check
        %p493 = pneg %p277
      $region58: #{mae_forward.4} parent=11 // pred_check_branch
        %495 = sbr.rel (%p493) target = $region60
      $region59: #{mae_forward.4} parent=11 // pred_region
        _
      $region60: #{mae_forward.4} parent=11 // pred_fallthru
        _
      // Predicated region
      $region61: #{mae_forward.4} parent=11 // pred_check
        %p496 = pneg %p298
      $region62: #{mae_forward.4} parent=11 // pred_check_branch
        %498 = sbr.rel (%p496) target = $region64
      $region63: #{mae_forward.4} parent=11 // pred_region
        _
      $region64: #{mae_forward.4} parent=11 // pred_fallthru
        _
      // Predicated region
      $region65: #{mae_forward.4} parent=11 // pred_check
        %p499 = pneg %p319
      $region66: #{mae_forward.4} parent=11 // pred_check_branch
        %501 = sbr.rel (%p499) target = $region68
      $region67: #{mae_forward.4} parent=11 // pred_region
        _
      $region68: #{mae_forward.4} parent=11 // pred_fallthru
        _
      // Predicated region
      $region69: #{mae_forward.4} parent=11 // pred_check
        %p502 = pneg %p340
      $region70: #{mae_forward.4} parent=11 // pred_check_branch
        %504 = sbr.rel (%p502) target = $region72
      $region71: #{mae_forward.4} parent=11 // pred_region
        _
      $region72: #{mae_forward.4} parent=11 // pred_fallthru
        _
      // Predicated region
      $region73: #{mae_forward.4} parent=11 // pred_check
        %p505 = pneg %p361
      $region74: #{mae_forward.4} parent=11 // pred_check_branch
        %507 = sbr.rel (%p505) target = $region76
      $region75: #{mae_forward.4} parent=11 // pred_region
        _
      $region76: #{mae_forward.4} parent=11 // pred_fallthru
        _
      // Predicated region
      $region77: #{mae_forward.4} parent=11 // pred_check
        %p508 = pneg %p382
      $region78: #{mae_forward.4} parent=11 // pred_check_branch
        %510 = sbr.rel (%p508) target = $region80
      $region79: #{mae_forward.4} parent=11 // pred_region
        _
      $region80: #{mae_forward.4} parent=11 // pred_fallthru
        _
      // Predicated region
      $region81: #{mae_forward.4} parent=11 // pred_check
        %p511 = pneg %p403
      $region82: #{mae_forward.4} parent=11 // pred_check_branch
        %513 = sbr.rel (%p511) target = $region84
      $region83: #{mae_forward.4} parent=11 // pred_region
        _
      $region84: #{mae_forward.4} parent=11 // pred_fallthru
        _
      // Predicated region
      $region85: #{mae_forward.4} parent=11 // pred_check
        %p514 = pneg %p424
      $region86: #{mae_forward.4} parent=11 // pred_check_branch
        %516 = sbr.rel (%p514) target = $region88
      $region87: #{mae_forward.4} parent=11 // pred_region
        _
      $region88: #{mae_forward.4} parent=11 // pred_fallthru
        _
    $region12: #{mae_forward.4} parent=5 // pred_fallthru
      _
    %p517 = scmp.lt.s32.totalorder %s25, 2
    // Predicated region
    $region89: #{mae_forward.4} parent=5 // pred_check
      %p518 = pneg %p517
    $region90: #{mae_forward.4} parent=5 // pred_check_branch
      %520 = sbr.rel (%p518) target = $region92
    $region91: #{mae_forward.4} parent=5 // pred_region
      _
    $region92: #{mae_forward.4} parent=5 // pred_fallthru
      _
    %p521 = scmp.le.s32.totalorder 1, %s25
    %p522 = scmp.lt.s32.totalorder %s25, 3
    %p523 = pnand %p521, %p522
    %p524 = pneg %p523
    // Predicated region
    $region93: #{mae_forward.4} parent=5 // pred_check
      _
    $region94: #{mae_forward.4} parent=5 // pred_check_branch
      %526 = sbr.rel (%p523) target = $region96
    $region95: #{mae_forward.4} parent=5 // pred_region
      %s527 = ssub.s32 %s25, 1
      %p528 = pneg %p46
      %p529 = pneg %p43
      %p530 = pneg %p67
      %p531 = pneg %p64
      %p532 = pneg %p88
      %p533 = pneg %p85
      %p534 = pneg %p109
      %p535 = pneg %p106
      %p536 = pneg %p130
      %p537 = pneg %p127
      %p538 = pneg %p151
      %p539 = pneg %p148
      %p540 = pneg %p172
      %p541 = pneg %p169
      %p542 = pneg %p193
      %p543 = pneg %p190
      %p544 = pneg %p214
      %p545 = pneg %p211
      %p546 = pneg %p235
      %p547 = pneg %p232
      %p548 = pneg %p256
      %p549 = pneg %p253
      %p550 = pneg %p277
      %p551 = pneg %p274
      %p552 = pneg %p298
      %p553 = pneg %p295
      %p554 = pneg %p319
      %p555 = pneg %p316
      %p556 = pneg %p340
      %p557 = pneg %p337
      %p558 = pneg %p361
      %p559 = pneg %p358
      %p560 = pneg %p382
      %p561 = pneg %p379
      %p562 = pneg %p403
      %p563 = pneg %p400
      %p564 = pneg %p424
      %p565 = pneg %p421
      %p566 = pneg %p445
      %p567 = pneg %p442
      %p568 = scmp.eq.s32.totalorder %s30, 0
      // Predicated region
      $region97: #{mae_forward.4} parent=95 // pred_check
        %p569 = pneg %p568
      $region98: #{mae_forward.4} parent=95 // pred_check_branch
        %571 = sbr.rel (%p569) target = $region100
      $region99: #{mae_forward.4} parent=95 // pred_region
        %vm572 = vcmask 261120
        %573 = vst.msk [vmem:[#allocation2] sm:$0xff] %vm572, 0.0
        %574 = vst.msk [vmem:[#allocation2 + $0x8] sm:$0xff] %vm572, 0.0
        %v575 = vld [vmem:[%s0] sm:$0xf]
        %v576 = vld [vmem:[%s1] sm:$0xf]
        %v577 = vadd.f32 %v575, %v576
        %vm578 = vcmask 257024
        %579 = vst.msk [vmem:[#allocation2] sm:$0xf] %vm578, %v577
        %s580 = scalar_lea.vmem %s0, 4
        %v581 = vld [vmem:[%s580] sm:$0xf]
        %v582 = vld [vmem:[%s1] sm:$0xf]
        %v583 = vadd.f32 %v581, %v582
        %584 = vst.msk [vmem:[#allocation2 + $0x8] sm:$0xf] %vm578, %v583
      $region100: #{mae_forward.4} parent=95 // pred_fallthru
        _
      %v585 = vld [vmem:[#allocation2] sm:$0xff]
      %v586 = vld [vmem:[#allocation2 + $0x8] sm:$0xff]
      %s587 = scalar_lea.vmem %s3, %s30
      %v588 = vld [vmem:[%s587] sm:$0x1]
      %s589 = scalar_lea.vmem %s4, %s30
      %v590 = vld [vmem:[%s589] sm:$0x1]
      %vm591 = vcmask 261120
      %v592 = vsel %vm591, %v585, 0.0
      %593 = vadd.xlane.f32.xlu0 %v592
      %v594 = vpop.xlane.xlu0 %593
      %v595 = vsel %vm591, %v586, 0.0
      %596 = vadd.xlane.f32.xlu0 %v595
      %v597 = vpop.xlane.xlu0 %596
      %v598 = vrcp.pop 32.0
      %v599 = vmul.f32 %v594, %v598
      %v600 = vmul.f32 %v597, %v598
      %v601 = vsub.f32 %v585, %v599
      %v602 = vsub.f32 %v586, %v600
      %v603 = vmul.f32 %v601, %v601
      %v604 = vmul.f32 %v602, %v602
      %v605 = vsel %vm591, %v603, 0.0
      %606 = vadd.xlane.f32.xlu0 %v605
      %v607 = vpop.xlane.xlu0 %606
      %v608 = vsel %vm591, %v604, 0.0
      %609 = vadd.xlane.f32.xlu0 %v608
      %v610 = vpop.xlane.xlu0 %609
      %v611 = vmul.f32 %v607, %v598
      %v612 = vmul.f32 %v610, %v598
      %v613 = vadd.f32 %v611, 1e-05
      %v614 = vadd.f32 %v612, 1e-05
      %v615 = vrsqrt.pop %v613
      %v616 = vrsqrt.pop %v614
      %v617 = vmul.f32 %v601, %v615
      %v618 = vmul.f32 %v602, %v616
      %v620 = vlaneseq
      %v621 = vshrl.u32 %v620, 7
      %v622 = vsub.s32 0, %v621
      %v623 = vrot.slane %v588, %v622
      %v625 = vmul.f32 %v617, %v623
      %v626 = vmul.f32 %v618, %v623
      %v628 = vlaneseq
      %v629 = vshrl.u32 %v628, 7
      %v630 = vsub.s32 0, %v629
      %v631 = vrot.slane %v590, %v630
      %v633 = vadd.f32 %v625, %v631
      %v634 = vadd.f32 %v626, %v631
      %s635 = smul.u32 %s30, 32
      %s636 = scalar_lea.vmem %s5, %s635
      %v637 = vld [vmem:[%s636] sm:$0xff]
      %v638 = vld [vmem:[%s636 + $0x8] sm:$0xff]
      %v639 = vld [vmem:[%s636 + $0x10] sm:$0xff]
      %v640 = vld [vmem:[%s636 + $0x18] sm:$0xff]
      %s641 = scalar_lea.vmem %s6, %s30
      %v642 = vld [vmem:[%s641] sm:$0x1]
      %v644 = vlaneseq
      %v645 = vshrl.u32 %v644, 7
      %v646 = vsub.s32 0, %v645
      %v647 = vrot.slane %v642, %v646
      %v650 = vsel %vm591, %v633, 0
      %v653 = vsel %vm591, %v634, 0
      %655 = vmatprep.subr.mxu0 0.0
      %656 = vmatpush1.msra.mxu0 %v637
      %657 = vmatprep.subr.mxu0 0.0
      %658 = vmatpush1.msra.mxu0 %v638
      %659 = vmatprep.subr.mxu0 0.0
      %660 = vmatpush1.msra.mxu0 %v639
      %661 = vmatprep.subr.mxu0 0.0
      %662 = vmatpush1.msra.mxu0 %v640
      %663 = vmatprep.subr.mxu0 0.0
      %664 = vmatpush1.msra.mxu0 0.0
      %665 = vmatprep.subr.mxu0 0.0
      %666 = vmatpush1.msra.mxu0 0.0
      %667 = vmatprep.subr.mxu0 0.0
      %668 = vmatpush1.msra.mxu0 0.0
      %669 = vmatprep.subr.mxu0 0.0
      %670 = vmatpush1.msra.mxu0 0.0
      %671 = vmatprep.subr.mxu0 0.0
      %672 = vmatpush1.msra.mxu0 0.0
      %673 = vmatprep.subr.mxu0 0.0
      %674 = vmatpush1.msra.mxu0 0.0
      %675 = vmatprep.subr.mxu0 0.0
      %676 = vmatpush1.msra.mxu0 0.0
      %677 = vmatprep.subr.mxu0 0.0
      %678 = vmatpush1.msra.mxu0 0.0
      %679 = vmatprep.subr.mxu0 0.0
      %680 = vmatpush1.msra.mxu0 0.0
      %681 = vmatprep.subr.mxu0 0.0
      %682 = vmatpush1.msra.mxu0 0.0
      %683 = vmatprep.subr.mxu0 0.0
      %684 = vmatpush1.msra.mxu0 0.0
      %685 = vmatprep.subr.mxu0 0.0
      %686 = vmatpush1.msra.mxu0 0.0
      %687 = vmatprep.subr.mxu0 0.0
      %688 = vmatpush1.msra.mxu0 0.0
      %689 = vmatprep.subr.mxu0 0.0
      %690 = vmatpush1.msra.mxu0 0.0
      %691 = vmatprep.subr.mxu0 0.0
      %692 = vmatpush1.msra.mxu0 0.0
      %693 = vmatprep.subr.mxu0 0.0
      %694 = vmatpush1.msra.mxu0 0.0
      %695 = vmatprep.subr.mxu0 0.0
      %696 = vmatpush1.msra.mxu0 0.0
      %697 = vmatprep.subr.mxu0 0.0
      %698 = vmatpush1.msra.mxu0 0.0
      %699 = vmatprep.subr.mxu0 0.0
      %700 = vmatpush1.msra.mxu0 0.0
      %701 = vmatprep.subr.mxu0 0.0
      %702 = vmatpush1.msra.mxu0 0.0
      %703 = vmatprep.subr.mxu0 0.0
      %704 = vmatpush1.msra.mxu0 0.0
      %705 = vmatprep.subr.mxu0 0.0
      %706 = vmatpush1.msra.mxu0 0.0
      %707 = vmatprep.subr.mxu0 0.0
      %708 = vmatpush1.msra.mxu0 0.0
      %709 = vmatprep.subr.mxu0 0.0
      %710 = vmatpush1.msra.mxu0 0.0
      %711 = vmatprep.subr.mxu0 0.0
      %712 = vmatpush1.msra.mxu0 0.0
      %713 = vmatprep.subr.mxu0 0.0
      %714 = vmatpush1.msra.mxu0 0.0
      %715 = vmatprep.subr.mxu0 0.0
      %716 = vmatpush1.msra.mxu0 0.0
      %717 = vmatprep.subr.mxu0 0.0
      %718 = vmatpush1.msra.mxu0 0.0
      %719 = vmatprep.mubr.f32.mxu0 0.0
      %720 = vmatmul.mubr.f32.gmra.mrb[0].mxu0 %v650
      %v721 = vpop.f32.mrb[0].mxu0
      %v722 = vadd.f32 %v647, %v721
      %v723 = vpop.f32.mrb[0].mxu0
      %724 = vmatprep.mubr.f32.mxu0 0.0
      %725 = vmatmul.mubr.f32.gmra.mrb[0].mxu0 %v653
      %v726 = vpop.f32.mrb[0].mxu0
      %v727 = vadd.f32 %v647, %v726
      %v728 = vpop.f32.mrb[0].mxu0
      %729 = vdwg.mxu0
      %s730 = scalar_lea.vmem %s7, %s635
      %v731 = vld [vmem:[%s730] sm:$0xff]
      %v732 = vld [vmem:[%s730 + $0x8] sm:$0xff]
      %v733 = vld [vmem:[%s730 + $0x10] sm:$0xff]
      %v734 = vld [vmem:[%s730 + $0x18] sm:$0xff]
      %v735 = vld [vmem:[%s2] sm:$0xff]
      %v736 = vld [vmem:[%s2 + $0x8] sm:$0xff]
      %739 = vrot.lane.b32.xlu0 %v722, 96
      %v740 = vpop.permute.xlu0 %739
      %741 = vrot.lane.b32.xlu0 %v727, 96
      %v742 = vpop.permute.xlu0 %741
      %vm743 = vcmask 64512
      %v744 = vsel %vm743, %v722, 0
      %v746 = vsel %vm743, %v727, 0
      %v748 = vsel %vm743, %v740, 0
      %v750 = vsel %vm743, %v742, 0
      %752 = vmatprep.subr.mxu0 0.0
      %753 = vmatpush1.xpose.msra.mxu0 %v748
      %754 = vmatprep.subr.mxu0 0.0
      %755 = vmatpush1.xpose.msra.mxu0 %v750
      %756 = vmatprep.subr.mxu0 0.0
      %757 = vmatpush1.xpose.msra.mxu0 0.0
      %758 = vmatprep.subr.mxu0 0.0
      %759 = vmatpush1.xpose.msra.mxu0 0.0
      %760 = vmatprep.subr.mxu0 0.0
      %761 = vmatpush1.xpose.msra.mxu0 0.0
      %762 = vmatprep.subr.mxu0 0.0
      %763 = vmatpush1.xpose.msra.mxu0 0.0
      %764 = vmatprep.subr.mxu0 0.0
      %765 = vmatpush1.xpose.msra.mxu0 0.0
      %766 = vmatprep.subr.mxu0 0.0
      %767 = vmatpush1.xpose.msra.mxu0 0.0
      %768 = vmatprep.subr.mxu0 0.0
      %769 = vmatpush1.xpose.msra.mxu0 0.0
      %770 = vmatprep.subr.mxu0 0.0
      %771 = vmatpush1.xpose.msra.mxu0 0.0
      %772 = vmatprep.subr.mxu0 0.0
      %773 = vmatpush1.xpose.msra.mxu0 0.0
      %774 = vmatprep.subr.mxu0 0.0
      %775 = vmatpush1.xpose.msra.mxu0 0.0
      %776 = vmatprep.subr.mxu0 0.0
      %777 = vmatpush1.xpose.msra.mxu0 0.0
      %778 = vmatprep.subr.mxu0 0.0
      %779 = vmatpush1.xpose.msra.mxu0 0.0
      %780 = vmatprep.subr.mxu0 0.0
      %781 = vmatpush1.xpose.msra.mxu0 0.0
      %782 = vmatprep.subr.mxu0 0.0
      %783 = vmatpush1.xpose.msra.mxu0 0.0
      %784 = vmatprep.subr.mxu0 0.0
      %785 = vmatpush1.xpose.msra.mxu0 0.0
      %786 = vmatprep.subr.mxu0 0.0
      %787 = vmatpush1.xpose.msra.mxu0 0.0
      %788 = vmatprep.subr.mxu0 0.0
      %789 = vmatpush1.xpose.msra.mxu0 0.0
      %790 = vmatprep.subr.mxu0 0.0
      %791 = vmatpush1.xpose.msra.mxu0 0.0
      %792 = vmatprep.subr.mxu0 0.0
      %793 = vmatpush1.xpose.msra.mxu0 0.0
      %794 = vmatprep.subr.mxu0 0.0
      %795 = vmatpush1.xpose.msra.mxu0 0.0
      %796 = vmatprep.subr.mxu0 0.0
      %797 = vmatpush1.xpose.msra.mxu0 0.0
      %798 = vmatprep.subr.mxu0 0.0
      %799 = vmatpush1.xpose.msra.mxu0 0.0
      %800 = vmatprep.subr.mxu0 0.0
      %801 = vmatpush1.xpose.msra.mxu0 0.0
      %802 = vmatprep.subr.mxu0 0.0
      %803 = vmatpush1.xpose.msra.mxu0 0.0
      %804 = vmatprep.subr.mxu0 0.0
      %805 = vmatpush1.xpose.msra.mxu0 0.0
      %806 = vmatprep.subr.mxu0 0.0
      %807 = vmatpush1.xpose.msra.mxu0 0.0
      %808 = vmatprep.subr.mxu0 0.0
      %809 = vmatpush1.xpose.msra.mxu0 0.0
      %810 = vmatprep.subr.mxu0 0.0
      %811 = vmatpush1.xpose.msra.mxu0 0.0
      %812 = vmatprep.subr.mxu0 0.0
      %813 = vmatpush1.xpose.msra.mxu0 0.0
      %814 = vmatprep.subr.mxu0 0.0
      %815 = vmatpush1.xpose.msra.mxu0 0.0
      %816 = vmatprep.mubr.f32.mxu0 0.0
      %817 = vmatmul.mubr.f32.gmra.mrb[0].mxu0 %v744
      %v818 = vpop.f32.mrb[0].mxu0
      %v819 = vadd.f32 %v735, %v818
      %v820 = vpop.f32.mrb[0].mxu0
      %821 = vmatprep.mubr.f32.mxu0 0.0
      %822 = vmatmul.mubr.f32.gmra.mrb[0].mxu0 %v746
      %v823 = vpop.f32.mrb[0].mxu0
      %v824 = vadd.f32 %v736, %v823
      %v825 = vpop.f32.mrb[0].mxu0
      %826 = vdwg.mxu0
      %vm827 = vcmask 130048
      %v828 = vsel %vm827, %v819, -inf
      %829 = vmax.xlane.f32.xlu0 %v828
      %v830 = vpop.xlane.xlu0 %829
      %v831 = vsel %vm827, %v824, -inf
      %832 = vmax.xlane.f32.xlu0 %v831
      %v833 = vpop.xlane.xlu0 %832
      %v834 = vsub.f32 %v819, %v830
      %v835 = vsub.f32 %v824, %v833
      %v836 = vmul.f32 %v834, 1.442695
      %v837 = vpow.pop %v836
      %v838 = vmul.f32 %v835, 1.442695
      %v839 = vpow.pop %v838
      %v840 = vsel %vm827, %v837, 0.0
      %841 = vadd.xlane.f32.xlu0 %v840
      %v842 = vpop.xlane.xlu0 %841
      %v843 = vsel %vm827, %v839, 0.0
      %844 = vadd.xlane.f32.xlu0 %v843
      %v845 = vpop.xlane.xlu0 %844
      %v846 = vrcp.pop %v842
      %v847 = vmul.f32 %v837, %v846
      %v848 = vrcp.pop %v845
      %v849 = vmul.f32 %v839, %v848
      %850 = vrot.lane.b32.xlu0 %v722, 64
      %v851 = vpop.permute.xlu0 %850
      %852 = vrot.lane.b32.xlu0 %v727, 64
      %v853 = vpop.permute.xlu0 %852
      %v857 = vsel %vm827, %v847, 0
      %v860 = vsel %vm827, %v849, 0
      %862 = vmatprep.subr.mxu0 0.0
      %863 = vmatpush1.msra.mxu0 %v851
      %864 = vmatprep.subr.mxu0 0.0
      %865 = vmatpush1.msra.mxu0 %v853
      %866 = vmatprep.subr.mxu0 0.0
      %867 = vmatpush1.msra.mxu0 0.0
      %868 = vmatprep.subr.mxu0 0.0
      %869 = vmatpush1.msra.mxu0 0.0
      %870 = vmatprep.subr.mxu0 0.0
      %871 = vmatpush1.msra.mxu0 0.0
      %872 = vmatprep.subr.mxu0 0.0
      %873 = vmatpush1.msra.mxu0 0.0
      %874 = vmatprep.subr.mxu0 0.0
      %875 = vmatpush1.msra.mxu0 0.0
      %876 = vmatprep.subr.mxu0 0.0
      %877 = vmatpush1.msra.mxu0 0.0
      %878 = vmatprep.subr.mxu0 0.0
      %879 = vmatpush1.msra.mxu0 0.0
      %880 = vmatprep.subr.mxu0 0.0
      %881 = vmatpush1.msra.mxu0 0.0
      %882 = vmatprep.subr.mxu0 0.0
      %883 = vmatpush1.msra.mxu0 0.0
      %884 = vmatprep.subr.mxu0 0.0
      %885 = vmatpush1.msra.mxu0 0.0
      %886 = vmatprep.subr.mxu0 0.0
      %887 = vmatpush1.msra.mxu0 0.0
      %888 = vmatprep.subr.mxu0 0.0
      %889 = vmatpush1.msra.mxu0 0.0
      %890 = vmatprep.subr.mxu0 0.0
      %891 = vmatpush1.msra.mxu0 0.0
      %892 = vmatprep.subr.mxu0 0.0
      %893 = vmatpush1.msra.mxu0 0.0
      %894 = vmatprep.subr.mxu0 0.0
      %895 = vmatpush1.msra.mxu0 0.0
      %896 = vmatprep.subr.mxu0 0.0
      %897 = vmatpush1.msra.mxu0 0.0
      %898 = vmatprep.subr.mxu0 0.0
      %899 = vmatpush1.msra.mxu0 0.0
      %900 = vmatprep.subr.mxu0 0.0
      %901 = vmatpush1.msra.mxu0 0.0
      %902 = vmatprep.subr.mxu0 0.0
      %903 = vmatpush1.msra.mxu0 0.0
      %904 = vmatprep.subr.mxu0 0.0
      %905 = vmatpush1.msra.mxu0 0.0
      %906 = vmatprep.subr.mxu0 0.0
      %907 = vmatpush1.msra.mxu0 0.0
      %908 = vmatprep.subr.mxu0 0.0
      %909 = vmatpush1.msra.mxu0 0.0
      %910 = vmatprep.subr.mxu0 0.0
      %911 = vmatpush1.msra.mxu0 0.0
      %912 = vmatprep.subr.mxu0 0.0
      %913 = vmatpush1.msra.mxu0 0.0
      %914 = vmatprep.subr.mxu0 0.0
      %915 = vmatpush1.msra.mxu0 0.0
      %916 = vmatprep.subr.mxu0 0.0
      %917 = vmatpush1.msra.mxu0 0.0
      %918 = vmatprep.subr.mxu0 0.0
      %919 = vmatpush1.msra.mxu0 0.0
      %920 = vmatprep.subr.mxu0 0.0
      %921 = vmatpush1.msra.mxu0 0.0
      %922 = vmatprep.subr.mxu0 0.0
      %923 = vmatpush1.msra.mxu0 0.0
      %924 = vmatprep.subr.mxu0 0.0
      %925 = vmatpush1.msra.mxu0 0.0
      %926 = vmatprep.mubr.f32.mxu0 0.0
      %927 = vmatmul.mubr.f32.gmra.mrb[0].mxu0 %v857
      %v928 = vpop.f32.mrb[0].mxu0
      %v929 = vadd.f32 0.0, %v928
      %v930 = vpop.f32.mrb[0].mxu0
      %931 = vmatprep.mubr.f32.mxu0 0.0
      %932 = vmatmul.mubr.f32.gmra.mrb[0].mxu0 %v860
      %v933 = vpop.f32.mrb[0].mxu0
      %v934 = vadd.f32 0.0, %v933
      %v935 = vpop.f32.mrb[0].mxu0
      %936 = vdwg.mxu0
      %937 = vrot.lane.b32.xlu0 %v722, 120
      %v938 = vpop.permute.xlu0 %937
      %939 = vrot.lane.b32.xlu0 %v727, 120
      %v940 = vpop.permute.xlu0 %939
      %941 = vrot.lane.b32.xlu0 %v722, 88
      %v942 = vpop.permute.xlu0 %941
      %943 = vrot.lane.b32.xlu0 %v727, 88
      %v944 = vpop.permute.xlu0 %943
      %v945 = vsel %vm743, %v938, 0
      %v947 = vsel %vm743, %v940, 0
      %v949 = vsel %vm743, %v942, 0
      %v951 = vsel %vm743, %v944, 0
      %953 = vmatprep.subr.mxu0 0.0
      %954 = vmatpush1.xpose.msra.mxu0 %v949
      %955 = vmatprep.subr.mxu0 0.0
      %956 = vmatpush1.xpose.msra.mxu0 %v951
      %957 = vmatprep.subr.mxu0 0.0
      %958 = vmatpush1.xpose.msra.mxu0 0.0
      %959 = vmatprep.subr.mxu0 0.0
      %960 = vmatpush1.xpose.msra.mxu0 0.0
      %961 = vmatprep.subr.mxu0 0.0
      %962 = vmatpush1.xpose.msra.mxu0 0.0
      %963 = vmatprep.subr.mxu0 0.0
      %964 = vmatpush1.xpose.msra.mxu0 0.0
      %965 = vmatprep.subr.mxu0 0.0
      %966 = vmatpush1.xpose.msra.mxu0 0.0
      %967 = vmatprep.subr.mxu0 0.0
      %968 = vmatpush1.xpose.msra.mxu0 0.0
      %969 = vmatprep.subr.mxu0 0.0
      %970 = vmatpush1.xpose.msra.mxu0 0.0
      %971 = vmatprep.subr.mxu0 0.0
      %972 = vmatpush1.xpose.msra.mxu0 0.0
      %973 = vmatprep.subr.mxu0 0.0
      %974 = vmatpush1.xpose.msra.mxu0 0.0
      %975 = vmatprep.subr.mxu0 0.0
      %976 = vmatpush1.xpose.msra.mxu0 0.0
      %977 = vmatprep.subr.mxu0 0.0
      %978 = vmatpush1.xpose.msra.mxu0 0.0
      %979 = vmatprep.subr.mxu0 0.0
      %980 = vmatpush1.xpose.msra.mxu0 0.0
      %981 = vmatprep.subr.mxu0 0.0
      %982 = vmatpush1.xpose.msra.mxu0 0.0
      %983 = vmatprep.subr.mxu0 0.0
      %984 = vmatpush1.xpose.msra.mxu0 0.0
      %985 = vmatprep.subr.mxu0 0.0
      %986 = vmatpush1.xpose.msra.mxu0 0.0
      %987 = vmatprep.subr.mxu0 0.0
      %988 = vmatpush1.xpose.msra.mxu0 0.0
      %989 = vmatprep.subr.mxu0 0.0
      %990 = vmatpush1.xpose.msra.mxu0 0.0
      %991 = vmatprep.subr.mxu0 0.0
      %992 = vmatpush1.xpose.msra.mxu0 0.0
      %993 = vmatprep.subr.mxu0 0.0
      %994 = vmatpush1.xpose.msra.mxu0 0.0
      %995 = vmatprep.subr.mxu0 0.0
      %996 = vmatpush1.xpose.msra.mxu0 0.0
      %997 = vmatprep.subr.mxu0 0.0
      %998 = vmatpush1.xpose.msra.mxu0 0.0
      %999 = vmatprep.subr.mxu0 0.0
      %1000 = vmatpush1.xpose.msra.mxu0 0.0
      %1001 = vmatprep.subr.mxu0 0.0
      %1002 = vmatpush1.xpose.msra.mxu0 0.0
      %1003 = vmatprep.subr.mxu0 0.0
      %1004 = vmatpush1.xpose.msra.mxu0 0.0
      %1005 = vmatprep.subr.mxu0 0.0
      %1006 = vmatpush1.xpose.msra.mxu0 0.0
      %1007 = vmatprep.subr.mxu0 0.0
      %1008 = vmatpush1.xpose.msra.mxu0 0.0
      %1009 = vmatprep.subr.mxu0 0.0
      %1010 = vmatpush1.xpose.msra.mxu0 0.0
      %1011 = vmatprep.subr.mxu0 0.0
      %1012 = vmatpush1.xpose.msra.mxu0 0.0
      %1013 = vmatprep.subr.mxu0 0.0
      %1014 = vmatpush1.xpose.msra.mxu0 0.0
      %1015 = vmatprep.subr.mxu0 0.0
      %1016 = vmatpush1.xpose.msra.mxu0 0.0
      %1017 = vmatprep.mubr.f32.mxu0 0.0
      %1018 = vmatmul.mubr.f32.gmra.mrb[0].mxu0 %v945
      %v1019 = vpop.f32.mrb[0].mxu0
      %v1020 = vadd.f32 %v735, %v1019
      %v1021 = vpop.f32.mrb[0].mxu0
      %1022 = vmatprep.mubr.f32.mxu0 0.0
      %1023 = vmatmul.mubr.f32.gmra.mrb[0].mxu0 %v947
      %v1024 = vpop.f32.mrb[0].mxu0
      %v1025 = vadd.f32 %v736, %v1024
      %v1026 = vpop.f32.mrb[0].mxu0
      %1027 = vdwg.mxu0
      %v1028 = vsel %vm827, %v1020, -inf
      %1029 = vmax.xlane.f32.xlu0 %v1028
      %v1030 = vpop.xlane.xlu0 %1029
      %v1031 = vsel %vm827, %v1025, -inf
      %1032 = vmax.xlane.f32.xlu0 %v1031
      %v1033 = vpop.xlane.xlu0 %1032
      %v1034 = vsub.f32 %v1020, %v1030
      %v1035 = vsub.f32 %v1025, %v1033
      %v1036 = vmul.f32 %v1034, 1.442695
      %v1037 = vpow.pop %v1036
      %v1038 = vmul.f32 %v1035, 1.442695
      %v1039 = vpow.pop %v1038
      %v1040 = vsel %vm827, %v1037, 0.0
      %1041 = vadd.xlane.f32.xlu0 %v1040
      %v1042 = vpop.xlane.xlu0 %1041
      %v1043 = vsel %vm827, %v1039, 0.0
      %1044 = vadd.xlane.f32.xlu0 %v1043
      %v1045 = vpop.xlane.xlu0 %1044
      %v1046 = vrcp.pop %v1042
      %v1047 = vmul.f32 %v1037, %v1046
      %v1048 = vrcp.pop %v1045
      %v1049 = vmul.f32 %v1039, %v1048
      %1050 = vrot.lane.b32.xlu0 %v722, 56
      %v1051 = vpop.permute.xlu0 %1050
      %1052 = vrot.lane.b32.xlu0 %v727, 56
      %v1053 = vpop.permute.xlu0 %1052
      %v1057 = vsel %vm827, %v1047, 0
      %v1060 = vsel %vm827, %v1049, 0
      %1062 = vmatprep.subr.mxu0 0.0
      %1063 = vmatpush1.msra.mxu0 %v1051
      %1064 = vmatprep.subr.mxu0 0.0
      %1065 = vmatpush1.msra.mxu0 %v1053
      %1066 = vmatprep.subr.mxu0 0.0
      %1067 = vmatpush1.msra.mxu0 0.0
      %1068 = vmatprep.subr.mxu0 0.0
      %1069 = vmatpush1.msra.mxu0 0.0
      %1070 = vmatprep.subr.mxu0 0.0
      %1071 = vmatpush1.msra.mxu0 0.0
      %1072 = vmatprep.subr.mxu0 0.0
      %1073 = vmatpush1.msra.mxu0 0.0
      %1074 = vmatprep.subr.mxu0 0.0
      %1075 = vmatpush1.msra.mxu0 0.0
      %1076 = vmatprep.subr.mxu0 0.0
      %1077 = vmatpush1.msra.mxu0 0.0
      %1078 = vmatprep.subr.mxu0 0.0
      %1079 = vmatpush1.msra.mxu0 0.0
      %1080 = vmatprep.subr.mxu0 0.0
      %1081 = vmatpush1.msra.mxu0 0.0
      %1082 = vmatprep.subr.mxu0 0.0
      %1083 = vmatpush1.msra.mxu0 0.0
      %1084 = vmatprep.subr.mxu0 0.0
      %1085 = vmatpush1.msra.mxu0 0.0
      %1086 = vmatprep.subr.mxu0 0.0
      %1087 = vmatpush1.msra.mxu0 0.0
      %1088 = vmatprep.subr.mxu0 0.0
      %1089 = vmatpush1.msra.mxu0 0.0
      %1090 = vmatprep.subr.mxu0 0.0
      %1091 = vmatpush1.msra.mxu0 0.0
      %1092 = vmatprep.subr.mxu0 0.0
      %1093 = vmatpush1.msra.mxu0 0.0
      %1094 = vmatprep.subr.mxu0 0.0
      %1095 = vmatpush1.msra.mxu0 0.0
      %1096 = vmatprep.subr.mxu0 0.0
      %1097 = vmatpush1.msra.mxu0 0.0
      %1098 = vmatprep.subr.mxu0 0.0
      %1099 = vmatpush1.msra.mxu0 0.0
      %1100 = vmatprep.subr.mxu0 0.0
      %1101 = vmatpush1.msra.mxu0 0.0
      %1102 = vmatprep.subr.mxu0 0.0
      %1103 = vmatpush1.msra.mxu0 0.0
      %1104 = vmatprep.subr.mxu0 0.0
      %1105 = vmatpush1.msra.mxu0 0.0
      %1106 = vmatprep.subr.mxu0 0.0
      %1107 = vmatpush1.msra.mxu0 0.0
      %1108 = vmatprep.subr.mxu0 0.0
      %1109 = vmatpush1.msra.mxu0 0.0
      %1110 = vmatprep.subr.mxu0 0.0
      %1111 = vmatpush1.msra.mxu0 0.0
      %1112 = vmatprep.subr.mxu0 0.0
      %1113 = vmatpush1.msra.mxu0 0.0
      %1114 = vmatprep.subr.mxu0 0.0
      %1115 = vmatpush1.msra.mxu0 0.0
      %1116 = vmatprep.subr.mxu0 0.0
      %1117 = vmatpush1.msra.mxu0 0.0
      %1118 = vmatprep.subr.mxu0 0.0
      %1119 = vmatpush1.msra.mxu0 0.0
      %1120 = vmatprep.subr.mxu0 0.0
      %1121 = vmatpush1.msra.mxu0 0.0
      %1122 = vmatprep.subr.mxu0 0.0
      %1123 = vmatpush1.msra.mxu0 0.0
      %1124 = vmatprep.subr.mxu0 0.0
      %1125 = vmatpush1.msra.mxu0 0.0
      %1126 = vmatprep.mubr.f32.mxu0 0.0
      %1127 = vmatmul.mubr.f32.gmra.mrb[0].mxu0 %v1057
      %v1128 = vpop.f32.mrb[0].mxu0
      %v1129 = vadd.f32 0.0, %v1128
      %v1130 = vpop.f32.mrb[0].mxu0
      %1131 = vmatprep.mubr.f32.mxu0 0.0
      %1132 = vmatmul.mubr.f32.gmra.mrb[0].mxu0 %v1060
      %v1133 = vpop.f32.mrb[0].mxu0
      %v1134 = vadd.f32 0.0, %v1133
      %v1135 = vpop.f32.mrb[0].mxu0
      %1136 = vdwg.mxu0
      %v1138 = vsel %vm743, %v1129, 0
      %v1141 = vsel %vm743, %v1134, 0
      %1143 = vmatprep.subr.mxu0 0.0
      %1144 = vmatpush1.msra.mxu0 %v732
      %1145 = vmatprep.subr.mxu0 0.0
      %1146 = vmatpush1.msra.mxu0 0.0
      %1147 = vmatprep.subr.mxu0 0.0
      %1148 = vmatpush1.msra.mxu0 0.0
      %1149 = vmatprep.subr.mxu0 0.0
      %1150 = vmatpush1.msra.mxu0 0.0
      %1151 = vmatprep.subr.mxu0 0.0
      %1152 = vmatpush1.msra.mxu0 0.0
      %1153 = vmatprep.subr.mxu0 0.0
      %1154 = vmatpush1.msra.mxu0 0.0
      %1155 = vmatprep.subr.mxu0 0.0
      %1156 = vmatpush1.msra.mxu0 0.0
      %1157 = vmatprep.subr.mxu0 0.0
      %1158 = vmatpush1.msra.mxu0 0.0
      %1159 = vmatprep.subr.mxu0 0.0
      %1160 = vmatpush1.msra.mxu0 0.0
      %1161 = vmatprep.subr.mxu0 0.0
      %1162 = vmatpush1.msra.mxu0 0.0
      %1163 = vmatprep.subr.mxu0 0.0
      %1164 = vmatpush1.msra.mxu0 0.0
      %1165 = vmatprep.subr.mxu0 0.0
      %1166 = vmatpush1.msra.mxu0 0.0
      %1167 = vmatprep.subr.mxu0 0.0
      %1168 = vmatpush1.msra.mxu0 0.0
      %1169 = vmatprep.subr.mxu0 0.0
      %1170 = vmatpush1.msra.mxu0 0.0
      %1171 = vmatprep.subr.mxu0 0.0
      %1172 = vmatpush1.msra.mxu0 0.0
      %1173 = vmatprep.subr.mxu0 0.0
      %1174 = vmatpush1.msra.mxu0 0.0
      %1175 = vmatprep.subr.mxu0 0.0
      %1176 = vmatpush1.msra.mxu0 0.0
      %1177 = vmatprep.subr.mxu0 0.0
      %1178 = vmatpush1.msra.mxu0 0.0
      %1179 = vmatprep.subr.mxu0 0.0
      %1180 = vmatpush1.msra.mxu0 0.0
      %1181 = vmatprep.subr.mxu0 0.0
      %1182 = vmatpush1.msra.mxu0 0.0
      %1183 = vmatprep.subr.mxu0 0.0
      %1184 = vmatpush1.msra.mxu0 0.0
      %1185 = vmatprep.subr.mxu0 0.0
      %1186 = vmatpush1.msra.mxu0 0.0
      %1187 = vmatprep.subr.mxu0 0.0
      %1188 = vmatpush1.msra.mxu0 0.0
      %1189 = vmatprep.subr.mxu0 0.0
      %1190 = vmatpush1.msra.mxu0 0.0
      %1191 = vmatprep.subr.mxu0 0.0
      %1192 = vmatpush1.msra.mxu0 0.0
      %1193 = vmatprep.subr.mxu0 0.0
      %1194 = vmatpush1.msra.mxu0 0.0
      %1195 = vmatprep.subr.mxu0 0.0
      %1196 = vmatpush1.msra.mxu0 0.0
      %1197 = vmatprep.subr.mxu0 0.0
      %1198 = vmatpush1.msra.mxu0 0.0
      %1199 = vmatprep.subr.mxu0 0.0
      %1200 = vmatpush1.msra.mxu0 0.0
      %1201 = vmatprep.subr.mxu0 0.0
      %1202 = vmatpush1.msra.mxu0 0.0
      %1203 = vmatprep.subr.mxu0 0.0
      %1204 = vmatpush1.msra.mxu0 0.0
      %1205 = vmatprep.subr.mxu0 0.0
      %1206 = vmatpush1.msra.mxu0 0.0
      %1207 = vmatprep.mubr.f32.mxu0 0.0
      %1208 = vmatmul.mubr.f32.gmra.mrb[0].mxu0 %v1138
      %v1209 = vpop.f32.mrb[0].mxu0
      %v1210 = vadd.f32 0.0, %v1209
      %v1211 = vpop.f32.mrb[0].mxu0
      %1212 = vmatprep.mubr.f32.mxu0 0.0
      %1213 = vmatmul.mubr.f32.gmra.mrb[0].mxu0 %v1141
      %v1214 = vpop.f32.mrb[0].mxu0
      %v1215 = vadd.f32 0.0, %v1214
      %v1216 = vpop.f32.mrb[0].mxu0
      %1217 = vdwg.mxu0
      %v1219 = vsel %vm743, %v929, 0
      %v1222 = vsel %vm743, %v934, 0
      %1224 = vmatprep.subr.mxu0 0.0
      %1225 = vmatpush1.msra.mxu0 %v731
      %1226 = vmatprep.subr.mxu0 0.0
      %1227 = vmatpush1.msra.mxu0 0.0
      %1228 = vmatprep.subr.mxu0 0.0
      %1229 = vmatpush1.msra.mxu0 0.0
      %1230 = vmatprep.subr.mxu0 0.0
      %1231 = vmatpush1.msra.mxu0 0.0
      %1232 = vmatprep.subr.mxu0 0.0
      %1233 = vmatpush1.msra.mxu0 0.0
      %1234 = vmatprep.subr.mxu0 0.0
      %1235 = vmatpush1.msra.mxu0 0.0
      %1236 = vmatprep.subr.mxu0 0.0
      %1237 = vmatpush1.msra.mxu0 0.0
      %1238 = vmatprep.subr.mxu0 0.0
      %1239 = vmatpush1.msra.mxu0 0.0
      %1240 = vmatprep.subr.mxu0 0.0
      %1241 = vmatpush1.msra.mxu0 0.0
      %1242 = vmatprep.subr.mxu0 0.0
      %1243 = vmatpush1.msra.mxu0 0.0
      %1244 = vmatprep.subr.mxu0 0.0
      %1245 = vmatpush1.msra.mxu0 0.0
      %1246 = vmatprep.subr.mxu0 0.0
      %1247 = vmatpush1.msra.mxu0 0.0
      %1248 = vmatprep.subr.mxu0 0.0
      %1249 = vmatpush1.msra.mxu0 0.0
      %1250 = vmatprep.subr.mxu0 0.0
      %1251 = vmatpush1.msra.mxu0 0.0
      %1252 = vmatprep.subr.mxu0 0.0
      %1253 = vmatpush1.msra.mxu0 0.0
      %1254 = vmatprep.subr.mxu0 0.0
      %1255 = vmatpush1.msra.mxu0 0.0
      %1256 = vmatprep.subr.mxu0 0.0
      %1257 = vmatpush1.msra.mxu0 0.0
      %1258 = vmatprep.subr.mxu0 0.0
      %1259 = vmatpush1.msra.mxu0 0.0
      %1260 = vmatprep.subr.mxu0 0.0
      %1261 = vmatpush1.msra.mxu0 0.0
      %1262 = vmatprep.subr.mxu0 0.0
      %1263 = vmatpush1.msra.mxu0 0.0
      %1264 = vmatprep.subr.mxu0 0.0
      %1265 = vmatpush1.msra.mxu0 0.0
      %1266 = vmatprep.subr.mxu0 0.0
      %1267 = vmatpush1.msra.mxu0 0.0
      %1268 = vmatprep.subr.mxu0 0.0
      %1269 = vmatpush1.msra.mxu0 0.0
      %1270 = vmatprep.subr.mxu0 0.0
      %1271 = vmatpush1.msra.mxu0 0.0
      %1272 = vmatprep.subr.mxu0 0.0
      %1273 = vmatpush1.msra.mxu0 0.0
      %1274 = vmatprep.subr.mxu0 0.0
      %1275 = vmatpush1.msra.mxu0 0.0
      %1276 = vmatprep.subr.mxu0 0.0
      %1277 = vmatpush1.msra.mxu0 0.0
      %1278 = vmatprep.subr.mxu0 0.0
      %1279 = vmatpush1.msra.mxu0 0.0
      %1280 = vmatprep.subr.mxu0 0.0
      %1281 = vmatpush1.msra.mxu0 0.0
      %1282 = vmatprep.subr.mxu0 0.0
      %1283 = vmatpush1.msra.mxu0 0.0
      %1284 = vmatprep.subr.mxu0 0.0
      %1285 = vmatpush1.msra.mxu0 0.0
      %1286 = vmatprep.subr.mxu0 0.0
      %1287 = vmatpush1.msra.mxu0 0.0
      %1288 = vmatprep.mubr.f32.mxu0 0.0
      %1289 = vmatmul.mubr.f32.gmra.mrb[0].mxu0 %v1219
      %v1290 = vpop.f32.mrb[0].mxu0
      %v1291 = vadd.f32 %v1210, %v1290
      %v1292 = vpop.f32.mrb[0].mxu0
      %1293 = vmatprep.mubr.f32.mxu0 0.0
      %1294 = vmatmul.mubr.f32.gmra.mrb[0].mxu0 %v1222
      %v1295 = vpop.f32.mrb[0].mxu0
      %v1296 = vadd.f32 %v1215, %v1295
      %v1297 = vpop.f32.mrb[0].mxu0
      %1298 = vdwg.mxu0
      %1299 = vrot.lane.b32.xlu0 %v722, 112
      %v1300 = vpop.permute.xlu0 %1299
      %1301 = vrot.lane.b32.xlu0 %v727, 112
      %v1302 = vpop.permute.xlu0 %1301
      %1303 = vrot.lane.b32.xlu0 %v722, 80
      %v1304 = vpop.permute.xlu0 %1303
      %1305 = vrot.lane.b32.xlu0 %v727, 80
      %v1306 = vpop.permute.xlu0 %1305
      %v1307 = vsel %vm743, %v1300, 0
      %v1309 = vsel %vm743, %v1302, 0
      %v1311 = vsel %vm743, %v1304, 0
      %v1313 = vsel %vm743, %v1306, 0
      %1315 = vmatprep.subr.mxu0 0.0
      %1316 = vmatpush1.xpose.msra.mxu0 %v1311
      %1317 = vmatprep.subr.mxu0 0.0
      %1318 = vmatpush1.xpose.msra.mxu0 %v1313
      %1319 = vmatprep.subr.mxu0 0.0
      %1320 = vmatpush1.xpose.msra.mxu0 0.0
      %1321 = vmatprep.subr.mxu0 0.0
      %1322 = vmatpush1.xpose.msra.mxu0 0.0
      %1323 = vmatprep.subr.mxu0 0.0
      %1324 = vmatpush1.xpose.msra.mxu0 0.0
      %1325 = vmatprep.subr.mxu0 0.0
      %1326 = vmatpush1.xpose.msra.mxu0 0.0
      %1327 = vmatprep.subr.mxu0 0.0
      %1328 = vmatpush1.xpose.msra.mxu0 0.0
      %1329 = vmatprep.subr.mxu0 0.0
      %1330 = vmatpush1.xpose.msra.mxu0 0.0
      %1331 = vmatprep.subr.mxu0 0.0
      %1332 = vmatpush1.xpose.msra.mxu0 0.0
      %1333 = vmatprep.subr.mxu0 0.0
      %1334 = vmatpush1.xpose.msra.mxu0 0.0
      %1335 = vmatprep.subr.mxu0 0.0
      %1336 = vmatpush1.xpose.msra.mxu0 0.0
      %1337 = vmatprep.subr.mxu0 0.0
      %1338 = vmatpush1.xpose.msra.mxu0 0.0
      %1339 = vmatprep.subr.mxu0 0.0
      %1340 = vmatpush1.xpose.msra.mxu0 0.0
      %1341 = vmatprep.subr.mxu0 0.0
      %1342 = vmatpush1.xpose.msra.mxu0 0.0
      %1343 = vmatprep.subr.mxu0 0.0
      %1344 = vmatpush1.xpose.msra.mxu0 0.0
      %1345 = vmatprep.subr.mxu0 0.0
      %1346 = vmatpush1.xpose.msra.mxu0 0.0
      %1347 = vmatprep.subr.mxu0 0.0
      %1348 = vmatpush1.xpose.msra.mxu0 0.0
      %1349 = vmatprep.subr.mxu0 0.0
      %1350 = vmatpush1.xpose.msra.mxu0 0.0
      %1351 = vmatprep.subr.mxu0 0.0
      %1352 = vmatpush1.xpose.msra.mxu0 0.0
      %1353 = vmatprep.subr.mxu0 0.0
      %1354 = vmatpush1.xpose.msra.mxu0 0.0
      %1355 = vmatprep.subr.mxu0 0.0
      %1356 = vmatpush1.xpose.msra.mxu0 0.0
      %1357 = vmatprep.subr.mxu0 0.0
      %1358 = vmatpush1.xpose.msra.mxu0 0.0
      %1359 = vmatprep.subr.mxu0 0.0
      %1360 = vmatpush1.xpose.msra.mxu0 0.0
      %1361 = vmatprep.subr.mxu0 0.0
      %1362 = vmatpush1.xpose.msra.mxu0 0.0
      %1363 = vmatprep.subr.mxu0 0.0
      %1364 = vmatpush1.xpose.msra.mxu0 0.0
      %1365 = vmatprep.subr.mxu0 0.0
      %1366 = vmatpush1.xpose.msra.mxu0 0.0
      %1367 = vmatprep.subr.mxu0 0.0
      %1368 = vmatpush1.xpose.msra.mxu0 0.0
      %1369 = vmatprep.subr.mxu0 0.0
      %1370 = vmatpush1.xpose.msra.mxu0 0.0
      %1371 = vmatprep.subr.mxu0 0.0
      %1372 = vmatpush1.xpose.msra.mxu0 0.0
      %1373 = vmatprep.subr.mxu0 0.0
      %1374 = vmatpush1.xpose.msra.mxu0 0.0
      %1375 = vmatprep.subr.mxu0 0.0
      %1376 = vmatpush1.xpose.msra.mxu0 0.0
      %1377 = vmatprep.subr.mxu0 0.0
      %1378 = vmatpush1.xpose.msra.mxu0 0.0
      %1379 = vmatprep.mubr.f32.mxu0 0.0
      %1380 = vmatmul.mubr.f32.gmra.mrb[0].mxu0 %v1307
      %v1381 = vpop.f32.mrb[0].mxu0
      %v1382 = vadd.f32 %v735, %v1381
      %v1383 = vpop.f32.mrb[0].mxu0
      %1384 = vmatprep.mubr.f32.mxu0 0.0
      %1385 = vmatmul.mubr.f32.gmra.mrb[0].mxu0 %v1309
      %v1386 = vpop.f32.mrb[0].mxu0
      %v1387 = vadd.f32 %v736, %v1386
      %v1388 = vpop.f32.mrb[0].mxu0
      %1389 = vdwg.mxu0
      %v1390 = vsel %vm827, %v1382, -inf
      %1391 = vmax.xlane.f32.xlu0 %v1390
      %v1392 = vpop.xlane.xlu0 %1391
      %v1393 = vsel %vm827, %v1387, -inf
      %1394 = vmax.xlane.f32.xlu0 %v1393
      %v1395 = vpop.xlane.xlu0 %1394
      %v1396 = vsub.f32 %v1382, %v1392
      %v1397 = vsub.f32 %v1387, %v1395
      %v1398 = vmul.f32 %v1396, 1.442695
      %v1399 = vpow.pop %v1398
      %v1400 = vmul.f32 %v1397, 1.442695
      %v1401 = vpow.pop %v1400
      %v1402 = vsel %vm827, %v1399, 0.0
      %1403 = vadd.xlane.f32.xlu0 %v1402
      %v1404 = vpop.xlane.xlu0 %1403
      %v1405 = vsel %vm827, %v1401, 0.0
      %1406 = vadd.xlane.f32.xlu0 %v1405
      %v1407 = vpop.xlane.xlu0 %1406
      %v1408 = vrcp.pop %v1404
      %v1409 = vmul.f32 %v1399, %v1408
      %v1410 = vrcp.pop %v1407
      %v1411 = vmul.f32 %v1401, %v1410
      %1412 = vrot.lane.b32.xlu0 %v722, 48
      %v1413 = vpop.permute.xlu0 %1412
      %1414 = vrot.lane.b32.xlu0 %v727, 48
      %v1415 = vpop.permute.xlu0 %1414
      %v1419 = vsel %vm827, %v1409, 0
      %v1422 = vsel %vm827, %v1411, 0
      %1424 = vmatprep.subr.mxu0 0.0
      %1425 = vmatpush1.msra.mxu0 %v1413
      %1426 = vmatprep.subr.mxu0 0.0
      %1427 = vmatpush1.msra.mxu0 %v1415
      %1428 = vmatprep.subr.mxu0 0.0
      %1429 = vmatpush1.msra.mxu0 0.0
      %1430 = vmatprep.subr.mxu0 0.0
      %1431 = vmatpush1.msra.mxu0 0.0
      %1432 = vmatprep.subr.mxu0 0.0
      %1433 = vmatpush1.msra.mxu0 0.0
      %1434 = vmatprep.subr.mxu0 0.0
      %1435 = vmatpush1.msra.mxu0 0.0
      %1436 = vmatprep.subr.mxu0 0.0
      %1437 = vmatpush1.msra.mxu0 0.0
      %1438 = vmatprep.subr.mxu0 0.0
      %1439 = vmatpush1.msra.mxu0 0.0
      %1440 = vmatprep.subr.mxu0 0.0
      %1441 = vmatpush1.msra.mxu0 0.0
      %1442 = vmatprep.subr.mxu0 0.0
      %1443 = vmatpush1.msra.mxu0 0.0
      %1444 = vmatprep.subr.mxu0 0.0
      %1445 = vmatpush1.msra.mxu0 0.0
      %1446 = vmatprep.subr.mxu0 0.0
      %1447 = vmatpush1.msra.mxu0 0.0
      %1448 = vmatprep.subr.mxu0 0.0
      %1449 = vmatpush1.msra.mxu0 0.0
      %1450 = vmatprep.subr.mxu0 0.0
      %1451 = vmatpush1.msra.mxu0 0.0
      %1452 = vmatprep.subr.mxu0 0.0
      %1453 = vmatpush1.msra.mxu0 0.0
      %1454 = vmatprep.subr.mxu0 0.0
      %1455 = vmatpush1.msra.mxu0 0.0
      %1456 = vmatprep.subr.mxu0 0.0
      %1457 = vmatpush1.msra.mxu0 0.0
      %1458 = vmatprep.subr.mxu0 0.0
      %1459 = vmatpush1.msra.mxu0 0.0
      %1460 = vmatprep.subr.mxu0 0.0
      %1461 = vmatpush1.msra.mxu0 0.0
      %1462 = vmatprep.subr.mxu0 0.0
      %1463 = vmatpush1.msra.mxu0 0.0
      %1464 = vmatprep.subr.mxu0 0.0
      %1465 = vmatpush1.msra.mxu0 0.0
      %1466 = vmatprep.subr.mxu0 0.0
      %1467 = vmatpush1.msra.mxu0 0.0
      %1468 = vmatprep.subr.mxu0 0.0
      %1469 = vmatpush1.msra.mxu0 0.0
      %1470 = vmatprep.subr.mxu0 0.0
      %1471 = vmatpush1.msra.mxu0 0.0
      %1472 = vmatprep.subr.mxu0 0.0
      %1473 = vmatpush1.msra.mxu0 0.0
      %1474 = vmatprep.subr.mxu0 0.0
      %1475 = vmatpush1.msra.mxu0 0.0
      %1476 = vmatprep.subr.mxu0 0.0
      %1477 = vmatpush1.msra.mxu0 0.0
      %1478 = vmatprep.subr.mxu0 0.0
      %1479 = vmatpush1.msra.mxu0 0.0
      %1480 = vmatprep.subr.mxu0 0.0
      %1481 = vmatpush1.msra.mxu0 0.0
      %1482 = vmatprep.subr.mxu0 0.0
      %1483 = vmatpush1.msra.mxu0 0.0
      %1484 = vmatprep.subr.mxu0 0.0
      %1485 = vmatpush1.msra.mxu0 0.0
      %1486 = vmatprep.subr.mxu0 0.0
      %1487 = vmatpush1.msra.mxu0 0.0
      %1488 = vmatprep.mubr.f32.mxu0 0.0
      %1489 = vmatmul.mubr.f32.gmra.mrb[0].mxu0 %v1419
      %v1490 = vpop.f32.mrb[0].mxu0
      %v1491 = vadd.f32 0.0, %v1490
      %v1492 = vpop.f32.mrb[0].mxu0
      %1493 = vmatprep.mubr.f32.mxu0 0.0
      %1494 = vmatmul.mubr.f32.gmra.mrb[0].mxu0 %v1422
      %v1495 = vpop.f32.mrb[0].mxu0
      %v1496 = vadd.f32 0.0, %v1495
      %v1497 = vpop.f32.mrb[0].mxu0
      %1498 = vdwg.mxu0
      %v1500 = vsel %vm743, %v1491, 0
      %v1503 = vsel %vm743, %v1496, 0
      %1505 = vmatprep.subr.mxu0 0.0
      %1506 = vmatpush1.msra.mxu0 %v733
      %1507 = vmatprep.subr.mxu0 0.0
      %1508 = vmatpush1.msra.mxu0 0.0
      %1509 = vmatprep.subr.mxu0 0.0
      %1510 = vmatpush1.msra.mxu0 0.0
      %1511 = vmatprep.subr.mxu0 0.0
      %1512 = vmatpush1.msra.mxu0 0.0
      %1513 = vmatprep.subr.mxu0 0.0
      %1514 = vmatpush1.msra.mxu0 0.0
      %1515 = vmatprep.subr.mxu0 0.0
      %1516 = vmatpush1.msra.mxu0 0.0
      %1517 = vmatprep.subr.mxu0 0.0
      %1518 = vmatpush1.msra.mxu0 0.0
      %1519 = vmatprep.subr.mxu0 0.0
      %1520 = vmatpush1.msra.mxu0 0.0
      %1521 = vmatprep.subr.mxu0 0.0
      %1522 = vmatpush1.msra.mxu0 0.0
      %1523 = vmatprep.subr.mxu0 0.0
      %1524 = vmatpush1.msra.mxu0 0.0
      %1525 = vmatprep.subr.mxu0 0.0
      %1526 = vmatpush1.msra.mxu0 0.0
      %1527 = vmatprep.subr.mxu0 0.0
      %1528 = vmatpush1.msra.mxu0 0.0
      %1529 = vmatprep.subr.mxu0 0.0
      %1530 = vmatpush1.msra.mxu0 0.0
      %1531 = vmatprep.subr.mxu0 0.0
      %1532 = vmatpush1.msra.mxu0 0.0
      %1533 = vmatprep.subr.mxu0 0.0
      %1534 = vmatpush1.msra.mxu0 0.0
      %1535 = vmatprep.subr.mxu0 0.0
      %1536 = vmatpush1.msra.mxu0 0.0
      %1537 = vmatprep.subr.mxu0 0.0
      %1538 = vmatpush1.msra.mxu0 0.0
      %1539 = vmatprep.subr.mxu0 0.0
      %1540 = vmatpush1.msra.mxu0 0.0
      %1541 = vmatprep.subr.mxu0 0.0
      %1542 = vmatpush1.msra.mxu0 0.0
      %1543 = vmatprep.subr.mxu0 0.0
      %1544 = vmatpush1.msra.mxu0 0.0
      %1545 = vmatprep.subr.mxu0 0.0
      %1546 = vmatpush1.msra.mxu0 0.0
      %1547 = vmatprep.subr.mxu0 0.0
      %1548 = vmatpush1.msra.mxu0 0.0
      %1549 = vmatprep.subr.mxu0 0.0
      %1550 = vmatpush1.msra.mxu0 0.0
      %1551 = vmatprep.subr.mxu0 0.0
      %1552 = vmatpush1.msra.mxu0 0.0
      %1553 = vmatprep.subr.mxu0 0.0
      %1554 = vmatpush1.msra.mxu0 0.0
      %1555 = vmatprep.subr.mxu0 0.0
      %1556 = vmatpush1.msra.mxu0 0.0
      %1557 = vmatprep.subr.mxu0 0.0
      %1558 = vmatpush1.msra.mxu0 0.0
      %1559 = vmatprep.subr.mxu0 0.0
      %1560 = vmatpush1.msra.mxu0 0.0
      %1561 = vmatprep.subr.mxu0 0.0
      %1562 = vmatpush1.msra.mxu0 0.0
      %1563 = vmatprep.subr.mxu0 0.0
      %1564 = vmatpush1.msra.mxu0 0.0
      %1565 = vmatprep.subr.mxu0 0.0
      %1566 = vmatpush1.msra.mxu0 0.0
      %1567 = vmatprep.subr.mxu0 0.0
      %1568 = vmatpush1.msra.mxu0 0.0
      %1569 = vmatprep.mubr.f32.mxu0 0.0
      %1570 = vmatmul.mubr.f32.gmra.mrb[0].mxu0 %v1500
      %v1571 = vpop.f32.mrb[0].mxu0
      %v1572 = vadd.f32 0.0, %v1571
      %v1573 = vpop.f32.mrb[0].mxu0
      %1574 = vmatprep.mubr.f32.mxu0 0.0
      %1575 = vmatmul.mubr.f32.gmra.mrb[0].mxu0 %v1503
      %v1576 = vpop.f32.mrb[0].mxu0
      %v1577 = vadd.f32 0.0, %v1576
      %v1578 = vpop.f32.mrb[0].mxu0
      %1579 = vdwg.mxu0
      %v1580 = vadd.f32 %v1291, %v1572
      %v1581 = vadd.f32 %v1296, %v1577
      %1582 = vrot.lane.b32.xlu0 %v722, 104
      %v1583 = vpop.permute.xlu0 %1582
      %1584 = vrot.lane.b32.xlu0 %v727, 104
      %v1585 = vpop.permute.xlu0 %1584
      %1586 = vrot.lane.b32.xlu0 %v722, 72
      %v1587 = vpop.permute.xlu0 %1586
      %1588 = vrot.lane.b32.xlu0 %v727, 72
      %v1589 = vpop.permute.xlu0 %1588
      %v1590 = vsel %vm743, %v1583, 0
      %v1592 = vsel %vm743, %v1585, 0
      %v1594 = vsel %vm743, %v1587, 0
      %v1596 = vsel %vm743, %v1589, 0
      %1598 = vmatprep.subr.mxu0 0.0
      %1599 = vmatpush1.xpose.msra.mxu0 %v1594
      %1600 = vmatprep.subr.mxu0 0.0
      %1601 = vmatpush1.xpose.msra.mxu0 %v1596
      %1602 = vmatprep.subr.mxu0 0.0
      %1603 = vmatpush1.xpose.msra.mxu0 0.0
      %1604 = vmatprep.subr.mxu0 0.0
      %1605 = vmatpush1.xpose.msra.mxu0 0.0
      %1606 = vmatprep.subr.mxu0 0.0
      %1607 = vmatpush1.xpose.msra.mxu0 0.0
      %1608 = vmatprep.subr.mxu0 0.0
      %1609 = vmatpush1.xpose.msra.mxu0 0.0
      %1610 = vmatprep.subr.mxu0 0.0
      %1611 = vmatpush1.xpose.msra.mxu0 0.0
      %1612 = vmatprep.subr.mxu0 0.0
      %1613 = vmatpush1.xpose.msra.mxu0 0.0
      %1614 = vmatprep.subr.mxu0 0.0
      %1615 = vmatpush1.xpose.msra.mxu0 0.0
      %1616 = vmatprep.subr.mxu0 0.0
      %1617 = vmatpush1.xpose.msra.mxu0 0.0
      %1618 = vmatprep.subr.mxu0 0.0
      %1619 = vmatpush1.xpose.msra.mxu0 0.0
      %1620 = vmatprep.subr.mxu0 0.0
      %1621 = vmatpush1.xpose.msra.mxu0 0.0
      %1622 = vmatprep.subr.mxu0 0.0
      %1623 = vmatpush1.xpose.msra.mxu0 0.0
      %1624 = vmatprep.subr.mxu0 0.0
      %1625 = vmatpush1.xpose.msra.mxu0 0.0
      %1626 = vmatprep.subr.mxu0 0.0
      %1627 = vmatpush1.xpose.msra.mxu0 0.0
      %1628 = vmatprep.subr.mxu0 0.0
      %1629 = vmatpush1.xpose.msra.mxu0 0.0
      %1630 = vmatprep.subr.mxu0 0.0
      %1631 = vmatpush1.xpose.msra.mxu0 0.0
      %1632 = vmatprep.subr.mxu0 0.0
      %1633 = vmatpush1.xpose.msra.mxu0 0.0
      %1634 = vmatprep.subr.mxu0 0.0
      %1635 = vmatpush1.xpose.msra.mxu0 0.0
      %1636 = vmatprep.subr.mxu0 0.0
      %1637 = vmatpush1.xpose.msra.mxu0 0.0
      %1638 = vmatprep.subr.mxu0 0.0
      %1639 = vmatpush1.xpose.msra.mxu0 0.0
      %1640 = vmatprep.subr.mxu0 0.0
      %1641 = vmatpush1.xpose.msra.mxu0 0.0
      %1642 = vmatprep.subr.mxu0 0.0
      %1643 = vmatpush1.xpose.msra.mxu0 0.0
      %1644 = vmatprep.subr.mxu0 0.0
      %1645 = vmatpush1.xpose.msra.mxu0 0.0
      %1646 = vmatprep.subr.mxu0 0.0
      %1647 = vmatpush1.xpose.msra.mxu0 0.0
      %1648 = vmatprep.subr.mxu0 0.0
      %1649 = vmatpush1.xpose.msra.mxu0 0.0
      %1650 = vmatprep.subr.mxu0 0.0
      %1651 = vmatpush1.xpose.msra.mxu0 0.0
      %1652 = vmatprep.subr.mxu0 0.0
      %1653 = vmatpush1.xpose.msra.mxu0 0.0
      %1654 = vmatprep.subr.mxu0 0.0
      %1655 = vmatpush1.xpose.msra.mxu0 0.0
      %1656 = vmatprep.subr.mxu0 0.0
      %1657 = vmatpush1.xpose.msra.mxu0 0.0
      %1658 = vmatprep.subr.mxu0 0.0
      %1659 = vmatpush1.xpose.msra.mxu0 0.0
      %1660 = vmatprep.subr.mxu0 0.0
      %1661 = vmatpush1.xpose.msra.mxu0 0.0
      %1662 = vmatprep.mubr.f32.mxu0 0.0
      %1663 = vmatmul.mubr.f32.gmra.mrb[0].mxu0 %v1590
      %v1664 = vpop.f32.mrb[0].mxu0
      %v1665 = vadd.f32 %v735, %v1664
      %v1666 = vpop.f32.mrb[0].mxu0
      %1667 = vmatprep.mubr.f32.mxu0 0.0
      %1668 = vmatmul.mubr.f32.gmra.mrb[0].mxu0 %v1592
      %v1669 = vpop.f32.mrb[0].mxu0
      %v1670 = vadd.f32 %v736, %v1669
      %v1671 = vpop.f32.mrb[0].mxu0
      %1672 = vdwg.mxu0
      %v1673 = vsel %vm827, %v1665, -inf
      %1674 = vmax.xlane.f32.xlu0 %v1673
      %v1675 = vpop.xlane.xlu0 %1674
      %v1676 = vsel %vm827, %v1670, -inf
      %1677 = vmax.xlane.f32.xlu0 %v1676
      %v1678 = vpop.xlane.xlu0 %1677
      %v1679 = vsub.f32 %v1665, %v1675
      %v1680 = vsub.f32 %v1670, %v1678
      %v1681 = vmul.f32 %v1679, 1.442695
      %v1682 = vpow.pop %v1681
      %v1683 = vmul.f32 %v1680, 1.442695
      %v1684 = vpow.pop %v1683
      %v1685 = vsel %vm827, %v1682, 0.0
      %1686 = vadd.xlane.f32.xlu0 %v1685
      %v1687 = vpop.xlane.xlu0 %1686
      %v1688 = vsel %vm827, %v1684, 0.0
      %1689 = vadd.xlane.f32.xlu0 %v1688
      %v1690 = vpop.xlane.xlu0 %1689
      %v1691 = vrcp.pop %v1687
      %v1692 = vmul.f32 %v1682, %v1691
      %v1693 = vrcp.pop %v1690
      %v1694 = vmul.f32 %v1684, %v1693
      %1695 = vrot.lane.b32.xlu0 %v722, 40
      %v1696 = vpop.permute.xlu0 %1695
      %1697 = vrot.lane.b32.xlu0 %v727, 40
      %v1698 = vpop.permute.xlu0 %1697
      %v1702 = vsel %vm827, %v1692, 0
      %v1705 = vsel %vm827, %v1694, 0
      %1707 = vmatprep.subr.mxu0 0.0
      %1708 = vmatpush1.msra.mxu0 %v1696
      %1709 = vmatprep.subr.mxu0 0.0
      %1710 = vmatpush1.msra.mxu0 %v1698
      %1711 = vmatprep.subr.mxu0 0.0
      %1712 = vmatpush1.msra.mxu0 0.0
      %1713 = vmatprep.subr.mxu0 0.0
      %1714 = vmatpush1.msra.mxu0 0.0
      %1715 = vmatprep.subr.mxu0 0.0
      %1716 = vmatpush1.msra.mxu0 0.0
      %1717 = vmatprep.subr.mxu0 0.0
      %1718 = vmatpush1.msra.mxu0 0.0
      %1719 = vmatprep.subr.mxu0 0.0
      %1720 = vmatpush1.msra.mxu0 0.0
      %1721 = vmatprep.subr.mxu0 0.0
      %1722 = vmatpush1.msra.mxu0 0.0
      %1723 = vmatprep.subr.mxu0 0.0
      %1724 = vmatpush1.msra.mxu0 0.0
      %1725 = vmatprep.subr.mxu0 0.0
      %1726 = vmatpush1.msra.mxu0 0.0
      %1727 = vmatprep.subr.mxu0 0.0
      %1728 = vmatpush1.msra.mxu0 0.0
      %1729 = vmatprep.subr.mxu0 0.0
      %1730 = vmatpush1.msra.mxu0 0.0
      %1731 = vmatprep.subr.mxu0 0.0
      %1732 = vmatpush1.msra.mxu0 0.0
      %1733 = vmatprep.subr.mxu0 0.0
      %1734 = vmatpush1.msra.mxu0 0.0
      %1735 = vmatprep.subr.mxu0 0.0
      %1736 = vmatpush1.msra.mxu0 0.0
      %1737 = vmatprep.subr.mxu0 0.0
      %1738 = vmatpush1.msra.mxu0 0.0
      %1739 = vmatprep.subr.mxu0 0.0
      %1740 = vmatpush1.msra.mxu0 0.0
      %1741 = vmatprep.subr.mxu0 0.0
      %1742 = vmatpush1.msra.mxu0 0.0
      %1743 = vmatprep.subr.mxu0 0.0
      %1744 = vmatpush1.msra.mxu0 0.0
      %1745 = vmatprep.subr.mxu0 0.0
      %1746 = vmatpush1.msra.mxu0 0.0
      %1747 = vmatprep.subr.mxu0 0.0
      %1748 = vmatpush1.msra.mxu0 0.0
      %1749 = vmatprep.subr.mxu0 0.0
      %1750 = vmatpush1.msra.mxu0 0.0
      %1751 = vmatprep.subr.mxu0 0.0
      %1752 = vmatpush1.msra.mxu0 0.0
      %1753 = vmatprep.subr.mxu0 0.0
      %1754 = vmatpush1.msra.mxu0 0.0
      %1755 = vmatprep.subr.mxu0 0.0
      %1756 = vmatpush1.msra.mxu0 0.0
      %1757 = vmatprep.subr.mxu0 0.0
      %1758 = vmatpush1.msra.mxu0 0.0
      %1759 = vmatprep.subr.mxu0 0.0
      %1760 = vmatpush1.msra.mxu0 0.0
      %1761 = vmatprep.subr.mxu0 0.0
      %1762 = vmatpush1.msra.mxu0 0.0
      %1763 = vmatprep.subr.mxu0 0.0
      %1764 = vmatpush1.msra.mxu0 0.0
      %1765 = vmatprep.subr.mxu0 0.0
      %1766 = vmatpush1.msra.mxu0 0.0
      %1767 = vmatprep.subr.mxu0 0.0
      %1768 = vmatpush1.msra.mxu0 0.0
      %1769 = vmatprep.subr.mxu0 0.0
      %1770 = vmatpush1.msra.mxu0 0.0
      %1771 = vmatprep.mubr.f32.mxu0 0.0
      %1772 = vmatmul.mubr.f32.gmra.mrb[0].mxu0 %v1702
      %v1773 = vpop.f32.mrb[0].mxu0
      %v1774 = vadd.f32 0.0, %v1773
      %v1775 = vpop.f32.mrb[0].mxu0
      %1776 = vmatprep.mubr.f32.mxu0 0.0
      %1777 = vmatmul.mubr.f32.gmra.mrb[0].mxu0 %v1705
      %v1778 = vpop.f32.mrb[0].mxu0
      %v1779 = vadd.f32 0.0, %v1778
      %v1780 = vpop.f32.mrb[0].mxu0
      %1781 = vdwg.mxu0
      %v1783 = vsel %vm743, %v1774, 0
      %v1786 = vsel %vm743, %v1779, 0
      %1788 = vmatprep.subr.mxu0 0.0
      %1789 = vmatpush1.msra.mxu0 %v734
      %1790 = vmatprep.subr.mxu0 0.0
      %1791 = vmatpush1.msra.mxu0 0.0
      %1792 = vmatprep.subr.mxu0 0.0
      %1793 = vmatpush1.msra.mxu0 0.0
      %1794 = vmatprep.subr.mxu0 0.0
      %1795 = vmatpush1.msra.mxu0 0.0
      %1796 = vmatprep.subr.mxu0 0.0
      %1797 = vmatpush1.msra.mxu0 0.0
      %1798 = vmatprep.subr.mxu0 0.0
      %1799 = vmatpush1.msra.mxu0 0.0
      %1800 = vmatprep.subr.mxu0 0.0
      %1801 = vmatpush1.msra.mxu0 0.0
      %1802 = vmatprep.subr.mxu0 0.0
      %1803 = vmatpush1.msra.mxu0 0.0
      %1804 = vmatprep.subr.mxu0 0.0
      %1805 = vmatpush1.msra.mxu0 0.0
      %1806 = vmatprep.subr.mxu0 0.0
      %1807 = vmatpush1.msra.mxu0 0.0
      %1808 = vmatprep.subr.mxu0 0.0
      %1809 = vmatpush1.msra.mxu0 0.0
      %1810 = vmatprep.subr.mxu0 0.0
      %1811 = vmatpush1.msra.mxu0 0.0
      %1812 = vmatprep.subr.mxu0 0.0
      %1813 = vmatpush1.msra.mxu0 0.0
      %1814 = vmatprep.subr.mxu0 0.0
      %1815 = vmatpush1.msra.mxu0 0.0
      %1816 = vmatprep.subr.mxu0 0.0
      %1817 = vmatpush1.msra.mxu0 0.0
      %1818 = vmatprep.subr.mxu0 0.0
      %1819 = vmatpush1.msra.mxu0 0.0
      %1820 = vmatprep.subr.mxu0 0.0
      %1821 = vmatpush1.msra.mxu0 0.0
      %1822 = vmatprep.subr.mxu0 0.0
      %1823 = vmatpush1.msra.mxu0 0.0
      %1824 = vmatprep.subr.mxu0 0.0
      %1825 = vmatpush1.msra.mxu0 0.0
      %1826 = vmatprep.subr.mxu0 0.0
      %1827 = vmatpush1.msra.mxu0 0.0
      %1828 = vmatprep.subr.mxu0 0.0
      %1829 = vmatpush1.msra.mxu0 0.0
      %1830 = vmatprep.subr.mxu0 0.0
      %1831 = vmatpush1.msra.mxu0 0.0
      %1832 = vmatprep.subr.mxu0 0.0
      %1833 = vmatpush1.msra.mxu0 0.0
      %1834 = vmatprep.subr.mxu0 0.0
      %1835 = vmatpush1.msra.mxu0 0.0
      %1836 = vmatprep.subr.mxu0 0.0
      %1837 = vmatpush1.msra.mxu0 0.0
      %1838 = vmatprep.subr.mxu0 0.0
      %1839 = vmatpush1.msra.mxu0 0.0
      %1840 = vmatprep.subr.mxu0 0.0
      %1841 = vmatpush1.msra.mxu0 0.0
      %1842 = vmatprep.subr.mxu0 0.0
      %1843 = vmatpush1.msra.mxu0 0.0
      %1844 = vmatprep.subr.mxu0 0.0
      %1845 = vmatpush1.msra.mxu0 0.0
      %1846 = vmatprep.subr.mxu0 0.0
      %1847 = vmatpush1.msra.mxu0 0.0
      %1848 = vmatprep.subr.mxu0 0.0
      %1849 = vmatpush1.msra.mxu0 0.0
      %1850 = vmatprep.subr.mxu0 0.0
      %1851 = vmatpush1.msra.mxu0 0.0
      %1852 = vmatprep.mubr.f32.mxu0 0.0
      %1853 = vmatmul.mubr.f32.gmra.mrb[0].mxu0 %v1783
      %v1854 = vpop.f32.mrb[0].mxu0
      %v1855 = vadd.f32 0.0, %v1854
      %v1856 = vpop.f32.mrb[0].mxu0
      %1857 = vmatprep.mubr.f32.mxu0 0.0
      %1858 = vmatmul.mubr.f32.gmra.mrb[0].mxu0 %v1786
      %v1859 = vpop.f32.mrb[0].mxu0
      %v1860 = vadd.f32 0.0, %v1859
      %v1861 = vpop.f32.mrb[0].mxu0
      %1862 = vdwg.mxu0
      %v1863 = vadd.f32 %v1580, %v1855
      %v1864 = vadd.f32 %v1581, %v1860
      %v1865 = vadd.f32 %v585, %v1863
      %v1866 = vadd.f32 %v586, %v1864
      %s1867 = scalar_lea.vmem %s8, %s30
      %v1868 = vld [vmem:[%s1867] sm:$0x1]
      %v1870 = vlaneseq
      %v1871 = vshrl.u32 %v1870, 7
      %v1872 = vsub.s32 0, %v1871
      %v1873 = vrot.slane %v1868, %v1872
      %v1875 = vadd.f32 %v1865, %v1873
      %v1876 = vadd.f32 %v1866, %v1873
      %s1877 = scalar_lea.vmem %s9, %s30
      %v1878 = vld [vmem:[%s1877] sm:$0x1]
      %s1879 = scalar_lea.vmem %s10, %s30
      %v1880 = vld [vmem:[%s1879] sm:$0x1]
      %v1881 = vsel %vm591, %v1875, 0.0
      %1882 = vadd.xlane.f32.xlu0 %v1881
      %v1883 = vpop.xlane.xlu0 %1882
      %v1884 = vsel %vm591, %v1876, 0.0
      %1885 = vadd.xlane.f32.xlu0 %v1884
      %v1886 = vpop.xlane.xlu0 %1885
      %v1887 = vmul.f32 %v1883, %v598
      %v1888 = vmul.f32 %v1886, %v598
      %v1889 = vsub.f32 %v1875, %v1887
      %v1890 = vsub.f32 %v1876, %v1888
      %v1891 = vmul.f32 %v1889, %v1889
      %v1892 = vmul.f32 %v1890, %v1890
      %v1893 = vsel %vm591, %v1891, 0.0
      %1894 = vadd.xlane.f32.xlu0 %v1893
      %v1895 = vpop.xlane.xlu0 %1894
      %v1896 = vsel %vm591, %v1892, 0.0
      %1897 = vadd.xlane.f32.xlu0 %v1896
      %v1898 = vpop.xlane.xlu0 %1897
      %v1899 = vmul.f32 %v1895, %v598
      %v1900 = vmul.f32 %v1898, %v598
      %v1901 = vadd.f32 %v1899, 1e-05
      %v1902 = vadd.f32 %v1900, 1e-05
      %v1903 = vrsqrt.pop %v1901
      %v1904 = vrsqrt.pop %v1902
      %v1905 = vmul.f32 %v1889, %v1903
      %v1906 = vmul.f32 %v1890, %v1904
      %v1908 = vlaneseq
      %v1909 = vshrl.u32 %v1908, 7
      %v1910 = vsub.s32 0, %v1909
      %v1911 = vrot.slane %v1878, %v1910
      %v1913 = vmul.f32 %v1905, %v1911
      %v1914 = vmul.f32 %v1906, %v1911
      %v1916 = vlaneseq
      %v1917 = vshrl.u32 %v1916, 7
      %v1918 = vsub.s32 0, %v1917
      %v1919 = vrot.slane %v1880, %v1918
      %v1921 = vadd.f32 %v1913, %v1919
      %v1922 = vadd.f32 %v1914, %v1919
      %s1923 = scalar_lea.vmem %s11, %s635
      %v1924 = vld [vmem:[%s1923] sm:$0xff]
      %v1925 = vld [vmem:[%s1923 + $0x8] sm:$0xff]
      %v1926 = vld [vmem:[%s1923 + $0x10] sm:$0xff]
      %v1927 = vld [vmem:[%s1923 + $0x18] sm:$0xff]
      %s1928 = scalar_lea.vmem %s12, %s30
      %v1929 = vld [vmem:[%s1928] sm:$0x1]
      %v1931 = vlaneseq
      %v1932 = vshrl.u32 %v1931, 7
      %v1933 = vsub.s32 0, %v1932
      %v1934 = vrot.slane %v1929, %v1933
      %v1937 = vsel %vm591, %v1921, 0
      %v1940 = vsel %vm591, %v1922, 0
      %1942 = vmatprep.subr.mxu0 0.0
      %1943 = vmatpush1.msra.mxu0 %v1924
      %1944 = vmatprep.subr.mxu0 0.0
      %1945 = vmatpush1.msra.mxu0 %v1925
      %1946 = vmatprep.subr.mxu0 0.0
      %1947 = vmatpush1.msra.mxu0 %v1926
      %1948 = vmatprep.subr.mxu0 0.0
      %1949 = vmatpush1.msra.mxu0 %v1927
      %1950 = vmatprep.subr.mxu0 0.0
      %1951 = vmatpush1.msra.mxu0 0.0
      %1952 = vmatprep.subr.mxu0 0.0
      %1953 = vmatpush1.msra.mxu0 0.0
      %1954 = vmatprep.subr.mxu0 0.0
      %1955 = vmatpush1.msra.mxu0 0.0
      %1956 = vmatprep.subr.mxu0 0.0
      %1957 = vmatpush1.msra.mxu0 0.0
      %1958 = vmatprep.subr.mxu0 0.0
      %1959 = vmatpush1.msra.mxu0 0.0
      %1960 = vmatprep.subr.mxu0 0.0
      %1961 = vmatpush1.msra.mxu0 0.0
      %1962 = vmatprep.subr.mxu0 0.0
      %1963 = vmatpush1.msra.mxu0 0.0
      %1964 = vmatprep.subr.mxu0 0.0
      %1965 = vmatpush1.msra.mxu0 0.0
      %1966 = vmatprep.subr.mxu0 0.0
      %1967 = vmatpush1.msra.mxu0 0.0
      %1968 = vmatprep.subr.mxu0 0.0
      %1969 = vmatpush1.msra.mxu0 0.0
      %1970 = vmatprep.subr.mxu0 0.0
      %1971 = vmatpush1.msra.mxu0 0.0
      %1972 = vmatprep.subr.mxu0 0.0
      %1973 = vmatpush1.msra.mxu0 0.0
      %1974 = vmatprep.subr.mxu0 0.0
      %1975 = vmatpush1.msra.mxu0 0.0
      %1976 = vmatprep.subr.mxu0 0.0
      %1977 = vmatpush1.msra.mxu0 0.0
      %1978 = vmatprep.subr.mxu0 0.0
      %1979 = vmatpush1.msra.mxu0 0.0
      %1980 = vmatprep.subr.mxu0 0.0
      %1981 = vmatpush1.msra.mxu0 0.0
      %1982 = vmatprep.subr.mxu0 0.0
      %1983 = vmatpush1.msra.mxu0 0.0
      %1984 = vmatprep.subr.mxu0 0.0
      %1985 = vmatpush1.msra.mxu0 0.0
      %1986 = vmatprep.subr.mxu0 0.0
      %1987 = vmatpush1.msra.mxu0 0.0
      %1988 = vmatprep.subr.mxu0 0.0
      %1989 = vmatpush1.msra.mxu0 0.0
      %1990 = vmatprep.subr.mxu0 0.0
      %1991 = vmatpush1.msra.mxu0 0.0
      %1992 = vmatprep.subr.mxu0 0.0
      %1993 = vmatpush1.msra.mxu0 0.0
      %1994 = vmatprep.subr.mxu0 0.0
      %1995 = vmatpush1.msra.mxu0 0.0
      %1996 = vmatprep.subr.mxu0 0.0
      %1997 = vmatpush1.msra.mxu0 0.0
      %1998 = vmatprep.subr.mxu0 0.0
      %1999 = vmatpush1.msra.mxu0 0.0
      %2000 = vmatprep.subr.mxu0 0.0
      %2001 = vmatpush1.msra.mxu0 0.0
      %2002 = vmatprep.subr.mxu0 0.0
      %2003 = vmatpush1.msra.mxu0 0.0
      %2004 = vmatprep.subr.mxu0 0.0
      %2005 = vmatpush1.msra.mxu0 0.0
      %2006 = vmatprep.mubr.f32.mxu0 0.0
      %2007 = vmatmul.mubr.f32.gmra.mrb[0].mxu0 %v1937
      %v2008 = vpop.f32.mrb[0].mxu0
      %v2009 = vadd.f32 %v1934, %v2008
      %v2010 = vpop.f32.mrb[0].mxu0
      %2011 = vmatprep.mubr.f32.mxu0 0.0
      %2012 = vmatmul.mubr.f32.gmra.mrb[0].mxu0 %v1940
      %v2013 = vpop.f32.mrb[0].mxu0
      %v2014 = vadd.f32 %v1934, %v2013
      %v2015 = vpop.f32.mrb[0].mxu0
      %2016 = vdwg.mxu0
      %v2017 = vmul.f32 %v2009, 0.5
      %v2018 = vmul.f32 %v2014, 0.5
      %v2019 = vmul.f32 %v2009, 0.70710677
      %v2020 = vmul.f32 %v2014, 0.70710677
      %vm2021 = vcmp.ge.f32.partialorder %v2019, 0.0
      %vm2022 = vcmp.ge.f32.partialorder %v2020, 0.0
      %v2023 = vsel %vm2021, 1.0, -1.0
      %v2024 = vsel %vm2022, 1.0, -1.0
      %v2025 = vand.u32 2147483647, %v2019
      %v2026 = vand.u32 2147483647, %v2020
      %v2027 = vmul.f32 %v2025, 0.3275911
      %v2028 = vmul.f32 %v2026, 0.3275911
      %v2029 = vadd.f32 %v2027, 1.0
      %v2030 = vadd.f32 %v2028, 1.0
      %v2031 = vrcp.pop %v2029
      %v2032 = vmul.f32 1.0, %v2031
      %v2033 = vrcp.pop %v2030
      %v2034 = vmul.f32 1.0, %v2033
      %v2035 = vmul.f32 %v2032, 1.0614054
      %v2036 = vmul.f32 %v2034, 1.0614054
      %v2037 = vadd.f32 %v2035, -1.4531521
      %v2038 = vadd.f32 %v2036, -1.4531521
      %v2039 = vmul.f32 %v2037, %v2032
      %v2040 = vmul.f32 %v2038, %v2034
      %v2041 = vadd.f32 %v2039, 1.4214138
      %v2042 = vadd.f32 %v2040, 1.4214138
      %v2043 = vmul.f32 %v2041, %v2032
      %v2044 = vmul.f32 %v2042, %v2034
      %v2045 = vadd.f32 %v2043, -0.28449672
      %v2046 = vadd.f32 %v2044, -0.28449672
      %v2047 = vmul.f32 %v2045, %v2032
      %v2048 = vmul.f32 %v2046, %v2034
      %v2049 = vadd.f32 %v2047, 0.2548296
      %v2050 = vadd.f32 %v2048, 0.2548296
      %v2051 = vmul.f32 %v2049, %v2032
      %v2052 = vmul.f32 %v2050, %v2034
      %v2053 = vsub.f32 0.0, %v2025
      %v2054 = vsub.f32 0.0, %v2026
      %v2055 = vmul.f32 %v2053, %v2025
      %v2056 = vmul.f32 %v2054, %v2026
      %v2057 = vmul.f32 %v2055, 1.442695
      %v2058 = vpow.pop %v2057
      %v2059 = vmul.f32 %v2056, 1.442695
      %v2060 = vpow.pop %v2059
      %v2061 = vmul.f32 %v2051, %v2058
      %v2062 = vmul.f32 %v2052, %v2060
      %v2063 = vsub.f32 1.0, %v2061
      %v2064 = vsub.f32 1.0, %v2062
      %v2065 = vmul.f32 %v2023, %v2063
      %v2066 = vmul.f32 %v2024, %v2064
      %v2067 = vadd.f32 %v2065, 1.0
      %v2068 = vadd.f32 %v2066, 1.0
      %v2069 = vmul.f32 %v2017, %v2067
      %v2070 = vmul.f32 %v2018, %v2068
      %s2071 = smul.u32 %s30, 128
      %s2072 = scalar_lea.vmem %s13, %s2071
      %v2073 = vld [vmem:[%s2072] sm:$0xff]
      %v2074 = vld [vmem:[%s2072 + $0x8] sm:$0xff]
      %v2075 = vld [vmem:[%s2072 + $0x10] sm:$0xff]
      %v2076 = vld [vmem:[%s2072 + $0x18] sm:$0xff]
      %v2077 = vld [vmem:[%s2072 + $0x20] sm:$0xff]
      %v2078 = vld [vmem:[%s2072 + $0x28] sm:$0xff]
      %v2079 = vld [vmem:[%s2072 + $0x30] sm:$0xff]
      %v2080 = vld [vmem:[%s2072 + $0x38] sm:$0xff]
      %v2081 = vld [vmem:[%s2072 + $0x40] sm:$0xff]
      %v2082 = vld [vmem:[%s2072 + $0x48] sm:$0xff]
      %v2083 = vld [vmem:[%s2072 + $0x50] sm:$0xff]
      %v2084 = vld [vmem:[%s2072 + $0x58] sm:$0xff]
      %v2085 = vld [vmem:[%s2072 + $0x60] sm:$0xff]
      %v2086 = vld [vmem:[%s2072 + $0x68] sm:$0xff]
      %v2087 = vld [vmem:[%s2072 + $0x70] sm:$0xff]
      %v2088 = vld [vmem:[%s2072 + $0x78] sm:$0xff]
      %2089 = vmatprep.subr.mxu0 0.0
      %2090 = vmatpush1.msra.mxu0 %v2073
      %2091 = vmatprep.subr.mxu0 0.0
      %2092 = vmatpush1.msra.mxu0 %v2074
      %2093 = vmatprep.subr.mxu0 0.0
      %2094 = vmatpush1.msra.mxu0 %v2075
      %2095 = vmatprep.subr.mxu0 0.0
      %2096 = vmatpush1.msra.mxu0 %v2076
      %2097 = vmatprep.subr.mxu0 0.0
      %2098 = vmatpush1.msra.mxu0 %v2077
      %2099 = vmatprep.subr.mxu0 0.0
      %2100 = vmatpush1.msra.mxu0 %v2078
      %2101 = vmatprep.subr.mxu0 0.0
      %2102 = vmatpush1.msra.mxu0 %v2079
      %2103 = vmatprep.subr.mxu0 0.0
      %2104 = vmatpush1.msra.mxu0 %v2080
      %2105 = vmatprep.subr.mxu0 0.0
      %2106 = vmatpush1.msra.mxu0 %v2081
      %2107 = vmatprep.subr.mxu0 0.0
      %2108 = vmatpush1.msra.mxu0 %v2082
      %2109 = vmatprep.subr.mxu0 0.0
      %2110 = vmatpush1.msra.mxu0 %v2083
      %2111 = vmatprep.subr.mxu0 0.0
      %2112 = vmatpush1.msra.mxu0 %v2084
      %2113 = vmatprep.subr.mxu0 0.0
      %2114 = vmatpush1.msra.mxu0 %v2085
      %2115 = vmatprep.subr.mxu0 0.0
      %2116 = vmatpush1.msra.mxu0 %v2086
      %2117 = vmatprep.subr.mxu0 0.0
      %2118 = vmatpush1.msra.mxu0 %v2087
      %2119 = vmatprep.subr.mxu0 0.0
      %2120 = vmatpush1.msra.mxu0 %v2088
      %2121 = vmatprep.subr.mxu0 0.0
      %2122 = vmatpush1.msra.mxu0 0.0
      %2123 = vmatprep.subr.mxu0 0.0
      %2124 = vmatpush1.msra.mxu0 0.0
      %2125 = vmatprep.subr.mxu0 0.0
      %2126 = vmatpush1.msra.mxu0 0.0
      %2127 = vmatprep.subr.mxu0 0.0
      %2128 = vmatpush1.msra.mxu0 0.0
      %2129 = vmatprep.subr.mxu0 0.0
      %2130 = vmatpush1.msra.mxu0 0.0
      %2131 = vmatprep.subr.mxu0 0.0
      %2132 = vmatpush1.msra.mxu0 0.0
      %2133 = vmatprep.subr.mxu0 0.0
      %2134 = vmatpush1.msra.mxu0 0.0
      %2135 = vmatprep.subr.mxu0 0.0
      %2136 = vmatpush1.msra.mxu0 0.0
      %2137 = vmatprep.subr.mxu0 0.0
      %2138 = vmatpush1.msra.mxu0 0.0
      %2139 = vmatprep.subr.mxu0 0.0
      %2140 = vmatpush1.msra.mxu0 0.0
      %2141 = vmatprep.subr.mxu0 0.0
      %2142 = vmatpush1.msra.mxu0 0.0
      %2143 = vmatprep.subr.mxu0 0.0
      %2144 = vmatpush1.msra.mxu0 0.0
      %2145 = vmatprep.subr.mxu0 0.0
      %2146 = vmatpush1.msra.mxu0 0.0
      %2147 = vmatprep.subr.mxu0 0.0
      %2148 = vmatpush1.msra.mxu0 0.0
      %2149 = vmatprep.subr.mxu0 0.0
      %2150 = vmatpush1.msra.mxu0 0.0
      %2151 = vmatprep.subr.mxu0 0.0
      %2152 = vmatpush1.msra.mxu0 0.0
      %2153 = vmatprep.mubr.f32.mxu0 0.0
      %2154 = vmatmul.mubr.f32.gmra.mrb[0].mxu0 %v2069
      %v2155 = vpop.f32.mrb[0].mxu0
      %v2156 = vadd.f32 0.0, %v2155
      %v2157 = vpop.f32.mrb[0].mxu0
      %2158 = vmatprep.mubr.f32.mxu0 0.0
      %2159 = vmatmul.mubr.f32.gmra.mrb[0].mxu0 %v2070
      %v2160 = vpop.f32.mrb[0].mxu0
      %v2161 = vadd.f32 0.0, %v2160
      %v2162 = vpop.f32.mrb[0].mxu0
      %2163 = vdwg.mxu0
      %v2164 = vadd.f32 %v1875, %v2156
      %v2165 = vadd.f32 %v1876, %v2161
      %s2166 = scalar_lea.vmem %s14, %s30
      %v2167 = vld [vmem:[%s2166] sm:$0x1]
      %v2169 = vlaneseq
      %v2170 = vshrl.u32 %v2169, 7
      %v2171 = vsub.s32 0, %v2170
      %v2172 = vrot.slane %v2167, %v2171
      %v2174 = vadd.f32 %v2164, %v2172
      %v2175 = vadd.f32 %v2165, %v2172
      %2176 = vst.msk [vmem:[#allocation2] sm:$0xff] %vm591, %v2174
      %2177 = vst.msk [vmem:[#allocation2 + $0x8] sm:$0xff] %vm591, %v2175
      %p2178 = scmp.eq.s32.totalorder %s30, 1
      // Predicated region
      $region101: #{mae_forward.4} parent=95 // pred_check
        %p2179 = pneg %p2178
      $region102: #{mae_forward.4} parent=95 // pred_check_branch
        %2181 = sbr.rel (%p2179) target = $region104
      $region103: #{mae_forward.4} parent=95 // pred_region
        %v2182 = vld [vmem:[%s15] sm:$0x1]
        %v2183 = vld [vmem:[%s16] sm:$0x1]
        %v2184 = vsel %vm591, %v2174, 0.0
        %2185 = vadd.xlane.f32.xlu0 %v2184
        %v2186 = vpop.xlane.xlu0 %2185
        %v2187 = vsel %vm591, %v2175, 0.0
        %2188 = vadd.xlane.f32.xlu0 %v2187
        %v2189 = vpop.xlane.xlu0 %2188
        %v2190 = vmul.f32 %v2186, %v598
        %v2191 = vmul.f32 %v2189, %v598
        %v2192 = vsub.f32 %v2174, %v2190
        %v2193 = vsub.f32 %v2175, %v2191
        %v2194 = vmul.f32 %v2192, %v2192
        %v2195 = vmul.f32 %v2193, %v2193
        %v2196 = vsel %vm591, %v2194, 0.0
        %2197 = vadd.xlane.f32.xlu0 %v2196
        %v2198 = vpop.xlane.xlu0 %2197
        %v2199 = vsel %vm591, %v2195, 0.0
        %2200 = vadd.xlane.f32.xlu0 %v2199
        %v2201 = vpop.xlane.xlu0 %2200
        %v2202 = vmul.f32 %v2198, %v598
        %v2203 = vmul.f32 %v2201, %v598
        %v2204 = vadd.f32 %v2202, 1e-05
        %v2205 = vadd.f32 %v2203, 1e-05
        %v2206 = vrsqrt.pop %v2204
        %v2207 = vrsqrt.pop %v2205
        %v2208 = vmul.f32 %v2192, %v2206
        %v2209 = vmul.f32 %v2193, %v2207
        %v2211 = vlaneseq
        %v2212 = vshrl.u32 %v2211, 7
        %v2213 = vsub.s32 0, %v2212
        %v2214 = vrot.slane %v2182, %v2213
        %v2216 = vmul.f32 %v2208, %v2214
        %v2217 = vmul.f32 %v2209, %v2214
        %v2219 = vlaneseq
        %v2220 = vshrl.u32 %v2219, 7
        %v2221 = vsub.s32 0, %v2220
        %v2222 = vrot.slane %v2183, %v2221
        %v2224 = vadd.f32 %v2216, %v2222
        %v2225 = vadd.f32 %v2217, %v2222
        %v2226 = vld [vmem:[%s17] sm:$0xff]
        %v2227 = vld [vmem:[%s17 + $0x8] sm:$0xff]
        %v2228 = vld [vmem:[%s17 + $0x10] sm:$0xff]
        %v2229 = vld [vmem:[%s17 + $0x18] sm:$0xff]
        %v2230 = vld [vmem:[%s18] sm:$0x1]
        %v2232 = vlaneseq
        %v2233 = vshrl.u32 %v2232, 7
        %v2234 = vsub.s32 0, %v2233
        %v2235 = vrot.slane %v2230, %v2234
        %v2238 = vsel %vm591, %v2224, 0
        %v2241 = vsel %vm591, %v2225, 0
        %2243 = vmatprep.subr.mxu0 0.0
        %2244 = vmatpush1.msra.mxu0 %v2226
        %2245 = vmatprep.subr.mxu0 0.0
        %2246 = vmatpush1.msra.mxu0 %v2227
        %2247 = vmatprep.subr.mxu0 0.0
        %2248 = vmatpush1.msra.mxu0 %v2228
        %2249 = vmatprep.subr.mxu0 0.0
        %2250 = vmatpush1.msra.mxu0 %v2229
        %2251 = vmatprep.subr.mxu0 0.0
        %2252 = vmatpush1.msra.mxu0 0.0
        %2253 = vmatprep.subr.mxu0 0.0
        %2254 = vmatpush1.msra.mxu0 0.0
        %2255 = vmatprep.subr.mxu0 0.0
        %2256 = vmatpush1.msra.mxu0 0.0
        %2257 = vmatprep.subr.mxu0 0.0
        %2258 = vmatpush1.msra.mxu0 0.0
        %2259 = vmatprep.subr.mxu0 0.0
        %2260 = vmatpush1.msra.mxu0 0.0
        %2261 = vmatprep.subr.mxu0 0.0
        %2262 = vmatpush1.msra.mxu0 0.0
        %2263 = vmatprep.subr.mxu0 0.0
        %2264 = vmatpush1.msra.mxu0 0.0
        %2265 = vmatprep.subr.mxu0 0.0
        %2266 = vmatpush1.msra.mxu0 0.0
        %2267 = vmatprep.subr.mxu0 0.0
        %2268 = vmatpush1.msra.mxu0 0.0
        %2269 = vmatprep.subr.mxu0 0.0
        %2270 = vmatpush1.msra.mxu0 0.0
        %2271 = vmatprep.subr.mxu0 0.0
        %2272 = vmatpush1.msra.mxu0 0.0
        %2273 = vmatprep.subr.mxu0 0.0
        %2274 = vmatpush1.msra.mxu0 0.0
        %2275 = vmatprep.subr.mxu0 0.0
        %2276 = vmatpush1.msra.mxu0 0.0
        %2277 = vmatprep.subr.mxu0 0.0
        %2278 = vmatpush1.msra.mxu0 0.0
        %2279 = vmatprep.subr.mxu0 0.0
        %2280 = vmatpush1.msra.mxu0 0.0
        %2281 = vmatprep.subr.mxu0 0.0
        %2282 = vmatpush1.msra.mxu0 0.0
        %2283 = vmatprep.subr.mxu0 0.0
        %2284 = vmatpush1.msra.mxu0 0.0
        %2285 = vmatprep.subr.mxu0 0.0
        %2286 = vmatpush1.msra.mxu0 0.0
        %2287 = vmatprep.subr.mxu0 0.0
        %2288 = vmatpush1.msra.mxu0 0.0
        %2289 = vmatprep.subr.mxu0 0.0
        %2290 = vmatpush1.msra.mxu0 0.0
        %2291 = vmatprep.subr.mxu0 0.0
        %2292 = vmatpush1.msra.mxu0 0.0
        %2293 = vmatprep.subr.mxu0 0.0
        %2294 = vmatpush1.msra.mxu0 0.0
        %2295 = vmatprep.subr.mxu0 0.0
        %2296 = vmatpush1.msra.mxu0 0.0
        %2297 = vmatprep.subr.mxu0 0.0
        %2298 = vmatpush1.msra.mxu0 0.0
        %2299 = vmatprep.subr.mxu0 0.0
        %2300 = vmatpush1.msra.mxu0 0.0
        %2301 = vmatprep.subr.mxu0 0.0
        %2302 = vmatpush1.msra.mxu0 0.0
        %2303 = vmatprep.subr.mxu0 0.0
        %2304 = vmatpush1.msra.mxu0 0.0
        %2305 = vmatprep.subr.mxu0 0.0
        %2306 = vmatpush1.msra.mxu0 0.0
        %2307 = vmatprep.mubr.f32.mxu0 0.0
        %2308 = vmatmul.mubr.f32.gmra.mrb[0].mxu0 %v2238
        %v2309 = vpop.f32.mrb[0].mxu0
        %v2310 = vadd.f32 %v2235, %v2309
        %v2311 = vpop.f32.mrb[0].mxu0
        %2312 = vmatprep.mubr.f32.mxu0 0.0
        %2313 = vmatmul.mubr.f32.gmra.mrb[0].mxu0 %v2241
        %v2314 = vpop.f32.mrb[0].mxu0
        %v2315 = vadd.f32 %v2235, %v2314
        %v2316 = vpop.f32.mrb[0].mxu0
        %2317 = vdwg.mxu0
        %2318 = vst [vmem:[%s19] sm:$0xff] %v2310
        %2319 = vst [vmem:[%s19 + $0x8] sm:$0xff] %v2315
      $region104: #{mae_forward.4} parent=95 // pred_fallthru
        _
      // Predicated region
      $region105: #{mae_forward.4} parent=95 // pred_check
        %p2320 = pneg %p442
      $region106: #{mae_forward.4} parent=95 // pred_check_branch
        %2322 = sbr.rel (%p2320) target = $region108
      $region107: #{mae_forward.4} parent=95 // pred_region
        _
      $region108: #{mae_forward.4} parent=95 // pred_fallthru
        _
      // Predicated region
      $region109: #{mae_forward.4} parent=95 // pred_check
        %p2323 = pneg %p442
      $region110: #{mae_forward.4} parent=95 // pred_check_branch
        %2325 = sbr.rel (%p2323) target = $region112
      $region111: #{mae_forward.4} parent=95 // pred_region
        _
      $region112: #{mae_forward.4} parent=95 // pred_fallthru
        _
    $region96: #{mae_forward.4} parent=5 // pred_fallthru
      _
    %p2326 = scmp.le.s32.totalorder 2, %s25
    // Predicated region
    $region113: #{mae_forward.4} parent=5 // pred_check
      %p2327 = pneg %p2326
    $region114: #{mae_forward.4} parent=5 // pred_check_branch
      %2329 = sbr.rel (%p2327) target = $region116
    $region115: #{mae_forward.4} parent=5 // pred_region
      %s2330 = ssub.s32 %s25, 2
    $region116: #{mae_forward.4} parent=5 // pred_fallthru
      _
  $region6: #{mae_forward.4} parent=0 // loop_footer
    %s29 = sadd.s32 1, %s25
  $region7: #{mae_forward.4} parent=0 // loop_footer_branch
    %24 = sbr.rel target = $region3
  $region8: #{mae_forward.4} parent=0 // loop_exit
    _

// kernel: mae_forward.5
$region0: #{mae_forward.5}
  #allocation0 [shape = 'u32[]', space=smem, size = 0x4, offset = 0x4, fixed_abs, tag = 'smem constant byte address 0x4 - core index']
  #allocation1 [shape = 'u32[144,128]{1,0:T(1,128)}', space=vmem, size = 0x12000, scoped, tag = 'internal scratch']
  #allocation2 [shape = 'f32[48,32]{1,0:T(8,128)}', space=vmem, size = 0x6000, scoped, tag = 'scratch operand']
  %s0 = inlined_call_operand.vmem [shape: f32[2,17,32], index: 0, kind: input, shape index: {}]
  %s1 = inlined_call_operand.vmem [shape: f32[17,32], index: 1, kind: input, shape index: {}]
  %s2 = inlined_call_operand.vmem [shape: f32[48,48], index: 2, kind: input, shape index: {}]
  %s3 = inlined_call_operand.vmem [shape: f32[2,1,32], index: 3, kind: input, shape index: {}]
  %s4 = inlined_call_operand.vmem [shape: f32[2,1,32], index: 4, kind: input, shape index: {}]
  %s5 = inlined_call_operand.vmem [shape: f32[2,32,96], index: 5, kind: input, shape index: {}]
  %s6 = inlined_call_operand.vmem [shape: f32[2,1,96], index: 6, kind: input, shape index: {}]
  %s7 = inlined_call_operand.vmem [shape: f32[2,32,32], index: 7, kind: input, shape index: {}]
  %s8 = inlined_call_operand.vmem [shape: f32[2,1,32], index: 8, kind: input, shape index: {}]
  %s9 = inlined_call_operand.vmem [shape: f32[2,1,32], index: 9, kind: input, shape index: {}]
  %s10 = inlined_call_operand.vmem [shape: f32[2,1,32], index: 10, kind: input, shape index: {}]
  %s11 = inlined_call_operand.vmem [shape: f32[2,32,128], index: 11, kind: input, shape index: {}]
  %s12 = inlined_call_operand.vmem [shape: f32[2,1,128], index: 12, kind: input, shape index: {}]
  %s13 = inlined_call_operand.vmem [shape: f32[2,128,32], index: 13, kind: input, shape index: {}]
  %s14 = inlined_call_operand.vmem [shape: f32[2,1,32], index: 14, kind: input, shape index: {}]
  %s15 = inlined_call_operand.vmem [shape: f32[1,32], index: 15, kind: input, shape index: {}]
  %s16 = inlined_call_operand.vmem [shape: f32[1,32], index: 16, kind: input, shape index: {}]
  %s17 = inlined_call_operand.vmem [shape: f32[32,128], index: 17, kind: input, shape index: {}]
  %s18 = inlined_call_operand.vmem [shape: f32[1,128], index: 18, kind: input, shape index: {}]
  %s19 = inlined_call_operand.vmem [shape: f32[48,128], index: 19, kind: input, shape index: {}]
  %s20 = inlined_call_operand.vmem [shape: f32[48,1], index: 20, kind: input, shape index: {}]
  %s21 = inlined_call_operand.vmem [shape: f32[48,128], index: 21, kind: output, shape index: {0}]
  %s22 = inlined_call_operand.hbm [shape: f32[1,1], index: 22, kind: output, shape index: {1}]
  %23 = xla_tuple %s21, %s22
  %s24 = sld [smem:[#allocation0]]
  $region133: #{mae_forward.5} parent=0
    _
  %s26 = ssub.s32 1, %s24
  %s27 = scalar_select 0, %s26, %s24
  $region1: #{mae_forward.5} parent=0
    #allocation3 [shape = 'u8[512]{0}', space=vmem, size = 0x400, scoped, tag = 'output window, operand 1, single buffered']
    #allocation4 [shape = 's32[2]{0}', space=sflag, size = 0x8, scoped, tag = 'scoped memory for mae_forward.5']
    %28 = vsyncpa [#allocation4], 0
    loop: start=0, step=1, limit=4
    $region2: #{mae_forward.5} parent=1 // loop_pre_header
      _
    $region3: #{mae_forward.5} parent=1 // loop_header
      %s30 = sphi 0, %s34
      %p31 = scmp.ge.s32.totalorder %s30, 4
      %s38 = sphi 0, %s38
      %s40 = sphi 0, %s38
      %s41 = sphi 0, %s40
      %s55 = sphi 0, %s41
      %s59 = sphi 0, %s59
      %s61 = sphi 0, %s59
      %s62 = sphi 0, %s61
      %s76 = sphi 0, %s62
      %s80 = sphi 0, %s80
      %s82 = sphi 0, %s80
      %s83 = sphi 0, %s82
      %s97 = sphi 0, %s83
      %s101 = sphi 0, %s101
      %s103 = sphi 0, %s101
      %s104 = sphi 0, %s103
      %s118 = sphi 0, %s104
      %s122 = sphi 0, %s122
      %s124 = sphi 0, %s122
      %s125 = sphi 0, %s124
      %s139 = sphi 0, %s125
      %s143 = sphi 0, %s143
      %s145 = sphi 0, %s143
      %s146 = sphi 0, %s145
      %s160 = sphi 0, %s146
      %s164 = sphi 0, %s164
      %s166 = sphi 0, %s164
      %s167 = sphi 0, %s166
      %s181 = sphi 0, %s167
      %s185 = sphi 0, %s185
      %s187 = sphi 0, %s185
      %s188 = sphi 0, %s187
      %s202 = sphi 0, %s188
      %s206 = sphi 0, %s206
      %s208 = sphi 0, %s206
      %s209 = sphi 0, %s208
      %s223 = sphi 0, %s209
      %s227 = sphi 0, %s227
      %s229 = sphi 0, %s227
      %s230 = sphi 0, %s229
      %s244 = sphi 0, %s230
      %s248 = sphi 0, %s248
      %s250 = sphi 0, %s248
      %s251 = sphi 0, %s250
      %s265 = sphi 0, %s251
      %s269 = sphi 0, %s269
      %s271 = sphi 0, %s269
      %s272 = sphi 0, %s271
      %s286 = sphi 0, %s272
      %s290 = sphi 0, %s290
      %s292 = sphi 0, %s290
      %s293 = sphi 0, %s292
      %s307 = sphi 0, %s293
      %s311 = sphi 0, %s311
      %s313 = sphi 0, %s311
      %s314 = sphi 0, %s313
      %s328 = sphi 0, %s314
      %s332 = sphi 0, %s332
      %s334 = sphi 0, %s332
      %s335 = sphi 0, %s334
      %s349 = sphi 0, %s335
      %s353 = sphi 0, %s353
      %s355 = sphi 0, %s353
      %s356 = sphi 0, %s355
      %s370 = sphi 0, %s356
      %s374 = sphi 0, %s374
      %s376 = sphi 0, %s374
      %s377 = sphi 0, %s376
      %s391 = sphi 0, %s377
      %s395 = sphi 0, %s395
      %s397 = sphi 0, %s395
      %s398 = sphi 0, %s397
      %s412 = sphi 0, %s398
      %s416 = sphi 0, %s416
      %s418 = sphi 0, %s416
      %s419 = sphi 0, %s418
      %s433 = sphi 0, %s419
      %s437 = sphi 0, %s437
      %s439 = sphi 0, %s437
      %s440 = sphi 0, %s439
      %s454 = sphi 0, %s440
      %s458 = sphi 0, %s458
      %s460 = sphi 0, %s458
      %s461 = sphi 0, %s460
      %s475 = sphi 0, %s461
      %s479 = sphi 0, %s479
      %s481 = sphi 0, %s479
      %s482 = sphi 0, %s481
      %s496 = sphi 0, %s482
      %s500 = sphi 0, %s500
      %s502 = sphi 0, %s500
      %s503 = sphi 0, %s502
      %s517 = sphi 0, %s503
    $region4: #{mae_forward.5} parent=1 // loop_header_branch
      %33 = sbr.rel (%p31) target = $region8
    $region5: #{mae_forward.5} parent=1 // loop_body
      %s35 = ssub.s32 %s30, 1
      %s36 = ssub.s32 %s30, 2
      %s37 = sadd.s32 %s30, 1
      %s39 = sadd.s32 %s38, 1
      %p42 = scmp.eq.s32.totalorder %s30, 1
      %p43 = scmp.ne.s32.totalorder %s38, %s40
      %p44 = scmp.eq.s32.totalorder %s30, 0
      %p45 = por %p43, %p44
      %p46 = scmp.ne.s32.totalorder %s38, %s40
      %p47 = scmp.eq.s32.totalorder %s35, 1
      %p48 = por %p46, %p47
      %p49 = scmp.ne.s32.totalorder %s40, %s41
      %p50 = scmp.eq.s32.totalorder %s35, 0
      %p51 = por %p49, %p50
      %p52 = scmp.ne.s32.totalorder %s40, %s41
      %p53 = scmp.eq.s32.totalorder %s36, 1
      %p54 = por %p52, %p53
      %p56 = scmp.ne.s32.totalorder %s41, %s55
      %p57 = scmp.eq.s32.totalorder %s36, 0
      %p58 = por %p56, %p57
      %s60 = sadd.s32 %s59, 1
      %p63 = scmp.eq.s32.totalorder %s30, 1
      %p64 = scmp.ne.s32.totalorder %s59, %s61
      %p65 = scmp.eq.s32.totalorder %s30, 0
      %p66 = por %p64, %p65
      %p67 = scmp.ne.s32.totalorder %s59, %s61
      %p68 = scmp.eq.s32.totalorder %s35, 1
      %p69 = por %p67, %p68
      %p70 = scmp.ne.s32.totalorder %s61, %s62
      %p71 = scmp.eq.s32.totalorder %s35, 0
      %p72 = por %p70, %p71
      %p73 = scmp.ne.s32.totalorder %s61, %s62
      %p74 = scmp.eq.s32.totalorder %s36, 1
      %p75 = por %p73, %p74
      %p77 = scmp.ne.s32.totalorder %s62, %s76
      %p78 = scmp.eq.s32.totalorder %s36, 0
      %p79 = por %p77, %p78
      %s81 = sadd.s32 %s80, 1
      %p84 = scmp.eq.s32.totalorder %s30, 1
      %p85 = scmp.ne.s32.totalorder %s80, %s82
      %p86 = scmp.eq.s32.totalorder %s30, 0
      %p87 = por %p85, %p86
      %p88 = scmp.ne.s32.totalorder %s80, %s82
      %p89 = scmp.eq.s32.totalorder %s35, 1
      %p90 = por %p88, %p89
      %p91 = scmp.ne.s32.totalorder %s82, %s83
      %p92 = scmp.eq.s32.totalorder %s35, 0
      %p93 = por %p91, %p92
      %p94 = scmp.ne.s32.totalorder %s82, %s83
      %p95 = scmp.eq.s32.totalorder %s36, 1
      %p96 = por %p94, %p95
      %p98 = scmp.ne.s32.totalorder %s83, %s97
      %p99 = scmp.eq.s32.totalorder %s36, 0
      %p100 = por %p98, %p99
      %s102 = sadd.s32 %s101, 1
      %p105 = scmp.eq.s32.totalorder %s30, 1
      %p106 = scmp.ne.s32.totalorder %s101, %s103
      %p107 = scmp.eq.s32.totalorder %s30, 0
      %p108 = por %p106, %p107
      %p109 = scmp.ne.s32.totalorder %s101, %s103
      %p110 = scmp.eq.s32.totalorder %s35, 1
      %p111 = por %p109, %p110
      %p112 = scmp.ne.s32.totalorder %s103, %s104
      %p113 = scmp.eq.s32.totalorder %s35, 0
      %p114 = por %p112, %p113
      %p115 = scmp.ne.s32.totalorder %s103, %s104
      %p116 = scmp.eq.s32.totalorder %s36, 1
      %p117 = por %p115, %p116
      %p119 = scmp.ne.s32.totalorder %s104, %s118
      %p120 = scmp.eq.s32.totalorder %s36, 0
      %p121 = por %p119, %p120
      %s123 = sadd.s32 %s122, 1
      %p126 = scmp.eq.s32.totalorder %s30, 1
      %p127 = scmp.ne.s32.totalorder %s122, %s124
      %p128 = scmp.eq.s32.totalorder %s30, 0
      %p129 = por %p127, %p128
      %p130 = scmp.ne.s32.totalorder %s122, %s124
      %p131 = scmp.eq.s32.totalorder %s35, 1
      %p132 = por %p130, %p131
      %p133 = scmp.ne.s32.totalorder %s124, %s125
      %p134 = scmp.eq.s32.totalorder %s35, 0
      %p135 = por %p133, %p134
      %p136 = scmp.ne.s32.totalorder %s124, %s125
      %p137 = scmp.eq.s32.totalorder %s36, 1
      %p138 = por %p136, %p137
      %p140 = scmp.ne.s32.totalorder %s125, %s139
      %p141 = scmp.eq.s32.totalorder %s36, 0
      %p142 = por %p140, %p141
      %s144 = sadd.s32 %s143, 1
      %p147 = scmp.eq.s32.totalorder %s30, 1
      %p148 = scmp.ne.s32.totalorder %s143, %s145
      %p149 = scmp.eq.s32.totalorder %s30, 0
      %p150 = por %p148, %p149
      %p151 = scmp.ne.s32.totalorder %s143, %s145
      %p152 = scmp.eq.s32.totalorder %s35, 1
      %p153 = por %p151, %p152
      %p154 = scmp.ne.s32.totalorder %s145, %s146
      %p155 = scmp.eq.s32.totalorder %s35, 0
      %p156 = por %p154, %p155
      %p157 = scmp.ne.s32.totalorder %s145, %s146
      %p158 = scmp.eq.s32.totalorder %s36, 1
      %p159 = por %p157, %p158
      %p161 = scmp.ne.s32.totalorder %s146, %s160
      %p162 = scmp.eq.s32.totalorder %s36, 0
      %p163 = por %p161, %p162
      %s165 = sadd.s32 %s164, 1
      %p168 = scmp.eq.s32.totalorder %s30, 1
      %p169 = scmp.ne.s32.totalorder %s164, %s166
      %p170 = scmp.eq.s32.totalorder %s30, 0
      %p171 = por %p169, %p170
      %p172 = scmp.ne.s32.totalorder %s164, %s166
      %p173 = scmp.eq.s32.totalorder %s35, 1
      %p174 = por %p172, %p173
      %p175 = scmp.ne.s32.totalorder %s166, %s167
      %p176 = scmp.eq.s32.totalorder %s35, 0
      %p177 = por %p175, %p176
      %p178 = scmp.ne.s32.totalorder %s166, %s167
      %p179 = scmp.eq.s32.totalorder %s36, 1
      %p180 = por %p178, %p179
      %p182 = scmp.ne.s32.totalorder %s167, %s181
      %p183 = scmp.eq.s32.totalorder %s36, 0
      %p184 = por %p182, %p183
      %s186 = sadd.s32 %s185, 1
      %p189 = scmp.eq.s32.totalorder %s30, 1
      %p190 = scmp.ne.s32.totalorder %s185, %s187
      %p191 = scmp.eq.s32.totalorder %s30, 0
      %p192 = por %p190, %p191
      %p193 = scmp.ne.s32.totalorder %s185, %s187
      %p194 = scmp.eq.s32.totalorder %s35, 1
      %p195 = por %p193, %p194
      %p196 = scmp.ne.s32.totalorder %s187, %s188
      %p197 = scmp.eq.s32.totalorder %s35, 0
      %p198 = por %p196, %p197
      %p199 = scmp.ne.s32.totalorder %s187, %s188
      %p200 = scmp.eq.s32.totalorder %s36, 1
      %p201 = por %p199, %p200
      %p203 = scmp.ne.s32.totalorder %s188, %s202
      %p204 = scmp.eq.s32.totalorder %s36, 0
      %p205 = por %p203, %p204
      %s207 = sadd.s32 %s206, 1
      %p210 = scmp.eq.s32.totalorder %s30, 1
      %p211 = scmp.ne.s32.totalorder %s206, %s208
      %p212 = scmp.eq.s32.totalorder %s30, 0
      %p213 = por %p211, %p212
      %p214 = scmp.ne.s32.totalorder %s206, %s208
      %p215 = scmp.eq.s32.totalorder %s35, 1
      %p216 = por %p214, %p215
      %p217 = scmp.ne.s32.totalorder %s208, %s209
      %p218 = scmp.eq.s32.totalorder %s35, 0
      %p219 = por %p217, %p218
      %p220 = scmp.ne.s32.totalorder %s208, %s209
      %p221 = scmp.eq.s32.totalorder %s36, 1
      %p222 = por %p220, %p221
      %p224 = scmp.ne.s32.totalorder %s209, %s223
      %p225 = scmp.eq.s32.totalorder %s36, 0
      %p226 = por %p224, %p225
      %s228 = sadd.s32 %s227, 1
      %p231 = scmp.eq.s32.totalorder %s30, 1
      %p232 = scmp.ne.s32.totalorder %s227, %s229
      %p233 = scmp.eq.s32.totalorder %s30, 0
      %p234 = por %p232, %p233
      %p235 = scmp.ne.s32.totalorder %s227, %s229
      %p236 = scmp.eq.s32.totalorder %s35, 1
      %p237 = por %p235, %p236
      %p238 = scmp.ne.s32.totalorder %s229, %s230
      %p239 = scmp.eq.s32.totalorder %s35, 0
      %p240 = por %p238, %p239
      %p241 = scmp.ne.s32.totalorder %s229, %s230
      %p242 = scmp.eq.s32.totalorder %s36, 1
      %p243 = por %p241, %p242
      %p245 = scmp.ne.s32.totalorder %s230, %s244
      %p246 = scmp.eq.s32.totalorder %s36, 0
      %p247 = por %p245, %p246
      %s249 = sadd.s32 %s248, 1
      %p252 = scmp.eq.s32.totalorder %s30, 1
      %p253 = scmp.ne.s32.totalorder %s248, %s250
      %p254 = scmp.eq.s32.totalorder %s30, 0
      %p255 = por %p253, %p254
      %p256 = scmp.ne.s32.totalorder %s248, %s250
      %p257 = scmp.eq.s32.totalorder %s35, 1
      %p258 = por %p256, %p257
      %p259 = scmp.ne.s32.totalorder %s250, %s251
      %p260 = scmp.eq.s32.totalorder %s35, 0
      %p261 = por %p259, %p260
      %p262 = scmp.ne.s32.totalorder %s250, %s251
      %p263 = scmp.eq.s32.totalorder %s36, 1
      %p264 = por %p262, %p263
      %p266 = scmp.ne.s32.totalorder %s251, %s265
      %p267 = scmp.eq.s32.totalorder %s36, 0
      %p268 = por %p266, %p267
      %s270 = sadd.s32 %s269, 1
      %p273 = scmp.eq.s32.totalorder %s30, 1
      %p274 = scmp.ne.s32.totalorder %s269, %s271
      %p275 = scmp.eq.s32.totalorder %s30, 0
      %p276 = por %p274, %p275
      %p277 = scmp.ne.s32.totalorder %s269, %s271
      %p278 = scmp.eq.s32.totalorder %s35, 1
      %p279 = por %p277, %p278
      %p280 = scmp.ne.s32.totalorder %s271, %s272
      %p281 = scmp.eq.s32.totalorder %s35, 0
      %p282 = por %p280, %p281
      %p283 = scmp.ne.s32.totalorder %s271, %s272
      %p284 = scmp.eq.s32.totalorder %s36, 1
      %p285 = por %p283, %p284
      %p287 = scmp.ne.s32.totalorder %s272, %s286
      %p288 = scmp.eq.s32.totalorder %s36, 0
      %p289 = por %p287, %p288
      %s291 = sadd.s32 %s290, 1
      %p294 = scmp.eq.s32.totalorder %s30, 1
      %p295 = scmp.ne.s32.totalorder %s290, %s292
      %p296 = scmp.eq.s32.totalorder %s30, 0
      %p297 = por %p295, %p296
      %p298 = scmp.ne.s32.totalorder %s290, %s292
      %p299 = scmp.eq.s32.totalorder %s35, 1
      %p300 = por %p298, %p299
      %p301 = scmp.ne.s32.totalorder %s292, %s293
      %p302 = scmp.eq.s32.totalorder %s35, 0
      %p303 = por %p301, %p302
      %p304 = scmp.ne.s32.totalorder %s292, %s293
      %p305 = scmp.eq.s32.totalorder %s36, 1
      %p306 = por %p304, %p305
      %p308 = scmp.ne.s32.totalorder %s293, %s307
      %p309 = scmp.eq.s32.totalorder %s36, 0
      %p310 = por %p308, %p309
      %s312 = sadd.s32 %s311, 1
      %p315 = scmp.eq.s32.totalorder %s30, 1
      %p316 = scmp.ne.s32.totalorder %s311, %s313
      %p317 = scmp.eq.s32.totalorder %s30, 0
      %p318 = por %p316, %p317
      %p319 = scmp.ne.s32.totalorder %s311, %s313
      %p320 = scmp.eq.s32.totalorder %s35, 1
      %p321 = por %p319, %p320
      %p322 = scmp.ne.s32.totalorder %s313, %s314
      %p323 = scmp.eq.s32.totalorder %s35, 0
      %p324 = por %p322, %p323
      %p325 = scmp.ne.s32.totalorder %s313, %s314
      %p326 = scmp.eq.s32.totalorder %s36, 1
      %p327 = por %p325, %p326
      %p329 = scmp.ne.s32.totalorder %s314, %s328
      %p330 = scmp.eq.s32.totalorder %s36, 0
      %p331 = por %p329, %p330
      %s333 = sadd.s32 %s332, 1
      %p336 = scmp.eq.s32.totalorder %s30, 1
      %p337 = scmp.ne.s32.totalorder %s332, %s334
      %p338 = scmp.eq.s32.totalorder %s30, 0
      %p339 = por %p337, %p338
      %p340 = scmp.ne.s32.totalorder %s332, %s334
      %p341 = scmp.eq.s32.totalorder %s35, 1
      %p342 = por %p340, %p341
      %p343 = scmp.ne.s32.totalorder %s334, %s335
      %p344 = scmp.eq.s32.totalorder %s35, 0
      %p345 = por %p343, %p344
      %p346 = scmp.ne.s32.totalorder %s334, %s335
      %p347 = scmp.eq.s32.totalorder %s36, 1
      %p348 = por %p346, %p347
      %p350 = scmp.ne.s32.totalorder %s335, %s349
      %p351 = scmp.eq.s32.totalorder %s36, 0
      %p352 = por %p350, %p351
      %s354 = sadd.s32 %s353, 1
      %p357 = scmp.eq.s32.totalorder %s30, 1
      %p358 = scmp.ne.s32.totalorder %s353, %s355
      %p359 = scmp.eq.s32.totalorder %s30, 0
      %p360 = por %p358, %p359
      %p361 = scmp.ne.s32.totalorder %s353, %s355
      %p362 = scmp.eq.s32.totalorder %s35, 1
      %p363 = por %p361, %p362
      %p364 = scmp.ne.s32.totalorder %s355, %s356
      %p365 = scmp.eq.s32.totalorder %s35, 0
      %p366 = por %p364, %p365
      %p367 = scmp.ne.s32.totalorder %s355, %s356
      %p368 = scmp.eq.s32.totalorder %s36, 1
      %p369 = por %p367, %p368
      %p371 = scmp.ne.s32.totalorder %s356, %s370
      %p372 = scmp.eq.s32.totalorder %s36, 0
      %p373 = por %p371, %p372
      %s375 = sadd.s32 %s374, 1
      %p378 = scmp.eq.s32.totalorder %s30, 1
      %p379 = scmp.ne.s32.totalorder %s374, %s376
      %p380 = scmp.eq.s32.totalorder %s30, 0
      %p381 = por %p379, %p380
      %p382 = scmp.ne.s32.totalorder %s374, %s376
      %p383 = scmp.eq.s32.totalorder %s35, 1
      %p384 = por %p382, %p383
      %p385 = scmp.ne.s32.totalorder %s376, %s377
      %p386 = scmp.eq.s32.totalorder %s35, 0
      %p387 = por %p385, %p386
      %p388 = scmp.ne.s32.totalorder %s376, %s377
      %p389 = scmp.eq.s32.totalorder %s36, 1
      %p390 = por %p388, %p389
      %p392 = scmp.ne.s32.totalorder %s377, %s391
      %p393 = scmp.eq.s32.totalorder %s36, 0
      %p394 = por %p392, %p393
      %s396 = sadd.s32 %s395, 1
      %p399 = scmp.eq.s32.totalorder %s30, 1
      %p400 = scmp.ne.s32.totalorder %s395, %s397
      %p401 = scmp.eq.s32.totalorder %s30, 0
      %p402 = por %p400, %p401
      %p403 = scmp.ne.s32.totalorder %s395, %s397
      %p404 = scmp.eq.s32.totalorder %s35, 1
      %p405 = por %p403, %p404
      %p406 = scmp.ne.s32.totalorder %s397, %s398
      %p407 = scmp.eq.s32.totalorder %s35, 0
      %p408 = por %p406, %p407
      %p409 = scmp.ne.s32.totalorder %s397, %s398
      %p410 = scmp.eq.s32.totalorder %s36, 1
      %p411 = por %p409, %p410
      %p413 = scmp.ne.s32.totalorder %s398, %s412
      %p414 = scmp.eq.s32.totalorder %s36, 0
      %p415 = por %p413, %p414
      %s417 = sadd.s32 %s416, 1
      %p420 = scmp.eq.s32.totalorder %s30, 1
      %p421 = scmp.ne.s32.totalorder %s416, %s418
      %p422 = scmp.eq.s32.totalorder %s30, 0
      %p423 = por %p421, %p422
      %p424 = scmp.ne.s32.totalorder %s416, %s418
      %p425 = scmp.eq.s32.totalorder %s35, 1
      %p426 = por %p424, %p425
      %p427 = scmp.ne.s32.totalorder %s418, %s419
      %p428 = scmp.eq.s32.totalorder %s35, 0
      %p429 = por %p427, %p428
      %p430 = scmp.ne.s32.totalorder %s418, %s419
      %p431 = scmp.eq.s32.totalorder %s36, 1
      %p432 = por %p430, %p431
      %p434 = scmp.ne.s32.totalorder %s419, %s433
      %p435 = scmp.eq.s32.totalorder %s36, 0
      %p436 = por %p434, %p435
      %s438 = sadd.s32 %s437, 1
      %p441 = scmp.eq.s32.totalorder %s30, 1
      %p442 = scmp.ne.s32.totalorder %s437, %s439
      %p443 = scmp.eq.s32.totalorder %s30, 0
      %p444 = por %p442, %p443
      %p445 = scmp.ne.s32.totalorder %s437, %s439
      %p446 = scmp.eq.s32.totalorder %s35, 1
      %p447 = por %p445, %p446
      %p448 = scmp.ne.s32.totalorder %s439, %s440
      %p449 = scmp.eq.s32.totalorder %s35, 0
      %p450 = por %p448, %p449
      %p451 = scmp.ne.s32.totalorder %s439, %s440
      %p452 = scmp.eq.s32.totalorder %s36, 1
      %p453 = por %p451, %p452
      %p455 = scmp.ne.s32.totalorder %s440, %s454
      %p456 = scmp.eq.s32.totalorder %s36, 0
      %p457 = por %p455, %p456
      %s459 = sadd.s32 %s458, 1
      %p462 = scmp.eq.s32.totalorder %s30, 1
      %p463 = scmp.ne.s32.totalorder %s458, %s460
      %p464 = scmp.eq.s32.totalorder %s30, 0
      %p465 = por %p463, %p464
      %p466 = scmp.ne.s32.totalorder %s458, %s460
      %p467 = scmp.eq.s32.totalorder %s35, 1
      %p468 = por %p466, %p467
      %p469 = scmp.ne.s32.totalorder %s460, %s461
      %p470 = scmp.eq.s32.totalorder %s35, 0
      %p471 = por %p469, %p470
      %p472 = scmp.ne.s32.totalorder %s460, %s461
      %p473 = scmp.eq.s32.totalorder %s36, 1
      %p474 = por %p472, %p473
      %p476 = scmp.ne.s32.totalorder %s461, %s475
      %p477 = scmp.eq.s32.totalorder %s36, 0
      %p478 = por %p476, %p477
      %s480 = sadd.s32 %s479, 1
      %p483 = scmp.eq.s32.totalorder %s30, 1
      %p484 = scmp.ne.s32.totalorder %s479, %s481
      %p485 = scmp.eq.s32.totalorder %s30, 0
      %p486 = por %p484, %p485
      %p487 = scmp.ne.s32.totalorder %s479, %s481
      %p488 = scmp.eq.s32.totalorder %s35, 1
      %p489 = por %p487, %p488
      %p490 = scmp.ne.s32.totalorder %s481, %s482
      %p491 = scmp.eq.s32.totalorder %s35, 0
      %p492 = por %p490, %p491
      %p493 = scmp.ne.s32.totalorder %s481, %s482
      %p494 = scmp.eq.s32.totalorder %s36, 1
      %p495 = por %p493, %p494
      %p497 = scmp.ne.s32.totalorder %s482, %s496
      %p498 = scmp.eq.s32.totalorder %s36, 0
      %p499 = por %p497, %p498
      %s501 = sadd.s32 %s500, 1
      %p504 = scmp.eq.s32.totalorder %s30, 1
      %p505 = scmp.ne.s32.totalorder %s500, %s502
      %p506 = scmp.eq.s32.totalorder %s30, 0
      %p507 = por %p505, %p506
      %p508 = scmp.ne.s32.totalorder %s500, %s502
      %p509 = scmp.eq.s32.totalorder %s35, 1
      %p510 = por %p508, %p509
      %p511 = scmp.ne.s32.totalorder %s502, %s503
      %p512 = scmp.eq.s32.totalorder %s35, 0
      %p513 = por %p511, %p512
      %p514 = scmp.ne.s32.totalorder %s502, %s503
      %p515 = scmp.eq.s32.totalorder %s36, 1
      %p516 = por %p514, %p515
      %p518 = scmp.ne.s32.totalorder %s503, %s517
      %p519 = scmp.eq.s32.totalorder %s36, 0
      %p520 = por %p518, %p519
      %p521 = scmp.le.s32.totalorder 1, %s30
      %p522 = scmp.lt.s32.totalorder %s30, 3
      %p523 = pnand %p521, %p522
      %p524 = pneg %p523
      // Predicated region
      $region9: #{mae_forward.5} parent=5 // pred_check
        _
      $region10: #{mae_forward.5} parent=5 // pred_check_branch
        %526 = sbr.rel (%p523) target = $region12
      $region11: #{mae_forward.5} parent=5 // pred_region
        %s527 = ssub.s32 %s30, 1
        // Predicated region
        $region13: #{mae_forward.5} parent=11 // pred_check
          %p528 = pneg %p51
        $region14: #{mae_forward.5} parent=11 // pred_check_branch
          %530 = sbr.rel (%p528) target = $region16
        $region15: #{mae_forward.5} parent=11 // pred_region
          _
        $region16: #{mae_forward.5} parent=11 // pred_fallthru
          _
        // Predicated region
        $region17: #{mae_forward.5} parent=11 // pred_check
          %p531 = pneg %p72
        $region18: #{mae_forward.5} parent=11 // pred_check_branch
          %533 = sbr.rel (%p531) target = $region20
        $region19: #{mae_forward.5} parent=11 // pred_region
          _
        $region20: #{mae_forward.5} parent=11 // pred_fallthru
          _
        // Predicated region
        $region21: #{mae_forward.5} parent=11 // pred_check
          %p534 = pneg %p93
        $region22: #{mae_forward.5} parent=11 // pred_check_branch
          %536 = sbr.rel (%p534) target = $region24
        $region23: #{mae_forward.5} parent=11 // pred_region
          _
        $region24: #{mae_forward.5} parent=11 // pred_fallthru
          _
        // Predicated region
        $region25: #{mae_forward.5} parent=11 // pred_check
          %p537 = pneg %p114
        $region26: #{mae_forward.5} parent=11 // pred_check_branch
          %539 = sbr.rel (%p537) target = $region28
        $region27: #{mae_forward.5} parent=11 // pred_region
          _
        $region28: #{mae_forward.5} parent=11 // pred_fallthru
          _
        // Predicated region
        $region29: #{mae_forward.5} parent=11 // pred_check
          %p540 = pneg %p135
        $region30: #{mae_forward.5} parent=11 // pred_check_branch
          %542 = sbr.rel (%p540) target = $region32
        $region31: #{mae_forward.5} parent=11 // pred_region
          _
        $region32: #{mae_forward.5} parent=11 // pred_fallthru
          _
        // Predicated region
        $region33: #{mae_forward.5} parent=11 // pred_check
          %p543 = pneg %p156
        $region34: #{mae_forward.5} parent=11 // pred_check_branch
          %545 = sbr.rel (%p543) target = $region36
        $region35: #{mae_forward.5} parent=11 // pred_region
          _
        $region36: #{mae_forward.5} parent=11 // pred_fallthru
          _
        // Predicated region
        $region37: #{mae_forward.5} parent=11 // pred_check
          %p546 = pneg %p177
        $region38: #{mae_forward.5} parent=11 // pred_check_branch
          %548 = sbr.rel (%p546) target = $region40
        $region39: #{mae_forward.5} parent=11 // pred_region
          _
        $region40: #{mae_forward.5} parent=11 // pred_fallthru
          _
        // Predicated region
        $region41: #{mae_forward.5} parent=11 // pred_check
          %p549 = pneg %p198
        $region42: #{mae_forward.5} parent=11 // pred_check_branch
          %551 = sbr.rel (%p549) target = $region44
        $region43: #{mae_forward.5} parent=11 // pred_region
          _
        $region44: #{mae_forward.5} parent=11 // pred_fallthru
          _
        // Predicated region
        $region45: #{mae_forward.5} parent=11 // pred_check
          %p552 = pneg %p219
        $region46: #{mae_forward.5} parent=11 // pred_check_branch
          %554 = sbr.rel (%p552) target = $region48
        $region47: #{mae_forward.5} parent=11 // pred_region
          _
        $region48: #{mae_forward.5} parent=11 // pred_fallthru
          _
        // Predicated region
        $region49: #{mae_forward.5} parent=11 // pred_check
          %p555 = pneg %p240
        $region50: #{mae_forward.5} parent=11 // pred_check_branch
          %557 = sbr.rel (%p555) target = $region52
        $region51: #{mae_forward.5} parent=11 // pred_region
          _
        $region52: #{mae_forward.5} parent=11 // pred_fallthru
          _
        // Predicated region
        $region53: #{mae_forward.5} parent=11 // pred_check
          %p558 = pneg %p261
        $region54: #{mae_forward.5} parent=11 // pred_check_branch
          %560 = sbr.rel (%p558) target = $region56
        $region55: #{mae_forward.5} parent=11 // pred_region
          _
        $region56: #{mae_forward.5} parent=11 // pred_fallthru
          _
        // Predicated region
        $region57: #{mae_forward.5} parent=11 // pred_check
          %p561 = pneg %p282
        $region58: #{mae_forward.5} parent=11 // pred_check_branch
          %563 = sbr.rel (%p561) target = $region60
        $region59: #{mae_forward.5} parent=11 // pred_region
          _
        $region60: #{mae_forward.5} parent=11 // pred_fallthru
          _
        // Predicated region
        $region61: #{mae_forward.5} parent=11 // pred_check
          %p564 = pneg %p303
        $region62: #{mae_forward.5} parent=11 // pred_check_branch
          %566 = sbr.rel (%p564) target = $region64
        $region63: #{mae_forward.5} parent=11 // pred_region
          _
        $region64: #{mae_forward.5} parent=11 // pred_fallthru
          _
        // Predicated region
        $region65: #{mae_forward.5} parent=11 // pred_check
          %p567 = pneg %p324
        $region66: #{mae_forward.5} parent=11 // pred_check_branch
          %569 = sbr.rel (%p567) target = $region68
        $region67: #{mae_forward.5} parent=11 // pred_region
          _
        $region68: #{mae_forward.5} parent=11 // pred_fallthru
          _
        // Predicated region
        $region69: #{mae_forward.5} parent=11 // pred_check
          %p570 = pneg %p345
        $region70: #{mae_forward.5} parent=11 // pred_check_branch
          %572 = sbr.rel (%p570) target = $region72
        $region71: #{mae_forward.5} parent=11 // pred_region
          _
        $region72: #{mae_forward.5} parent=11 // pred_fallthru
          _
        // Predicated region
        $region73: #{mae_forward.5} parent=11 // pred_check
          %p573 = pneg %p366
        $region74: #{mae_forward.5} parent=11 // pred_check_branch
          %575 = sbr.rel (%p573) target = $region76
        $region75: #{mae_forward.5} parent=11 // pred_region
          _
        $region76: #{mae_forward.5} parent=11 // pred_fallthru
          _
        // Predicated region
        $region77: #{mae_forward.5} parent=11 // pred_check
          %p576 = pneg %p387
        $region78: #{mae_forward.5} parent=11 // pred_check_branch
          %578 = sbr.rel (%p576) target = $region80
        $region79: #{mae_forward.5} parent=11 // pred_region
          _
        $region80: #{mae_forward.5} parent=11 // pred_fallthru
          _
        // Predicated region
        $region81: #{mae_forward.5} parent=11 // pred_check
          %p579 = pneg %p408
        $region82: #{mae_forward.5} parent=11 // pred_check_branch
          %581 = sbr.rel (%p579) target = $region84
        $region83: #{mae_forward.5} parent=11 // pred_region
          _
        $region84: #{mae_forward.5} parent=11 // pred_fallthru
          _
        // Predicated region
        $region85: #{mae_forward.5} parent=11 // pred_check
          %p582 = pneg %p429
        $region86: #{mae_forward.5} parent=11 // pred_check_branch
          %584 = sbr.rel (%p582) target = $region88
        $region87: #{mae_forward.5} parent=11 // pred_region
          _
        $region88: #{mae_forward.5} parent=11 // pred_fallthru
          _
        // Predicated region
        $region89: #{mae_forward.5} parent=11 // pred_check
          %p585 = pneg %p450
        $region90: #{mae_forward.5} parent=11 // pred_check_branch
          %587 = sbr.rel (%p585) target = $region92
        $region91: #{mae_forward.5} parent=11 // pred_region
          _
        $region92: #{mae_forward.5} parent=11 // pred_fallthru
          _
        // Predicated region
        $region93: #{mae_forward.5} parent=11 // pred_check
          %p588 = pneg %p471
        $region94: #{mae_forward.5} parent=11 // pred_check_branch
          %590 = sbr.rel (%p588) target = $region96
        $region95: #{mae_forward.5} parent=11 // pred_region
          _
        $region96: #{mae_forward.5} parent=11 // pred_fallthru
          _
      $region12: #{mae_forward.5} parent=5 // pred_fallthru
        _
      %p591 = scmp.lt.s32.totalorder %s30, 2
      // Predicated region
      $region97: #{mae_forward.5} parent=5 // pred_check
        %p592 = pneg %p591
      $region98: #{mae_forward.5} parent=5 // pred_check_branch
        %594 = sbr.rel (%p592) target = $region100
      $region99: #{mae_forward.5} parent=5 // pred_region
        _
      $region100: #{mae_forward.5} parent=5 // pred_fallthru
        _
      %p595 = scmp.le.s32.totalorder 1, %s30
      %p596 = scmp.lt.s32.totalorder %s30, 3
      %p597 = pnand %p595, %p596
      %p598 = pneg %p597
      // Predicated region
      $region101: #{mae_forward.5} parent=5 // pred_check
        _
      $region102: #{mae_forward.5} parent=5 // pred_check_branch
        %600 = sbr.rel (%p597) target = $region104
      $region103: #{mae_forward.5} parent=5 // pred_region
        %s601 = ssub.s32 %s30, 1
        %p602 = pneg %p51
        %p603 = pneg %p48
        %p604 = pneg %p72
        %p605 = pneg %p69
        %p606 = pneg %p93
        %p607 = pneg %p90
        %p608 = pneg %p114
        %p609 = pneg %p111
        %p610 = pneg %p135
        %p611 = pneg %p132
        %p612 = pneg %p156
        %p613 = pneg %p153
        %p614 = pneg %p177
        %p615 = pneg %p174
        %p616 = pneg %p198
        %p617 = pneg %p195
        %p618 = pneg %p219
        %p619 = pneg %p216
        %p620 = pneg %p240
        %p621 = pneg %p237
        %p622 = pneg %p261
        %p623 = pneg %p258
        %p624 = pneg %p282
        %p625 = pneg %p279
        %p626 = pneg %p303
        %p627 = pneg %p300
        %p628 = pneg %p324
        %p629 = pneg %p321
        %p630 = pneg %p345
        %p631 = pneg %p342
        %p632 = pneg %p366
        %p633 = pneg %p363
        %p634 = pneg %p387
        %p635 = pneg %p384
        %p636 = pneg %p408
        %p637 = pneg %p405
        %p638 = pneg %p429
        %p639 = pneg %p426
        %p640 = pneg %p450
        %p641 = pneg %p447
        %p642 = pneg %p471
        %p643 = pneg %p468
        %p644 = pneg %p492
        %p645 = pneg %p489
        %p646 = pneg %p513
        %p647 = pneg %p510
        %p648 = scmp.eq.s32.totalorder %s35, 0
        // Predicated region
        $region105: #{mae_forward.5} parent=103 // pred_check
          %p649 = pneg %p648
        $region106: #{mae_forward.5} parent=103 // pred_check_branch
          %651 = sbr.rel (%p649) target = $region108
        $region107: #{mae_forward.5} parent=103 // pred_region
          %vm652 = vcmask 261120
          %653 = vst.msk [vmem:[#allocation2] sm:$0xff] %vm652, 0.0
          %654 = vst.msk [vmem:[#allocation2 + $0x8] sm:$0xff] %vm652, 0.0
          %655 = vst.msk [vmem:[#allocation2 + $0x10] sm:$0xff] %vm652, 0.0
          %656 = vst.msk [vmem:[#allocation2 + $0x18] sm:$0xff] %vm652, 0.0
          %657 = vst.msk [vmem:[#allocation2 + $0x20] sm:$0xff] %vm652, 0.0
          %658 = vst.msk [vmem:[#allocation2 + $0x28] sm:$0xff] %vm652, 0.0
          %v659 = vld [vmem:[%s0] sm:$0xff]
          %v660 = vld [vmem:[%s0 + $0x8] sm:$0xff]
          %v661 = vld [vmem:[%s0 + $0x10] sm:$0x1]
          %v662 = vld [vmem:[%s1] sm:$0xff]
          %v663 = vld [vmem:[%s1 + $0x8] sm:$0xff]
          %v664 = vld [vmem:[%s1 + $0x10] sm:$0x1]
          %v665 = vadd.f32 %v659, %v662
          %v666 = vadd.f32 %v660, %v663
          %v667 = vadd.f32 %v661, %v664
          %668 = vst.msk [vmem:[#allocation2] sm:$0xff] %vm652, %v665
          %669 = vst.msk [vmem:[#allocation2 + $0x8] sm:$0xff] %vm652, %v666
          %vm670 = vcmask 253952
          %671 = vst.msk [vmem:[#allocation2 + $0x10] sm:$0x1] %vm670, %v667
          %s672 = scalar_lea.vmem %s0, 24
          %v673 = vld [vmem:[%s672] sm:$0xff]
          %v674 = vld [vmem:[%s672 + $0x8] sm:$0xff]
          %v675 = vld [vmem:[%s672 + $0x10] sm:$0x1]
          %v676 = vld [vmem:[%s1] sm:$0xff]
          %v677 = vld [vmem:[%s1 + $0x8] sm:$0xff]
          %v678 = vld [vmem:[%s1 + $0x10] sm:$0x1]
          %v679 = vadd.f32 %v673, %v676
          %v680 = vadd.f32 %v674, %v677
          %v681 = vadd.f32 %v675, %v678
          %682 = vst.msk [vmem:[#allocation2 + $0x18] sm:$0xff] %vm652, %v679
          %683 = vst.msk [vmem:[#allocation2 + $0x20] sm:$0xff] %vm652, %v680
          %684 = vst.msk [vmem:[#allocation2 + $0x28] sm:$0x1] %vm670, %v681
        $region108: #{mae_forward.5} parent=103 // pred_fallthru
          _
        %v685 = vld [vmem:[#allocation2] sm:$0xff]
        %v686 = vld [vmem:[#allocation2 + $0x8] sm:$0xff]
        %v687 = vld [vmem:[#allocation2 + $0x10] sm:$0xff]
        %v688 = vld [vmem:[#allocation2 + $0x18] sm:$0xff]
        %v689 = vld [vmem:[#allocation2 + $0x20] sm:$0xff]
        %v690 = vld [vmem:[#allocation2 + $0x28] sm:$0xff]
        %s691 = scalar_lea.vmem %s3, %s35
        %v692 = vld [vmem:[%s691] sm:$0x1]
        %s693 = scalar_lea.vmem %s4, %s35
        %v694 = vld [vmem:[%s693] sm:$0x1]
        %vm695 = vcmask 261120
        %v696 = vsel %vm695, %v685, 0.0
        %697 = vadd.xlane.f32.xlu0 %v696
        %v698 = vpop.xlane.xlu0 %697
        %v699 = vsel %vm695, %v686, 0.0
        %700 = vadd.xlane.f32.xlu0 %v699
        %v701 = vpop.xlane.xlu0 %700
        %v702 = vsel %vm695, %v687, 0.0
        %703 = vadd.xlane.f32.xlu0 %v702
        %v704 = vpop.xlane.xlu0 %703
        %v705 = vsel %vm695, %v688, 0.0
        %706 = vadd.xlane.f32.xlu0 %v705
        %v707 = vpop.xlane.xlu0 %706
        %v708 = vsel %vm695, %v689, 0.0
        %709 = vadd.xlane.f32.xlu0 %v708
        %v710 = vpop.xlane.xlu0 %709
        %v711 = vsel %vm695, %v690, 0.0
        %712 = vadd.xlane.f32.xlu0 %v711
        %v713 = vpop.xlane.xlu0 %712
        %v714 = vrcp.pop 32.0
        %v715 = vmul.f32 %v698, %v714
        %v716 = vmul.f32 %v701, %v714
        %v717 = vmul.f32 %v704, %v714
        %v718 = vmul.f32 %v707, %v714
        %v719 = vmul.f32 %v710, %v714
        %v720 = vmul.f32 %v713, %v714
        %v721 = vsub.f32 %v685, %v715
        %v722 = vsub.f32 %v686, %v716
        %v723 = vsub.f32 %v687, %v717
        %v724 = vsub.f32 %v688, %v718
        %v725 = vsub.f32 %v689, %v719
        %v726 = vsub.f32 %v690, %v720
        %v727 = vmul.f32 %v721, %v721
        %v728 = vmul.f32 %v722, %v722
        %v729 = vmul.f32 %v723, %v723
        %v730 = vmul.f32 %v724, %v724
        %v731 = vmul.f32 %v725, %v725
        %v732 = vmul.f32 %v726, %v726
        %v733 = vsel %vm695, %v727, 0.0
        %734 = vadd.xlane.f32.xlu0 %v733
        %v735 = vpop.xlane.xlu0 %734
        %v736 = vsel %vm695, %v728, 0.0
        %737 = vadd.xlane.f32.xlu0 %v736
        %v738 = vpop.xlane.xlu0 %737
        %v739 = vsel %vm695, %v729, 0.0
        %740 = vadd.xlane.f32.xlu0 %v739
        %v741 = vpop.xlane.xlu0 %740
        %v742 = vsel %vm695, %v730, 0.0
        %743 = vadd.xlane.f32.xlu0 %v742
        %v744 = vpop.xlane.xlu0 %743
        %v745 = vsel %vm695, %v731, 0.0
        %746 = vadd.xlane.f32.xlu0 %v745
        %v747 = vpop.xlane.xlu0 %746
        %v748 = vsel %vm695, %v732, 0.0
        %749 = vadd.xlane.f32.xlu0 %v748
        %v750 = vpop.xlane.xlu0 %749
        %v751 = vmul.f32 %v735, %v714
        %v752 = vmul.f32 %v738, %v714
        %v753 = vmul.f32 %v741, %v714
        %v754 = vmul.f32 %v744, %v714
        %v755 = vmul.f32 %v747, %v714
        %v756 = vmul.f32 %v750, %v714
        %v757 = vadd.f32 %v751, 1e-05
        %v758 = vadd.f32 %v752, 1e-05
        %v759 = vadd.f32 %v753, 1e-05
        %v760 = vadd.f32 %v754, 1e-05
        %v761 = vadd.f32 %v755, 1e-05
        %v762 = vadd.f32 %v756, 1e-05
        %v763 = vrsqrt.pop %v757
        %v764 = vrsqrt.pop %v758
        %v765 = vrsqrt.pop %v759
        %v766 = vrsqrt.pop %v760
        %v767 = vrsqrt.pop %v761
        %v768 = vrsqrt.pop %v762
        %v769 = vmul.f32 %v721, %v763
        %v770 = vmul.f32 %v722, %v764
        %v771 = vmul.f32 %v723, %v765
        %v772 = vmul.f32 %v724, %v766
        %v773 = vmul.f32 %v725, %v767
        %v774 = vmul.f32 %v726, %v768
        %v776 = vlaneseq
        %v777 = vshrl.u32 %v776, 7
        %v778 = vsub.s32 0, %v777
        %v779 = vrot.slane %v692, %v778
        %v781 = vmul.f32 %v769, %v779
        %v782 = vmul.f32 %v770, %v779
        %v783 = vmul.f32 %v771, %v779
        %v784 = vmul.f32 %v772, %v779
        %v785 = vmul.f32 %v773, %v779
        %v786 = vmul.f32 %v774, %v779
        %v788 = vlaneseq
        %v789 = vshrl.u32 %v788, 7
        %v790 = vsub.s32 0, %v789
        %v791 = vrot.slane %v694, %v790
        %v793 = vadd.f32 %v781, %v791
        %v794 = vadd.f32 %v782, %v791
        %v795 = vadd.f32 %v783, %v791
        %v796 = vadd.f32 %v784, %v791
        %v797 = vadd.f32 %v785, %v791
        %v798 = vadd.f32 %v786, %v791
        %s799 = smul.u32 %s35, 32
        %s800 = scalar_lea.vmem %s5, %s799
        %v801 = vld [vmem:[%s800] sm:$0xff]
        %v802 = vld [vmem:[%s800 + $0x8] sm:$0xff]
        %v803 = vld [vmem:[%s800 + $0x10] sm:$0xff]
        %v804 = vld [vmem:[%s800 + $0x18] sm:$0xff]
        %s805 = scalar_lea.vmem %s6, %s35
        %v806 = vld [vmem:[%s805] sm:$0x1]
        %v808 = vlaneseq
        %v809 = vshrl.u32 %v808, 7
        %v810 = vsub.s32 0, %v809
        %v811 = vrot.slane %v806, %v810
        %v814 = vsel %vm695, %v793, 0
        %v817 = vsel %vm695, %v794, 0
        %v820 = vsel %vm695, %v795, 0
        %v823 = vsel %vm695, %v796, 0
        %v826 = vsel %vm695, %v797, 0
        %v829 = vsel %vm695, %v798, 0
        %831 = vmatprep.subr.mxu0 0.0
        %832 = vmatpush1.msra.mxu0 %v801
        %833 = vmatprep.subr.mxu0 0.0
        %834 = vmatpush1.msra.mxu0 %v802
        %835 = vmatprep.subr.mxu0 0.0
        %836 = vmatpush1.msra.mxu0 %v803
        %837 = vmatprep.subr.mxu0 0.0
        %838 = vmatpush1.msra.mxu0 %v804
        %839 = vmatprep.subr.mxu0 0.0
        %840 = vmatpush1.msra.mxu0 0.0
        %841 = vmatprep.subr.mxu0 0.0
        %842 = vmatpush1.msra.mxu0 0.0
        %843 = vmatprep.subr.mxu0 0.0
        %844 = vmatpush1.msra.mxu0 0.0
        %845 = vmatprep.subr.mxu0 0.0
        %846 = vmatpush1.msra.mxu0 0.0
        %847 = vmatprep.subr.mxu0 0.0
        %848 = vmatpush1.msra.mxu0 0.0
        %849 = vmatprep.subr.mxu0 0.0
        %850 = vmatpush1.msra.mxu0 0.0
        %851 = vmatprep.subr.mxu0 0.0
        %852 = vmatpush1.msra.mxu0 0.0
        %853 = vmatprep.subr.mxu0 0.0
        %854 = vmatpush1.msra.mxu0 0.0
        %855 = vmatprep.subr.mxu0 0.0
        %856 = vmatpush1.msra.mxu0 0.0
        %857 = vmatprep.subr.mxu0 0.0
        %858 = vmatpush1.msra.mxu0 0.0
        %859 = vmatprep.subr.mxu0 0.0
        %860 = vmatpush1.msra.mxu0 0.0
        %861 = vmatprep.subr.mxu0 0.0
        %862 = vmatpush1.msra.mxu0 0.0
        %863 = vmatprep.subr.mxu0 0.0
        %864 = vmatpush1.msra.mxu0 0.0
        %865 = vmatprep.subr.mxu0 0.0
        %866 = vmatpush1.msra.mxu0 0.0
        %867 = vmatprep.subr.mxu0 0.0
        %868 = vmatpush1.msra.mxu0 0.0
        %869 = vmatprep.subr.mxu0 0.0
        %870 = vmatpush1.msra.mxu0 0.0
        %871 = vmatprep.subr.mxu0 0.0
        %872 = vmatpush1.msra.mxu0 0.0
        %873 = vmatprep.subr.mxu0 0.0
        %874 = vmatpush1.msra.mxu0 0.0
        %875 = vmatprep.subr.mxu0 0.0
        %876 = vmatpush1.msra.mxu0 0.0
        %877 = vmatprep.subr.mxu0 0.0
        %878 = vmatpush1.msra.mxu0 0.0
        %879 = vmatprep.subr.mxu0 0.0
        %880 = vmatpush1.msra.mxu0 0.0
        %881 = vmatprep.subr.mxu0 0.0
        %882 = vmatpush1.msra.mxu0 0.0
        %883 = vmatprep.subr.mxu0 0.0
        %884 = vmatpush1.msra.mxu0 0.0
        %885 = vmatprep.subr.mxu0 0.0
        %886 = vmatpush1.msra.mxu0 0.0
        %887 = vmatprep.subr.mxu0 0.0
        %888 = vmatpush1.msra.mxu0 0.0
        %889 = vmatprep.subr.mxu0 0.0
        %890 = vmatpush1.msra.mxu0 0.0
        %891 = vmatprep.subr.mxu0 0.0
        %892 = vmatpush1.msra.mxu0 0.0
        %893 = vmatprep.subr.mxu0 0.0
        %894 = vmatpush1.msra.mxu0 0.0
        %895 = vmatprep.mubr.f32.mxu0 0.0
        %896 = vmatmul.mubr.f32.gmra.mrb[0].mxu0 %v814
        %v897 = vpop.f32.mrb[0].mxu0
        %v898 = vadd.f32 %v811, %v897
        %v899 = vpop.f32.mrb[0].mxu0
        %900 = vmatprep.mubr.f32.mxu0 0.0
        %901 = vmatmul.mubr.f32.gmra.mrb[0].mxu0 %v817
        %v902 = vpop.f32.mrb[0].mxu0
        %v903 = vadd.f32 %v811, %v902
        %v904 = vpop.f32.mrb[0].mxu0
        %905 = vmatprep.mubr.f32.mxu0 0.0
        %906 = vmatmul.mubr.f32.gmra.mrb[0].mxu0 %v820
        %v907 = vpop.f32.mrb[0].mxu0
        %v908 = vadd.f32 %v811, %v907
        %v909 = vpop.f32.mrb[0].mxu0
        %910 = vmatprep.mubr.f32.mxu0 0.0
        %911 = vmatmul.mubr.f32.gmra.mrb[0].mxu0 %v823
        %v912 = vpop.f32.mrb[0].mxu0
        %v913 = vadd.f32 %v811, %v912
        %v914 = vpop.f32.mrb[0].mxu0
        %915 = vmatprep.mubr.f32.mxu0 0.0
        %916 = vmatmul.mubr.f32.gmra.mrb[0].mxu0 %v826
        %v917 = vpop.f32.mrb[0].mxu0
        %v918 = vadd.f32 %v811, %v917
        %v919 = vpop.f32.mrb[0].mxu0
        %920 = vmatprep.mubr.f32.mxu0 0.0
        %921 = vmatmul.mubr.f32.gmra.mrb[0].mxu0 %v829
        %v922 = vpop.f32.mrb[0].mxu0
        %v923 = vadd.f32 %v811, %v922
        %v924 = vpop.f32.mrb[0].mxu0
        %925 = vdwg.mxu0
        %s926 = scalar_lea.vmem %s7, %s799
        %v927 = vld [vmem:[%s926] sm:$0xff]
        %v928 = vld [vmem:[%s926 + $0x8] sm:$0xff]
        %v929 = vld [vmem:[%s926 + $0x10] sm:$0xff]
        %v930 = vld [vmem:[%s926 + $0x18] sm:$0xff]
        %v931 = vld [vmem:[%s2] sm:$0xff]
        %v932 = vld [vmem:[%s2 + $0x8] sm:$0xff]
        %v933 = vld [vmem:[%s2 + $0x10] sm:$0xff]
        %v934 = vld [vmem:[%s2 + $0x18] sm:$0xff]
        %v935 = vld [vmem:[%s2 + $0x20] sm:$0xff]
        %v936 = vld [vmem:[%s2 + $0x28] sm:$0xff]
        %943 = vrot.lane.b32.xlu0 %v898, 96
        %v944 = vpop.permute.xlu0 %943
        %945 = vrot.lane.b32.xlu0 %v903, 96
        %v946 = vpop.permute.xlu0 %945
        %947 = vrot.lane.b32.xlu0 %v908, 96
        %v948 = vpop.permute.xlu0 %947
        %949 = vrot.lane.b32.xlu0 %v913, 96
        %v950 = vpop.permute.xlu0 %949
        %951 = vrot.lane.b32.xlu0 %v918, 96
        %v952 = vpop.permute.xlu0 %951
        %953 = vrot.lane.b32.xlu0 %v923, 96
        %v954 = vpop.permute.xlu0 %953
        %vm955 = vcmask 64512
        %v956 = vsel %vm955, %v898, 0
        %v958 = vsel %vm955, %v903, 0
        %v960 = vsel %vm955, %v908, 0
        %v962 = vsel %vm955, %v913, 0
        %v964 = vsel %vm955, %v918, 0
        %v966 = vsel %vm955, %v923, 0
        %v968 = vsel %vm955, %v944, 0
        %v970 = vsel %vm955, %v946, 0
        %v972 = vsel %vm955, %v948, 0
        %v974 = vsel %vm955, %v950, 0
        %v976 = vsel %vm955, %v952, 0
        %v978 = vsel %vm955, %v954, 0
        %980 = vmatprep.subr.mxu0 0.0
        %981 = vmatpush1.xpose.msra.mxu0 %v968
        %982 = vmatprep.subr.mxu0 0.0
        %983 = vmatpush1.xpose.msra.mxu0 %v970
        %984 = vmatprep.subr.mxu0 0.0
        %985 = vmatpush1.xpose.msra.mxu0 %v972
        %986 = vmatprep.subr.mxu0 0.0
        %987 = vmatpush1.xpose.msra.mxu0 %v974
        %988 = vmatprep.subr.mxu0 0.0
        %989 = vmatpush1.xpose.msra.mxu0 %v976
        %990 = vmatprep.subr.mxu0 0.0
        %991 = vmatpush1.xpose.msra.mxu0 %v978
        %992 = vmatprep.subr.mxu0 0.0
        %993 = vmatpush1.xpose.msra.mxu0 0.0
        %994 = vmatprep.subr.mxu0 0.0
        %995 = vmatpush1.xpose.msra.mxu0 0.0
        %996 = vmatprep.subr.mxu0 0.0
        %997 = vmatpush1.xpose.msra.mxu0 0.0
        %998 = vmatprep.subr.mxu0 0.0
        %999 = vmatpush1.xpose.msra.mxu0 0.0
        %1000 = vmatprep.subr.mxu0 0.0
        %1001 = vmatpush1.xpose.msra.mxu0 0.0
        %1002 = vmatprep.subr.mxu0 0.0
        %1003 = vmatpush1.xpose.msra.mxu0 0.0
        %1004 = vmatprep.subr.mxu0 0.0
        %1005 = vmatpush1.xpose.msra.mxu0 0.0
        %1006 = vmatprep.subr.mxu0 0.0
        %1007 = vmatpush1.xpose.msra.mxu0 0.0
        %1008 = vmatprep.subr.mxu0 0.0
        %1009 = vmatpush1.xpose.msra.mxu0 0.0
        %1010 = vmatprep.subr.mxu0 0.0
        %1011 = vmatpush1.xpose.msra.mxu0 0.0
        %1012 = vmatprep.subr.mxu0 0.0
        %1013 = vmatpush1.xpose.msra.mxu0 0.0
        %1014 = vmatprep.subr.mxu0 0.0
        %1015 = vmatpush1.xpose.msra.mxu0 0.0
        %1016 = vmatprep.subr.mxu0 0.0
        %1017 = vmatpush1.xpose.msra.mxu0 0.0
        %1018 = vmatprep.subr.mxu0 0.0
        %1019 = vmatpush1.xpose.msra.mxu0 0.0
        %1020 = vmatprep.subr.mxu0 0.0
        %1021 = vmatpush1.xpose.msra.mxu0 0.0
        %1022 = vmatprep.subr.mxu0 0.0
        %1023 = vmatpush1.xpose.msra.mxu0 0.0
        %1024 = vmatprep.subr.mxu0 0.0
        %1025 = vmatpush1.xpose.msra.mxu0 0.0
        %1026 = vmatprep.subr.mxu0 0.0
        %1027 = vmatpush1.xpose.msra.mxu0 0.0
        %1028 = vmatprep.subr.mxu0 0.0
        %1029 = vmatpush1.xpose.msra.mxu0 0.0
        %1030 = vmatprep.subr.mxu0 0.0
        %1031 = vmatpush1.xpose.msra.mxu0 0.0
        %1032 = vmatprep.subr.mxu0 0.0
        %1033 = vmatpush1.xpose.msra.mxu0 0.0
        %1034 = vmatprep.subr.mxu0 0.0
        %1035 = vmatpush1.xpose.msra.mxu0 0.0
        %1036 = vmatprep.subr.mxu0 0.0
        %1037 = vmatpush1.xpose.msra.mxu0 0.0
        %1038 = vmatprep.subr.mxu0 0.0
        %1039 = vmatpush1.xpose.msra.mxu0 0.0
        %1040 = vmatprep.subr.mxu0 0.0
        %1041 = vmatpush1.xpose.msra.mxu0 0.0
        %1042 = vmatprep.subr.mxu0 0.0
        %1043 = vmatpush1.xpose.msra.mxu0 0.0
        %1044 = vmatprep.mubr.f32.mxu0 0.0
        %1045 = vmatmul.mubr.f32.gmra.mrb[0].mxu0 %v956
        %v1046 = vpop.f32.mrb[0].mxu0
        %v1047 = vadd.f32 %v931, %v1046
        %v1048 = vpop.f32.mrb[0].mxu0
        %1049 = vmatprep.mubr.f32.mxu0 0.0
        %1050 = vmatmul.mubr.f32.gmra.mrb[0].mxu0 %v958
        %v1051 = vpop.f32.mrb[0].mxu0
        %v1052 = vadd.f32 %v932, %v1051
        %v1053 = vpop.f32.mrb[0].mxu0
        %1054 = vmatprep.mubr.f32.mxu0 0.0
        %1055 = vmatmul.mubr.f32.gmra.mrb[0].mxu0 %v960
        %v1056 = vpop.f32.mrb[0].mxu0
        %v1057 = vadd.f32 %v933, %v1056
        %v1058 = vpop.f32.mrb[0].mxu0
        %1059 = vmatprep.mubr.f32.mxu0 0.0
        %1060 = vmatmul.mubr.f32.gmra.mrb[0].mxu0 %v962
        %v1061 = vpop.f32.mrb[0].mxu0
        %v1062 = vadd.f32 %v934, %v1061
        %v1063 = vpop.f32.mrb[0].mxu0
        %1064 = vmatprep.mubr.f32.mxu0 0.0
        %1065 = vmatmul.mubr.f32.gmra.mrb[0].mxu0 %v964
        %v1066 = vpop.f32.mrb[0].mxu0
        %v1067 = vadd.f32 %v935, %v1066
        %v1068 = vpop.f32.mrb[0].mxu0
        %1069 = vmatprep.mubr.f32.mxu0 0.0
        %1070 = vmatmul.mubr.f32.gmra.mrb[0].mxu0 %v966
        %v1071 = vpop.f32.mrb[0].mxu0
        %v1072 = vadd.f32 %v936, %v1071
        %v1073 = vpop.f32.mrb[0].mxu0
        %1074 = vdwg.mxu0
        %vm1075 = vcmask 392192
        %v1076 = vsel %vm1075, %v1047, -inf
        %1077 = vmax.xlane.f32.xlu0 %v1076
        %v1078 = vpop.xlane.xlu0 %1077
        %v1079 = vsel %vm1075, %v1052, -inf
        %1080 = vmax.xlane.f32.xlu0 %v1079
        %v1081 = vpop.xlane.xlu0 %1080
        %v1082 = vsel %vm1075, %v1057, -inf
        %1083 = vmax.xlane.f32.xlu0 %v1082
        %v1084 = vpop.xlane.xlu0 %1083
        %v1085 = vsel %vm1075, %v1062, -inf
        %1086 = vmax.xlane.f32.xlu0 %v1085
        %v1087 = vpop.xlane.xlu0 %1086
        %v1088 = vsel %vm1075, %v1067, -inf
        %1089 = vmax.xlane.f32.xlu0 %v1088
        %v1090 = vpop.xlane.xlu0 %1089
        %v1091 = vsel %vm1075, %v1072, -inf
        %1092 = vmax.xlane.f32.xlu0 %v1091
        %v1093 = vpop.xlane.xlu0 %1092
        %v1094 = vsub.f32 %v1047, %v1078
        %v1095 = vsub.f32 %v1052, %v1081
        %v1096 = vsub.f32 %v1057, %v1084
        %v1097 = vsub.f32 %v1062, %v1087
        %v1098 = vsub.f32 %v1067, %v1090
        %v1099 = vsub.f32 %v1072, %v1093
        %v1100 = vmul.f32 %v1094, 1.442695
        %v1101 = vpow.pop %v1100
        %v1102 = vmul.f32 %v1095, 1.442695
        %v1103 = vpow.pop %v1102
        %v1104 = vmul.f32 %v1096, 1.442695
        %v1105 = vpow.pop %v1104
        %v1106 = vmul.f32 %v1097, 1.442695
        %v1107 = vpow.pop %v1106
        %v1108 = vmul.f32 %v1098, 1.442695
        %v1109 = vpow.pop %v1108
        %v1110 = vmul.f32 %v1099, 1.442695
        %v1111 = vpow.pop %v1110
        %v1112 = vsel %vm1075, %v1101, 0.0
        %1113 = vadd.xlane.f32.xlu0 %v1112
        %v1114 = vpop.xlane.xlu0 %1113
        %v1115 = vsel %vm1075, %v1103, 0.0
        %1116 = vadd.xlane.f32.xlu0 %v1115
        %v1117 = vpop.xlane.xlu0 %1116
        %v1118 = vsel %vm1075, %v1105, 0.0
        %1119 = vadd.xlane.f32.xlu0 %v1118
        %v1120 = vpop.xlane.xlu0 %1119
        %v1121 = vsel %vm1075, %v1107, 0.0
        %1122 = vadd.xlane.f32.xlu0 %v1121
        %v1123 = vpop.xlane.xlu0 %1122
        %v1124 = vsel %vm1075, %v1109, 0.0
        %1125 = vadd.xlane.f32.xlu0 %v1124
        %v1126 = vpop.xlane.xlu0 %1125
        %v1127 = vsel %vm1075, %v1111, 0.0
        %1128 = vadd.xlane.f32.xlu0 %v1127
        %v1129 = vpop.xlane.xlu0 %1128
        %v1130 = vrcp.pop %v1114
        %v1131 = vmul.f32 %v1101, %v1130
        %v1132 = vrcp.pop %v1117
        %v1133 = vmul.f32 %v1103, %v1132
        %v1134 = vrcp.pop %v1120
        %v1135 = vmul.f32 %v1105, %v1134
        %v1136 = vrcp.pop %v1123
        %v1137 = vmul.f32 %v1107, %v1136
        %v1138 = vrcp.pop %v1126
        %v1139 = vmul.f32 %v1109, %v1138
        %v1140 = vrcp.pop %v1129
        %v1141 = vmul.f32 %v1111, %v1140
        %1142 = vrot.lane.b32.xlu0 %v898, 64
        %v1143 = vpop.permute.xlu0 %1142
        %1144 = vrot.lane.b32.xlu0 %v903, 64
        %v1145 = vpop.permute.xlu0 %1144
        %1146 = vrot.lane.b32.xlu0 %v908, 64
        %v1147 = vpop.permute.xlu0 %1146
        %1148 = vrot.lane.b32.xlu0 %v913, 64
        %v1149 = vpop.permute.xlu0 %1148
        %1150 = vrot.lane.b32.xlu0 %v918, 64
        %v1151 = vpop.permute.xlu0 %1150
        %1152 = vrot.lane.b32.xlu0 %v923, 64
        %v1153 = vpop.permute.xlu0 %1152
        %v1161 = vsel %vm1075, %v1131, 0
        %v1164 = vsel %vm1075, %v1133, 0
        %v1167 = vsel %vm1075, %v1135, 0
        %v1170 = vsel %vm1075, %v1137, 0
        %v1173 = vsel %vm1075, %v1139, 0
        %v1176 = vsel %vm1075, %v1141, 0
        %1178 = vmatprep.subr.mxu0 0.0
        %1179 = vmatpush1.msra.mxu0 %v1143
        %1180 = vmatprep.subr.mxu0 0.0
        %1181 = vmatpush1.msra.mxu0 %v1145
        %1182 = vmatprep.subr.mxu0 0.0
        %1183 = vmatpush1.msra.mxu0 %v1147
        %1184 = vmatprep.subr.mxu0 0.0
        %1185 = vmatpush1.msra.mxu0 %v1149
        %1186 = vmatprep.subr.mxu0 0.0
        %1187 = vmatpush1.msra.mxu0 %v1151
        %1188 = vmatprep.subr.mxu0 0.0
        %1189 = vmatpush1.msra.mxu0 %v1153
        %1190 = vmatprep.subr.mxu0 0.0
        %1191 = vmatpush1.msra.mxu0 0.0
        %1192 = vmatprep.subr.mxu0 0.0
        %1193 = vmatpush1.msra.mxu0 0.0
        %1194 = vmatprep.subr.mxu0 0.0
        %1195 = vmatpush1.msra.mxu0 0.0
        %1196 = vmatprep.subr.mxu0 0.0
        %1197 = vmatpush1.msra.mxu0 0.0
        %1198 = vmatprep.subr.mxu0 0.0
        %1199 = vmatpush1.msra.mxu0 0.0
        %1200 = vmatprep.subr.mxu0 0.0
        %1201 = vmatpush1.msra.mxu0 0.0
        %1202 = vmatprep.subr.mxu0 0.0
        %1203 = vmatpush1.msra.mxu0 0.0
        %1204 = vmatprep.subr.mxu0 0.0
        %1205 = vmatpush1.msra.mxu0 0.0
        %1206 = vmatprep.subr.mxu0 0.0
        %1207 = vmatpush1.msra.mxu0 0.0
        %1208 = vmatprep.subr.mxu0 0.0
        %1209 = vmatpush1.msra.mxu0 0.0
        %1210 = vmatprep.subr.mxu0 0.0
        %1211 = vmatpush1.msra.mxu0 0.0
        %1212 = vmatprep.subr.mxu0 0.0
        %1213 = vmatpush1.msra.mxu0 0.0
        %1214 = vmatprep.subr.mxu0 0.0
        %1215 = vmatpush1.msra.mxu0 0.0
        %1216 = vmatprep.subr.mxu0 0.0
        %1217 = vmatpush1.msra.mxu0 0.0
        %1218 = vmatprep.subr.mxu0 0.0
        %1219 = vmatpush1.msra.mxu0 0.0
        %1220 = vmatprep.subr.mxu0 0.0
        %1221 = vmatpush1.msra.mxu0 0.0
        %1222 = vmatprep.subr.mxu0 0.0
        %1223 = vmatpush1.msra.mxu0 0.0
        %1224 = vmatprep.subr.mxu0 0.0
        %1225 = vmatpush1.msra.mxu0 0.0
        %1226 = vmatprep.subr.mxu0 0.0
        %1227 = vmatpush1.msra.mxu0 0.0
        %1228 = vmatprep.subr.mxu0 0.0
        %1229 = vmatpush1.msra.mxu0 0.0
        %1230 = vmatprep.subr.mxu0 0.0
        %1231 = vmatpush1.msra.mxu0 0.0
        %1232 = vmatprep.subr.mxu0 0.0
        %1233 = vmatpush1.msra.mxu0 0.0
        %1234 = vmatprep.subr.mxu0 0.0
        %1235 = vmatpush1.msra.mxu0 0.0
        %1236 = vmatprep.subr.mxu0 0.0
        %1237 = vmatpush1.msra.mxu0 0.0
        %1238 = vmatprep.subr.mxu0 0.0
        %1239 = vmatpush1.msra.mxu0 0.0
        %1240 = vmatprep.subr.mxu0 0.0
        %1241 = vmatpush1.msra.mxu0 0.0
        %1242 = vmatprep.mubr.f32.mxu0 0.0
        %1243 = vmatmul.mubr.f32.gmra.mrb[0].mxu0 %v1161
        %v1244 = vpop.f32.mrb[0].mxu0
        %v1245 = vadd.f32 0.0, %v1244
        %v1246 = vpop.f32.mrb[0].mxu0
        %1247 = vmatprep.mubr.f32.mxu0 0.0
        %1248 = vmatmul.mubr.f32.gmra.mrb[0].mxu0 %v1164
        %v1249 = vpop.f32.mrb[0].mxu0
        %v1250 = vadd.f32 0.0, %v1249
        %v1251 = vpop.f32.mrb[0].mxu0
        %1252 = vmatprep.mubr.f32.mxu0 0.0
        %1253 = vmatmul.mubr.f32.gmra.mrb[0].mxu0 %v1167
        %v1254 = vpop.f32.mrb[0].mxu0
        %v1255 = vadd.f32 0.0, %v1254
        %v1256 = vpop.f32.mrb[0].mxu0
        %1257 = vmatprep.mubr.f32.mxu0 0.0
        %1258 = vmatmul.mubr.f32.gmra.mrb[0].mxu0 %v1170
        %v1259 = vpop.f32.mrb[0].mxu0
        %v1260 = vadd.f32 0.0, %v1259
        %v1261 = vpop.f32.mrb[0].mxu0
        %1262 = vmatprep.mubr.f32.mxu0 0.0
        %1263 = vmatmul.mubr.f32.gmra.mrb[0].mxu0 %v1173
        %v1264 = vpop.f32.mrb[0].mxu0
        %v1265 = vadd.f32 0.0, %v1264
        %v1266 = vpop.f32.mrb[0].mxu0
        %1267 = vmatprep.mubr.f32.mxu0 0.0
        %1268 = vmatmul.mubr.f32.gmra.mrb[0].mxu0 %v1176
        %v1269 = vpop.f32.mrb[0].mxu0
        %v1270 = vadd.f32 0.0, %v1269
        %v1271 = vpop.f32.mrb[0].mxu0
        %1272 = vdwg.mxu0
        %1273 = vrot.lane.b32.xlu0 %v898, 120
        %v1274 = vpop.permute.xlu0 %1273
        %1275 = vrot.lane.b32.xlu0 %v903, 120
        %v1276 = vpop.permute.xlu0 %1275
        %1277 = vrot.lane.b32.xlu0 %v908, 120
        %v1278 = vpop.permute.xlu0 %1277
        %1279 = vrot.lane.b32.xlu0 %v913, 120
        %v1280 = vpop.permute.xlu0 %1279
        %1281 = vrot.lane.b32.xlu0 %v918, 120
        %v1282 = vpop.permute.xlu0 %1281
        %1283 = vrot.lane.b32.xlu0 %v923, 120
        %v1284 = vpop.permute.xlu0 %1283
        %1285 = vrot.lane.b32.xlu0 %v898, 88
        %v1286 = vpop.permute.xlu0 %1285
        %1287 = vrot.lane.b32.xlu0 %v903, 88
        %v1288 = vpop.permute.xlu0 %1287
        %1289 = vrot.lane.b32.xlu0 %v908, 88
        %v1290 = vpop.permute.xlu0 %1289
        %1291 = vrot.lane.b32.xlu0 %v913, 88
        %v1292 = vpop.permute.xlu0 %1291
        %1293 = vrot.lane.b32.xlu0 %v918, 88
        %v1294 = vpop.permute.xlu0 %1293
        %1295 = vrot.lane.b32.xlu0 %v923, 88
        %v1296 = vpop.permute.xlu0 %1295
        %v1297 = vsel %vm955, %v1274, 0
        %v1299 = vsel %vm955, %v1276, 0
        %v1301 = vsel %vm955, %v1278, 0
        %v1303 = vsel %vm955, %v1280, 0
        %v1305 = vsel %vm955, %v1282, 0
        %v1307 = vsel %vm955, %v1284, 0
        %v1309 = vsel %vm955, %v1286, 0
        %v1311 = vsel %vm955, %v1288, 0
        %v1313 = vsel %vm955, %v1290, 0
        %v1315 = vsel %vm955, %v1292, 0
        %v1317 = vsel %vm955, %v1294, 0
        %v1319 = vsel %vm955, %v1296, 0
        %1321 = vmatprep.subr.mxu0 0.0
        %1322 = vmatpush1.xpose.msra.mxu0 %v1309
        %1323 = vmatprep.subr.mxu0 0.0
        %1324 = vmatpush1.xpose.msra.mxu0 %v1311
        %1325 = vmatprep.subr.mxu0 0.0
        %1326 = vmatpush1.xpose.msra.mxu0 %v1313
        %1327 = vmatprep.subr.mxu0 0.0
        %1328 = vmatpush1.xpose.msra.mxu0 %v1315
        %1329 = vmatprep.subr.mxu0 0.0
        %1330 = vmatpush1.xpose.msra.mxu0 %v1317
        %1331 = vmatprep.subr.mxu0 0.0
        %1332 = vmatpush1.xpose.msra.mxu0 %v1319
        %1333 = vmatprep.subr.mxu0 0.0
        %1334 = vmatpush1.xpose.msra.mxu0 0.0
        %1335 = vmatprep.subr.mxu0 0.0
        %1336 = vmatpush1.xpose.msra.mxu0 0.0
        %1337 = vmatprep.subr.mxu0 0.0
        %1338 = vmatpush1.xpose.msra.mxu0 0.0
        %1339 = vmatprep.subr.mxu0 0.0
        %1340 = vmatpush1.xpose.msra.mxu0 0.0
        %1341 = vmatprep.subr.mxu0 0.0
        %1342 = vmatpush1.xpose.msra.mxu0 0.0
        %1343 = vmatprep.subr.mxu0 0.0
        %1344 = vmatpush1.xpose.msra.mxu0 0.0
        %1345 = vmatprep.subr.mxu0 0.0
        %1346 = vmatpush1.xpose.msra.mxu0 0.0
        %1347 = vmatprep.subr.mxu0 0.0
        %1348 = vmatpush1.xpose.msra.mxu0 0.0
        %1349 = vmatprep.subr.mxu0 0.0
        %1350 = vmatpush1.xpose.msra.mxu0 0.0
        %1351 = vmatprep.subr.mxu0 0.0
        %1352 = vmatpush1.xpose.msra.mxu0 0.0
        %1353 = vmatprep.subr.mxu0 0.0
        %1354 = vmatpush1.xpose.msra.mxu0 0.0
        %1355 = vmatprep.subr.mxu0 0.0
        %1356 = vmatpush1.xpose.msra.mxu0 0.0
        %1357 = vmatprep.subr.mxu0 0.0
        %1358 = vmatpush1.xpose.msra.mxu0 0.0
        %1359 = vmatprep.subr.mxu0 0.0
        %1360 = vmatpush1.xpose.msra.mxu0 0.0
        %1361 = vmatprep.subr.mxu0 0.0
        %1362 = vmatpush1.xpose.msra.mxu0 0.0
        %1363 = vmatprep.subr.mxu0 0.0
        %1364 = vmatpush1.xpose.msra.mxu0 0.0
        %1365 = vmatprep.subr.mxu0 0.0
        %1366 = vmatpush1.xpose.msra.mxu0 0.0
        %1367 = vmatprep.subr.mxu0 0.0
        %1368 = vmatpush1.xpose.msra.mxu0 0.0
        %1369 = vmatprep.subr.mxu0 0.0
        %1370 = vmatpush1.xpose.msra.mxu0 0.0
        %1371 = vmatprep.subr.mxu0 0.0
        %1372 = vmatpush1.xpose.msra.mxu0 0.0
        %1373 = vmatprep.subr.mxu0 0.0
        %1374 = vmatpush1.xpose.msra.mxu0 0.0
        %1375 = vmatprep.subr.mxu0 0.0
        %1376 = vmatpush1.xpose.msra.mxu0 0.0
        %1377 = vmatprep.subr.mxu0 0.0
        %1378 = vmatpush1.xpose.msra.mxu0 0.0
        %1379 = vmatprep.subr.mxu0 0.0
        %1380 = vmatpush1.xpose.msra.mxu0 0.0
        %1381 = vmatprep.subr.mxu0 0.0
        %1382 = vmatpush1.xpose.msra.mxu0 0.0
        %1383 = vmatprep.subr.mxu0 0.0
        %1384 = vmatpush1.xpose.msra.mxu0 0.0
        %1385 = vmatprep.mubr.f32.mxu0 0.0
        %1386 = vmatmul.mubr.f32.gmra.mrb[0].mxu0 %v1297
        %v1387 = vpop.f32.mrb[0].mxu0
        %v1388 = vadd.f32 %v931, %v1387
        %v1389 = vpop.f32.mrb[0].mxu0
        %1390 = vmatprep.mubr.f32.mxu0 0.0
        %1391 = vmatmul.mubr.f32.gmra.mrb[0].mxu0 %v1299
        %v1392 = vpop.f32.mrb[0].mxu0
        %v1393 = vadd.f32 %v932, %v1392
        %v1394 = vpop.f32.mrb[0].mxu0
        %1395 = vmatprep.mubr.f32.mxu0 0.0
        %1396 = vmatmul.mubr.f32.gmra.mrb[0].mxu0 %v1301
        %v1397 = vpop.f32.mrb[0].mxu0
        %v1398 = vadd.f32 %v933, %v1397
        %v1399 = vpop.f32.mrb[0].mxu0
        %1400 = vmatprep.mubr.f32.mxu0 0.0
        %1401 = vmatmul.mubr.f32.gmra.mrb[0].mxu0 %v1303
        %v1402 = vpop.f32.mrb[0].mxu0
        %v1403 = vadd.f32 %v934, %v1402
        %v1404 = vpop.f32.mrb[0].mxu0
        %1405 = vmatprep.mubr.f32.mxu0 0.0
        %1406 = vmatmul.mubr.f32.gmra.mrb[0].mxu0 %v1305
        %v1407 = vpop.f32.mrb[0].mxu0
        %v1408 = vadd.f32 %v935, %v1407
        %v1409 = vpop.f32.mrb[0].mxu0
        %1410 = vmatprep.mubr.f32.mxu0 0.0
        %1411 = vmatmul.mubr.f32.gmra.mrb[0].mxu0 %v1307
        %v1412 = vpop.f32.mrb[0].mxu0
        %v1413 = vadd.f32 %v936, %v1412
        %v1414 = vpop.f32.mrb[0].mxu0
        %1415 = vdwg.mxu0
        %v1416 = vsel %vm1075, %v1388, -inf
        %1417 = vmax.xlane.f32.xlu0 %v1416
        %v1418 = vpop.xlane.xlu0 %1417
        %v1419 = vsel %vm1075, %v1393, -inf
        %1420 = vmax.xlane.f32.xlu0 %v1419
        %v1421 = vpop.xlane.xlu0 %1420
        %v1422 = vsel %vm1075, %v1398, -inf
        %1423 = vmax.xlane.f32.xlu0 %v1422
        %v1424 = vpop.xlane.xlu0 %1423
        %v1425 = vsel %vm1075, %v1403, -inf
        %1426 = vmax.xlane.f32.xlu0 %v1425
        %v1427 = vpop.xlane.xlu0 %1426
        %v1428 = vsel %vm1075, %v1408, -inf
        %1429 = vmax.xlane.f32.xlu0 %v1428
        %v1430 = vpop.xlane.xlu0 %1429
        %v1431 = vsel %vm1075, %v1413, -inf
        %1432 = vmax.xlane.f32.xlu0 %v1431
        %v1433 = vpop.xlane.xlu0 %1432
        %v1434 = vsub.f32 %v1388, %v1418
        %v1435 = vsub.f32 %v1393, %v1421
        %v1436 = vsub.f32 %v1398, %v1424
        %v1437 = vsub.f32 %v1403, %v1427
        %v1438 = vsub.f32 %v1408, %v1430
        %v1439 = vsub.f32 %v1413, %v1433
        %v1440 = vmul.f32 %v1434, 1.442695
        %v1441 = vpow.pop %v1440
        %v1442 = vmul.f32 %v1435, 1.442695
        %v1443 = vpow.pop %v1442
        %v1444 = vmul.f32 %v1436, 1.442695
        %v1445 = vpow.pop %v1444
        %v1446 = vmul.f32 %v1437, 1.442695
        %v1447 = vpow.pop %v1446
        %v1448 = vmul.f32 %v1438, 1.442695
        %v1449 = vpow.pop %v1448
        %v1450 = vmul.f32 %v1439, 1.442695
        %v1451 = vpow.pop %v1450
        %v1452 = vsel %vm1075, %v1441, 0.0
        %1453 = vadd.xlane.f32.xlu0 %v1452
        %v1454 = vpop.xlane.xlu0 %1453
        %v1455 = vsel %vm1075, %v1443, 0.0
        %1456 = vadd.xlane.f32.xlu0 %v1455
        %v1457 = vpop.xlane.xlu0 %1456
        %v1458 = vsel %vm1075, %v1445, 0.0
        %1459 = vadd.xlane.f32.xlu0 %v1458
        %v1460 = vpop.xlane.xlu0 %1459
        %v1461 = vsel %vm1075, %v1447, 0.0
        %1462 = vadd.xlane.f32.xlu0 %v1461
        %v1463 = vpop.xlane.xlu0 %1462
        %v1464 = vsel %vm1075, %v1449, 0.0
        %1465 = vadd.xlane.f32.xlu0 %v1464
        %v1466 = vpop.xlane.xlu0 %1465
        %v1467 = vsel %vm1075, %v1451, 0.0
        %1468 = vadd.xlane.f32.xlu0 %v1467
        %v1469 = vpop.xlane.xlu0 %1468
        %v1470 = vrcp.pop %v1454
        %v1471 = vmul.f32 %v1441, %v1470
        %v1472 = vrcp.pop %v1457
        %v1473 = vmul.f32 %v1443, %v1472
        %v1474 = vrcp.pop %v1460
        %v1475 = vmul.f32 %v1445, %v1474
        %v1476 = vrcp.pop %v1463
        %v1477 = vmul.f32 %v1447, %v1476
        %v1478 = vrcp.pop %v1466
        %v1479 = vmul.f32 %v1449, %v1478
        %v1480 = vrcp.pop %v1469
        %v1481 = vmul.f32 %v1451, %v1480
        %1482 = vrot.lane.b32.xlu0 %v898, 56
        %v1483 = vpop.permute.xlu0 %1482
        %1484 = vrot.lane.b32.xlu0 %v903, 56
        %v1485 = vpop.permute.xlu0 %1484
        %1486 = vrot.lane.b32.xlu0 %v908, 56
        %v1487 = vpop.permute.xlu0 %1486
        %1488 = vrot.lane.b32.xlu0 %v913, 56
        %v1489 = vpop.permute.xlu0 %1488
        %1490 = vrot.lane.b32.xlu0 %v918, 56
        %v1491 = vpop.permute.xlu0 %1490
        %1492 = vrot.lane.b32.xlu0 %v923, 56
        %v1493 = vpop.permute.xlu0 %1492
        %v1501 = vsel %vm1075, %v1471, 0
        %v1504 = vsel %vm1075, %v1473, 0
        %v1507 = vsel %vm1075, %v1475, 0
        %v1510 = vsel %vm1075, %v1477, 0
        %v1513 = vsel %vm1075, %v1479, 0
        %v1516 = vsel %vm1075, %v1481, 0
        %1518 = vmatprep.subr.mxu0 0.0
        %1519 = vmatpush1.msra.mxu0 %v1483
        %1520 = vmatprep.subr.mxu0 0.0
        %1521 = vmatpush1.msra.mxu0 %v1485
        %1522 = vmatprep.subr.mxu0 0.0
        %1523 = vmatpush1.msra.mxu0 %v1487
        %1524 = vmatprep.subr.mxu0 0.0
        %1525 = vmatpush1.msra.mxu0 %v1489
        %1526 = vmatprep.subr.mxu0 0.0
        %1527 = vmatpush1.msra.mxu0 %v1491
        %1528 = vmatprep.subr.mxu0 0.0
        %1529 = vmatpush1.msra.mxu0 %v1493
        %1530 = vmatprep.subr.mxu0 0.0
        %1531 = vmatpush1.msra.mxu0 0.0
        %1532 = vmatprep.subr.mxu0 0.0
        %1533 = vmatpush1.msra.mxu0 0.0
        %1534 = vmatprep.subr.mxu0 0.0
        %1535 = vmatpush1.msra.mxu0 0.0
        %1536 = vmatprep.subr.mxu0 0.0
        %1537 = vmatpush1.msra.mxu0 0.0
        %1538 = vmatprep.subr.mxu0 0.0
        %1539 = vmatpush1.msra.mxu0 0.0
        %1540 = vmatprep.subr.mxu0 0.0
        %1541 = vmatpush1.msra.mxu0 0.0
        %1542 = vmatprep.subr.mxu0 0.0
        %1543 = vmatpush1.msra.mxu0 0.0
        %1544 = vmatprep.subr.mxu0 0.0
        %1545 = vmatpush1.msra.mxu0 0.0
        %1546 = vmatprep.subr.mxu0 0.0
        %1547 = vmatpush1.msra.mxu0 0.0
        %1548 = vmatprep.subr.mxu0 0.0
        %1549 = vmatpush1.msra.mxu0 0.0
        %1550 = vmatprep.subr.mxu0 0.0
        %1551 = vmatpush1.msra.mxu0 0.0
        %1552 = vmatprep.subr.mxu0 0.0
        %1553 = vmatpush1.msra.mxu0 0.0
        %1554 = vmatprep.subr.mxu0 0.0
        %1555 = vmatpush1.msra.mxu0 0.0
        %1556 = vmatprep.subr.mxu0 0.0
        %1557 = vmatpush1.msra.mxu0 0.0
        %1558 = vmatprep.subr.mxu0 0.0
        %1559 = vmatpush1.msra.mxu0 0.0
        %1560 = vmatprep.subr.mxu0 0.0
        %1561 = vmatpush1.msra.mxu0 0.0
        %1562 = vmatprep.subr.mxu0 0.0
        %1563 = vmatpush1.msra.mxu0 0.0
        %1564 = vmatprep.subr.mxu0 0.0
        %1565 = vmatpush1.msra.mxu0 0.0
        %1566 = vmatprep.subr.mxu0 0.0
        %1567 = vmatpush1.msra.mxu0 0.0
        %1568 = vmatprep.subr.mxu0 0.0
        %1569 = vmatpush1.msra.mxu0 0.0
        %1570 = vmatprep.subr.mxu0 0.0
        %1571 = vmatpush1.msra.mxu0 0.0
        %1572 = vmatprep.subr.mxu0 0.0
        %1573 = vmatpush1.msra.mxu0 0.0
        %1574 = vmatprep.subr.mxu0 0.0
        %1575 = vmatpush1.msra.mxu0 0.0
        %1576 = vmatprep.subr.mxu0 0.0
        %1577 = vmatpush1.msra.mxu0 0.0
        %1578 = vmatprep.subr.mxu0 0.0
        %1579 = vmatpush1.msra.mxu0 0.0
        %1580 = vmatprep.subr.mxu0 0.0
        %1581 = vmatpush1.msra.mxu0 0.0
        %1582 = vmatprep.mubr.f32.mxu0 0.0
        %1583 = vmatmul.mubr.f32.gmra.mrb[0].mxu0 %v1501
        %v1584 = vpop.f32.mrb[0].mxu0
        %v1585 = vadd.f32 0.0, %v1584
        %v1586 = vpop.f32.mrb[0].mxu0
        %1587 = vmatprep.mubr.f32.mxu0 0.0
        %1588 = vmatmul.mubr.f32.gmra.mrb[0].mxu0 %v1504
        %v1589 = vpop.f32.mrb[0].mxu0
        %v1590 = vadd.f32 0.0, %v1589
        %v1591 = vpop.f32.mrb[0].mxu0
        %1592 = vmatprep.mubr.f32.mxu0 0.0
        %1593 = vmatmul.mubr.f32.gmra.mrb[0].mxu0 %v1507
        %v1594 = vpop.f32.mrb[0].mxu0
        %v1595 = vadd.f32 0.0, %v1594
        %v1596 = vpop.f32.mrb[0].mxu0
        %1597 = vmatprep.mubr.f32.mxu0 0.0
        %1598 = vmatmul.mubr.f32.gmra.mrb[0].mxu0 %v1510
        %v1599 = vpop.f32.mrb[0].mxu0
        %v1600 = vadd.f32 0.0, %v1599
        %v1601 = vpop.f32.mrb[0].mxu0
        %1602 = vmatprep.mubr.f32.mxu0 0.0
        %1603 = vmatmul.mubr.f32.gmra.mrb[0].mxu0 %v1513
        %v1604 = vpop.f32.mrb[0].mxu0
        %v1605 = vadd.f32 0.0, %v1604
        %v1606 = vpop.f32.mrb[0].mxu0
        %1607 = vmatprep.mubr.f32.mxu0 0.0
        %1608 = vmatmul.mubr.f32.gmra.mrb[0].mxu0 %v1516
        %v1609 = vpop.f32.mrb[0].mxu0
        %v1610 = vadd.f32 0.0, %v1609
        %v1611 = vpop.f32.mrb[0].mxu0
        %1612 = vdwg.mxu0
        %v1614 = vsel %vm955, %v1585, 0
        %v1617 = vsel %vm955, %v1590, 0
        %v1620 = vsel %vm955, %v1595, 0
        %v1623 = vsel %vm955, %v1600, 0
        %v1626 = vsel %vm955, %v1605, 0
        %v1629 = vsel %vm955, %v1610, 0
        %1631 = vmatprep.subr.mxu0 0.0
        %1632 = vmatpush1.msra.mxu0 %v928
        %1633 = vmatprep.subr.mxu0 0.0
        %1634 = vmatpush1.msra.mxu0 0.0
        %1635 = vmatprep.subr.mxu0 0.0
        %1636 = vmatpush1.msra.mxu0 0.0
        %1637 = vmatprep.subr.mxu0 0.0
        %1638 = vmatpush1.msra.mxu0 0.0
        %1639 = vmatprep.subr.mxu0 0.0
        %1640 = vmatpush1.msra.mxu0 0.0
        %1641 = vmatprep.subr.mxu0 0.0
        %1642 = vmatpush1.msra.mxu0 0.0
        %1643 = vmatprep.subr.mxu0 0.0
        %1644 = vmatpush1.msra.mxu0 0.0
        %1645 = vmatprep.subr.mxu0 0.0
        %1646 = vmatpush1.msra.mxu0 0.0
        %1647 = vmatprep.subr.mxu0 0.0
        %1648 = vmatpush1.msra.mxu0 0.0
        %1649 = vmatprep.subr.mxu0 0.0
        %1650 = vmatpush1.msra.mxu0 0.0
        %1651 = vmatprep.subr.mxu0 0.0
        %1652 = vmatpush1.msra.mxu0 0.0
        %1653 = vmatprep.subr.mxu0 0.0
        %1654 = vmatpush1.msra.mxu0 0.0
        %1655 = vmatprep.subr.mxu0 0.0
        %1656 = vmatpush1.msra.mxu0 0.0
        %1657 = vmatprep.subr.mxu0 0.0
        %1658 = vmatpush1.msra.mxu0 0.0
        %1659 = vmatprep.subr.mxu0 0.0
        %1660 = vmatpush1.msra.mxu0 0.0
        %1661 = vmatprep.subr.mxu0 0.0
        %1662 = vmatpush1.msra.mxu0 0.0
        %1663 = vmatprep.subr.mxu0 0.0
        %1664 = vmatpush1.msra.mxu0 0.0
        %1665 = vmatprep.subr.mxu0 0.0
        %1666 = vmatpush1.msra.mxu0 0.0
        %1667 = vmatprep.subr.mxu0 0.0
        %1668 = vmatpush1.msra.mxu0 0.0
        %1669 = vmatprep.subr.mxu0 0.0
        %1670 = vmatpush1.msra.mxu0 0.0
        %1671 = vmatprep.subr.mxu0 0.0
        %1672 = vmatpush1.msra.mxu0 0.0
        %1673 = vmatprep.subr.mxu0 0.0
        %1674 = vmatpush1.msra.mxu0 0.0
        %1675 = vmatprep.subr.mxu0 0.0
        %1676 = vmatpush1.msra.mxu0 0.0
        %1677 = vmatprep.subr.mxu0 0.0
        %1678 = vmatpush1.msra.mxu0 0.0
        %1679 = vmatprep.subr.mxu0 0.0
        %1680 = vmatpush1.msra.mxu0 0.0
        %1681 = vmatprep.subr.mxu0 0.0
        %1682 = vmatpush1.msra.mxu0 0.0
        %1683 = vmatprep.subr.mxu0 0.0
        %1684 = vmatpush1.msra.mxu0 0.0
        %1685 = vmatprep.subr.mxu0 0.0
        %1686 = vmatpush1.msra.mxu0 0.0
        %1687 = vmatprep.subr.mxu0 0.0
        %1688 = vmatpush1.msra.mxu0 0.0
        %1689 = vmatprep.subr.mxu0 0.0
        %1690 = vmatpush1.msra.mxu0 0.0
        %1691 = vmatprep.subr.mxu0 0.0
        %1692 = vmatpush1.msra.mxu0 0.0
        %1693 = vmatprep.subr.mxu0 0.0
        %1694 = vmatpush1.msra.mxu0 0.0
        %1695 = vmatprep.mubr.f32.mxu0 0.0
        %1696 = vmatmul.mubr.f32.gmra.mrb[0].mxu0 %v1614
        %v1697 = vpop.f32.mrb[0].mxu0
        %v1698 = vadd.f32 0.0, %v1697
        %v1699 = vpop.f32.mrb[0].mxu0
        %1700 = vmatprep.mubr.f32.mxu0 0.0
        %1701 = vmatmul.mubr.f32.gmra.mrb[0].mxu0 %v1617
        %v1702 = vpop.f32.mrb[0].mxu0
        %v1703 = vadd.f32 0.0, %v1702
        %v1704 = vpop.f32.mrb[0].mxu0
        %1705 = vmatprep.mubr.f32.mxu0 0.0
        %1706 = vmatmul.mubr.f32.gmra.mrb[0].mxu0 %v1620
        %v1707 = vpop.f32.mrb[0].mxu0
        %v1708 = vadd.f32 0.0, %v1707
        %v1709 = vpop.f32.mrb[0].mxu0
        %1710 = vmatprep.mubr.f32.mxu0 0.0
        %1711 = vmatmul.mubr.f32.gmra.mrb[0].mxu0 %v1623
        %v1712 = vpop.f32.mrb[0].mxu0
        %v1713 = vadd.f32 0.0, %v1712
        %v1714 = vpop.f32.mrb[0].mxu0
        %1715 = vmatprep.mubr.f32.mxu0 0.0
        %1716 = vmatmul.mubr.f32.gmra.mrb[0].mxu0 %v1626
        %v1717 = vpop.f32.mrb[0].mxu0
        %v1718 = vadd.f32 0.0, %v1717
        %v1719 = vpop.f32.mrb[0].mxu0
        %1720 = vmatprep.mubr.f32.mxu0 0.0
        %1721 = vmatmul.mubr.f32.gmra.mrb[0].mxu0 %v1629
        %v1722 = vpop.f32.mrb[0].mxu0
        %v1723 = vadd.f32 0.0, %v1722
        %v1724 = vpop.f32.mrb[0].mxu0
        %1725 = vdwg.mxu0
        %v1727 = vsel %vm955, %v1245, 0
        %v1730 = vsel %vm955, %v1250, 0
        %v1733 = vsel %vm955, %v1255, 0
        %v1736 = vsel %vm955, %v1260, 0
        %v1739 = vsel %vm955, %v1265, 0
        %v1742 = vsel %vm955, %v1270, 0
        %1744 = vmatprep.subr.mxu0 0.0
        %1745 = vmatpush1.msra.mxu0 %v927
        %1746 = vmatprep.subr.mxu0 0.0
        %1747 = vmatpush1.msra.mxu0 0.0
        %1748 = vmatprep.subr.mxu0 0.0
        %1749 = vmatpush1.msra.mxu0 0.0
        %1750 = vmatprep.subr.mxu0 0.0
        %1751 = vmatpush1.msra.mxu0 0.0
        %1752 = vmatprep.subr.mxu0 0.0
        %1753 = vmatpush1.msra.mxu0 0.0
        %1754 = vmatprep.subr.mxu0 0.0
        %1755 = vmatpush1.msra.mxu0 0.0
        %1756 = vmatprep.subr.mxu0 0.0
        %1757 = vmatpush1.msra.mxu0 0.0
        %1758 = vmatprep.subr.mxu0 0.0
        %1759 = vmatpush1.msra.mxu0 0.0
        %1760 = vmatprep.subr.mxu0 0.0
        %1761 = vmatpush1.msra.mxu0 0.0
        %1762 = vmatprep.subr.mxu0 0.0
        %1763 = vmatpush1.msra.mxu0 0.0
        %1764 = vmatprep.subr.mxu0 0.0
        %1765 = vmatpush1.msra.mxu0 0.0
        %1766 = vmatprep.subr.mxu0 0.0
        %1767 = vmatpush1.msra.mxu0 0.0
        %1768 = vmatprep.subr.mxu0 0.0
        %1769 = vmatpush1.msra.mxu0 0.0
        %1770 = vmatprep.subr.mxu0 0.0
        %1771 = vmatpush1.msra.mxu0 0.0
        %1772 = vmatprep.subr.mxu0 0.0
        %1773 = vmatpush1.msra.mxu0 0.0
        %1774 = vmatprep.subr.mxu0 0.0
        %1775 = vmatpush1.msra.mxu0 0.0
        %1776 = vmatprep.subr.mxu0 0.0
        %1777 = vmatpush1.msra.mxu0 0.0
        %1778 = vmatprep.subr.mxu0 0.0
        %1779 = vmatpush1.msra.mxu0 0.0
        %1780 = vmatprep.subr.mxu0 0.0
        %1781 = vmatpush1.msra.mxu0 0.0
        %1782 = vmatprep.subr.mxu0 0.0
        %1783 = vmatpush1.msra.mxu0 0.0
        %1784 = vmatprep.subr.mxu0 0.0
        %1785 = vmatpush1.msra.mxu0 0.0
        %1786 = vmatprep.subr.mxu0 0.0
        %1787 = vmatpush1.msra.mxu0 0.0
        %1788 = vmatprep.subr.mxu0 0.0
        %1789 = vmatpush1.msra.mxu0 0.0
        %1790 = vmatprep.subr.mxu0 0.0
        %1791 = vmatpush1.msra.mxu0 0.0
        %1792 = vmatprep.subr.mxu0 0.0
        %1793 = vmatpush1.msra.mxu0 0.0
        %1794 = vmatprep.subr.mxu0 0.0
        %1795 = vmatpush1.msra.mxu0 0.0
        %1796 = vmatprep.subr.mxu0 0.0
        %1797 = vmatpush1.msra.mxu0 0.0
        %1798 = vmatprep.subr.mxu0 0.0
        %1799 = vmatpush1.msra.mxu0 0.0
        %1800 = vmatprep.subr.mxu0 0.0
        %1801 = vmatpush1.msra.mxu0 0.0
        %1802 = vmatprep.subr.mxu0 0.0
        %1803 = vmatpush1.msra.mxu0 0.0
        %1804 = vmatprep.subr.mxu0 0.0
        %1805 = vmatpush1.msra.mxu0 0.0
        %1806 = vmatprep.subr.mxu0 0.0
        %1807 = vmatpush1.msra.mxu0 0.0
        %1808 = vmatprep.mubr.f32.mxu0 0.0
        %1809 = vmatmul.mubr.f32.gmra.mrb[0].mxu0 %v1727
        %v1810 = vpop.f32.mrb[0].mxu0
        %v1811 = vadd.f32 %v1698, %v1810
        %v1812 = vpop.f32.mrb[0].mxu0
        %1813 = vmatprep.mubr.f32.mxu0 0.0
        %1814 = vmatmul.mubr.f32.gmra.mrb[0].mxu0 %v1730
        %v1815 = vpop.f32.mrb[0].mxu0
        %v1816 = vadd.f32 %v1703, %v1815
        %v1817 = vpop.f32.mrb[0].mxu0
        %1818 = vmatprep.mubr.f32.mxu0 0.0
        %1819 = vmatmul.mubr.f32.gmra.mrb[0].mxu0 %v1733
        %v1820 = vpop.f32.mrb[0].mxu0
        %v1821 = vadd.f32 %v1708, %v1820
        %v1822 = vpop.f32.mrb[0].mxu0
        %1823 = vmatprep.mubr.f32.mxu0 0.0
        %1824 = vmatmul.mubr.f32.gmra.mrb[0].mxu0 %v1736
        %v1825 = vpop.f32.mrb[0].mxu0
        %v1826 = vadd.f32 %v1713, %v1825
        %v1827 = vpop.f32.mrb[0].mxu0
        %1828 = vmatprep.mubr.f32.mxu0 0.0
        %1829 = vmatmul.mubr.f32.gmra.mrb[0].mxu0 %v1739
        %v1830 = vpop.f32.mrb[0].mxu0
        %v1831 = vadd.f32 %v1718, %v1830
        %v1832 = vpop.f32.mrb[0].mxu0
        %1833 = vmatprep.mubr.f32.mxu0 0.0
        %1834 = vmatmul.mubr.f32.gmra.mrb[0].mxu0 %v1742
        %v1835 = vpop.f32.mrb[0].mxu0
        %v1836 = vadd.f32 %v1723, %v1835
        %v1837 = vpop.f32.mrb[0].mxu0
        %1838 = vdwg.mxu0
        %1839 = vrot.lane.b32.xlu0 %v898, 112
        %v1840 = vpop.permute.xlu0 %1839
        %1841 = vrot.lane.b32.xlu0 %v903, 112
        %v1842 = vpop.permute.xlu0 %1841
        %1843 = vrot.lane.b32.xlu0 %v908, 112
        %v1844 = vpop.permute.xlu0 %1843
        %1845 = vrot.lane.b32.xlu0 %v913, 112
        %v1846 = vpop.permute.xlu0 %1845
        %1847 = vrot.lane.b32.xlu0 %v918, 112
        %v1848 = vpop.permute.xlu0 %1847
        %1849 = vrot.lane.b32.xlu0 %v923, 112
        %v1850 = vpop.permute.xlu0 %1849
        %1851 = vrot.lane.b32.xlu0 %v898, 80
        %v1852 = vpop.permute.xlu0 %1851
        %1853 = vrot.lane.b32.xlu0 %v903, 80
        %v1854 = vpop.permute.xlu0 %1853
        %1855 = vrot.lane.b32.xlu0 %v908, 80
        %v1856 = vpop.permute.xlu0 %1855
        %1857 = vrot.lane.b32.xlu0 %v913, 80
        %v1858 = vpop.permute.xlu0 %1857
        %1859 = vrot.lane.b32.xlu0 %v918, 80
        %v1860 = vpop.permute.xlu0 %1859
        %1861 = vrot.lane.b32.xlu0 %v923, 80
        %v1862 = vpop.permute.xlu0 %1861
        %v1863 = vsel %vm955, %v1840, 0
        %v1865 = vsel %vm955, %v1842, 0
        %v1867 = vsel %vm955, %v1844, 0
        %v1869 = vsel %vm955, %v1846, 0
        %v1871 = vsel %vm955, %v1848, 0
        %v1873 = vsel %vm955, %v1850, 0
        %v1875 = vsel %vm955, %v1852, 0
        %v1877 = vsel %vm955, %v1854, 0
        %v1879 = vsel %vm955, %v1856, 0
        %v1881 = vsel %vm955, %v1858, 0
        %v1883 = vsel %vm955, %v1860, 0
        %v1885 = vsel %vm955, %v1862, 0
        %1887 = vmatprep.subr.mxu0 0.0
        %1888 = vmatpush1.xpose.msra.mxu0 %v1875
        %1889 = vmatprep.subr.mxu0 0.0
        %1890 = vmatpush1.xpose.msra.mxu0 %v1877
        %1891 = vmatprep.subr.mxu0 0.0
        %1892 = vmatpush1.xpose.msra.mxu0 %v1879
        %1893 = vmatprep.subr.mxu0 0.0
        %1894 = vmatpush1.xpose.msra.mxu0 %v1881
        %1895 = vmatprep.subr.mxu0 0.0
        %1896 = vmatpush1.xpose.msra.mxu0 %v1883
        %1897 = vmatprep.subr.mxu0 0.0
        %1898 = vmatpush1.xpose.msra.mxu0 %v1885
        %1899 = vmatprep.subr.mxu0 0.0
        %1900 = vmatpush1.xpose.msra.mxu0 0.0
        %1901 = vmatprep.subr.mxu0 0.0
        %1902 = vmatpush1.xpose.msra.mxu0 0.0
        %1903 = vmatprep.subr.mxu0 0.0
        %1904 = vmatpush1.xpose.msra.mxu0 0.0
        %1905 = vmatprep.subr.mxu0 0.0
        %1906 = vmatpush1.xpose.msra.mxu0 0.0
        %1907 = vmatprep.subr.mxu0 0.0
        %1908 = vmatpush1.xpose.msra.mxu0 0.0
        %1909 = vmatprep.subr.mxu0 0.0
        %1910 = vmatpush1.xpose.msra.mxu0 0.0
        %1911 = vmatprep.subr.mxu0 0.0
        %1912 = vmatpush1.xpose.msra.mxu0 0.0
        %1913 = vmatprep.subr.mxu0 0.0
        %1914 = vmatpush1.xpose.msra.mxu0 0.0
        %1915 = vmatprep.subr.mxu0 0.0
        %1916 = vmatpush1.xpose.msra.mxu0 0.0
        %1917 = vmatprep.subr.mxu0 0.0
        %1918 = vmatpush1.xpose.msra.mxu0 0.0
        %1919 = vmatprep.subr.mxu0 0.0
        %1920 = vmatpush1.xpose.msra.mxu0 0.0
        %1921 = vmatprep.subr.mxu0 0.0
        %1922 = vmatpush1.xpose.msra.mxu0 0.0
        %1923 = vmatprep.subr.mxu0 0.0
        %1924 = vmatpush1.xpose.msra.mxu0 0.0
        %1925 = vmatprep.subr.mxu0 0.0
        %1926 = vmatpush1.xpose.msra.mxu0 0.0
        %1927 = vmatprep.subr.mxu0 0.0
        %1928 = vmatpush1.xpose.msra.mxu0 0.0
        %1929 = vmatprep.subr.mxu0 0.0
        %1930 = vmatpush1.xpose.msra.mxu0 0.0
        %1931 = vmatprep.subr.mxu0 0.0
        %1932 = vmatpush1.xpose.msra.mxu0 0.0
        %1933 = vmatprep.subr.mxu0 0.0
        %1934 = vmatpush1.xpose.msra.mxu0 0.0
        %1935 = vmatprep.subr.mxu0 0.0
        %1936 = vmatpush1.xpose.msra.mxu0 0.0
        %1937 = vmatprep.subr.mxu0 0.0
        %1938 = vmatpush1.xpose.msra.mxu0 0.0
        %1939 = vmatprep.subr.mxu0 0.0
        %1940 = vmatpush1.xpose.msra.mxu0 0.0
        %1941 = vmatprep.subr.mxu0 0.0
        %1942 = vmatpush1.xpose.msra.mxu0 0.0
        %1943 = vmatprep.subr.mxu0 0.0
        %1944 = vmatpush1.xpose.msra.mxu0 0.0
        %1945 = vmatprep.subr.mxu0 0.0
        %1946 = vmatpush1.xpose.msra.mxu0 0.0
        %1947 = vmatprep.subr.mxu0 0.0
        %1948 = vmatpush1.xpose.msra.mxu0 0.0
        %1949 = vmatprep.subr.mxu0 0.0
        %1950 = vmatpush1.xpose.msra.mxu0 0.0
        %1951 = vmatprep.mubr.f32.mxu0 0.0
        %1952 = vmatmul.mubr.f32.gmra.mrb[0].mxu0 %v1863
        %v1953 = vpop.f32.mrb[0].mxu0
        %v1954 = vadd.f32 %v931, %v1953
        %v1955 = vpop.f32.mrb[0].mxu0
        %1956 = vmatprep.mubr.f32.mxu0 0.0
        %1957 = vmatmul.mubr.f32.gmra.mrb[0].mxu0 %v1865
        %v1958 = vpop.f32.mrb[0].mxu0
        %v1959 = vadd.f32 %v932, %v1958
        %v1960 = vpop.f32.mrb[0].mxu0
        %1961 = vmatprep.mubr.f32.mxu0 0.0
        %1962 = vmatmul.mubr.f32.gmra.mrb[0].mxu0 %v1867
        %v1963 = vpop.f32.mrb[0].mxu0
        %v1964 = vadd.f32 %v933, %v1963
        %v1965 = vpop.f32.mrb[0].mxu0
        %1966 = vmatprep.mubr.f32.mxu0 0.0
        %1967 = vmatmul.mubr.f32.gmra.mrb[0].mxu0 %v1869
        %v1968 = vpop.f32.mrb[0].mxu0
        %v1969 = vadd.f32 %v934, %v1968
        %v1970 = vpop.f32.mrb[0].mxu0
        %1971 = vmatprep.mubr.f32.mxu0 0.0
        %1972 = vmatmul.mubr.f32.gmra.mrb[0].mxu0 %v1871
        %v1973 = vpop.f32.mrb[0].mxu0
        %v1974 = vadd.f32 %v935, %v1973
        %v1975 = vpop.f32.mrb[0].mxu0
        %1976 = vmatprep.mubr.f32.mxu0 0.0
        %1977 = vmatmul.mubr.f32.gmra.mrb[0].mxu0 %v1873
        %v1978 = vpop.f32.mrb[0].mxu0
        %v1979 = vadd.f32 %v936, %v1978
        %v1980 = vpop.f32.mrb[0].mxu0
        %1981 = vdwg.mxu0
        %v1982 = vsel %vm1075, %v1954, -inf
        %1983 = vmax.xlane.f32.xlu0 %v1982
        %v1984 = vpop.xlane.xlu0 %1983
        %v1985 = vsel %vm1075, %v1959, -inf
        %1986 = vmax.xlane.f32.xlu0 %v1985
        %v1987 = vpop.xlane.xlu0 %1986
        %v1988 = vsel %vm1075, %v1964, -inf
        %1989 = vmax.xlane.f32.xlu0 %v1988
        %v1990 = vpop.xlane.xlu0 %1989
        %v1991 = vsel %vm1075, %v1969, -inf
        %1992 = vmax.xlane.f32.xlu0 %v1991
        %v1993 = vpop.xlane.xlu0 %1992
        %v1994 = vsel %vm1075, %v1974, -inf
        %1995 = vmax.xlane.f32.xlu0 %v1994
        %v1996 = vpop.xlane.xlu0 %1995
        %v1997 = vsel %vm1075, %v1979, -inf
        %1998 = vmax.xlane.f32.xlu0 %v1997
        %v1999 = vpop.xlane.xlu0 %1998
        %v2000 = vsub.f32 %v1954, %v1984
        %v2001 = vsub.f32 %v1959, %v1987
        %v2002 = vsub.f32 %v1964, %v1990
        %v2003 = vsub.f32 %v1969, %v1993
        %v2004 = vsub.f32 %v1974, %v1996
        %v2005 = vsub.f32 %v1979, %v1999
        %v2006 = vmul.f32 %v2000, 1.442695
        %v2007 = vpow.pop %v2006
        %v2008 = vmul.f32 %v2001, 1.442695
        %v2009 = vpow.pop %v2008
        %v2010 = vmul.f32 %v2002, 1.442695
        %v2011 = vpow.pop %v2010
        %v2012 = vmul.f32 %v2003, 1.442695
        %v2013 = vpow.pop %v2012
        %v2014 = vmul.f32 %v2004, 1.442695
        %v2015 = vpow.pop %v2014
        %v2016 = vmul.f32 %v2005, 1.442695
        %v2017 = vpow.pop %v2016
        %v2018 = vsel %vm1075, %v2007, 0.0
        %2019 = vadd.xlane.f32.xlu0 %v2018
        %v2020 = vpop.xlane.xlu0 %2019
        %v2021 = vsel %vm1075, %v2009, 0.0
        %2022 = vadd.xlane.f32.xlu0 %v2021
        %v2023 = vpop.xlane.xlu0 %2022
        %v2024 = vsel %vm1075, %v2011, 0.0
        %2025 = vadd.xlane.f32.xlu0 %v2024
        %v2026 = vpop.xlane.xlu0 %2025
        %v2027 = vsel %vm1075, %v2013, 0.0
        %2028 = vadd.xlane.f32.xlu0 %v2027
        %v2029 = vpop.xlane.xlu0 %2028
        %v2030 = vsel %vm1075, %v2015, 0.0
        %2031 = vadd.xlane.f32.xlu0 %v2030
        %v2032 = vpop.xlane.xlu0 %2031
        %v2033 = vsel %vm1075, %v2017, 0.0
        %2034 = vadd.xlane.f32.xlu0 %v2033
        %v2035 = vpop.xlane.xlu0 %2034
        %v2036 = vrcp.pop %v2020
        %v2037 = vmul.f32 %v2007, %v2036
        %v2038 = vrcp.pop %v2023
        %v2039 = vmul.f32 %v2009, %v2038
        %v2040 = vrcp.pop %v2026
        %v2041 = vmul.f32 %v2011, %v2040
        %v2042 = vrcp.pop %v2029
        %v2043 = vmul.f32 %v2013, %v2042
        %v2044 = vrcp.pop %v2032
        %v2045 = vmul.f32 %v2015, %v2044
        %v2046 = vrcp.pop %v2035
        %v2047 = vmul.f32 %v2017, %v2046
        %2048 = vrot.lane.b32.xlu0 %v898, 48
        %v2049 = vpop.permute.xlu0 %2048
        %2050 = vrot.lane.b32.xlu0 %v903, 48
        %v2051 = vpop.permute.xlu0 %2050
        %2052 = vrot.lane.b32.xlu0 %v908, 48
        %v2053 = vpop.permute.xlu0 %2052
        %2054 = vrot.lane.b32.xlu0 %v913, 48
        %v2055 = vpop.permute.xlu0 %2054
        %2056 = vrot.lane.b32.xlu0 %v918, 48
        %v2057 = vpop.permute.xlu0 %2056
        %2058 = vrot.lane.b32.xlu0 %v923, 48
        %v2059 = vpop.permute.xlu0 %2058
        %v2067 = vsel %vm1075, %v2037, 0
        %v2070 = vsel %vm1075, %v2039, 0
        %v2073 = vsel %vm1075, %v2041, 0
        %v2076 = vsel %vm1075, %v2043, 0
        %v2079 = vsel %vm1075, %v2045, 0
        %v2082 = vsel %vm1075, %v2047, 0
        %2084 = vmatprep.subr.mxu0 0.0
        %2085 = vmatpush1.msra.mxu0 %v2049
        %2086 = vmatprep.subr.mxu0 0.0
        %2087 = vmatpush1.msra.mxu0 %v2051
        %2088 = vmatprep.subr.mxu0 0.0
        %2089 = vmatpush1.msra.mxu0 %v2053
        %2090 = vmatprep.subr.mxu0 0.0
        %2091 = vmatpush1.msra.mxu0 %v2055
        %2092 = vmatprep.subr.mxu0 0.0
        %2093 = vmatpush1.msra.mxu0 %v2057
        %2094 = vmatprep.subr.mxu0 0.0
        %2095 = vmatpush1.msra.mxu0 %v2059
        %2096 = vmatprep.subr.mxu0 0.0
        %2097 = vmatpush1.msra.mxu0 0.0
        %2098 = vmatprep.subr.mxu0 0.0
        %2099 = vmatpush1.msra.mxu0 0.0
        %2100 = vmatprep.subr.mxu0 0.0
        %2101 = vmatpush1.msra.mxu0 0.0
        %2102 = vmatprep.subr.mxu0 0.0
        %2103 = vmatpush1.msra.mxu0 0.0
        %2104 = vmatprep.subr.mxu0 0.0
        %2105 = vmatpush1.msra.mxu0 0.0
        %2106 = vmatprep.subr.mxu0 0.0
        %2107 = vmatpush1.msra.mxu0 0.0
        %2108 = vmatprep.subr.mxu0 0.0
        %2109 = vmatpush1.msra.mxu0 0.0
        %2110 = vmatprep.subr.mxu0 0.0
        %2111 = vmatpush1.msra.mxu0 0.0
        %2112 = vmatprep.subr.mxu0 0.0
        %2113 = vmatpush1.msra.mxu0 0.0
        %2114 = vmatprep.subr.mxu0 0.0
        %2115 = vmatpush1.msra.mxu0 0.0
        %2116 = vmatprep.subr.mxu0 0.0
        %2117 = vmatpush1.msra.mxu0 0.0
        %2118 = vmatprep.subr.mxu0 0.0
        %2119 = vmatpush1.msra.mxu0 0.0
        %2120 = vmatprep.subr.mxu0 0.0
        %2121 = vmatpush1.msra.mxu0 0.0
        %2122 = vmatprep.subr.mxu0 0.0
        %2123 = vmatpush1.msra.mxu0 0.0
        %2124 = vmatprep.subr.mxu0 0.0
        %2125 = vmatpush1.msra.mxu0 0.0
        %2126 = vmatprep.subr.mxu0 0.0
        %2127 = vmatpush1.msra.mxu0 0.0
        %2128 = vmatprep.subr.mxu0 0.0
        %2129 = vmatpush1.msra.mxu0 0.0
        %2130 = vmatprep.subr.mxu0 0.0
        %2131 = vmatpush1.msra.mxu0 0.0
        %2132 = vmatprep.subr.mxu0 0.0
        %2133 = vmatpush1.msra.mxu0 0.0
        %2134 = vmatprep.subr.mxu0 0.0
        %2135 = vmatpush1.msra.mxu0 0.0
        %2136 = vmatprep.subr.mxu0 0.0
        %2137 = vmatpush1.msra.mxu0 0.0
        %2138 = vmatprep.subr.mxu0 0.0
        %2139 = vmatpush1.msra.mxu0 0.0
        %2140 = vmatprep.subr.mxu0 0.0
        %2141 = vmatpush1.msra.mxu0 0.0
        %2142 = vmatprep.subr.mxu0 0.0
        %2143 = vmatpush1.msra.mxu0 0.0
        %2144 = vmatprep.subr.mxu0 0.0
        %2145 = vmatpush1.msra.mxu0 0.0
        %2146 = vmatprep.subr.mxu0 0.0
        %2147 = vmatpush1.msra.mxu0 0.0
        %2148 = vmatprep.mubr.f32.mxu0 0.0
        %2149 = vmatmul.mubr.f32.gmra.mrb[0].mxu0 %v2067
        %v2150 = vpop.f32.mrb[0].mxu0
        %v2151 = vadd.f32 0.0, %v2150
        %v2152 = vpop.f32.mrb[0].mxu0
        %2153 = vmatprep.mubr.f32.mxu0 0.0
        %2154 = vmatmul.mubr.f32.gmra.mrb[0].mxu0 %v2070
        %v2155 = vpop.f32.mrb[0].mxu0
        %v2156 = vadd.f32 0.0, %v2155
        %v2157 = vpop.f32.mrb[0].mxu0
        %2158 = vmatprep.mubr.f32.mxu0 0.0
        %2159 = vmatmul.mubr.f32.gmra.mrb[0].mxu0 %v2073
        %v2160 = vpop.f32.mrb[0].mxu0
        %v2161 = vadd.f32 0.0, %v2160
        %v2162 = vpop.f32.mrb[0].mxu0
        %2163 = vmatprep.mubr.f32.mxu0 0.0
        %2164 = vmatmul.mubr.f32.gmra.mrb[0].mxu0 %v2076
        %v2165 = vpop.f32.mrb[0].mxu0
        %v2166 = vadd.f32 0.0, %v2165
        %v2167 = vpop.f32.mrb[0].mxu0
        %2168 = vmatprep.mubr.f32.mxu0 0.0
        %2169 = vmatmul.mubr.f32.gmra.mrb[0].mxu0 %v2079
        %v2170 = vpop.f32.mrb[0].mxu0
        %v2171 = vadd.f32 0.0, %v2170
        %v2172 = vpop.f32.mrb[0].mxu0
        %2173 = vmatprep.mubr.f32.mxu0 0.0
        %2174 = vmatmul.mubr.f32.gmra.mrb[0].mxu0 %v2082
        %v2175 = vpop.f32.mrb[0].mxu0
        %v2176 = vadd.f32 0.0, %v2175
        %v2177 = vpop.f32.mrb[0].mxu0
        %2178 = vdwg.mxu0
        %v2180 = vsel %vm955, %v2151, 0
        %v2183 = vsel %vm955, %v2156, 0
        %v2186 = vsel %vm955, %v2161, 0
        %v2189 = vsel %vm955, %v2166, 0
        %v2192 = vsel %vm955, %v2171, 0
        %v2195 = vsel %vm955, %v2176, 0
        %2197 = vmatprep.subr.mxu0 0.0
        %2198 = vmatpush1.msra.mxu0 %v929
        %2199 = vmatprep.subr.mxu0 0.0
        %2200 = vmatpush1.msra.mxu0 0.0
        %2201 = vmatprep.subr.mxu0 0.0
        %2202 = vmatpush1.msra.mxu0 0.0
        %2203 = vmatprep.subr.mxu0 0.0
        %2204 = vmatpush1.msra.mxu0 0.0
        %2205 = vmatprep.subr.mxu0 0.0
        %2206 = vmatpush1.msra.mxu0 0.0
        %2207 = vmatprep.subr.mxu0 0.0
        %2208 = vmatpush1.msra.mxu0 0.0
        %2209 = vmatprep.subr.mxu0 0.0
        %2210 = vmatpush1.msra.mxu0 0.0
        %2211 = vmatprep.subr.mxu0 0.0
        %2212 = vmatpush1.msra.mxu0 0.0
        %2213 = vmatprep.subr.mxu0 0.0
        %2214 = vmatpush1.msra.mxu0 0.0
        %2215 = vmatprep.subr.mxu0 0.0
        %2216 = vmatpush1.msra.mxu0 0.0
        %2217 = vmatprep.subr.mxu0 0.0
        %2218 = vmatpush1.msra.mxu0 0.0
        %2219 = vmatprep.subr.mxu0 0.0
        %2220 = vmatpush1.msra.mxu0 0.0
        %2221 = vmatprep.subr.mxu0 0.0
        %2222 = vmatpush1.msra.mxu0 0.0
        %2223 = vmatprep.subr.mxu0 0.0
        %2224 = vmatpush1.msra.mxu0 0.0
        %2225 = vmatprep.subr.mxu0 0.0
        %2226 = vmatpush1.msra.mxu0 0.0
        %2227 = vmatprep.subr.mxu0 0.0
        %2228 = vmatpush1.msra.mxu0 0.0
        %2229 = vmatprep.subr.mxu0 0.0
        %2230 = vmatpush1.msra.mxu0 0.0
        %2231 = vmatprep.subr.mxu0 0.0
        %2232 = vmatpush1.msra.mxu0 0.0
        %2233 = vmatprep.subr.mxu0 0.0
        %2234 = vmatpush1.msra.mxu0 0.0
        %2235 = vmatprep.subr.mxu0 0.0
        %2236 = vmatpush1.msra.mxu0 0.0
        %2237 = vmatprep.subr.mxu0 0.0
        %2238 = vmatpush1.msra.mxu0 0.0
        %2239 = vmatprep.subr.mxu0 0.0
        %2240 = vmatpush1.msra.mxu0 0.0
        %2241 = vmatprep.subr.mxu0 0.0
        %2242 = vmatpush1.msra.mxu0 0.0
        %2243 = vmatprep.subr.mxu0 0.0
        %2244 = vmatpush1.msra.mxu0 0.0
        %2245 = vmatprep.subr.mxu0 0.0
        %2246 = vmatpush1.msra.mxu0 0.0
        %2247 = vmatprep.subr.mxu0 0.0
        %2248 = vmatpush1.msra.mxu0 0.0
        %2249 = vmatprep.subr.mxu0 0.0
        %2250 = vmatpush1.msra.mxu0 0.0
        %2251 = vmatprep.subr.mxu0 0.0
        %2252 = vmatpush1.msra.mxu0 0.0
        %2253 = vmatprep.subr.mxu0 0.0
        %2254 = vmatpush1.msra.mxu0 0.0
        %2255 = vmatprep.subr.mxu0 0.0
        %2256 = vmatpush1.msra.mxu0 0.0
        %2257 = vmatprep.subr.mxu0 0.0
        %2258 = vmatpush1.msra.mxu0 0.0
        %2259 = vmatprep.subr.mxu0 0.0
        %2260 = vmatpush1.msra.mxu0 0.0
        %2261 = vmatprep.mubr.f32.mxu0 0.0
        %2262 = vmatmul.mubr.f32.gmra.mrb[0].mxu0 %v2180
        %v2263 = vpop.f32.mrb[0].mxu0
        %v2264 = vadd.f32 0.0, %v2263
        %v2265 = vpop.f32.mrb[0].mxu0
        %2266 = vmatprep.mubr.f32.mxu0 0.0
        %2267 = vmatmul.mubr.f32.gmra.mrb[0].mxu0 %v2183
        %v2268 = vpop.f32.mrb[0].mxu0
        %v2269 = vadd.f32 0.0, %v2268
        %v2270 = vpop.f32.mrb[0].mxu0
        %2271 = vmatprep.mubr.f32.mxu0 0.0
        %2272 = vmatmul.mubr.f32.gmra.mrb[0].mxu0 %v2186
        %v2273 = vpop.f32.mrb[0].mxu0
        %v2274 = vadd.f32 0.0, %v2273
        %v2275 = vpop.f32.mrb[0].mxu0
        %2276 = vmatprep.mubr.f32.mxu0 0.0
        %2277 = vmatmul.mubr.f32.gmra.mrb[0].mxu0 %v2189
        %v2278 = vpop.f32.mrb[0].mxu0
        %v2279 = vadd.f32 0.0, %v2278
        %v2280 = vpop.f32.mrb[0].mxu0
        %2281 = vmatprep.mubr.f32.mxu0 0.0
        %2282 = vmatmul.mubr.f32.gmra.mrb[0].mxu0 %v2192
        %v2283 = vpop.f32.mrb[0].mxu0
        %v2284 = vadd.f32 0.0, %v2283
        %v2285 = vpop.f32.mrb[0].mxu0
        %2286 = vmatprep.mubr.f32.mxu0 0.0
        %2287 = vmatmul.mubr.f32.gmra.mrb[0].mxu0 %v2195
        %v2288 = vpop.f32.mrb[0].mxu0
        %v2289 = vadd.f32 0.0, %v2288
        %v2290 = vpop.f32.mrb[0].mxu0
        %2291 = vdwg.mxu0
        %v2292 = vadd.f32 %v1811, %v2264
        %v2293 = vadd.f32 %v1816, %v2269
        %v2294 = vadd.f32 %v1821, %v2274
        %v2295 = vadd.f32 %v1826, %v2279
        %v2296 = vadd.f32 %v1831, %v2284
        %v2297 = vadd.f32 %v1836, %v2289
        %2298 = vrot.lane.b32.xlu0 %v898, 104
        %v2299 = vpop.permute.xlu0 %2298
        %2300 = vrot.lane.b32.xlu0 %v903, 104
        %v2301 = vpop.permute.xlu0 %2300
        %2302 = vrot.lane.b32.xlu0 %v908, 104
        %v2303 = vpop.permute.xlu0 %2302
        %2304 = vrot.lane.b32.xlu0 %v913, 104
        %v2305 = vpop.permute.xlu0 %2304
        %2306 = vrot.lane.b32.xlu0 %v918, 104
        %v2307 = vpop.permute.xlu0 %2306
        %2308 = vrot.lane.b32.xlu0 %v923, 104
        %v2309 = vpop.permute.xlu0 %2308
        %2310 = vrot.lane.b32.xlu0 %v898, 72
        %v2311 = vpop.permute.xlu0 %2310
        %2312 = vrot.lane.b32.xlu0 %v903, 72
        %v2313 = vpop.permute.xlu0 %2312
        %2314 = vrot.lane.b32.xlu0 %v908, 72
        %v2315 = vpop.permute.xlu0 %2314
        %2316 = vrot.lane.b32.xlu0 %v913, 72
        %v2317 = vpop.permute.xlu0 %2316
        %2318 = vrot.lane.b32.xlu0 %v918, 72
        %v2319 = vpop.permute.xlu0 %2318
        %2320 = vrot.lane.b32.xlu0 %v923, 72
        %v2321 = vpop.permute.xlu0 %2320
        %v2322 = vsel %vm955, %v2299, 0
        %v2324 = vsel %vm955, %v2301, 0
        %v2326 = vsel %vm955, %v2303, 0
        %v2328 = vsel %vm955, %v2305, 0
        %v2330 = vsel %vm955, %v2307, 0
        %v2332 = vsel %vm955, %v2309, 0
        %v2334 = vsel %vm955, %v2311, 0
        %v2336 = vsel %vm955, %v2313, 0
        %v2338 = vsel %vm955, %v2315, 0
        %v2340 = vsel %vm955, %v2317, 0
        %v2342 = vsel %vm955, %v2319, 0
        %v2344 = vsel %vm955, %v2321, 0
        %2346 = vmatprep.subr.mxu0 0.0
        %2347 = vmatpush1.xpose.msra.mxu0 %v2334
        %2348 = vmatprep.subr.mxu0 0.0
        %2349 = vmatpush1.xpose.msra.mxu0 %v2336
        %2350 = vmatprep.subr.mxu0 0.0
        %2351 = vmatpush1.xpose.msra.mxu0 %v2338
        %2352 = vmatprep.subr.mxu0 0.0
        %2353 = vmatpush1.xpose.msra.mxu0 %v2340
        %2354 = vmatprep.subr.mxu0 0.0
        %2355 = vmatpush1.xpose.msra.mxu0 %v2342
        %2356 = vmatprep.subr.mxu0 0.0
        %2357 = vmatpush1.xpose.msra.mxu0 %v2344
        %2358 = vmatprep.subr.mxu0 0.0
        %2359 = vmatpush1.xpose.msra.mxu0 0.0
        %2360 = vmatprep.subr.mxu0 0.0
        %2361 = vmatpush1.xpose.msra.mxu0 0.0
        %2362 = vmatprep.subr.mxu0 0.0
        %2363 = vmatpush1.xpose.msra.mxu0 0.0
        %2364 = vmatprep.subr.mxu0 0.0
        %2365 = vmatpush1.xpose.msra.mxu0 0.0
        %2366 = vmatprep.subr.mxu0 0.0
        %2367 = vmatpush1.xpose.msra.mxu0 0.0
        %2368 = vmatprep.subr.mxu0 0.0
        %2369 = vmatpush1.xpose.msra.mxu0 0.0
        %2370 = vmatprep.subr.mxu0 0.0
        %2371 = vmatpush1.xpose.msra.mxu0 0.0
        %2372 = vmatprep.subr.mxu0 0.0
        %2373 = vmatpush1.xpose.msra.mxu0 0.0
        %2374 = vmatprep.subr.mxu0 0.0
        %2375 = vmatpush1.xpose.msra.mxu0 0.0
        %2376 = vmatprep.subr.mxu0 0.0
        %2377 = vmatpush1.xpose.msra.mxu0 0.0
        %2378 = vmatprep.subr.mxu0 0.0
        %2379 = vmatpush1.xpose.msra.mxu0 0.0
        %2380 = vmatprep.subr.mxu0 0.0
        %2381 = vmatpush1.xpose.msra.mxu0 0.0
        %2382 = vmatprep.subr.mxu0 0.0
        %2383 = vmatpush1.xpose.msra.mxu0 0.0
        %2384 = vmatprep.subr.mxu0 0.0
        %2385 = vmatpush1.xpose.msra.mxu0 0.0
        %2386 = vmatprep.subr.mxu0 0.0
        %2387 = vmatpush1.xpose.msra.mxu0 0.0
        %2388 = vmatprep.subr.mxu0 0.0
        %2389 = vmatpush1.xpose.msra.mxu0 0.0
        %2390 = vmatprep.subr.mxu0 0.0
        %2391 = vmatpush1.xpose.msra.mxu0 0.0
        %2392 = vmatprep.subr.mxu0 0.0
        %2393 = vmatpush1.xpose.msra.mxu0 0.0
        %2394 = vmatprep.subr.mxu0 0.0
        %2395 = vmatpush1.xpose.msra.mxu0 0.0
        %2396 = vmatprep.subr.mxu0 0.0
        %2397 = vmatpush1.xpose.msra.mxu0 0.0
        %2398 = vmatprep.subr.mxu0 0.0
        %2399 = vmatpush1.xpose.msra.mxu0 0.0
        %2400 = vmatprep.subr.mxu0 0.0
        %2401 = vmatpush1.xpose.msra.mxu0 0.0
        %2402 = vmatprep.subr.mxu0 0.0
        %2403 = vmatpush1.xpose.msra.mxu0 0.0
        %2404 = vmatprep.subr.mxu0 0.0
        %2405 = vmatpush1.xpose.msra.mxu0 0.0
        %2406 = vmatprep.subr.mxu0 0.0
        %2407 = vmatpush1.xpose.msra.mxu0 0.0
        %2408 = vmatprep.subr.mxu0 0.0
        %2409 = vmatpush1.xpose.msra.mxu0 0.0
        %2410 = vmatprep.mubr.f32.mxu0 0.0
        %2411 = vmatmul.mubr.f32.gmra.mrb[0].mxu0 %v2322
        %v2412 = vpop.f32.mrb[0].mxu0
        %v2413 = vadd.f32 %v931, %v2412
        %v2414 = vpop.f32.mrb[0].mxu0
        %2415 = vmatprep.mubr.f32.mxu0 0.0
        %2416 = vmatmul.mubr.f32.gmra.mrb[0].mxu0 %v2324
        %v2417 = vpop.f32.mrb[0].mxu0
        %v2418 = vadd.f32 %v932, %v2417
        %v2419 = vpop.f32.mrb[0].mxu0
        %2420 = vmatprep.mubr.f32.mxu0 0.0
        %2421 = vmatmul.mubr.f32.gmra.mrb[0].mxu0 %v2326
        %v2422 = vpop.f32.mrb[0].mxu0
        %v2423 = vadd.f32 %v933, %v2422
        %v2424 = vpop.f32.mrb[0].mxu0
        %2425 = vmatprep.mubr.f32.mxu0 0.0
        %2426 = vmatmul.mubr.f32.gmra.mrb[0].mxu0 %v2328
        %v2427 = vpop.f32.mrb[0].mxu0
        %v2428 = vadd.f32 %v934, %v2427
        %v2429 = vpop.f32.mrb[0].mxu0
        %2430 = vmatprep.mubr.f32.mxu0 0.0
        %2431 = vmatmul.mubr.f32.gmra.mrb[0].mxu0 %v2330
        %v2432 = vpop.f32.mrb[0].mxu0
        %v2433 = vadd.f32 %v935, %v2432
        %v2434 = vpop.f32.mrb[0].mxu0
        %2435 = vmatprep.mubr.f32.mxu0 0.0
        %2436 = vmatmul.mubr.f32.gmra.mrb[0].mxu0 %v2332
        %v2437 = vpop.f32.mrb[0].mxu0
        %v2438 = vadd.f32 %v936, %v2437
        %v2439 = vpop.f32.mrb[0].mxu0
        %2440 = vdwg.mxu0
        %v2441 = vsel %vm1075, %v2413, -inf
        %2442 = vmax.xlane.f32.xlu0 %v2441
        %v2443 = vpop.xlane.xlu0 %2442
        %v2444 = vsel %vm1075, %v2418, -inf
        %2445 = vmax.xlane.f32.xlu0 %v2444
        %v2446 = vpop.xlane.xlu0 %2445
        %v2447 = vsel %vm1075, %v2423, -inf
        %2448 = vmax.xlane.f32.xlu0 %v2447
        %v2449 = vpop.xlane.xlu0 %2448
        %v2450 = vsel %vm1075, %v2428, -inf
        %2451 = vmax.xlane.f32.xlu0 %v2450
        %v2452 = vpop.xlane.xlu0 %2451
        %v2453 = vsel %vm1075, %v2433, -inf
        %2454 = vmax.xlane.f32.xlu0 %v2453
        %v2455 = vpop.xlane.xlu0 %2454
        %v2456 = vsel %vm1075, %v2438, -inf
        %2457 = vmax.xlane.f32.xlu0 %v2456
        %v2458 = vpop.xlane.xlu0 %2457
        %v2459 = vsub.f32 %v2413, %v2443
        %v2460 = vsub.f32 %v2418, %v2446
        %v2461 = vsub.f32 %v2423, %v2449
        %v2462 = vsub.f32 %v2428, %v2452
        %v2463 = vsub.f32 %v2433, %v2455
        %v2464 = vsub.f32 %v2438, %v2458
        %v2465 = vmul.f32 %v2459, 1.442695
        %v2466 = vpow.pop %v2465
        %v2467 = vmul.f32 %v2460, 1.442695
        %v2468 = vpow.pop %v2467
        %v2469 = vmul.f32 %v2461, 1.442695
        %v2470 = vpow.pop %v2469
        %v2471 = vmul.f32 %v2462, 1.442695
        %v2472 = vpow.pop %v2471
        %v2473 = vmul.f32 %v2463, 1.442695
        %v2474 = vpow.pop %v2473
        %v2475 = vmul.f32 %v2464, 1.442695
        %v2476 = vpow.pop %v2475
        %v2477 = vsel %vm1075, %v2466, 0.0
        %2478 = vadd.xlane.f32.xlu0 %v2477
        %v2479 = vpop.xlane.xlu0 %2478
        %v2480 = vsel %vm1075, %v2468, 0.0
        %2481 = vadd.xlane.f32.xlu0 %v2480
        %v2482 = vpop.xlane.xlu0 %2481
        %v2483 = vsel %vm1075, %v2470, 0.0
        %2484 = vadd.xlane.f32.xlu0 %v2483
        %v2485 = vpop.xlane.xlu0 %2484
        %v2486 = vsel %vm1075, %v2472, 0.0
        %2487 = vadd.xlane.f32.xlu0 %v2486
        %v2488 = vpop.xlane.xlu0 %2487
        %v2489 = vsel %vm1075, %v2474, 0.0
        %2490 = vadd.xlane.f32.xlu0 %v2489
        %v2491 = vpop.xlane.xlu0 %2490
        %v2492 = vsel %vm1075, %v2476, 0.0
        %2493 = vadd.xlane.f32.xlu0 %v2492
        %v2494 = vpop.xlane.xlu0 %2493
        %v2495 = vrcp.pop %v2479
        %v2496 = vmul.f32 %v2466, %v2495
        %v2497 = vrcp.pop %v2482
        %v2498 = vmul.f32 %v2468, %v2497
        %v2499 = vrcp.pop %v2485
        %v2500 = vmul.f32 %v2470, %v2499
        %v2501 = vrcp.pop %v2488
        %v2502 = vmul.f32 %v2472, %v2501
        %v2503 = vrcp.pop %v2491
        %v2504 = vmul.f32 %v2474, %v2503
        %v2505 = vrcp.pop %v2494
        %v2506 = vmul.f32 %v2476, %v2505
        %2507 = vrot.lane.b32.xlu0 %v898, 40
        %v2508 = vpop.permute.xlu0 %2507
        %2509 = vrot.lane.b32.xlu0 %v903, 40
        %v2510 = vpop.permute.xlu0 %2509
        %2511 = vrot.lane.b32.xlu0 %v908, 40
        %v2512 = vpop.permute.xlu0 %2511
        %2513 = vrot.lane.b32.xlu0 %v913, 40
        %v2514 = vpop.permute.xlu0 %2513
        %2515 = vrot.lane.b32.xlu0 %v918, 40
        %v2516 = vpop.permute.xlu0 %2515
        %2517 = vrot.lane.b32.xlu0 %v923, 40
        %v2518 = vpop.permute.xlu0 %2517
        %v2526 = vsel %vm1075, %v2496, 0
        %v2529 = vsel %vm1075, %v2498, 0
        %v2532 = vsel %vm1075, %v2500, 0
        %v2535 = vsel %vm1075, %v2502, 0
        %v2538 = vsel %vm1075, %v2504, 0
        %v2541 = vsel %vm1075, %v2506, 0
        %2543 = vmatprep.subr.mxu0 0.0
        %2544 = vmatpush1.msra.mxu0 %v2508
        %2545 = vmatprep.subr.mxu0 0.0
        %2546 = vmatpush1.msra.mxu0 %v2510
        %2547 = vmatprep.subr.mxu0 0.0
        %2548 = vmatpush1.msra.mxu0 %v2512
        %2549 = vmatprep.subr.mxu0 0.0
        %2550 = vmatpush1.msra.mxu0 %v2514
        %2551 = vmatprep.subr.mxu0 0.0
        %2552 = vmatpush1.msra.mxu0 %v2516
        %2553 = vmatprep.subr.mxu0 0.0
        %2554 = vmatpush1.msra.mxu0 %v2518
        %2555 = vmatprep.subr.mxu0 0.0
        %2556 = vmatpush1.msra.mxu0 0.0
        %2557 = vmatprep.subr.mxu0 0.0
        %2558 = vmatpush1.msra.mxu0 0.0
        %2559 = vmatprep.subr.mxu0 0.0
        %2560 = vmatpush1.msra.mxu0 0.0
        %2561 = vmatprep.subr.mxu0 0.0
        %2562 = vmatpush1.msra.mxu0 0.0
        %2563 = vmatprep.subr.mxu0 0.0
        %2564 = vmatpush1.msra.mxu0 0.0
        %2565 = vmatprep.subr.mxu0 0.0
        %2566 = vmatpush1.msra.mxu0 0.0
        %2567 = vmatprep.subr.mxu0 0.0
        %2568 = vmatpush1.msra.mxu0 0.0
        %2569 = vmatprep.subr.mxu0 0.0
        %2570 = vmatpush1.msra.mxu0 0.0
        %2571 = vmatprep.subr.mxu0 0.0
        %2572 = vmatpush1.msra.mxu0 0.0
        %2573 = vmatprep.subr.mxu0 0.0
        %2574 = vmatpush1.msra.mxu0 0.0
        %2575 = vmatprep.subr.mxu0 0.0
        %2576 = vmatpush1.msra.mxu0 0.0
        %2577 = vmatprep.subr.mxu0 0.0
        %2578 = vmatpush1.msra.mxu0 0.0
        %2579 = vmatprep.subr.mxu0 0.0
        %2580 = vmatpush1.msra.mxu0 0.0
        %2581 = vmatprep.subr.mxu0 0.0
        %2582 = vmatpush1.msra.mxu0 0.0
        %2583 = vmatprep.subr.mxu0 0.0
        %2584 = vmatpush1.msra.mxu0 0.0
        %2585 = vmatprep.subr.mxu0 0.0
        %2586 = vmatpush1.msra.mxu0 0.0
        %2587 = vmatprep.subr.mxu0 0.0
        %2588 = vmatpush1.msra.mxu0 0.0
        %2589 = vmatprep.subr.mxu0 0.0
        %2590 = vmatpush1.msra.mxu0 0.0
        %2591 = vmatprep.subr.mxu0 0.0
        %2592 = vmatpush1.msra.mxu0 0.0
        %2593 = vmatprep.subr.mxu0 0.0
        %2594 = vmatpush1.msra.mxu0 0.0
        %2595 = vmatprep.subr.mxu0 0.0
        %2596 = vmatpush1.msra.mxu0 0.0
        %2597 = vmatprep.subr.mxu0 0.0
        %2598 = vmatpush1.msra.mxu0 0.0
        %2599 = vmatprep.subr.mxu0 0.0
        %2600 = vmatpush1.msra.mxu0 0.0
        %2601 = vmatprep.subr.mxu0 0.0
        %2602 = vmatpush1.msra.mxu0 0.0
        %2603 = vmatprep.subr.mxu0 0.0
        %2604 = vmatpush1.msra.mxu0 0.0
        %2605 = vmatprep.subr.mxu0 0.0
        %2606 = vmatpush1.msra.mxu0 0.0
        %2607 = vmatprep.mubr.f32.mxu0 0.0
        %2608 = vmatmul.mubr.f32.gmra.mrb[0].mxu0 %v2526
        %v2609 = vpop.f32.mrb[0].mxu0
        %v2610 = vadd.f32 0.0, %v2609
        %v2611 = vpop.f32.mrb[0].mxu0
        %2612 = vmatprep.mubr.f32.mxu0 0.0
        %2613 = vmatmul.mubr.f32.gmra.mrb[0].mxu0 %v2529
        %v2614 = vpop.f32.mrb[0].mxu0
        %v2615 = vadd.f32 0.0, %v2614
        %v2616 = vpop.f32.mrb[0].mxu0
        %2617 = vmatprep.mubr.f32.mxu0 0.0
        %2618 = vmatmul.mubr.f32.gmra.mrb[0].mxu0 %v2532
        %v2619 = vpop.f32.mrb[0].mxu0
        %v2620 = vadd.f32 0.0, %v2619
        %v2621 = vpop.f32.mrb[0].mxu0
        %2622 = vmatprep.mubr.f32.mxu0 0.0
        %2623 = vmatmul.mubr.f32.gmra.mrb[0].mxu0 %v2535
        %v2624 = vpop.f32.mrb[0].mxu0
        %v2625 = vadd.f32 0.0, %v2624
        %v2626 = vpop.f32.mrb[0].mxu0
        %2627 = vmatprep.mubr.f32.mxu0 0.0
        %2628 = vmatmul.mubr.f32.gmra.mrb[0].mxu0 %v2538
        %v2629 = vpop.f32.mrb[0].mxu0
        %v2630 = vadd.f32 0.0, %v2629
        %v2631 = vpop.f32.mrb[0].mxu0
        %2632 = vmatprep.mubr.f32.mxu0 0.0
        %2633 = vmatmul.mubr.f32.gmra.mrb[0].mxu0 %v2541
        %v2634 = vpop.f32.mrb[0].mxu0
        %v2635 = vadd.f32 0.0, %v2634
        %v2636 = vpop.f32.mrb[0].mxu0
        %2637 = vdwg.mxu0
        %v2639 = vsel %vm955, %v2610, 0
        %v2642 = vsel %vm955, %v2615, 0
        %v2645 = vsel %vm955, %v2620, 0
        %v2648 = vsel %vm955, %v2625, 0
        %v2651 = vsel %vm955, %v2630, 0
        %v2654 = vsel %vm955, %v2635, 0
        %2656 = vmatprep.subr.mxu0 0.0
        %2657 = vmatpush1.msra.mxu0 %v930
        %2658 = vmatprep.subr.mxu0 0.0
        %2659 = vmatpush1.msra.mxu0 0.0
        %2660 = vmatprep.subr.mxu0 0.0
        %2661 = vmatpush1.msra.mxu0 0.0
        %2662 = vmatprep.subr.mxu0 0.0
        %2663 = vmatpush1.msra.mxu0 0.0
        %2664 = vmatprep.subr.mxu0 0.0
        %2665 = vmatpush1.msra.mxu0 0.0
        %2666 = vmatprep.subr.mxu0 0.0
        %2667 = vmatpush1.msra.mxu0 0.0
        %2668 = vmatprep.subr.mxu0 0.0
        %2669 = vmatpush1.msra.mxu0 0.0
        %2670 = vmatprep.subr.mxu0 0.0
        %2671 = vmatpush1.msra.mxu0 0.0
        %2672 = vmatprep.subr.mxu0 0.0
        %2673 = vmatpush1.msra.mxu0 0.0
        %2674 = vmatprep.subr.mxu0 0.0
        %2675 = vmatpush1.msra.mxu0 0.0
        %2676 = vmatprep.subr.mxu0 0.0
        %2677 = vmatpush1.msra.mxu0 0.0
        %2678 = vmatprep.subr.mxu0 0.0
        %2679 = vmatpush1.msra.mxu0 0.0
        %2680 = vmatprep.subr.mxu0 0.0
        %2681 = vmatpush1.msra.mxu0 0.0
        %2682 = vmatprep.subr.mxu0 0.0
        %2683 = vmatpush1.msra.mxu0 0.0
        %2684 = vmatprep.subr.mxu0 0.0
        %2685 = vmatpush1.msra.mxu0 0.0
        %2686 = vmatprep.subr.mxu0 0.0
        %2687 = vmatpush1.msra.mxu0 0.0
        %2688 = vmatprep.subr.mxu0 0.0
        %2689 = vmatpush1.msra.mxu0 0.0
        %2690 = vmatprep.subr.mxu0 0.0
        %2691 = vmatpush1.msra.mxu0 0.0
        %2692 = vmatprep.subr.mxu0 0.0
        %2693 = vmatpush1.msra.mxu0 0.0
        %2694 = vmatprep.subr.mxu0 0.0
        %2695 = vmatpush1.msra.mxu0 0.0
        %2696 = vmatprep.subr.mxu0 0.0
        %2697 = vmatpush1.msra.mxu0 0.0
        %2698 = vmatprep.subr.mxu0 0.0
        %2699 = vmatpush1.msra.mxu0 0.0
        %2700 = vmatprep.subr.mxu0 0.0
        %2701 = vmatpush1.msra.mxu0 0.0
        %2702 = vmatprep.subr.mxu0 0.0
        %2703 = vmatpush1.msra.mxu0 0.0
        %2704 = vmatprep.subr.mxu0 0.0
        %2705 = vmatpush1.msra.mxu0 0.0
        %2706 = vmatprep.subr.mxu0 0.0
        %2707 = vmatpush1.msra.mxu0 0.0
        %2708 = vmatprep.subr.mxu0 0.0
        %2709 = vmatpush1.msra.mxu0 0.0
        %2710 = vmatprep.subr.mxu0 0.0
        %2711 = vmatpush1.msra.mxu0 0.0
        %2712 = vmatprep.subr.mxu0 0.0
        %2713 = vmatpush1.msra.mxu0 0.0
        %2714 = vmatprep.subr.mxu0 0.0
        %2715 = vmatpush1.msra.mxu0 0.0
        %2716 = vmatprep.subr.mxu0 0.0
        %2717 = vmatpush1.msra.mxu0 0.0
        %2718 = vmatprep.subr.mxu0 0.0
        %2719 = vmatpush1.msra.mxu0 0.0
        %2720 = vmatprep.mubr.f32.mxu0 0.0
        %2721 = vmatmul.mubr.f32.gmra.mrb[0].mxu0 %v2639
        %v2722 = vpop.f32.mrb[0].mxu0
        %v2723 = vadd.f32 0.0, %v2722
        %v2724 = vpop.f32.mrb[0].mxu0
        %2725 = vmatprep.mubr.f32.mxu0 0.0
        %2726 = vmatmul.mubr.f32.gmra.mrb[0].mxu0 %v2642
        %v2727 = vpop.f32.mrb[0].mxu0
        %v2728 = vadd.f32 0.0, %v2727
        %v2729 = vpop.f32.mrb[0].mxu0
        %2730 = vmatprep.mubr.f32.mxu0 0.0
        %2731 = vmatmul.mubr.f32.gmra.mrb[0].mxu0 %v2645
        %v2732 = vpop.f32.mrb[0].mxu0
        %v2733 = vadd.f32 0.0, %v2732
        %v2734 = vpop.f32.mrb[0].mxu0
        %2735 = vmatprep.mubr.f32.mxu0 0.0
        %2736 = vmatmul.mubr.f32.gmra.mrb[0].mxu0 %v2648
        %v2737 = vpop.f32.mrb[0].mxu0
        %v2738 = vadd.f32 0.0, %v2737
        %v2739 = vpop.f32.mrb[0].mxu0
        %2740 = vmatprep.mubr.f32.mxu0 0.0
        %2741 = vmatmul.mubr.f32.gmra.mrb[0].mxu0 %v2651
        %v2742 = vpop.f32.mrb[0].mxu0
        %v2743 = vadd.f32 0.0, %v2742
        %v2744 = vpop.f32.mrb[0].mxu0
        %2745 = vmatprep.mubr.f32.mxu0 0.0
        %2746 = vmatmul.mubr.f32.gmra.mrb[0].mxu0 %v2654
        %v2747 = vpop.f32.mrb[0].mxu0
        %v2748 = vadd.f32 0.0, %v2747
        %v2749 = vpop.f32.mrb[0].mxu0
        %2750 = vdwg.mxu0
        %v2751 = vadd.f32 %v2292, %v2723
        %v2752 = vadd.f32 %v2293, %v2728
        %v2753 = vadd.f32 %v2294, %v2733
        %v2754 = vadd.f32 %v2295, %v2738
        %v2755 = vadd.f32 %v2296, %v2743
        %v2756 = vadd.f32 %v2297, %v2748
        %v2757 = vadd.f32 %v685, %v2751
        %v2758 = vadd.f32 %v686, %v2752
        %v2759 = vadd.f32 %v687, %v2753
        %v2760 = vadd.f32 %v688, %v2754
        %v2761 = vadd.f32 %v689, %v2755
        %v2762 = vadd.f32 %v690, %v2756
        %s2763 = scalar_lea.vmem %s8, %s35
        %v2764 = vld [vmem:[%s2763] sm:$0x1]
        %v2766 = vlaneseq
        %v2767 = vshrl.u32 %v2766, 7
        %v2768 = vsub.s32 0, %v2767
        %v2769 = vrot.slane %v2764, %v2768
        %v2771 = vadd.f32 %v2757, %v2769
        %v2772 = vadd.f32 %v2758, %v2769
        %v2773 = vadd.f32 %v2759, %v2769
        %v2774 = vadd.f32 %v2760, %v2769
        %v2775 = vadd.f32 %v2761, %v2769
        %v2776 = vadd.f32 %v2762, %v2769
        %s2777 = scalar_lea.vmem %s9, %s35
        %v2778 = vld [vmem:[%s2777] sm:$0x1]
        %s2779 = scalar_lea.vmem %s10, %s35
        %v2780 = vld [vmem:[%s2779] sm:$0x1]
        %v2781 = vsel %vm695, %v2771, 0.0
        %2782 = vadd.xlane.f32.xlu0 %v2781
        %v2783 = vpop.xlane.xlu0 %2782
        %v2784 = vsel %vm695, %v2772, 0.0
        %2785 = vadd.xlane.f32.xlu0 %v2784
        %v2786 = vpop.xlane.xlu0 %2785
        %v2787 = vsel %vm695, %v2773, 0.0
        %2788 = vadd.xlane.f32.xlu0 %v2787
        %v2789 = vpop.xlane.xlu0 %2788
        %v2790 = vsel %vm695, %v2774, 0.0
        %2791 = vadd.xlane.f32.xlu0 %v2790
        %v2792 = vpop.xlane.xlu0 %2791
        %v2793 = vsel %vm695, %v2775, 0.0
        %2794 = vadd.xlane.f32.xlu0 %v2793
        %v2795 = vpop.xlane.xlu0 %2794
        %v2796 = vsel %vm695, %v2776, 0.0
        %2797 = vadd.xlane.f32.xlu0 %v2796
        %v2798 = vpop.xlane.xlu0 %2797
        %v2799 = vmul.f32 %v2783, %v714
        %v2800 = vmul.f32 %v2786, %v714
        %v2801 = vmul.f32 %v2789, %v714
        %v2802 = vmul.f32 %v2792, %v714
        %v2803 = vmul.f32 %v2795, %v714
        %v2804 = vmul.f32 %v2798, %v714
        %v2805 = vsub.f32 %v2771, %v2799
        %v2806 = vsub.f32 %v2772, %v2800
        %v2807 = vsub.f32 %v2773, %v2801
        %v2808 = vsub.f32 %v2774, %v2802
        %v2809 = vsub.f32 %v2775, %v2803
        %v2810 = vsub.f32 %v2776, %v2804
        %v2811 = vmul.f32 %v2805, %v2805
        %v2812 = vmul.f32 %v2806, %v2806
        %v2813 = vmul.f32 %v2807, %v2807
        %v2814 = vmul.f32 %v2808, %v2808
        %v2815 = vmul.f32 %v2809, %v2809
        %v2816 = vmul.f32 %v2810, %v2810
        %v2817 = vsel %vm695, %v2811, 0.0
        %2818 = vadd.xlane.f32.xlu0 %v2817
        %v2819 = vpop.xlane.xlu0 %2818
        %v2820 = vsel %vm695, %v2812, 0.0
        %2821 = vadd.xlane.f32.xlu0 %v2820
        %v2822 = vpop.xlane.xlu0 %2821
        %v2823 = vsel %vm695, %v2813, 0.0
        %2824 = vadd.xlane.f32.xlu0 %v2823
        %v2825 = vpop.xlane.xlu0 %2824
        %v2826 = vsel %vm695, %v2814, 0.0
        %2827 = vadd.xlane.f32.xlu0 %v2826
        %v2828 = vpop.xlane.xlu0 %2827
        %v2829 = vsel %vm695, %v2815, 0.0
        %2830 = vadd.xlane.f32.xlu0 %v2829
        %v2831 = vpop.xlane.xlu0 %2830
        %v2832 = vsel %vm695, %v2816, 0.0
        %2833 = vadd.xlane.f32.xlu0 %v2832
        %v2834 = vpop.xlane.xlu0 %2833
        %v2835 = vmul.f32 %v2819, %v714
        %v2836 = vmul.f32 %v2822, %v714
        %v2837 = vmul.f32 %v2825, %v714
        %v2838 = vmul.f32 %v2828, %v714
        %v2839 = vmul.f32 %v2831, %v714
        %v2840 = vmul.f32 %v2834, %v714
        %v2841 = vadd.f32 %v2835, 1e-05
        %v2842 = vadd.f32 %v2836, 1e-05
        %v2843 = vadd.f32 %v2837, 1e-05
        %v2844 = vadd.f32 %v2838, 1e-05
        %v2845 = vadd.f32 %v2839, 1e-05
        %v2846 = vadd.f32 %v2840, 1e-05
        %v2847 = vrsqrt.pop %v2841
        %v2848 = vrsqrt.pop %v2842
        %v2849 = vrsqrt.pop %v2843
        %v2850 = vrsqrt.pop %v2844
        %v2851 = vrsqrt.pop %v2845
        %v2852 = vrsqrt.pop %v2846
        %v2853 = vmul.f32 %v2805, %v2847
        %v2854 = vmul.f32 %v2806, %v2848
        %v2855 = vmul.f32 %v2807, %v2849
        %v2856 = vmul.f32 %v2808, %v2850
        %v2857 = vmul.f32 %v2809, %v2851
        %v2858 = vmul.f32 %v2810, %v2852
        %v2860 = vlaneseq
        %v2861 = vshrl.u32 %v2860, 7
        %v2862 = vsub.s32 0, %v2861
        %v2863 = vrot.slane %v2778, %v2862
        %v2865 = vmul.f32 %v2853, %v2863
        %v2866 = vmul.f32 %v2854, %v2863
        %v2867 = vmul.f32 %v2855, %v2863
        %v2868 = vmul.f32 %v2856, %v2863
        %v2869 = vmul.f32 %v2857, %v2863
        %v2870 = vmul.f32 %v2858, %v2863
        %v2872 = vlaneseq
        %v2873 = vshrl.u32 %v2872, 7
        %v2874 = vsub.s32 0, %v2873
        %v2875 = vrot.slane %v2780, %v2874
        %v2877 = vadd.f32 %v2865, %v2875
        %v2878 = vadd.f32 %v2866, %v2875
        %v2879 = vadd.f32 %v2867, %v2875
        %v2880 = vadd.f32 %v2868, %v2875
        %v2881 = vadd.f32 %v2869, %v2875
        %v2882 = vadd.f32 %v2870, %v2875
        %s2883 = scalar_lea.vmem %s11, %s799
        %v2884 = vld [vmem:[%s2883] sm:$0xff]
        %v2885 = vld [vmem:[%s2883 + $0x8] sm:$0xff]
        %v2886 = vld [vmem:[%s2883 + $0x10] sm:$0xff]
        %v2887 = vld [vmem:[%s2883 + $0x18] sm:$0xff]
        %s2888 = scalar_lea.vmem %s12, %s35
        %v2889 = vld [vmem:[%s2888] sm:$0x1]
        %v2891 = vlaneseq
        %v2892 = vshrl.u32 %v2891, 7
        %v2893 = vsub.s32 0, %v2892
        %v2894 = vrot.slane %v2889, %v2893
        %v2897 = vsel %vm695, %v2877, 0
        %v2900 = vsel %vm695, %v2878, 0
        %v2903 = vsel %vm695, %v2879, 0
        %v2906 = vsel %vm695, %v2880, 0
        %v2909 = vsel %vm695, %v2881, 0
        %v2912 = vsel %vm695, %v2882, 0
        %2914 = vmatprep.subr.mxu0 0.0
        %2915 = vmatpush1.msra.mxu0 %v2884
        %2916 = vmatprep.subr.mxu0 0.0
        %2917 = vmatpush1.msra.mxu0 %v2885
        %2918 = vmatprep.subr.mxu0 0.0
        %2919 = vmatpush1.msra.mxu0 %v2886
        %2920 = vmatprep.subr.mxu0 0.0
        %2921 = vmatpush1.msra.mxu0 %v2887
        %2922 = vmatprep.subr.mxu0 0.0
        %2923 = vmatpush1.msra.mxu0 0.0
        %2924 = vmatprep.subr.mxu0 0.0
        %2925 = vmatpush1.msra.mxu0 0.0
        %2926 = vmatprep.subr.mxu0 0.0
        %2927 = vmatpush1.msra.mxu0 0.0
        %2928 = vmatprep.subr.mxu0 0.0
        %2929 = vmatpush1.msra.mxu0 0.0
        %2930 = vmatprep.subr.mxu0 0.0
        %2931 = vmatpush1.msra.mxu0 0.0
        %2932 = vmatprep.subr.mxu0 0.0
        %2933 = vmatpush1.msra.mxu0 0.0
        %2934 = vmatprep.subr.mxu0 0.0
        %2935 = vmatpush1.msra.mxu0 0.0
        %2936 = vmatprep.subr.mxu0 0.0
        %2937 = vmatpush1.msra.mxu0 0.0
        %2938 = vmatprep.subr.mxu0 0.0
        %2939 = vmatpush1.msra.mxu0 0.0
        %2940 = vmatprep.subr.mxu0 0.0
        %2941 = vmatpush1.msra.mxu0 0.0
        %2942 = vmatprep.subr.mxu0 0.0
        %2943 = vmatpush1.msra.mxu0 0.0
        %2944 = vmatprep.subr.mxu0 0.0
        %2945 = vmatpush1.msra.mxu0 0.0
        %2946 = vmatprep.subr.mxu0 0.0
        %2947 = vmatpush1.msra.mxu0 0.0
        %2948 = vmatprep.subr.mxu0 0.0
        %2949 = vmatpush1.msra.mxu0 0.0
        %2950 = vmatprep.subr.mxu0 0.0
        %2951 = vmatpush1.msra.mxu0 0.0
        %2952 = vmatprep.subr.mxu0 0.0
        %2953 = vmatpush1.msra.mxu0 0.0
        %2954 = vmatprep.subr.mxu0 0.0
        %2955 = vmatpush1.msra.mxu0 0.0
        %2956 = vmatprep.subr.mxu0 0.0
        %2957 = vmatpush1.msra.mxu0 0.0
        %2958 = vmatprep.subr.mxu0 0.0
        %2959 = vmatpush1.msra.mxu0 0.0
        %2960 = vmatprep.subr.mxu0 0.0
        %2961 = vmatpush1.msra.mxu0 0.0
        %2962 = vmatprep.subr.mxu0 0.0
        %2963 = vmatpush1.msra.mxu0 0.0
        %2964 = vmatprep.subr.mxu0 0.0
        %2965 = vmatpush1.msra.mxu0 0.0
        %2966 = vmatprep.subr.mxu0 0.0
        %2967 = vmatpush1.msra.mxu0 0.0
        %2968 = vmatprep.subr.mxu0 0.0
        %2969 = vmatpush1.msra.mxu0 0.0
        %2970 = vmatprep.subr.mxu0 0.0
        %2971 = vmatpush1.msra.mxu0 0.0
        %2972 = vmatprep.subr.mxu0 0.0
        %2973 = vmatpush1.msra.mxu0 0.0
        %2974 = vmatprep.subr.mxu0 0.0
        %2975 = vmatpush1.msra.mxu0 0.0
        %2976 = vmatprep.subr.mxu0 0.0
        %2977 = vmatpush1.msra.mxu0 0.0
        %2978 = vmatprep.mubr.f32.mxu0 0.0
        %2979 = vmatmul.mubr.f32.gmra.mrb[0].mxu0 %v2897
        %v2980 = vpop.f32.mrb[0].mxu0
        %v2981 = vadd.f32 %v2894, %v2980
        %v2982 = vpop.f32.mrb[0].mxu0
        %2983 = vmatprep.mubr.f32.mxu0 0.0
        %2984 = vmatmul.mubr.f32.gmra.mrb[0].mxu0 %v2900
        %v2985 = vpop.f32.mrb[0].mxu0
        %v2986 = vadd.f32 %v2894, %v2985
        %v2987 = vpop.f32.mrb[0].mxu0
        %2988 = vmatprep.mubr.f32.mxu0 0.0
        %2989 = vmatmul.mubr.f32.gmra.mrb[0].mxu0 %v2903
        %v2990 = vpop.f32.mrb[0].mxu0
        %v2991 = vadd.f32 %v2894, %v2990
        %v2992 = vpop.f32.mrb[0].mxu0
        %2993 = vmatprep.mubr.f32.mxu0 0.0
        %2994 = vmatmul.mubr.f32.gmra.mrb[0].mxu0 %v2906
        %v2995 = vpop.f32.mrb[0].mxu0
        %v2996 = vadd.f32 %v2894, %v2995
        %v2997 = vpop.f32.mrb[0].mxu0
        %2998 = vmatprep.mubr.f32.mxu0 0.0
        %2999 = vmatmul.mubr.f32.gmra.mrb[0].mxu0 %v2909
        %v3000 = vpop.f32.mrb[0].mxu0
        %v3001 = vadd.f32 %v2894, %v3000
        %v3002 = vpop.f32.mrb[0].mxu0
        %3003 = vmatprep.mubr.f32.mxu0 0.0
        %3004 = vmatmul.mubr.f32.gmra.mrb[0].mxu0 %v2912
        %v3005 = vpop.f32.mrb[0].mxu0
        %v3006 = vadd.f32 %v2894, %v3005
        %v3007 = vpop.f32.mrb[0].mxu0
        %3008 = vdwg.mxu0
        %v3009 = vmul.f32 %v2981, 0.5
        %v3010 = vmul.f32 %v2986, 0.5
        %v3011 = vmul.f32 %v2991, 0.5
        %v3012 = vmul.f32 %v2996, 0.5
        %v3013 = vmul.f32 %v3001, 0.5
        %v3014 = vmul.f32 %v3006, 0.5
        %v3015 = vmul.f32 %v2981, 0.70710677
        %v3016 = vmul.f32 %v2986, 0.70710677
        %v3017 = vmul.f32 %v2991, 0.70710677
        %v3018 = vmul.f32 %v2996, 0.70710677
        %v3019 = vmul.f32 %v3001, 0.70710677
        %v3020 = vmul.f32 %v3006, 0.70710677
        %vm3021 = vcmp.ge.f32.partialorder %v3015, 0.0
        %vm3022 = vcmp.ge.f32.partialorder %v3016, 0.0
        %vm3023 = vcmp.ge.f32.partialorder %v3017, 0.0
        %vm3024 = vcmp.ge.f32.partialorder %v3018, 0.0
        %vm3025 = vcmp.ge.f32.partialorder %v3019, 0.0
        %vm3026 = vcmp.ge.f32.partialorder %v3020, 0.0
        %v3027 = vsel %vm3021, 1.0, -1.0
        %v3028 = vsel %vm3022, 1.0, -1.0
        %v3029 = vsel %vm3023, 1.0, -1.0
        %v3030 = vsel %vm3024, 1.0, -1.0
        %v3031 = vsel %vm3025, 1.0, -1.0
        %v3032 = vsel %vm3026, 1.0, -1.0
        %v3033 = vand.u32 2147483647, %v3015
        %v3034 = vand.u32 2147483647, %v3016
        %v3035 = vand.u32 2147483647, %v3017
        %v3036 = vand.u32 2147483647, %v3018
        %v3037 = vand.u32 2147483647, %v3019
        %v3038 = vand.u32 2147483647, %v3020
        %v3039 = vmul.f32 %v3033, 0.3275911
        %v3040 = vmul.f32 %v3034, 0.3275911
        %v3041 = vmul.f32 %v3035, 0.3275911
        %v3042 = vmul.f32 %v3036, 0.3275911
        %v3043 = vmul.f32 %v3037, 0.3275911
        %v3044 = vmul.f32 %v3038, 0.3275911
        %v3045 = vadd.f32 %v3039, 1.0
        %v3046 = vadd.f32 %v3040, 1.0
        %v3047 = vadd.f32 %v3041, 1.0
        %v3048 = vadd.f32 %v3042, 1.0
        %v3049 = vadd.f32 %v3043, 1.0
        %v3050 = vadd.f32 %v3044, 1.0
        %v3051 = vrcp.pop %v3045
        %v3052 = vmul.f32 1.0, %v3051
        %v3053 = vrcp.pop %v3046
        %v3054 = vmul.f32 1.0, %v3053
        %v3055 = vrcp.pop %v3047
        %v3056 = vmul.f32 1.0, %v3055
        %v3057 = vrcp.pop %v3048
        %v3058 = vmul.f32 1.0, %v3057
        %v3059 = vrcp.pop %v3049
        %v3060 = vmul.f32 1.0, %v3059
        %v3061 = vrcp.pop %v3050
        %v3062 = vmul.f32 1.0, %v3061
        %v3063 = vmul.f32 %v3052, 1.0614054
        %v3064 = vmul.f32 %v3054, 1.0614054
        %v3065 = vmul.f32 %v3056, 1.0614054
        %v3066 = vmul.f32 %v3058, 1.0614054
        %v3067 = vmul.f32 %v3060, 1.0614054
        %v3068 = vmul.f32 %v3062, 1.0614054
        %v3069 = vadd.f32 %v3063, -1.4531521
        %v3070 = vadd.f32 %v3064, -1.4531521
        %v3071 = vadd.f32 %v3065, -1.4531521
        %v3072 = vadd.f32 %v3066, -1.4531521
        %v3073 = vadd.f32 %v3067, -1.4531521
        %v3074 = vadd.f32 %v3068, -1.4531521
        %v3075 = vmul.f32 %v3069, %v3052
        %v3076 = vmul.f32 %v3070, %v3054
        %v3077 = vmul.f32 %v3071, %v3056
        %v3078 = vmul.f32 %v3072, %v3058
        %v3079 = vmul.f32 %v3073, %v3060
        %v3080 = vmul.f32 %v3074, %v3062
        %v3081 = vadd.f32 %v3075, 1.4214138
        %v3082 = vadd.f32 %v3076, 1.4214138
        %v3083 = vadd.f32 %v3077, 1.4214138
        %v3084 = vadd.f32 %v3078, 1.4214138
        %v3085 = vadd.f32 %v3079, 1.4214138
        %v3086 = vadd.f32 %v3080, 1.4214138
        %v3087 = vmul.f32 %v3081, %v3052
        %v3088 = vmul.f32 %v3082, %v3054
        %v3089 = vmul.f32 %v3083, %v3056
        %v3090 = vmul.f32 %v3084, %v3058
        %v3091 = vmul.f32 %v3085, %v3060
        %v3092 = vmul.f32 %v3086, %v3062
        %v3093 = vadd.f32 %v3087, -0.28449672
        %v3094 = vadd.f32 %v3088, -0.28449672
        %v3095 = vadd.f32 %v3089, -0.28449672
        %v3096 = vadd.f32 %v3090, -0.28449672
        %v3097 = vadd.f32 %v3091, -0.28449672
        %v3098 = vadd.f32 %v3092, -0.28449672
        %v3099 = vmul.f32 %v3093, %v3052
        %v3100 = vmul.f32 %v3094, %v3054
        %v3101 = vmul.f32 %v3095, %v3056
        %v3102 = vmul.f32 %v3096, %v3058
        %v3103 = vmul.f32 %v3097, %v3060
        %v3104 = vmul.f32 %v3098, %v3062
        %v3105 = vadd.f32 %v3099, 0.2548296
        %v3106 = vadd.f32 %v3100, 0.2548296
        %v3107 = vadd.f32 %v3101, 0.2548296
        %v3108 = vadd.f32 %v3102, 0.2548296
        %v3109 = vadd.f32 %v3103, 0.2548296
        %v3110 = vadd.f32 %v3104, 0.2548296
        %v3111 = vmul.f32 %v3105, %v3052
        %v3112 = vmul.f32 %v3106, %v3054
        %v3113 = vmul.f32 %v3107, %v3056
        %v3114 = vmul.f32 %v3108, %v3058
        %v3115 = vmul.f32 %v3109, %v3060
        %v3116 = vmul.f32 %v3110, %v3062
        %v3117 = vsub.f32 0.0, %v3033
        %v3118 = vsub.f32 0.0, %v3034
        %v3119 = vsub.f32 0.0, %v3035
        %v3120 = vsub.f32 0.0, %v3036
        %v3121 = vsub.f32 0.0, %v3037
        %v3122 = vsub.f32 0.0, %v3038
        %v3123 = vmul.f32 %v3117, %v3033
        %v3124 = vmul.f32 %v3118, %v3034
        %v3125 = vmul.f32 %v3119, %v3035
        %v3126 = vmul.f32 %v3120, %v3036
        %v3127 = vmul.f32 %v3121, %v3037
        %v3128 = vmul.f32 %v3122, %v3038
        %v3129 = vmul.f32 %v3123, 1.442695
        %v3130 = vpow.pop %v3129
        %v3131 = vmul.f32 %v3124, 1.442695
        %v3132 = vpow.pop %v3131
        %v3133 = vmul.f32 %v3125, 1.442695
        %v3134 = vpow.pop %v3133
        %v3135 = vmul.f32 %v3126, 1.442695
        %v3136 = vpow.pop %v3135
        %v3137 = vmul.f32 %v3127, 1.442695
        %v3138 = vpow.pop %v3137
        %v3139 = vmul.f32 %v3128, 1.442695
        %v3140 = vpow.pop %v3139
        %v3141 = vmul.f32 %v3111, %v3130
        %v3142 = vmul.f32 %v3112, %v3132
        %v3143 = vmul.f32 %v3113, %v3134
        %v3144 = vmul.f32 %v3114, %v3136
        %v3145 = vmul.f32 %v3115, %v3138
        %v3146 = vmul.f32 %v3116, %v3140
        %v3147 = vsub.f32 1.0, %v3141
        %v3148 = vsub.f32 1.0, %v3142
        %v3149 = vsub.f32 1.0, %v3143
        %v3150 = vsub.f32 1.0, %v3144
        %v3151 = vsub.f32 1.0, %v3145
        %v3152 = vsub.f32 1.0, %v3146
        %v3153 = vmul.f32 %v3027, %v3147
        %v3154 = vmul.f32 %v3028, %v3148
        %v3155 = vmul.f32 %v3029, %v3149
        %v3156 = vmul.f32 %v3030, %v3150
        %v3157 = vmul.f32 %v3031, %v3151
        %v3158 = vmul.f32 %v3032, %v3152
        %v3159 = vadd.f32 %v3153, 1.0
        %v3160 = vadd.f32 %v3154, 1.0
        %v3161 = vadd.f32 %v3155, 1.0
        %v3162 = vadd.f32 %v3156, 1.0
        %v3163 = vadd.f32 %v3157, 1.0
        %v3164 = vadd.f32 %v3158, 1.0
        %v3165 = vmul.f32 %v3009, %v3159
        %v3166 = vmul.f32 %v3010, %v3160
        %v3167 = vmul.f32 %v3011, %v3161
        %v3168 = vmul.f32 %v3012, %v3162
        %v3169 = vmul.f32 %v3013, %v3163
        %v3170 = vmul.f32 %v3014, %v3164
        %s3171 = smul.u32 %s35, 128
        %s3172 = scalar_lea.vmem %s13, %s3171
        %v3173 = vld [vmem:[%s3172] sm:$0xff]
        %v3174 = vld [vmem:[%s3172 + $0x8] sm:$0xff]
        %v3175 = vld [vmem:[%s3172 + $0x10] sm:$0xff]
        %v3176 = vld [vmem:[%s3172 + $0x18] sm:$0xff]
        %v3177 = vld [vmem:[%s3172 + $0x20] sm:$0xff]
        %v3178 = vld [vmem:[%s3172 + $0x28] sm:$0xff]
        %v3179 = vld [vmem:[%s3172 + $0x30] sm:$0xff]
        %v3180 = vld [vmem:[%s3172 + $0x38] sm:$0xff]
        %v3181 = vld [vmem:[%s3172 + $0x40] sm:$0xff]
        %v3182 = vld [vmem:[%s3172 + $0x48] sm:$0xff]
        %v3183 = vld [vmem:[%s3172 + $0x50] sm:$0xff]
        %v3184 = vld [vmem:[%s3172 + $0x58] sm:$0xff]
        %v3185 = vld [vmem:[%s3172 + $0x60] sm:$0xff]
        %v3186 = vld [vmem:[%s3172 + $0x68] sm:$0xff]
        %v3187 = vld [vmem:[%s3172 + $0x70] sm:$0xff]
        %v3188 = vld [vmem:[%s3172 + $0x78] sm:$0xff]
        %3189 = vmatprep.subr.mxu0 0.0
        %3190 = vmatpush1.msra.mxu0 %v3173
        %3191 = vmatprep.subr.mxu0 0.0
        %3192 = vmatpush1.msra.mxu0 %v3174
        %3193 = vmatprep.subr.mxu0 0.0
        %3194 = vmatpush1.msra.mxu0 %v3175
        %3195 = vmatprep.subr.mxu0 0.0
        %3196 = vmatpush1.msra.mxu0 %v3176
        %3197 = vmatprep.subr.mxu0 0.0
        %3198 = vmatpush1.msra.mxu0 %v3177
        %3199 = vmatprep.subr.mxu0 0.0
        %3200 = vmatpush1.msra.mxu0 %v3178
        %3201 = vmatprep.subr.mxu0 0.0
        %3202 = vmatpush1.msra.mxu0 %v3179
        %3203 = vmatprep.subr.mxu0 0.0
        %3204 = vmatpush1.msra.mxu0 %v3180
        %3205 = vmatprep.subr.mxu0 0.0
        %3206 = vmatpush1.msra.mxu0 %v3181
        %3207 = vmatprep.subr.mxu0 0.0
        %3208 = vmatpush1.msra.mxu0 %v3182
        %3209 = vmatprep.subr.mxu0 0.0
        %3210 = vmatpush1.msra.mxu0 %v3183
        %3211 = vmatprep.subr.mxu0 0.0
        %3212 = vmatpush1.msra.mxu0 %v3184
        %3213 = vmatprep.subr.mxu0 0.0
        %3214 = vmatpush1.msra.mxu0 %v3185
        %3215 = vmatprep.subr.mxu0 0.0
        %3216 = vmatpush1.msra.mxu0 %v3186
        %3217 = vmatprep.subr.mxu0 0.0
        %3218 = vmatpush1.msra.mxu0 %v3187
        %3219 = vmatprep.subr.mxu0 0.0
        %3220 = vmatpush1.msra.mxu0 %v3188
        %3221 = vmatprep.subr.mxu0 0.0
        %3222 = vmatpush1.msra.mxu0 0.0
        %3223 = vmatprep.subr.mxu0 0.0
        %3224 = vmatpush1.msra.mxu0 0.0
        %3225 = vmatprep.subr.mxu0 0.0
        %3226 = vmatpush1.msra.mxu0 0.0
        %3227 = vmatprep.subr.mxu0 0.0
        %3228 = vmatpush1.msra.mxu0 0.0
        %3229 = vmatprep.subr.mxu0 0.0
        %3230 = vmatpush1.msra.mxu0 0.0
        %3231 = vmatprep.subr.mxu0 0.0
        %3232 = vmatpush1.msra.mxu0 0.0
        %3233 = vmatprep.subr.mxu0 0.0
        %3234 = vmatpush1.msra.mxu0 0.0
        %3235 = vmatprep.subr.mxu0 0.0
        %3236 = vmatpush1.msra.mxu0 0.0
        %3237 = vmatprep.subr.mxu0 0.0
        %3238 = vmatpush1.msra.mxu0 0.0
        %3239 = vmatprep.subr.mxu0 0.0
        %3240 = vmatpush1.msra.mxu0 0.0
        %3241 = vmatprep.subr.mxu0 0.0
        %3242 = vmatpush1.msra.mxu0 0.0
        %3243 = vmatprep.subr.mxu0 0.0
        %3244 = vmatpush1.msra.mxu0 0.0
        %3245 = vmatprep.subr.mxu0 0.0
        %3246 = vmatpush1.msra.mxu0 0.0
        %3247 = vmatprep.subr.mxu0 0.0
        %3248 = vmatpush1.msra.mxu0 0.0
        %3249 = vmatprep.subr.mxu0 0.0
        %3250 = vmatpush1.msra.mxu0 0.0
        %3251 = vmatprep.subr.mxu0 0.0
        %3252 = vmatpush1.msra.mxu0 0.0
        %3253 = vmatprep.mubr.f32.mxu0 0.0
        %3254 = vmatmul.mubr.f32.gmra.mrb[0].mxu0 %v3165
        %v3255 = vpop.f32.mrb[0].mxu0
        %v3256 = vadd.f32 0.0, %v3255
        %v3257 = vpop.f32.mrb[0].mxu0
        %3258 = vmatprep.mubr.f32.mxu0 0.0
        %3259 = vmatmul.mubr.f32.gmra.mrb[0].mxu0 %v3166
        %v3260 = vpop.f32.mrb[0].mxu0
        %v3261 = vadd.f32 0.0, %v3260
        %v3262 = vpop.f32.mrb[0].mxu0
        %3263 = vmatprep.mubr.f32.mxu0 0.0
        %3264 = vmatmul.mubr.f32.gmra.mrb[0].mxu0 %v3167
        %v3265 = vpop.f32.mrb[0].mxu0
        %v3266 = vadd.f32 0.0, %v3265
        %v3267 = vpop.f32.mrb[0].mxu0
        %3268 = vmatprep.mubr.f32.mxu0 0.0
        %3269 = vmatmul.mubr.f32.gmra.mrb[0].mxu0 %v3168
        %v3270 = vpop.f32.mrb[0].mxu0
        %v3271 = vadd.f32 0.0, %v3270
        %v3272 = vpop.f32.mrb[0].mxu0
        %3273 = vmatprep.mubr.f32.mxu0 0.0
        %3274 = vmatmul.mubr.f32.gmra.mrb[0].mxu0 %v3169
        %v3275 = vpop.f32.mrb[0].mxu0
        %v3276 = vadd.f32 0.0, %v3275
        %v3277 = vpop.f32.mrb[0].mxu0
        %3278 = vmatprep.mubr.f32.mxu0 0.0
        %3279 = vmatmul.mubr.f32.gmra.mrb[0].mxu0 %v3170
        %v3280 = vpop.f32.mrb[0].mxu0
        %v3281 = vadd.f32 0.0, %v3280
        %v3282 = vpop.f32.mrb[0].mxu0
        %3283 = vdwg.mxu0
        %v3284 = vadd.f32 %v2771, %v3256
        %v3285 = vadd.f32 %v2772, %v3261
        %v3286 = vadd.f32 %v2773, %v3266
        %v3287 = vadd.f32 %v2774, %v3271
        %v3288 = vadd.f32 %v2775, %v3276
        %v3289 = vadd.f32 %v2776, %v3281
        %s3290 = scalar_lea.vmem %s14, %s35
        %v3291 = vld [vmem:[%s3290] sm:$0x1]
        %v3293 = vlaneseq
        %v3294 = vshrl.u32 %v3293, 7
        %v3295 = vsub.s32 0, %v3294
        %v3296 = vrot.slane %v3291, %v3295
        %v3298 = vadd.f32 %v3284, %v3296
        %v3299 = vadd.f32 %v3285, %v3296
        %v3300 = vadd.f32 %v3286, %v3296
        %v3301 = vadd.f32 %v3287, %v3296
        %v3302 = vadd.f32 %v3288, %v3296
        %v3303 = vadd.f32 %v3289, %v3296
        %3304 = vst.msk [vmem:[#allocation2] sm:$0xff] %vm695, %v3298
        %3305 = vst.msk [vmem:[#allocation2 + $0x8] sm:$0xff] %vm695, %v3299
        %3306 = vst.msk [vmem:[#allocation2 + $0x10] sm:$0xff] %vm695, %v3300
        %3307 = vst.msk [vmem:[#allocation2 + $0x18] sm:$0xff] %vm695, %v3301
        %3308 = vst.msk [vmem:[#allocation2 + $0x20] sm:$0xff] %vm695, %v3302
        %3309 = vst.msk [vmem:[#allocation2 + $0x28] sm:$0xff] %vm695, %v3303
        %p3310 = scmp.eq.s32.totalorder %s35, 1
        // Predicated region
        $region109: #{mae_forward.5} parent=103 // pred_check
          %p3311 = pneg %p3310
        $region110: #{mae_forward.5} parent=103 // pred_check_branch
          %3313 = sbr.rel (%p3311) target = $region112
        $region111: #{mae_forward.5} parent=103 // pred_region
          %v3314 = vld [vmem:[%s15] sm:$0x1]
          %v3315 = vld [vmem:[%s16] sm:$0x1]
          %v3316 = vsel %vm695, %v3298, 0.0
          %3317 = vadd.xlane.f32.xlu0 %v3316
          %v3318 = vpop.xlane.xlu0 %3317
          %v3319 = vsel %vm695, %v3299, 0.0
          %3320 = vadd.xlane.f32.xlu0 %v3319
          %v3321 = vpop.xlane.xlu0 %3320
          %v3322 = vsel %vm695, %v3300, 0.0
          %3323 = vadd.xlane.f32.xlu0 %v3322
          %v3324 = vpop.xlane.xlu0 %3323
          %v3325 = vsel %vm695, %v3301, 0.0
          %3326 = vadd.xlane.f32.xlu0 %v3325
          %v3327 = vpop.xlane.xlu0 %3326
          %v3328 = vsel %vm695, %v3302, 0.0
          %3329 = vadd.xlane.f32.xlu0 %v3328
          %v3330 = vpop.xlane.xlu0 %3329
          %v3331 = vsel %vm695, %v3303, 0.0
          %3332 = vadd.xlane.f32.xlu0 %v3331
          %v3333 = vpop.xlane.xlu0 %3332
          %v3334 = vmul.f32 %v3318, %v714
          %v3335 = vmul.f32 %v3321, %v714
          %v3336 = vmul.f32 %v3324, %v714
          %v3337 = vmul.f32 %v3327, %v714
          %v3338 = vmul.f32 %v3330, %v714
          %v3339 = vmul.f32 %v3333, %v714
          %v3340 = vsub.f32 %v3298, %v3334
          %v3341 = vsub.f32 %v3299, %v3335
          %v3342 = vsub.f32 %v3300, %v3336
          %v3343 = vsub.f32 %v3301, %v3337
          %v3344 = vsub.f32 %v3302, %v3338
          %v3345 = vsub.f32 %v3303, %v3339
          %v3346 = vmul.f32 %v3340, %v3340
          %v3347 = vmul.f32 %v3341, %v3341
          %v3348 = vmul.f32 %v3342, %v3342
          %v3349 = vmul.f32 %v3343, %v3343
          %v3350 = vmul.f32 %v3344, %v3344
          %v3351 = vmul.f32 %v3345, %v3345
          %v3352 = vsel %vm695, %v3346, 0.0
          %3353 = vadd.xlane.f32.xlu0 %v3352
          %v3354 = vpop.xlane.xlu0 %3353
          %v3355 = vsel %vm695, %v3347, 0.0
          %3356 = vadd.xlane.f32.xlu0 %v3355
          %v3357 = vpop.xlane.xlu0 %3356
          %v3358 = vsel %vm695, %v3348, 0.0
          %3359 = vadd.xlane.f32.xlu0 %v3358
          %v3360 = vpop.xlane.xlu0 %3359
          %v3361 = vsel %vm695, %v3349, 0.0
          %3362 = vadd.xlane.f32.xlu0 %v3361
          %v3363 = vpop.xlane.xlu0 %3362
          %v3364 = vsel %vm695, %v3350, 0.0
          %3365 = vadd.xlane.f32.xlu0 %v3364
          %v3366 = vpop.xlane.xlu0 %3365
          %v3367 = vsel %vm695, %v3351, 0.0
          %3368 = vadd.xlane.f32.xlu0 %v3367
          %v3369 = vpop.xlane.xlu0 %3368
          %v3370 = vmul.f32 %v3354, %v714
          %v3371 = vmul.f32 %v3357, %v714
          %v3372 = vmul.f32 %v3360, %v714
          %v3373 = vmul.f32 %v3363, %v714
          %v3374 = vmul.f32 %v3366, %v714
          %v3375 = vmul.f32 %v3369, %v714
          %v3376 = vadd.f32 %v3370, 1e-05
          %v3377 = vadd.f32 %v3371, 1e-05
          %v3378 = vadd.f32 %v3372, 1e-05
          %v3379 = vadd.f32 %v3373, 1e-05
          %v3380 = vadd.f32 %v3374, 1e-05
          %v3381 = vadd.f32 %v3375, 1e-05
          %v3382 = vrsqrt.pop %v3376
          %v3383 = vrsqrt.pop %v3377
          %v3384 = vrsqrt.pop %v3378
          %v3385 = vrsqrt.pop %v3379
          %v3386 = vrsqrt.pop %v3380
          %v3387 = vrsqrt.pop %v3381
          %v3388 = vmul.f32 %v3340, %v3382
          %v3389 = vmul.f32 %v3341, %v3383
          %v3390 = vmul.f32 %v3342, %v3384
          %v3391 = vmul.f32 %v3343, %v3385
          %v3392 = vmul.f32 %v3344, %v3386
          %v3393 = vmul.f32 %v3345, %v3387
          %v3395 = vlaneseq
          %v3396 = vshrl.u32 %v3395, 7
          %v3397 = vsub.s32 0, %v3396
          %v3398 = vrot.slane %v3314, %v3397
          %v3400 = vmul.f32 %v3388, %v3398
          %v3401 = vmul.f32 %v3389, %v3398
          %v3402 = vmul.f32 %v3390, %v3398
          %v3403 = vmul.f32 %v3391, %v3398
          %v3404 = vmul.f32 %v3392, %v3398
          %v3405 = vmul.f32 %v3393, %v3398
          %v3407 = vlaneseq
          %v3408 = vshrl.u32 %v3407, 7
          %v3409 = vsub.s32 0, %v3408
          %v3410 = vrot.slane %v3315, %v3409
          %v3412 = vadd.f32 %v3400, %v3410
          %v3413 = vadd.f32 %v3401, %v3410
          %v3414 = vadd.f32 %v3402, %v3410
          %v3415 = vadd.f32 %v3403, %v3410
          %v3416 = vadd.f32 %v3404, %v3410
          %v3417 = vadd.f32 %v3405, %v3410
          %v3418 = vld [vmem:[%s17] sm:$0xff]
          %v3419 = vld [vmem:[%s17 + $0x8] sm:$0xff]
          %v3420 = vld [vmem:[%s17 + $0x10] sm:$0xff]
          %v3421 = vld [vmem:[%s17 + $0x18] sm:$0xff]
          %v3422 = vld [vmem:[%s18] sm:$0x1]
          %v3424 = vlaneseq
          %v3425 = vshrl.u32 %v3424, 7
          %v3426 = vsub.s32 0, %v3425
          %v3427 = vrot.slane %v3422, %v3426
          %v3430 = vsel %vm695, %v3412, 0
          %v3433 = vsel %vm695, %v3413, 0
          %v3436 = vsel %vm695, %v3414, 0
          %v3439 = vsel %vm695, %v3415, 0
          %v3442 = vsel %vm695, %v3416, 0
          %v3445 = vsel %vm695, %v3417, 0
          %3447 = vmatprep.subr.mxu0 0.0
          %3448 = vmatpush1.msra.mxu0 %v3418
          %3449 = vmatprep.subr.mxu0 0.0
          %3450 = vmatpush1.msra.mxu0 %v3419
          %3451 = vmatprep.subr.mxu0 0.0
          %3452 = vmatpush1.msra.mxu0 %v3420
          %3453 = vmatprep.subr.mxu0 0.0
          %3454 = vmatpush1.msra.mxu0 %v3421
          %3455 = vmatprep.subr.mxu0 0.0
          %3456 = vmatpush1.msra.mxu0 0.0
          %3457 = vmatprep.subr.mxu0 0.0
          %3458 = vmatpush1.msra.mxu0 0.0
          %3459 = vmatprep.subr.mxu0 0.0
          %3460 = vmatpush1.msra.mxu0 0.0
          %3461 = vmatprep.subr.mxu0 0.0
          %3462 = vmatpush1.msra.mxu0 0.0
          %3463 = vmatprep.subr.mxu0 0.0
          %3464 = vmatpush1.msra.mxu0 0.0
          %3465 = vmatprep.subr.mxu0 0.0
          %3466 = vmatpush1.msra.mxu0 0.0
          %3467 = vmatprep.subr.mxu0 0.0
          %3468 = vmatpush1.msra.mxu0 0.0
          %3469 = vmatprep.subr.mxu0 0.0
          %3470 = vmatpush1.msra.mxu0 0.0
          %3471 = vmatprep.subr.mxu0 0.0
          %3472 = vmatpush1.msra.mxu0 0.0
          %3473 = vmatprep.subr.mxu0 0.0
          %3474 = vmatpush1.msra.mxu0 0.0
          %3475 = vmatprep.subr.mxu0 0.0
          %3476 = vmatpush1.msra.mxu0 0.0
          %3477 = vmatprep.subr.mxu0 0.0
          %3478 = vmatpush1.msra.mxu0 0.0
          %3479 = vmatprep.subr.mxu0 0.0
          %3480 = vmatpush1.msra.mxu0 0.0
          %3481 = vmatprep.subr.mxu0 0.0
          %3482 = vmatpush1.msra.mxu0 0.0
          %3483 = vmatprep.subr.mxu0 0.0
          %3484 = vmatpush1.msra.mxu0 0.0
          %3485 = vmatprep.subr.mxu0 0.0
          %3486 = vmatpush1.msra.mxu0 0.0
          %3487 = vmatprep.subr.mxu0 0.0
          %3488 = vmatpush1.msra.mxu0 0.0
          %3489 = vmatprep.subr.mxu0 0.0
          %3490 = vmatpush1.msra.mxu0 0.0
          %3491 = vmatprep.subr.mxu0 0.0
          %3492 = vmatpush1.msra.mxu0 0.0
          %3493 = vmatprep.subr.mxu0 0.0
          %3494 = vmatpush1.msra.mxu0 0.0
          %3495 = vmatprep.subr.mxu0 0.0
          %3496 = vmatpush1.msra.mxu0 0.0
          %3497 = vmatprep.subr.mxu0 0.0
          %3498 = vmatpush1.msra.mxu0 0.0
          %3499 = vmatprep.subr.mxu0 0.0
          %3500 = vmatpush1.msra.mxu0 0.0
          %3501 = vmatprep.subr.mxu0 0.0
          %3502 = vmatpush1.msra.mxu0 0.0
          %3503 = vmatprep.subr.mxu0 0.0
          %3504 = vmatpush1.msra.mxu0 0.0
          %3505 = vmatprep.subr.mxu0 0.0
          %3506 = vmatpush1.msra.mxu0 0.0
          %3507 = vmatprep.subr.mxu0 0.0
          %3508 = vmatpush1.msra.mxu0 0.0
          %3509 = vmatprep.subr.mxu0 0.0
          %3510 = vmatpush1.msra.mxu0 0.0
          %3511 = vmatprep.mubr.f32.mxu0 0.0
          %3512 = vmatmul.mubr.f32.gmra.mrb[0].mxu0 %v3430
          %v3513 = vpop.f32.mrb[0].mxu0
          %v3514 = vadd.f32 %v3427, %v3513
          %v3515 = vpop.f32.mrb[0].mxu0
          %3516 = vmatprep.mubr.f32.mxu0 0.0
          %3517 = vmatmul.mubr.f32.gmra.mrb[0].mxu0 %v3433
          %v3518 = vpop.f32.mrb[0].mxu0
          %v3519 = vadd.f32 %v3427, %v3518
          %v3520 = vpop.f32.mrb[0].mxu0
          %3521 = vmatprep.mubr.f32.mxu0 0.0
          %3522 = vmatmul.mubr.f32.gmra.mrb[0].mxu0 %v3436
          %v3523 = vpop.f32.mrb[0].mxu0
          %v3524 = vadd.f32 %v3427, %v3523
          %v3525 = vpop.f32.mrb[0].mxu0
          %3526 = vmatprep.mubr.f32.mxu0 0.0
          %3527 = vmatmul.mubr.f32.gmra.mrb[0].mxu0 %v3439
          %v3528 = vpop.f32.mrb[0].mxu0
          %v3529 = vadd.f32 %v3427, %v3528
          %v3530 = vpop.f32.mrb[0].mxu0
          %3531 = vmatprep.mubr.f32.mxu0 0.0
          %3532 = vmatmul.mubr.f32.gmra.mrb[0].mxu0 %v3442
          %v3533 = vpop.f32.mrb[0].mxu0
          %v3534 = vadd.f32 %v3427, %v3533
          %v3535 = vpop.f32.mrb[0].mxu0
          %3536 = vmatprep.mubr.f32.mxu0 0.0
          %3537 = vmatmul.mubr.f32.gmra.mrb[0].mxu0 %v3445
          %v3538 = vpop.f32.mrb[0].mxu0
          %v3539 = vadd.f32 %v3427, %v3538
          %v3540 = vpop.f32.mrb[0].mxu0
          %3541 = vdwg.mxu0
          %3542 = vst [vmem:[%s21] sm:$0xff] %v3514
          %3543 = vst [vmem:[%s21 + $0x8] sm:$0xff] %v3519
          %3544 = vst [vmem:[%s21 + $0x10] sm:$0xff] %v3524
          %3545 = vst [vmem:[%s21 + $0x18] sm:$0xff] %v3529
          %3546 = vst [vmem:[%s21 + $0x20] sm:$0xff] %v3534
          %3547 = vst [vmem:[%s21 + $0x28] sm:$0xff] %v3539
          %v3548 = vld [vmem:[%s19] sm:$0xff]
          %v3549 = vld [vmem:[%s19 + $0x8] sm:$0xff]
          %v3550 = vld [vmem:[%s19 + $0x10] sm:$0xff]
          %v3551 = vld [vmem:[%s19 + $0x18] sm:$0xff]
          %v3552 = vld [vmem:[%s19 + $0x20] sm:$0xff]
          %v3553 = vld [vmem:[%s19 + $0x28] sm:$0xff]
          %v3554 = vsub.f32 %v3514, %v3548
          %v3555 = vsub.f32 %v3519, %v3549
          %v3556 = vsub.f32 %v3524, %v3550
          %v3557 = vsub.f32 %v3529, %v3551
          %v3558 = vsub.f32 %v3534, %v3552
          %v3559 = vsub.f32 %v3539, %v3553
          %v3560 = vmul.f32 %v3554, %v3554
          %v3561 = vmul.f32 %v3555, %v3555
          %v3562 = vmul.f32 %v3556, %v3556
          %v3563 = vmul.f32 %v3557, %v3557
          %v3564 = vmul.f32 %v3558, %v3558
          %v3565 = vmul.f32 %v3559, %v3559
          %3566 = vadd.xlane.f32.xlu0 %v3560
          %v3567 = vpop.xlane.xlu0 %3566
          %3568 = vadd.xlane.f32.xlu0 %v3561
          %v3569 = vpop.xlane.xlu0 %3568
          %3570 = vadd.xlane.f32.xlu0 %v3562
          %v3571 = vpop.xlane.xlu0 %3570
          %3572 = vadd.xlane.f32.xlu0 %v3563
          %v3573 = vpop.xlane.xlu0 %3572
          %3574 = vadd.xlane.f32.xlu0 %v3564
          %v3575 = vpop.xlane.xlu0 %3574
          %3576 = vadd.xlane.f32.xlu0 %v3565
          %v3577 = vpop.xlane.xlu0 %3576
          %v3578 = vmul.f32 %v3567, 0.020833334
          %v3579 = vmul.f32 %v3569, 0.020833334
          %v3580 = vmul.f32 %v3571, 0.020833334
          %v3581 = vmul.f32 %v3573, 0.020833334
          %v3582 = vmul.f32 %v3575, 0.020833334
          %v3583 = vmul.f32 %v3577, 0.020833334
          %v3584 = vld [vmem:[%s20] sm:$0xff]
          %v3585 = vld [vmem:[%s20 + $0x8] sm:$0xff]
          %v3586 = vld [vmem:[%s20 + $0x10] sm:$0xff]
          %v3587 = vld [vmem:[%s20 + $0x18] sm:$0xff]
          %v3588 = vld [vmem:[%s20 + $0x20] sm:$0xff]
          %v3589 = vld [vmem:[%s20 + $0x28] sm:$0xff]
          %v3590 = vmul.f32 %v3578, %v3584
          %v3591 = vmul.f32 %v3579, %v3585
          %v3592 = vmul.f32 %v3580, %v3586
          %v3593 = vmul.f32 %v3581, %v3587
          %v3594 = vmul.f32 %v3582, %v3588
          %v3595 = vmul.f32 %v3583, %v3589
          %vm3596 = vcmask 7168
          %v3597 = vsel %vm3596, %v3590, 0.0
          %v3598 = vsel %vm3596, %v3591, 0.0
          %v3599 = vadd.f32 %v3597, %v3598
          %v3600 = vsel %vm3596, %v3592, 0.0
          %v3601 = vadd.f32 %v3599, %v3600
          %v3602 = vsel %vm3596, %v3593, 0.0
          %v3603 = vadd.f32 %v3601, %v3602
          %v3604 = vsel %vm3596, %v3594, 0.0
          %v3605 = vadd.f32 %v3603, %v3604
          %v3606 = vsel %vm3596, %v3595, 0.0
          %v3607 = vadd.f32 %v3605, %v3606
          %3608 = vadd.xlane.f32.xlu0 %v3607
          %v3609 = vpop.xlane.xlu0 %3608
          %v3610 = vrot.slane %v3609, 4
          %v3611 = vadd.f32 %v3609, %v3610
          %v3612 = vrot.slane %v3611, 2
          %v3613 = vadd.f32 %v3611, %v3612
          %v3614 = vrot.slane %v3613, 1
          %v3615 = vadd.f32 %v3613, %v3614
          %s3616 = vtos %v3615
          %v3617 = vstv %s3616
          %v3618 = vsel %vm3596, %v3584, 0.0
          %v3619 = vsel %vm3596, %v3585, 0.0
          %v3620 = vadd.f32 %v3618, %v3619
          %v3621 = vsel %vm3596, %v3586, 0.0
          %v3622 = vadd.f32 %v3620, %v3621
          %v3623 = vsel %vm3596, %v3587, 0.0
          %v3624 = vadd.f32 %v3622, %v3623
          %v3625 = vsel %vm3596, %v3588, 0.0
          %v3626 = vadd.f32 %v3624, %v3625
          %v3627 = vsel %vm3596, %v3589, 0.0
          %v3628 = vadd.f32 %v3626, %v3627
          %3629 = vadd.xlane.f32.xlu0 %v3628
          %v3630 = vpop.xlane.xlu0 %3629
          %v3631 = vrot.slane %v3630, 4
          %v3632 = vadd.f32 %v3630, %v3631
          %v3633 = vrot.slane %v3632, 2
          %v3634 = vadd.f32 %v3632, %v3633
          %v3635 = vrot.slane %v3634, 1
          %v3636 = vadd.f32 %v3634, %v3635
          %s3637 = vtos %v3636
          %v3638 = vstv %s3637
          %v3639 = vmax.f32 %v3638, 1e-06
          %v3640 = vrcp.pop %v3639
          %v3641 = vmul.f32 %v3617, %v3640
          %vm3642 = vcmask 0
          %3643 = vst.msk [vmem:[#allocation3] sm:$0x1] %vm3642, %v3641
        $region112: #{mae_forward.5} parent=103 // pred_fallthru
          _
        // Predicated region
        $region113: #{mae_forward.5} parent=103 // pred_check
          %p3644 = pneg %p489
        $region114: #{mae_forward.5} parent=103 // pred_check_branch
          %3646 = sbr.rel (%p3644) target = $region116
        $region115: #{mae_forward.5} parent=103 // pred_region
          _
        $region116: #{mae_forward.5} parent=103 // pred_fallthru
          _
        // Predicated region
        $region117: #{mae_forward.5} parent=103 // pred_check
          %p3647 = pneg %p510
        $region118: #{mae_forward.5} parent=103 // pred_check_branch
          %3649 = sbr.rel (%p3647) target = $region120
        $region119: #{mae_forward.5} parent=103 // pred_region
          %s3651 = ssub.s32 16, 16
          %3652 = vsyncadd [#allocation4], %s3651
          %s3654 = sshll.u32 [#allocation3], 4
          %s3655 = int_to_ptr.vmem [resolvable:$true] %s3654
          %3657 = dma.vmem_to_hbm [thread:$0]  %s3655, 16, %s22, [#allocation4]
        $region120: #{mae_forward.5} parent=103 // pred_fallthru
          _
        // Predicated region
        $region121: #{mae_forward.5} parent=103 // pred_check
          %p3658 = pneg %p489
        $region122: #{mae_forward.5} parent=103 // pred_check_branch
          %3660 = sbr.rel (%p3658) target = $region124
        $region123: #{mae_forward.5} parent=103 // pred_region
          _
        $region124: #{mae_forward.5} parent=103 // pred_fallthru
          _
        // Predicated region
        $region125: #{mae_forward.5} parent=103 // pred_check
          %p3661 = pneg %p510
        $region126: #{mae_forward.5} parent=103 // pred_check_branch
          %3663 = sbr.rel (%p3661) target = $region128
        $region127: #{mae_forward.5} parent=103 // pred_region
          %3664 = dma.done [#allocation4], 16
        $region128: #{mae_forward.5} parent=103 // pred_fallthru
          _
      $region104: #{mae_forward.5} parent=5 // pred_fallthru
        _
      %p3665 = scmp.le.s32.totalorder 2, %s30
      // Predicated region
      $region129: #{mae_forward.5} parent=5 // pred_check
        %p3666 = pneg %p3665
      $region130: #{mae_forward.5} parent=5 // pred_check_branch
        %3668 = sbr.rel (%p3666) target = $region132
      $region131: #{mae_forward.5} parent=5 // pred_region
        %s3669 = ssub.s32 %s30, 2
      $region132: #{mae_forward.5} parent=5 // pred_fallthru
        _
    $region6: #{mae_forward.5} parent=1 // loop_footer
      %s34 = sadd.s32 1, %s30
    $region7: #{mae_forward.5} parent=1 // loop_footer_branch
      %29 = sbr.rel target = $region3
    $region8: #{mae_forward.5} parent=1 // loop_exit
      _
    %3670 = vsyncpa [#allocation4], 1
    %s3671 = scalar_lea.sflag [#allocation4], 1
    %3672 = vsyncpa %s3671, 1

</llo_original>
